<compile_context>
chip_gen: v7x
topology: tpu7x:2x2x1
jax: 0.10.0
libtpu: 0.0.40
codegen_flags: <defaults>
</compile_context>

<pallas_src>
import numpy as np
import jax
import jax.numpy as jnp
from jax.experimental import pallas as pl
from jax.experimental.pallas import tpu as pltpu

# ----------------------------- model config --------------------------------
IMG_SIZE = 16
LATENT_DIM = 8
CHANNELS = 3
INIT_SIZE = IMG_SIZE // 4            # 4
BATCH = 2
C0 = 64                              # channels after the l1 .view
HW0 = INIT_SIZE * INIT_SIZE          # 16


# ----------------- host-side constant builders (compile time) ---------------
def _upsample_matrix(b, h, w):
    """(b*h*w, b*2h*2w) 0/1 matrix; x_up = x @ U for x in (C, N) layout."""
    n_out = b * (2 * h) * (2 * w)
    j = np.arange(n_out)
    bb = j // (4 * h * w)
    rem = j % (4 * h * w)
    h2 = rem // (2 * w)
    w2 = rem % (2 * w)
    src = bb * h * w + (h2 // 2) * w + (w2 // 2)
    u = (np.arange(b * h * w)[:, None] == src[None, :]).astype(np.float32)
    return jnp.asarray(u)


def _conv_tap_masks(b, h, w):
    """(9, b*h*w) validity masks for the 3x3 pad-1 conv taps, (C, N) layout."""
    n = np.arange(b * h * w)
    hh = (n // w) % h
    ww = n % w
    rows = []
    for dy in (-1, 0, 1):
        for dx in (-1, 0, 1):
            ok = (hh + dy >= 0) & (hh + dy < h) & (ww + dx >= 0) & (ww + dx < w)
            rows.append(ok)
    return jnp.asarray(np.stack(rows).astype(np.float32))


def _l1_selectors(f_in, batch, hw):
    """Constant matrices that let the kernel expand gen^T (f_in, B) into the
    (f_in*hw, B*hw) operand of the folded-Linear matmul."""
    sel_f = np.repeat(np.eye(f_in, dtype=np.float32), hw, axis=0)     # (f_in*hw, f_in)
    sel_b = np.repeat(np.eye(batch, dtype=np.float32), hw, axis=1)    # (B, B*hw)
    r = np.arange(f_in * hw)[:, None] % hw
    m = np.arange(batch * hw)[None, :] % hw
    mask_hw = (r == m).astype(np.float32)                             # (f_in*hw, B*hw)
    return jnp.asarray(sel_f), jnp.asarray(sel_b), jnp.asarray(mask_hw)


def _pack_l1(w, bias, c0, hw, batch):
    """l1 weight (f_in, c0*hw) -> A (c0, f_in*hw) with A[c, f*hw+p] = w[f, c*hw+p];
    bias -> (c0, batch*hw) broadcast over the batch blocks."""
    f_in = w.shape[0]
    a = jnp.transpose(w.reshape(f_in, c0, hw), (1, 0, 2)).reshape(c0, f_in * hw)
    bias0 = jnp.tile(bias.reshape(c0, hw), (1, batch))
    return a, bias0


def _pack_conv(w):
    """torch conv weight (Cout, Cin, 3, 3) -> (Cout, 9*Cin) bf16, tap-major."""
    cout, cin = w.shape[0], w.shape[1]
    wm = jnp.transpose(w, (0, 2, 3, 1)).reshape(cout, 9 * cin)
    return wm.astype(jnp.bfloat16)


# ------------------------------ kernel helpers ------------------------------
def _shift_lanes(x, off):
    """y[:, n] = x[:, n + off] (zero where n + off is out of range)."""
    if off == 0:
        return x
    rows = x.shape[0]
    pad = jnp.zeros((rows, abs(off)), x.dtype)
    if off > 0:
        return jnp.concatenate([x[:, off:], pad], axis=1)
    return jnp.concatenate([pad, x[:, :off]], axis=1)


def _conv3x3(x, w, b, masks, w_spatial):
    """3x3 pad-1 conv in (C, N) layout as ONE (Cout, 9Cin) @ (9Cin, N) dot."""
    taps = []
    ki = 0
    for dy in (-1, 0, 1):
        for dx in (-1, 0, 1):
            t = _shift_lanes(x, dy * w_spatial + dx) * masks[ki:ki + 1, :]
            taps.append(t)
            ki += 1
    taps = jnp.concatenate(taps, axis=0).astype(jnp.bfloat16)       # (9*Cin, N)
    out = jnp.dot(w, taps, preferred_element_type=jnp.float32)      # (Cout, N)
    return out + b


def _batchnorm(x, g, b, eps, leaky):
    """Training-mode BN over the lane (B*H*W) axis, single-pass statistics."""
    inv_n = 1.0 / x.shape[1]
    mean = jnp.sum(x, axis=1, keepdims=True) * inv_n
    sq = jnp.sum(x * x, axis=1, keepdims=True) * inv_n
    var = sq - mean * mean
    y = g * (x - mean) * jax.lax.rsqrt(var + eps) + b
    if leaky:
        y = jnp.where(y > 0, y, 0.2 * y)
    return y


# -------------------------------- fused kernel ------------------------------
def generator_kernel(
    gen_t_ref, a1_ref, sel_f_ref, sel_b_ref, mask_hw_ref, bias0_ref,
    g0_ref, b0_ref, u1_ref, wc1_ref, bc1_ref, m1_ref, g1_ref, b1_ref,
    u2_ref, wc2_ref, bc2_ref, m2_ref, g2_ref, b2_ref, wc3_ref, bc3_ref,
    out_ref,
):
    # ---- folded Linear: x0[c, b*16+hw] -> (64, B*16) ----
    g_bm = jnp.dot(gen_t_ref[...], sel_b_ref[...],
                   preferred_element_type=jnp.float32)              # (40, B*16)
    g_full = jnp.dot(sel_f_ref[...], g_bm,
                     preferred_element_type=jnp.float32)            # (640, B*16)
    rhs = mask_hw_ref[...] * g_full
    x0 = jnp.dot(a1_ref[...], rhs,
                 preferred_element_type=jnp.float32) + bias0_ref[...]  # (64, 32)

    # ---- BatchNorm2d(64), eps=1e-5 ----
    y0 = _batchnorm(x0, g0_ref[...], b0_ref[...], 1e-5, leaky=False)

    # ---- Upsample 4->8, Conv(64->64), BN(eps=0.8), LeakyReLU(0.2) ----
    x1 = jnp.dot(y0, u1_ref[...], preferred_element_type=jnp.float32)   # (64, 128)
    c1 = _conv3x3(x1, wc1_ref[...], bc1_ref[...], m1_ref[...], 2 * INIT_SIZE)
    y1 = _batchnorm(c1, g1_ref[...], b1_ref[...], 0.8, leaky=True)

    # ---- Upsample 8->16, Conv(64->32), BN(eps=0.8), LeakyReLU(0.2) ----
    x2 = jnp.dot(y1, u2_ref[...], preferred_element_type=jnp.float32)   # (64, 512)
    c2 = _conv3x3(x2, wc2_ref[...], bc2_ref[...], m2_ref[...], IMG_SIZE)
    y2 = _batchnorm(c2, g2_ref[...], b2_ref[...], 0.8, leaky=True)

    # ---- Conv(32->3) + Tanh ----
    c3 = _conv3x3(y2, wc3_ref[...], bc3_ref[...], m2_ref[...], IMG_SIZE)  # (3, 512)
    out_ref[...] = jnp.tanh(c3)


# ------------------------------- parameters ---------------------------------
def init_params(key):
    keys = iter(jax.random.split(key, 32))

    def nrm(shape, std=1.0, mean=0.0):
        return mean + std * jax.random.normal(next(keys), shape, jnp.float32)

    def uni(shape, bound):
        return jax.random.uniform(next(keys), shape, jnp.float32, -bound, bound)

    p = {}
    p["hair_emb"] = nrm((6, LATENT_DIM))
    p["eyes_emb"] = nrm((4, LATENT_DIM))
    p["face_emb"] = nrm((3, LATENT_DIM))
    p["glasses_emb"] = nrm((2, LATENT_DIM))

    fan_in = 5 * LATENT_DIM
    bound = 1.0 / fan_in ** 0.5
    p["l1_w"] = uni((fan_in, C0 * HW0), bound)      # torch weight.T  (40, 1024)
    p["l1_b"] = uni((C0 * HW0,), bound)

    p["bn0_g"] = nrm((C0, 1), 0.02, 1.0)
    p["bn0_b"] = jnp.zeros((C0, 1), jnp.float32)
    p["bn1_g"] = nrm((C0, 1), 0.02, 1.0)
    p["bn1_b"] = jnp.zeros((C0, 1), jnp.float32)
    p["bn2_g"] = nrm((32, 1), 0.02, 1.0)
    p["bn2_b"] = jnp.zeros((32, 1), jnp.float32)

    p["c1_w"] = nrm((64, 64, 3, 3), 0.02)
    p["c1_b"] = uni((64,), 1.0 / (64 * 9) ** 0.5)
    p["c2_w"] = nrm((32, 64, 3, 3), 0.02)
    p["c2_b"] = uni((32,), 1.0 / (64 * 9) ** 0.5)
    p["c3_w"] = nrm((CHANNELS, 32, 3, 3), 0.02)
    p["c3_b"] = uni((CHANNELS,), 1.0 / (32 * 9) ** 0.5)
    return p


def pack_operands(params, batch):
    """One-time packing of weights + constant matrices into kernel operands."""
    a1, bias0 = _pack_l1(params["l1_w"], params["l1_b"], C0, HW0, batch)
    sel_f, sel_b, mask_hw = _l1_selectors(5 * LATENT_DIM, batch, HW0)
    u1 = _upsample_matrix(batch, INIT_SIZE, INIT_SIZE)               # (32, 128)
    u2 = _upsample_matrix(batch, 2 * INIT_SIZE, 2 * INIT_SIZE)       # (128, 512)
    m1 = _conv_tap_masks(batch, 2 * INIT_SIZE, 2 * INIT_SIZE)        # (9, 128)
    m2 = _conv_tap_masks(batch, IMG_SIZE, IMG_SIZE)                  # (9, 512)
    wc1 = _pack_conv(params["c1_w"]); bc1 = params["c1_b"].reshape(-1, 1)
    wc2 = _pack_conv(params["c2_w"]); bc2 = params["c2_b"].reshape(-1, 1)
    wc3 = _pack_conv(params["c3_w"]); bc3 = params["c3_b"].reshape(-1, 1)
    return (a1, sel_f, sel_b, mask_hw, bias0,
            params["bn0_g"], params["bn0_b"], u1, wc1, bc1, m1,
            params["bn1_g"], params["bn1_b"], u2, wc2, bc2, m2,
            params["bn2_g"], params["bn2_b"], wc3, bc3)


# -------------------------------- forward -----------------------------------
def generator_forward(params, operands, noise, labels):
    # Embedding lookups + concat stay in XLA (pure index gathers).
    hair = jnp.take(params["hair_emb"], labels[0], axis=0)
    eyes = jnp.take(params["eyes_emb"], labels[1], axis=0)
    face = jnp.take(params["face_emb"], labels[2], axis=0)
    glasses = jnp.take(params["glasses_emb"], labels[3], axis=0)
    gen_input = jnp.concatenate([hair, eyes, face, glasses, noise], axis=1)
    gen_t = gen_input.T.astype(jnp.float32)                          # (40, B)

    batch = noise.shape[0]
    n_out = batch * IMG_SIZE * IMG_SIZE
    inputs = (gen_t,) + tuple(operands)

    out2d = pl.pallas_call(
        generator_kernel,
        grid=(1,),
        out_shape=jax.ShapeDtypeStruct((CHANNELS, n_out), jnp.float32),
        in_specs=[
            pl.BlockSpec(o.shape, (lambda *_, n=o.ndim: (0,) * n)) for o in inputs
        ],
        out_specs=pl.BlockSpec((CHANNELS, n_out), lambda *_: (0, 0)),
        compiler_params=pltpu.CompilerParams(
            dimension_semantics=("arbitrary",),
        ),
    )(*inputs)

    # (C, B*H*W) lane-dense kernel output -> NCHW (tiny permute in XLA).
    img = out2d.reshape(CHANNELS, batch, IMG_SIZE, IMG_SIZE).transpose(1, 0, 2, 3)
    return img


# ---------------------------------- main -------------------------------------
if __name__ == "__main__":
    key = jax.random.PRNGKey(0)
    kp, kn, k0, k1, k2, k3 = jax.random.split(key, 6)

    params = init_params(kp)
    operands = pack_operands(params, BATCH)

    noise = jax.random.normal(kn, (BATCH, LATENT_DIM), jnp.float32)
    labels = jnp.stack(
        [
            jax.random.randint(k0, (BATCH,), 0, 6),
            jax.random.randint(k1, (BATCH,), 0, 4),
            jax.random.randint(k2, (BATCH,), 0, 3),
            jax.random.randint(k3, (BATCH,), 0, 2),
        ],
        axis=0,
    ).astype(jnp.int32)

    fwd = jax.jit(generator_forward)
    img = fwd(params, operands, noise, labels)
    jax.block_until_ready(img)

    assert img.shape == (BATCH, CHANNELS, IMG_SIZE, IMG_SIZE), img.shape
    assert img.dtype == jnp.float32
    print("KERNEL_OK")
</pallas_src>

<mosaic_0001>
module attributes {stable_mosaic.version = 11 : i64} {
  func.func @generator_kernel(%arg0: i32, %arg1: memref<40x2xf32, #tpu.memory_space<vmem>>, %arg2: memref<64x640xf32, #tpu.memory_space<vmem>>, %arg3: memref<640x40xf32, #tpu.memory_space<vmem>>, %arg4: memref<2x32xf32, #tpu.memory_space<vmem>>, %arg5: memref<640x32xf32, #tpu.memory_space<vmem>>, %arg6: memref<64x32xf32, #tpu.memory_space<vmem>>, %arg7: memref<64x1xf32, #tpu.memory_space<vmem>>, %arg8: memref<64x1xf32, #tpu.memory_space<vmem>>, %arg9: memref<32x128xf32, #tpu.memory_space<vmem>>, %arg10: memref<64x576xbf16, #tpu.memory_space<vmem>>, %arg11: memref<64x1xf32, #tpu.memory_space<vmem>>, %arg12: memref<9x128xf32, #tpu.memory_space<vmem>>, %arg13: memref<64x1xf32, #tpu.memory_space<vmem>>, %arg14: memref<64x1xf32, #tpu.memory_space<vmem>>, %arg15: memref<128x512xf32, #tpu.memory_space<vmem>>, %arg16: memref<32x576xbf16, #tpu.memory_space<vmem>>, %arg17: memref<32x1xf32, #tpu.memory_space<vmem>>, %arg18: memref<9x512xf32, #tpu.memory_space<vmem>>, %arg19: memref<32x1xf32, #tpu.memory_space<vmem>>, %arg20: memref<32x1xf32, #tpu.memory_space<vmem>>, %arg21: memref<3x288xbf16, #tpu.memory_space<vmem>>, %arg22: memref<3x1xf32, #tpu.memory_space<vmem>>, %arg23: memref<3x512xf32, #tpu.memory_space<vmem>>) attributes {dimension_semantics = [#tpu.dimension_semantics<arbitrary>], iteration_bounds = array<i64: 1>, scalar_prefetch = 0 : i64, scratch_operands = 0 : i64, tpu.core_type = #tpu.core_type<tc>, window_params = [{pipeline_mode = #tpu.pipeline_mode<synchronous>, transform_indices = @transform_0, window_bounds = array<i64: 40, 2>}, {pipeline_mode = #tpu.pipeline_mode<synchronous>, transform_indices = @transform_1, window_bounds = array<i64: 64, 640>}, {pipeline_mode = #tpu.pipeline_mode<synchronous>, transform_indices = @transform_2, window_bounds = array<i64: 640, 40>}, {pipeline_mode = #tpu.pipeline_mode<synchronous>, transform_indices = @transform_3, window_bounds = array<i64: 2, 32>}, {pipeline_mode = #tpu.pipeline_mode<synchronous>, transform_indices = @transform_4, window_bounds = array<i64: 640, 32>}, {pipeline_mode = #tpu.pipeline_mode<synchronous>, transform_indices = @transform_5, window_bounds = array<i64: 64, 32>}, {pipeline_mode = #tpu.pipeline_mode<synchronous>, transform_indices = @transform_6, window_bounds = array<i64: 64, 1>}, {pipeline_mode = #tpu.pipeline_mode<synchronous>, transform_indices = @transform_7, window_bounds = array<i64: 64, 1>}, {pipeline_mode = #tpu.pipeline_mode<synchronous>, transform_indices = @transform_8, window_bounds = array<i64: 32, 128>}, {pipeline_mode = #tpu.pipeline_mode<synchronous>, transform_indices = @transform_9, window_bounds = array<i64: 64, 576>}, {pipeline_mode = #tpu.pipeline_mode<synchronous>, transform_indices = @transform_10, window_bounds = array<i64: 64, 1>}, {pipeline_mode = #tpu.pipeline_mode<synchronous>, transform_indices = @transform_11, window_bounds = array<i64: 9, 128>}, {pipeline_mode = #tpu.pipeline_mode<synchronous>, transform_indices = @transform_12, window_bounds = array<i64: 64, 1>}, {pipeline_mode = #tpu.pipeline_mode<synchronous>, transform_indices = @transform_13, window_bounds = array<i64: 64, 1>}, {pipeline_mode = #tpu.pipeline_mode<synchronous>, transform_indices = @transform_14, window_bounds = array<i64: 128, 512>}, {pipeline_mode = #tpu.pipeline_mode<synchronous>, transform_indices = @transform_15, window_bounds = array<i64: 32, 576>}, {pipeline_mode = #tpu.pipeline_mode<synchronous>, transform_indices = @transform_16, window_bounds = array<i64: 32, 1>}, {pipeline_mode = #tpu.pipeline_mode<synchronous>, transform_indices = @transform_17, window_bounds = array<i64: 9, 512>}, {pipeline_mode = #tpu.pipeline_mode<synchronous>, transform_indices = @transform_18, window_bounds = array<i64: 32, 1>}, {pipeline_mode = #tpu.pipeline_mode<synchronous>, transform_indices = @transform_19, window_bounds = array<i64: 32, 1>}, {pipeline_mode = #tpu.pipeline_mode<synchronous>, transform_indices = @transform_20, window_bounds = array<i64: 3, 288>}, {pipeline_mode = #tpu.pipeline_mode<synchronous>, transform_indices = @transform_21, window_bounds = array<i64: 3, 1>}, {pipeline_mode = #tpu.pipeline_mode<synchronous>, transform_indices = @transform_22, window_bounds = array<i64: 3, 512>}]} {
    %c0 = arith.constant 0 : index
    %c0_0 = arith.constant 0 : index
    %0 = vector.load %arg1[%c0, %c0_0] : memref<40x2xf32, #tpu.memory_space<vmem>>, vector<40x2xf32>
    %c0_1 = arith.constant 0 : index
    %c0_2 = arith.constant 0 : index
    %1 = vector.load %arg4[%c0_1, %c0_2] : memref<2x32xf32, #tpu.memory_space<vmem>>, vector<2x32xf32>
    %cst = arith.constant dense<0.000000e+00> : vector<40x32xf32>
    %2 = tpu.matmul %0, %1, %cst {dimension_numbers = #tpu.dot_dimension_numbers<[1], [0], [0], [1], [0, 0, 1, 1], [], []>} : vector<40x2xf32>, vector<2x32xf32>, vector<40x32xf32> -> vector<40x32xf32>
    %c0_3 = arith.constant 0 : index
    %c0_4 = arith.constant 0 : index
    %3 = vector.load %arg3[%c0_3, %c0_4] : memref<640x40xf32, #tpu.memory_space<vmem>>, vector<640x40xf32>
    %cst_5 = arith.constant dense<0.000000e+00> : vector<640x32xf32>
    %4 = tpu.matmul %3, %2, %cst_5 {dimension_numbers = #tpu.dot_dimension_numbers<[1], [0], [0], [1], [0, 0, 1, 1], [], []>} : vector<640x40xf32>, vector<40x32xf32>, vector<640x32xf32> -> vector<640x32xf32>
    %c0_6 = arith.constant 0 : index
    %c0_7 = arith.constant 0 : index
    %5 = vector.load %arg5[%c0_6, %c0_7] : memref<640x32xf32, #tpu.memory_space<vmem>>, vector<640x32xf32>
    %6 = arith.mulf %5, %4 : vector<640x32xf32>
    %c0_8 = arith.constant 0 : index
    %c0_9 = arith.constant 0 : index
    %7 = vector.load %arg2[%c0_8, %c0_9] : memref<64x640xf32, #tpu.memory_space<vmem>>, vector<64x640xf32>
    %cst_10 = arith.constant dense<0.000000e+00> : vector<64x32xf32>
    %8 = tpu.matmul %7, %6, %cst_10 {dimension_numbers = #tpu.dot_dimension_numbers<[1], [0], [0], [1], [0, 0, 1, 1], [], []>} : vector<64x640xf32>, vector<640x32xf32>, vector<64x32xf32> -> vector<64x32xf32>
    %c0_11 = arith.constant 0 : index
    %c0_12 = arith.constant 0 : index
    %9 = vector.load %arg6[%c0_11, %c0_12] : memref<64x32xf32, #tpu.memory_space<vmem>>, vector<64x32xf32>
    %10 = arith.addf %8, %9 : vector<64x32xf32>
    %c0_13 = arith.constant 0 : index
    %c0_14 = arith.constant 0 : index
    %11 = vector.load %arg7[%c0_13, %c0_14] : memref<64x1xf32, #tpu.memory_space<vmem>>, vector<64x1xf32>
    %c0_15 = arith.constant 0 : index
    %c0_16 = arith.constant 0 : index
    %12 = vector.load %arg8[%c0_15, %c0_16] : memref<64x1xf32, #tpu.memory_space<vmem>>, vector<64x1xf32>
    %cst_17 = arith.constant dense<0.000000e+00> : vector<64xf32>
    %13 = vector.multi_reduction <add>, %10, %cst_17 [1] : vector<64x32xf32> to vector<64xf32>
    %14 = vector.shape_cast %13 : vector<64xf32> to vector<64x1xf32>
    %cst_18 = arith.constant 3.125000e-02 : f32
    %15 = vector.broadcast %cst_18 : f32 to vector<64x1xf32>
    %16 = arith.mulf %14, %15 : vector<64x1xf32>
    %17 = arith.mulf %10, %10 : vector<64x32xf32>
    %cst_19 = arith.constant dense<0.000000e+00> : vector<64xf32>
    %18 = vector.multi_reduction <add>, %17, %cst_19 [1] : vector<64x32xf32> to vector<64xf32>
    %19 = vector.shape_cast %18 : vector<64xf32> to vector<64x1xf32>
    %cst_20 = arith.constant 3.125000e-02 : f32
    %20 = vector.broadcast %cst_20 : f32 to vector<64x1xf32>
    %21 = arith.mulf %19, %20 : vector<64x1xf32>
    %22 = arith.mulf %16, %16 : vector<64x1xf32>
    %23 = arith.subf %21, %22 : vector<64x1xf32>
    %24 = vector.broadcast %16 : vector<64x1xf32> to vector<64x32xf32>
    %25 = arith.subf %10, %24 : vector<64x32xf32>
    %26 = vector.broadcast %11 : vector<64x1xf32> to vector<64x32xf32>
    %27 = arith.mulf %26, %25 : vector<64x32xf32>
    %cst_21 = arith.constant 9.99999974E-6 : f32
    %28 = vector.broadcast %cst_21 : f32 to vector<64x1xf32>
    %29 = arith.addf %23, %28 : vector<64x1xf32>
    %30 = math.rsqrt %29 : vector<64x1xf32>
    %31 = vector.broadcast %30 : vector<64x1xf32> to vector<64x32xf32>
    %32 = arith.mulf %27, %31 : vector<64x32xf32>
    %33 = vector.broadcast %12 : vector<64x1xf32> to vector<64x32xf32>
    %34 = arith.addf %32, %33 : vector<64x32xf32>
    %c0_22 = arith.constant 0 : index
    %c0_23 = arith.constant 0 : index
    %35 = vector.load %arg9[%c0_22, %c0_23] : memref<32x128xf32, #tpu.memory_space<vmem>>, vector<32x128xf32>
    %cst_24 = arith.constant dense<0.000000e+00> : vector<64x128xf32>
    %36 = tpu.matmul %34, %35, %cst_24 {dimension_numbers = #tpu.dot_dimension_numbers<[1], [0], [0], [1], [0, 0, 1, 1], [], []>} : vector<64x32xf32>, vector<32x128xf32>, vector<64x128xf32> -> vector<64x128xf32>
    %c0_25 = arith.constant 0 : index
    %c0_26 = arith.constant 0 : index
    %37 = vector.load %arg10[%c0_25, %c0_26] : memref<64x576xbf16, #tpu.memory_space<vmem>>, vector<64x576xbf16>
    %c0_27 = arith.constant 0 : index
    %c0_28 = arith.constant 0 : index
    %38 = vector.load %arg11[%c0_27, %c0_28] : memref<64x1xf32, #tpu.memory_space<vmem>>, vector<64x1xf32>
    %c0_29 = arith.constant 0 : index
    %c0_30 = arith.constant 0 : index
    %39 = vector.load %arg12[%c0_29, %c0_30] : memref<9x128xf32, #tpu.memory_space<vmem>>, vector<9x128xf32>
    %cst_31 = arith.constant 0.000000e+00 : f32
    %40 = vector.broadcast %cst_31 : f32 to vector<64x9xf32>
    %41 = vector.extract_strided_slice %36 {offsets = [0, 0], sizes = [64, 119], strides = [1, 1]} : vector<64x128xf32> to vector<64x119xf32>
    %42 = tpu.concatenate %40, %41 in 1 : vector<64x9xf32>, vector<64x119xf32> -> vector<64x128xf32>
    %43 = vector.extract_strided_slice %39 {offsets = [0, 0], sizes = [1, 128], strides = [1, 1]} : vector<9x128xf32> to vector<1x128xf32>
    %44 = vector.broadcast %43 : vector<1x128xf32> to vector<64x128xf32>
    %45 = arith.mulf %42, %44 : vector<64x128xf32>
    %cst_32 = arith.constant 0.000000e+00 : f32
    %46 = vector.broadcast %cst_32 : f32 to vector<64x8xf32>
    %47 = vector.extract_strided_slice %36 {offsets = [0, 0], sizes = [64, 120], strides = [1, 1]} : vector<64x128xf32> to vector<64x120xf32>
    %48 = tpu.concatenate %46, %47 in 1 : vector<64x8xf32>, vector<64x120xf32> -> vector<64x128xf32>
    %49 = vector.extract_strided_slice %39 {offsets = [1, 0], sizes = [1, 128], strides = [1, 1]} : vector<9x128xf32> to vector<1x128xf32>
    %50 = vector.broadcast %49 : vector<1x128xf32> to vector<64x128xf32>
    %51 = arith.mulf %48, %50 : vector<64x128xf32>
    %cst_33 = arith.constant 0.000000e+00 : f32
    %52 = vector.broadcast %cst_33 : f32 to vector<64x7xf32>
    %53 = vector.extract_strided_slice %36 {offsets = [0, 0], sizes = [64, 121], strides = [1, 1]} : vector<64x128xf32> to vector<64x121xf32>
    %54 = tpu.concatenate %52, %53 in 1 : vector<64x7xf32>, vector<64x121xf32> -> vector<64x128xf32>
    %55 = vector.extract_strided_slice %39 {offsets = [2, 0], sizes = [1, 128], strides = [1, 1]} : vector<9x128xf32> to vector<1x128xf32>
    %56 = vector.broadcast %55 : vector<1x128xf32> to vector<64x128xf32>
    %57 = arith.mulf %54, %56 : vector<64x128xf32>
    %cst_34 = arith.constant 0.000000e+00 : f32
    %58 = vector.broadcast %cst_34 : f32 to vector<64x1xf32>
    %59 = vector.extract_strided_slice %36 {offsets = [0, 0], sizes = [64, 127], strides = [1, 1]} : vector<64x128xf32> to vector<64x127xf32>
    %60 = tpu.concatenate %58, %59 in 1 : vector<64x1xf32>, vector<64x127xf32> -> vector<64x128xf32>
    %61 = vector.extract_strided_slice %39 {offsets = [3, 0], sizes = [1, 128], strides = [1, 1]} : vector<9x128xf32> to vector<1x128xf32>
    %62 = vector.broadcast %61 : vector<1x128xf32> to vector<64x128xf32>
    %63 = arith.mulf %60, %62 : vector<64x128xf32>
    %64 = vector.extract_strided_slice %39 {offsets = [4, 0], sizes = [1, 128], strides = [1, 1]} : vector<9x128xf32> to vector<1x128xf32>
    %65 = vector.broadcast %64 : vector<1x128xf32> to vector<64x128xf32>
    %66 = arith.mulf %36, %65 : vector<64x128xf32>
    %cst_35 = arith.constant 0.000000e+00 : f32
    %67 = vector.broadcast %cst_35 : f32 to vector<64x1xf32>
    %68 = vector.extract_strided_slice %36 {offsets = [0, 1], sizes = [64, 127], strides = [1, 1]} : vector<64x128xf32> to vector<64x127xf32>
    %69 = tpu.concatenate %68, %67 in 1 : vector<64x127xf32>, vector<64x1xf32> -> vector<64x128xf32>
    %70 = vector.extract_strided_slice %39 {offsets = [5, 0], sizes = [1, 128], strides = [1, 1]} : vector<9x128xf32> to vector<1x128xf32>
    %71 = vector.broadcast %70 : vector<1x128xf32> to vector<64x128xf32>
    %72 = arith.mulf %69, %71 : vector<64x128xf32>
    %cst_36 = arith.constant 0.000000e+00 : f32
    %73 = vector.broadcast %cst_36 : f32 to vector<64x7xf32>
    %74 = vector.extract_strided_slice %36 {offsets = [0, 7], sizes = [64, 121], strides = [1, 1]} : vector<64x128xf32> to vector<64x121xf32>
    %75 = tpu.concatenate %74, %73 in 1 : vector<64x121xf32>, vector<64x7xf32> -> vector<64x128xf32>
    %76 = vector.extract_strided_slice %39 {offsets = [6, 0], sizes = [1, 128], strides = [1, 1]} : vector<9x128xf32> to vector<1x128xf32>
    %77 = vector.broadcast %76 : vector<1x128xf32> to vector<64x128xf32>
    %78 = arith.mulf %75, %77 : vector<64x128xf32>
    %cst_37 = arith.constant 0.000000e+00 : f32
    %79 = vector.broadcast %cst_37 : f32 to vector<64x8xf32>
    %80 = vector.extract_strided_slice %36 {offsets = [0, 8], sizes = [64, 120], strides = [1, 1]} : vector<64x128xf32> to vector<64x120xf32>
    %81 = tpu.concatenate %80, %79 in 1 : vector<64x120xf32>, vector<64x8xf32> -> vector<64x128xf32>
    %82 = vector.extract_strided_slice %39 {offsets = [7, 0], sizes = [1, 128], strides = [1, 1]} : vector<9x128xf32> to vector<1x128xf32>
    %83 = vector.broadcast %82 : vector<1x128xf32> to vector<64x128xf32>
    %84 = arith.mulf %81, %83 : vector<64x128xf32>
    %cst_38 = arith.constant 0.000000e+00 : f32
    %85 = vector.broadcast %cst_38 : f32 to vector<64x9xf32>
    %86 = vector.extract_strided_slice %36 {offsets = [0, 9], sizes = [64, 119], strides = [1, 1]} : vector<64x128xf32> to vector<64x119xf32>
    %87 = tpu.concatenate %86, %85 in 1 : vector<64x119xf32>, vector<64x9xf32> -> vector<64x128xf32>
    %88 = vector.extract_strided_slice %39 {offsets = [8, 0], sizes = [1, 128], strides = [1, 1]} : vector<9x128xf32> to vector<1x128xf32>
    %89 = vector.broadcast %88 : vector<1x128xf32> to vector<64x128xf32>
    %90 = arith.mulf %87, %89 : vector<64x128xf32>
    %91 = tpu.concatenate %45, %51, %57, %63, %66, %72, %78, %84, %90 in 0 : vector<64x128xf32>, vector<64x128xf32>, vector<64x128xf32>, vector<64x128xf32>, vector<64x128xf32>, vector<64x128xf32>, vector<64x128xf32>, vector<64x128xf32>, vector<64x128xf32> -> vector<576x128xf32>
    %92 = arith.truncf %91 : vector<576x128xf32> to vector<576x128xbf16>
    %cst_39 = arith.constant dense<0.000000e+00> : vector<64x128xf32>
    %93 = tpu.matmul %37, %92, %cst_39 {dimension_numbers = #tpu.dot_dimension_numbers<[1], [0], [0], [1], [0, 0, 1, 1], [], []>} : vector<64x576xbf16>, vector<576x128xbf16>, vector<64x128xf32> -> vector<64x128xf32>
    %94 = vector.broadcast %38 : vector<64x1xf32> to vector<64x128xf32>
    %95 = arith.addf %93, %94 : vector<64x128xf32>
    %c0_40 = arith.constant 0 : index
    %c0_41 = arith.constant 0 : index
    %96 = vector.load %arg13[%c0_40, %c0_41] : memref<64x1xf32, #tpu.memory_space<vmem>>, vector<64x1xf32>
    %c0_42 = arith.constant 0 : index
    %c0_43 = arith.constant 0 : index
    %97 = vector.load %arg14[%c0_42, %c0_43] : memref<64x1xf32, #tpu.memory_space<vmem>>, vector<64x1xf32>
    %cst_44 = arith.constant dense<0.000000e+00> : vector<64xf32>
    %98 = vector.multi_reduction <add>, %95, %cst_44 [1] : vector<64x128xf32> to vector<64xf32>
    %99 = vector.shape_cast %98 : vector<64xf32> to vector<64x1xf32>
    %cst_45 = arith.constant 7.812500e-03 : f32
    %100 = vector.broadcast %cst_45 : f32 to vector<64x1xf32>
    %101 = arith.mulf %99, %100 : vector<64x1xf32>
    %102 = arith.mulf %95, %95 : vector<64x128xf32>
    %cst_46 = arith.constant dense<0.000000e+00> : vector<64xf32>
    %103 = vector.multi_reduction <add>, %102, %cst_46 [1] : vector<64x128xf32> to vector<64xf32>
    %104 = vector.shape_cast %103 : vector<64xf32> to vector<64x1xf32>
    %cst_47 = arith.constant 7.812500e-03 : f32
    %105 = vector.broadcast %cst_47 : f32 to vector<64x1xf32>
    %106 = arith.mulf %104, %105 : vector<64x1xf32>
    %107 = arith.mulf %101, %101 : vector<64x1xf32>
    %108 = arith.subf %106, %107 : vector<64x1xf32>
    %109 = vector.broadcast %101 : vector<64x1xf32> to vector<64x128xf32>
    %110 = arith.subf %95, %109 : vector<64x128xf32>
    %111 = vector.broadcast %96 : vector<64x1xf32> to vector<64x128xf32>
    %112 = arith.mulf %111, %110 : vector<64x128xf32>
    %cst_48 = arith.constant 8.000000e-01 : f32
    %113 = vector.broadcast %cst_48 : f32 to vector<64x1xf32>
    %114 = arith.addf %108, %113 : vector<64x1xf32>
    %115 = math.rsqrt %114 : vector<64x1xf32>
    %116 = vector.broadcast %115 : vector<64x1xf32> to vector<64x128xf32>
    %117 = arith.mulf %112, %116 : vector<64x128xf32>
    %118 = vector.broadcast %97 : vector<64x1xf32> to vector<64x128xf32>
    %119 = arith.addf %117, %118 : vector<64x128xf32>
    %cst_49 = arith.constant 0.000000e+00 : f32
    %120 = vector.broadcast %cst_49 : f32 to vector<64x128xf32>
    %121 = arith.cmpf ogt, %119, %120 : vector<64x128xf32>
    %cst_50 = arith.constant 2.000000e-01 : f32
    %122 = vector.broadcast %cst_50 : f32 to vector<64x128xf32>
    %123 = arith.mulf %122, %119 : vector<64x128xf32>
    %124 = arith.select %121, %119, %123 : vector<64x128xi1>, vector<64x128xf32>
    %c0_51 = arith.constant 0 : index
    %c0_52 = arith.constant 0 : index
    %125 = vector.load %arg15[%c0_51, %c0_52] : memref<128x512xf32, #tpu.memory_space<vmem>>, vector<128x512xf32>
    %cst_53 = arith.constant dense<0.000000e+00> : vector<64x512xf32>
    %126 = tpu.matmul %124, %125, %cst_53 {dimension_numbers = #tpu.dot_dimension_numbers<[1], [0], [0], [1], [0, 0, 1, 1], [], []>} : vector<64x128xf32>, vector<128x512xf32>, vector<64x512xf32> -> vector<64x512xf32>
    %c0_54 = arith.constant 0 : index
    %c0_55 = arith.constant 0 : index
    %127 = vector.load %arg16[%c0_54, %c0_55] : memref<32x576xbf16, #tpu.memory_space<vmem>>, vector<32x576xbf16>
    %c0_56 = arith.constant 0 : index
    %c0_57 = arith.constant 0 : index
    %128 = vector.load %arg17[%c0_56, %c0_57] : memref<32x1xf32, #tpu.memory_space<vmem>>, vector<32x1xf32>
    %c0_58 = arith.constant 0 : index
    %c0_59 = arith.constant 0 : index
    %129 = vector.load %arg18[%c0_58, %c0_59] : memref<9x512xf32, #tpu.memory_space<vmem>>, vector<9x512xf32>
    %cst_60 = arith.constant 0.000000e+00 : f32
    %130 = vector.broadcast %cst_60 : f32 to vector<64x17xf32>
    %131 = vector.extract_strided_slice %126 {offsets = [0, 0], sizes = [64, 495], strides = [1, 1]} : vector<64x512xf32> to vector<64x495xf32>
    %132 = tpu.concatenate %130, %131 in 1 : vector<64x17xf32>, vector<64x495xf32> -> vector<64x512xf32>
    %133 = vector.extract_strided_slice %129 {offsets = [0, 0], sizes = [1, 512], strides = [1, 1]} : vector<9x512xf32> to vector<1x512xf32>
    %134 = vector.broadcast %133 : vector<1x512xf32> to vector<64x512xf32>
    %135 = arith.mulf %132, %134 : vector<64x512xf32>
    %cst_61 = arith.constant 0.000000e+00 : f32
    %136 = vector.broadcast %cst_61 : f32 to vector<64x16xf32>
    %137 = vector.extract_strided_slice %126 {offsets = [0, 0], sizes = [64, 496], strides = [1, 1]} : vector<64x512xf32> to vector<64x496xf32>
    %138 = tpu.concatenate %136, %137 in 1 : vector<64x16xf32>, vector<64x496xf32> -> vector<64x512xf32>
    %139 = vector.extract_strided_slice %129 {offsets = [1, 0], sizes = [1, 512], strides = [1, 1]} : vector<9x512xf32> to vector<1x512xf32>
    %140 = vector.broadcast %139 : vector<1x512xf32> to vector<64x512xf32>
    %141 = arith.mulf %138, %140 : vector<64x512xf32>
    %cst_62 = arith.constant 0.000000e+00 : f32
    %142 = vector.broadcast %cst_62 : f32 to vector<64x15xf32>
    %143 = vector.extract_strided_slice %126 {offsets = [0, 0], sizes = [64, 497], strides = [1, 1]} : vector<64x512xf32> to vector<64x497xf32>
    %144 = tpu.concatenate %142, %143 in 1 : vector<64x15xf32>, vector<64x497xf32> -> vector<64x512xf32>
    %145 = vector.extract_strided_slice %129 {offsets = [2, 0], sizes = [1, 512], strides = [1, 1]} : vector<9x512xf32> to vector<1x512xf32>
    %146 = vector.broadcast %145 : vector<1x512xf32> to vector<64x512xf32>
    %147 = arith.mulf %144, %146 : vector<64x512xf32>
    %cst_63 = arith.constant 0.000000e+00 : f32
    %148 = vector.broadcast %cst_63 : f32 to vector<64x1xf32>
    %149 = vector.extract_strided_slice %126 {offsets = [0, 0], sizes = [64, 511], strides = [1, 1]} : vector<64x512xf32> to vector<64x511xf32>
    %150 = tpu.concatenate %148, %149 in 1 : vector<64x1xf32>, vector<64x511xf32> -> vector<64x512xf32>
    %151 = vector.extract_strided_slice %129 {offsets = [3, 0], sizes = [1, 512], strides = [1, 1]} : vector<9x512xf32> to vector<1x512xf32>
    %152 = vector.broadcast %151 : vector<1x512xf32> to vector<64x512xf32>
    %153 = arith.mulf %150, %152 : vector<64x512xf32>
    %154 = vector.extract_strided_slice %129 {offsets = [4, 0], sizes = [1, 512], strides = [1, 1]} : vector<9x512xf32> to vector<1x512xf32>
    %155 = vector.broadcast %154 : vector<1x512xf32> to vector<64x512xf32>
    %156 = arith.mulf %126, %155 : vector<64x512xf32>
    %cst_64 = arith.constant 0.000000e+00 : f32
    %157 = vector.broadcast %cst_64 : f32 to vector<64x1xf32>
    %158 = vector.extract_strided_slice %126 {offsets = [0, 1], sizes = [64, 511], strides = [1, 1]} : vector<64x512xf32> to vector<64x511xf32>
    %159 = tpu.concatenate %158, %157 in 1 : vector<64x511xf32>, vector<64x1xf32> -> vector<64x512xf32>
    %160 = vector.extract_strided_slice %129 {offsets = [5, 0], sizes = [1, 512], strides = [1, 1]} : vector<9x512xf32> to vector<1x512xf32>
    %161 = vector.broadcast %160 : vector<1x512xf32> to vector<64x512xf32>
    %162 = arith.mulf %159, %161 : vector<64x512xf32>
    %cst_65 = arith.constant 0.000000e+00 : f32
    %163 = vector.broadcast %cst_65 : f32 to vector<64x15xf32>
    %164 = vector.extract_strided_slice %126 {offsets = [0, 15], sizes = [64, 497], strides = [1, 1]} : vector<64x512xf32> to vector<64x497xf32>
    %165 = tpu.concatenate %164, %163 in 1 : vector<64x497xf32>, vector<64x15xf32> -> vector<64x512xf32>
    %166 = vector.extract_strided_slice %129 {offsets = [6, 0], sizes = [1, 512], strides = [1, 1]} : vector<9x512xf32> to vector<1x512xf32>
    %167 = vector.broadcast %166 : vector<1x512xf32> to vector<64x512xf32>
    %168 = arith.mulf %165, %167 : vector<64x512xf32>
    %cst_66 = arith.constant 0.000000e+00 : f32
    %169 = vector.broadcast %cst_66 : f32 to vector<64x16xf32>
    %170 = vector.extract_strided_slice %126 {offsets = [0, 16], sizes = [64, 496], strides = [1, 1]} : vector<64x512xf32> to vector<64x496xf32>
    %171 = tpu.concatenate %170, %169 in 1 : vector<64x496xf32>, vector<64x16xf32> -> vector<64x512xf32>
    %172 = vector.extract_strided_slice %129 {offsets = [7, 0], sizes = [1, 512], strides = [1, 1]} : vector<9x512xf32> to vector<1x512xf32>
    %173 = vector.broadcast %172 : vector<1x512xf32> to vector<64x512xf32>
    %174 = arith.mulf %171, %173 : vector<64x512xf32>
    %cst_67 = arith.constant 0.000000e+00 : f32
    %175 = vector.broadcast %cst_67 : f32 to vector<64x17xf32>
    %176 = vector.extract_strided_slice %126 {offsets = [0, 17], sizes = [64, 495], strides = [1, 1]} : vector<64x512xf32> to vector<64x495xf32>
    %177 = tpu.concatenate %176, %175 in 1 : vector<64x495xf32>, vector<64x17xf32> -> vector<64x512xf32>
    %178 = vector.extract_strided_slice %129 {offsets = [8, 0], sizes = [1, 512], strides = [1, 1]} : vector<9x512xf32> to vector<1x512xf32>
    %179 = vector.broadcast %178 : vector<1x512xf32> to vector<64x512xf32>
    %180 = arith.mulf %177, %179 : vector<64x512xf32>
    %181 = tpu.concatenate %135, %141, %147, %153, %156, %162, %168, %174, %180 in 0 : vector<64x512xf32>, vector<64x512xf32>, vector<64x512xf32>, vector<64x512xf32>, vector<64x512xf32>, vector<64x512xf32>, vector<64x512xf32>, vector<64x512xf32>, vector<64x512xf32> -> vector<576x512xf32>
    %182 = arith.truncf %181 : vector<576x512xf32> to vector<576x512xbf16>
    %cst_68 = arith.constant dense<0.000000e+00> : vector<32x512xf32>
    %183 = tpu.matmul %127, %182, %cst_68 {dimension_numbers = #tpu.dot_dimension_numbers<[1], [0], [0], [1], [0, 0, 1, 1], [], []>} : vector<32x576xbf16>, vector<576x512xbf16>, vector<32x512xf32> -> vector<32x512xf32>
    %184 = vector.broadcast %128 : vector<32x1xf32> to vector<32x512xf32>
    %185 = arith.addf %183, %184 : vector<32x512xf32>
    %c0_69 = arith.constant 0 : index
    %c0_70 = arith.constant 0 : index
    %186 = vector.load %arg19[%c0_69, %c0_70] : memref<32x1xf32, #tpu.memory_space<vmem>>, vector<32x1xf32>
    %c0_71 = arith.constant 0 : index
    %c0_72 = arith.constant 0 : index
    %187 = vector.load %arg20[%c0_71, %c0_72] : memref<32x1xf32, #tpu.memory_space<vmem>>, vector<32x1xf32>
    %cst_73 = arith.constant dense<0.000000e+00> : vector<32xf32>
    %188 = vector.multi_reduction <add>, %185, %cst_73 [1] : vector<32x512xf32> to vector<32xf32>
    %189 = vector.shape_cast %188 : vector<32xf32> to vector<32x1xf32>
    %cst_74 = arith.constant 0.001953125 : f32
    %190 = vector.broadcast %cst_74 : f32 to vector<32x1xf32>
    %191 = arith.mulf %189, %190 : vector<32x1xf32>
    %192 = arith.mulf %185, %185 : vector<32x512xf32>
    %cst_75 = arith.constant dense<0.000000e+00> : vector<32xf32>
    %193 = vector.multi_reduction <add>, %192, %cst_75 [1] : vector<32x512xf32> to vector<32xf32>
    %194 = vector.shape_cast %193 : vector<32xf32> to vector<32x1xf32>
    %cst_76 = arith.constant 0.001953125 : f32
    %195 = vector.broadcast %cst_76 : f32 to vector<32x1xf32>
    %196 = arith.mulf %194, %195 : vector<32x1xf32>
    %197 = arith.mulf %191, %191 : vector<32x1xf32>
    %198 = arith.subf %196, %197 : vector<32x1xf32>
    %199 = vector.broadcast %191 : vector<32x1xf32> to vector<32x512xf32>
    %200 = arith.subf %185, %199 : vector<32x512xf32>
    %201 = vector.broadcast %186 : vector<32x1xf32> to vector<32x512xf32>
    %202 = arith.mulf %201, %200 : vector<32x512xf32>
    %cst_77 = arith.constant 8.000000e-01 : f32
    %203 = vector.broadcast %cst_77 : f32 to vector<32x1xf32>
    %204 = arith.addf %198, %203 : vector<32x1xf32>
    %205 = math.rsqrt %204 : vector<32x1xf32>
    %206 = vector.broadcast %205 : vector<32x1xf32> to vector<32x512xf32>
    %207 = arith.mulf %202, %206 : vector<32x512xf32>
    %208 = vector.broadcast %187 : vector<32x1xf32> to vector<32x512xf32>
    %209 = arith.addf %207, %208 : vector<32x512xf32>
    %cst_78 = arith.constant 0.000000e+00 : f32
    %210 = vector.broadcast %cst_78 : f32 to vector<32x512xf32>
    %211 = arith.cmpf ogt, %209, %210 : vector<32x512xf32>
    %cst_79 = arith.constant 2.000000e-01 : f32
    %212 = vector.broadcast %cst_79 : f32 to vector<32x512xf32>
    %213 = arith.mulf %212, %209 : vector<32x512xf32>
    %214 = arith.select %211, %209, %213 : vector<32x512xi1>, vector<32x512xf32>
    %c0_80 = arith.constant 0 : index
    %c0_81 = arith.constant 0 : index
    %215 = vector.load %arg21[%c0_80, %c0_81] : memref<3x288xbf16, #tpu.memory_space<vmem>>, vector<3x288xbf16>
    %c0_82 = arith.constant 0 : index
    %c0_83 = arith.constant 0 : index
    %216 = vector.load %arg22[%c0_82, %c0_83] : memref<3x1xf32, #tpu.memory_space<vmem>>, vector<3x1xf32>
    %c0_84 = arith.constant 0 : index
    %c0_85 = arith.constant 0 : index
    %217 = vector.load %arg18[%c0_84, %c0_85] : memref<9x512xf32, #tpu.memory_space<vmem>>, vector<9x512xf32>
    %cst_86 = arith.constant 0.000000e+00 : f32
    %218 = vector.broadcast %cst_86 : f32 to vector<32x17xf32>
    %219 = vector.extract_strided_slice %214 {offsets = [0, 0], sizes = [32, 495], strides = [1, 1]} : vector<32x512xf32> to vector<32x495xf32>
    %220 = tpu.concatenate %218, %219 in 1 : vector<32x17xf32>, vector<32x495xf32> -> vector<32x512xf32>
    %221 = vector.extract_strided_slice %217 {offsets = [0, 0], sizes = [1, 512], strides = [1, 1]} : vector<9x512xf32> to vector<1x512xf32>
    %222 = vector.broadcast %221 : vector<1x512xf32> to vector<32x512xf32>
    %223 = arith.mulf %220, %222 : vector<32x512xf32>
    %cst_87 = arith.constant 0.000000e+00 : f32
    %224 = vector.broadcast %cst_87 : f32 to vector<32x16xf32>
    %225 = vector.extract_strided_slice %214 {offsets = [0, 0], sizes = [32, 496], strides = [1, 1]} : vector<32x512xf32> to vector<32x496xf32>
    %226 = tpu.concatenate %224, %225 in 1 : vector<32x16xf32>, vector<32x496xf32> -> vector<32x512xf32>
    %227 = vector.extract_strided_slice %217 {offsets = [1, 0], sizes = [1, 512], strides = [1, 1]} : vector<9x512xf32> to vector<1x512xf32>
    %228 = vector.broadcast %227 : vector<1x512xf32> to vector<32x512xf32>
    %229 = arith.mulf %226, %228 : vector<32x512xf32>
    %cst_88 = arith.constant 0.000000e+00 : f32
    %230 = vector.broadcast %cst_88 : f32 to vector<32x15xf32>
    %231 = vector.extract_strided_slice %214 {offsets = [0, 0], sizes = [32, 497], strides = [1, 1]} : vector<32x512xf32> to vector<32x497xf32>
    %232 = tpu.concatenate %230, %231 in 1 : vector<32x15xf32>, vector<32x497xf32> -> vector<32x512xf32>
    %233 = vector.extract_strided_slice %217 {offsets = [2, 0], sizes = [1, 512], strides = [1, 1]} : vector<9x512xf32> to vector<1x512xf32>
    %234 = vector.broadcast %233 : vector<1x512xf32> to vector<32x512xf32>
    %235 = arith.mulf %232, %234 : vector<32x512xf32>
    %cst_89 = arith.constant 0.000000e+00 : f32
    %236 = vector.broadcast %cst_89 : f32 to vector<32x1xf32>
    %237 = vector.extract_strided_slice %214 {offsets = [0, 0], sizes = [32, 511], strides = [1, 1]} : vector<32x512xf32> to vector<32x511xf32>
    %238 = tpu.concatenate %236, %237 in 1 : vector<32x1xf32>, vector<32x511xf32> -> vector<32x512xf32>
    %239 = vector.extract_strided_slice %217 {offsets = [3, 0], sizes = [1, 512], strides = [1, 1]} : vector<9x512xf32> to vector<1x512xf32>
    %240 = vector.broadcast %239 : vector<1x512xf32> to vector<32x512xf32>
    %241 = arith.mulf %238, %240 : vector<32x512xf32>
    %242 = vector.extract_strided_slice %217 {offsets = [4, 0], sizes = [1, 512], strides = [1, 1]} : vector<9x512xf32> to vector<1x512xf32>
    %243 = vector.broadcast %242 : vector<1x512xf32> to vector<32x512xf32>
    %244 = arith.mulf %214, %243 : vector<32x512xf32>
    %cst_90 = arith.constant 0.000000e+00 : f32
    %245 = vector.broadcast %cst_90 : f32 to vector<32x1xf32>
    %246 = vector.extract_strided_slice %214 {offsets = [0, 1], sizes = [32, 511], strides = [1, 1]} : vector<32x512xf32> to vector<32x511xf32>
    %247 = tpu.concatenate %246, %245 in 1 : vector<32x511xf32>, vector<32x1xf32> -> vector<32x512xf32>
    %248 = vector.extract_strided_slice %217 {offsets = [5, 0], sizes = [1, 512], strides = [1, 1]} : vector<9x512xf32> to vector<1x512xf32>
    %249 = vector.broadcast %248 : vector<1x512xf32> to vector<32x512xf32>
    %250 = arith.mulf %247, %249 : vector<32x512xf32>
    %cst_91 = arith.constant 0.000000e+00 : f32
    %251 = vector.broadcast %cst_91 : f32 to vector<32x15xf32>
    %252 = vector.extract_strided_slice %214 {offsets = [0, 15], sizes = [32, 497], strides = [1, 1]} : vector<32x512xf32> to vector<32x497xf32>
    %253 = tpu.concatenate %252, %251 in 1 : vector<32x497xf32>, vector<32x15xf32> -> vector<32x512xf32>
    %254 = vector.extract_strided_slice %217 {offsets = [6, 0], sizes = [1, 512], strides = [1, 1]} : vector<9x512xf32> to vector<1x512xf32>
    %255 = vector.broadcast %254 : vector<1x512xf32> to vector<32x512xf32>
    %256 = arith.mulf %253, %255 : vector<32x512xf32>
    %cst_92 = arith.constant 0.000000e+00 : f32
    %257 = vector.broadcast %cst_92 : f32 to vector<32x16xf32>
    %258 = vector.extract_strided_slice %214 {offsets = [0, 16], sizes = [32, 496], strides = [1, 1]} : vector<32x512xf32> to vector<32x496xf32>
    %259 = tpu.concatenate %258, %257 in 1 : vector<32x496xf32>, vector<32x16xf32> -> vector<32x512xf32>
    %260 = vector.extract_strided_slice %217 {offsets = [7, 0], sizes = [1, 512], strides = [1, 1]} : vector<9x512xf32> to vector<1x512xf32>
    %261 = vector.broadcast %260 : vector<1x512xf32> to vector<32x512xf32>
    %262 = arith.mulf %259, %261 : vector<32x512xf32>
    %cst_93 = arith.constant 0.000000e+00 : f32
    %263 = vector.broadcast %cst_93 : f32 to vector<32x17xf32>
    %264 = vector.extract_strided_slice %214 {offsets = [0, 17], sizes = [32, 495], strides = [1, 1]} : vector<32x512xf32> to vector<32x495xf32>
    %265 = tpu.concatenate %264, %263 in 1 : vector<32x495xf32>, vector<32x17xf32> -> vector<32x512xf32>
    %266 = vector.extract_strided_slice %217 {offsets = [8, 0], sizes = [1, 512], strides = [1, 1]} : vector<9x512xf32> to vector<1x512xf32>
    %267 = vector.broadcast %266 : vector<1x512xf32> to vector<32x512xf32>
    %268 = arith.mulf %265, %267 : vector<32x512xf32>
    %269 = tpu.concatenate %223, %229, %235, %241, %244, %250, %256, %262, %268 in 0 : vector<32x512xf32>, vector<32x512xf32>, vector<32x512xf32>, vector<32x512xf32>, vector<32x512xf32>, vector<32x512xf32>, vector<32x512xf32>, vector<32x512xf32>, vector<32x512xf32> -> vector<288x512xf32>
    %270 = arith.truncf %269 : vector<288x512xf32> to vector<288x512xbf16>
    %cst_94 = arith.constant dense<0.000000e+00> : vector<3x512xf32>
    %271 = tpu.matmul %215, %270, %cst_94 {dimension_numbers = #tpu.dot_dimension_numbers<[1], [0], [0], [1], [0, 0, 1, 1], [], []>} : vector<3x288xbf16>, vector<288x512xbf16>, vector<3x512xf32> -> vector<3x512xf32>
    %272 = vector.broadcast %216 : vector<3x1xf32> to vector<3x512xf32>
    %273 = arith.addf %271, %272 : vector<3x512xf32>
    %274 = math.tanh %273 : vector<3x512xf32>
    %c0_95 = arith.constant 0 : index
    %c0_96 = arith.constant 0 : index
    %275 = vector.load %arg23[%c0_95, %c0_96] : memref<3x512xf32, #tpu.memory_space<vmem>>, vector<3x512xf32>
    tpu.vector_store %arg23[%c0_95, %c0_96], %274 {strides = array<i32>} : memref<3x512xf32, #tpu.memory_space<vmem>>, vector<3x512xf32>,
    return
  }
  func.func @transform_0(%arg0: i32) -> (i32, i32) {
    %c0_i32 = arith.constant 0 : i32
    %c0_i32_0 = arith.constant 0 : i32
    %c0_i32_1 = arith.constant 0 : i32
    return %c0_i32, %c0_i32_0 : i32, i32
  }
  func.func @transform_1(%arg0: i32) -> (i32, i32) {
    %c0_i32 = arith.constant 0 : i32
    %c0_i32_0 = arith.constant 0 : i32
    %c0_i32_1 = arith.constant 0 : i32
    return %c0_i32, %c0_i32_0 : i32, i32
  }
  func.func @transform_2(%arg0: i32) -> (i32, i32) {
    %c0_i32 = arith.constant 0 : i32
    %c0_i32_0 = arith.constant 0 : i32
    %c0_i32_1 = arith.constant 0 : i32
    return %c0_i32, %c0_i32_0 : i32, i32
  }
  func.func @transform_3(%arg0: i32) -> (i32, i32) {
    %c0_i32 = arith.constant 0 : i32
    %c0_i32_0 = arith.constant 0 : i32
    %c0_i32_1 = arith.constant 0 : i32
    return %c0_i32, %c0_i32_0 : i32, i32
  }
  func.func @transform_4(%arg0: i32) -> (i32, i32) {
    %c0_i32 = arith.constant 0 : i32
    %c0_i32_0 = arith.constant 0 : i32
    %c0_i32_1 = arith.constant 0 : i32
    return %c0_i32, %c0_i32_0 : i32, i32
  }
  func.func @transform_5(%arg0: i32) -> (i32, i32) {
    %c0_i32 = arith.constant 0 : i32
    %c0_i32_0 = arith.constant 0 : i32
    %c0_i32_1 = arith.constant 0 : i32
    return %c0_i32, %c0_i32_0 : i32, i32
  }
  func.func @transform_6(%arg0: i32) -> (i32, i32) {
    %c0_i32 = arith.constant 0 : i32
    %c0_i32_0 = arith.constant 0 : i32
    %c0_i32_1 = arith.constant 0 : i32
    return %c0_i32, %c0_i32_0 : i32, i32
  }
  func.func @transform_7(%arg0: i32) -> (i32, i32) {
    %c0_i32 = arith.constant 0 : i32
    %c0_i32_0 = arith.constant 0 : i32
    %c0_i32_1 = arith.constant 0 : i32
    return %c0_i32, %c0_i32_0 : i32, i32
  }
  func.func @transform_8(%arg0: i32) -> (i32, i32) {
    %c0_i32 = arith.constant 0 : i32
    %c0_i32_0 = arith.constant 0 : i32
    %c0_i32_1 = arith.constant 0 : i32
    return %c0_i32, %c0_i32_0 : i32, i32
  }
  func.func @transform_9(%arg0: i32) -> (i32, i32) {
    %c0_i32 = arith.constant 0 : i32
    %c0_i32_0 = arith.constant 0 : i32
    %c0_i32_1 = arith.constant 0 : i32
    return %c0_i32, %c0_i32_0 : i32, i32
  }
  func.func @transform_10(%arg0: i32) -> (i32, i32) {
    %c0_i32 = arith.constant 0 : i32
    %c0_i32_0 = arith.constant 0 : i32
    %c0_i32_1 = arith.constant 0 : i32
    return %c0_i32, %c0_i32_0 : i32, i32
  }
  func.func @transform_11(%arg0: i32) -> (i32, i32) {
    %c0_i32 = arith.constant 0 : i32
    %c0_i32_0 = arith.constant 0 : i32
    %c0_i32_1 = arith.constant 0 : i32
    return %c0_i32, %c0_i32_0 : i32, i32
  }
  func.func @transform_12(%arg0: i32) -> (i32, i32) {
    %c0_i32 = arith.constant 0 : i32
    %c0_i32_0 = arith.constant 0 : i32
    %c0_i32_1 = arith.constant 0 : i32
    return %c0_i32, %c0_i32_0 : i32, i32
  }
  func.func @transform_13(%arg0: i32) -> (i32, i32) {
    %c0_i32 = arith.constant 0 : i32
    %c0_i32_0 = arith.constant 0 : i32
    %c0_i32_1 = arith.constant 0 : i32
    return %c0_i32, %c0_i32_0 : i32, i32
  }
  func.func @transform_14(%arg0: i32) -> (i32, i32) {
    %c0_i32 = arith.constant 0 : i32
    %c0_i32_0 = arith.constant 0 : i32
    %c0_i32_1 = arith.constant 0 : i32
    return %c0_i32, %c0_i32_0 : i32, i32
  }
  func.func @transform_15(%arg0: i32) -> (i32, i32) {
    %c0_i32 = arith.constant 0 : i32
    %c0_i32_0 = arith.constant 0 : i32
    %c0_i32_1 = arith.constant 0 : i32
    return %c0_i32, %c0_i32_0 : i32, i32
  }
  func.func @transform_16(%arg0: i32) -> (i32, i32) {
    %c0_i32 = arith.constant 0 : i32
    %c0_i32_0 = arith.constant 0 : i32
    %c0_i32_1 = arith.constant 0 : i32
    return %c0_i32, %c0_i32_0 : i32, i32
  }
  func.func @transform_17(%arg0: i32) -> (i32, i32) {
    %c0_i32 = arith.constant 0 : i32
    %c0_i32_0 = arith.constant 0 : i32
    %c0_i32_1 = arith.constant 0 : i32
    return %c0_i32, %c0_i32_0 : i32, i32
  }
  func.func @transform_18(%arg0: i32) -> (i32, i32) {
    %c0_i32 = arith.constant 0 : i32
    %c0_i32_0 = arith.constant 0 : i32
    %c0_i32_1 = arith.constant 0 : i32
    return %c0_i32, %c0_i32_0 : i32, i32
  }
  func.func @transform_19(%arg0: i32) -> (i32, i32) {
    %c0_i32 = arith.constant 0 : i32
    %c0_i32_0 = arith.constant 0 : i32
    %c0_i32_1 = arith.constant 0 : i32
    return %c0_i32, %c0_i32_0 : i32, i32
  }
  func.func @transform_20(%arg0: i32) -> (i32, i32) {
    %c0_i32 = arith.constant 0 : i32
    %c0_i32_0 = arith.constant 0 : i32
    %c0_i32_1 = arith.constant 0 : i32
    return %c0_i32, %c0_i32_0 : i32, i32
  }
  func.func @transform_21(%arg0: i32) -> (i32, i32) {
    %c0_i32 = arith.constant 0 : i32
    %c0_i32_0 = arith.constant 0 : i32
    %c0_i32_1 = arith.constant 0 : i32
    return %c0_i32, %c0_i32_0 : i32, i32
  }
  func.func @transform_22(%arg0: i32) -> (i32, i32) {
    %c0_i32 = arith.constant 0 : i32
    %c0_i32_0 = arith.constant 0 : i32
    %c0_i32_1 = arith.constant 0 : i32
    return %c0_i32, %c0_i32_0 : i32, i32
  }
}

</mosaic_0001>

<llo_original>
// kernel: generator_forward.1
$region0: #{generator_forward.1}
  #allocation0 [shape = 'u32[]', space=smem, size = 0x4, offset = 0x4, fixed_abs, tag = 'smem constant byte address 0x4 - core index']
  #allocation1 [shape = 'u32[144,128]{1,0:T(1,128)}', space=vmem, size = 0x12000, scoped, tag = 'internal scratch']
  %s0 = inlined_call_operand.vmem [shape: f32[40,2], index: 0, kind: input, shape index: {}]
  %s1 = inlined_call_operand.vmem [shape: f32[64,640], index: 1, kind: input, shape index: {}]
  %s2 = inlined_call_operand.vmem [shape: f32[640,40], index: 2, kind: input, shape index: {}]
  %s3 = inlined_call_operand.vmem [shape: f32[2,32], index: 3, kind: input, shape index: {}]
  %s4 = inlined_call_operand.vmem [shape: f32[640,32], index: 4, kind: input, shape index: {}]
  %s5 = inlined_call_operand.vmem [shape: f32[64,32], index: 5, kind: input, shape index: {}]
  %s6 = inlined_call_operand.vmem [shape: f32[64,1], index: 6, kind: input, shape index: {}]
  %s7 = inlined_call_operand.vmem [shape: f32[64,1], index: 7, kind: input, shape index: {}]
  %s8 = inlined_call_operand.vmem [shape: f32[32,128], index: 8, kind: input, shape index: {}]
  %s9 = inlined_call_operand.vmem [shape: bf16[64,576], index: 9, kind: input, shape index: {}]
  %s10 = inlined_call_operand.vmem [shape: f32[64,1], index: 10, kind: input, shape index: {}]
  %s11 = inlined_call_operand.vmem [shape: f32[9,128], index: 11, kind: input, shape index: {}]
  %s12 = inlined_call_operand.vmem [shape: f32[64,1], index: 12, kind: input, shape index: {}]
  %s13 = inlined_call_operand.vmem [shape: f32[64,1], index: 13, kind: input, shape index: {}]
  %s14 = inlined_call_operand.vmem [shape: f32[128,512], index: 14, kind: input, shape index: {}]
  %s15 = inlined_call_operand.vmem [shape: bf16[32,576], index: 15, kind: input, shape index: {}]
  %s16 = inlined_call_operand.vmem [shape: f32[32,1], index: 16, kind: input, shape index: {}]
  %s17 = inlined_call_operand.vmem [shape: f32[9,512], index: 17, kind: input, shape index: {}]
  %s18 = inlined_call_operand.vmem [shape: f32[32,1], index: 18, kind: input, shape index: {}]
  %s19 = inlined_call_operand.vmem [shape: f32[32,1], index: 19, kind: input, shape index: {}]
  %s20 = inlined_call_operand.vmem [shape: bf16[3,288], index: 20, kind: input, shape index: {}]
  %s21 = inlined_call_operand.vmem [shape: f32[3,1], index: 21, kind: input, shape index: {}]
  %s22 = inlined_call_operand.vmem [shape: f32[3,512], index: 22, kind: output, shape index: {}]
  %s23 = sld [smem:[#allocation0]]
  $region98: #{generator_forward.1} parent=0
    _
  %s25 = ssub.s32 1, %s23
  %s26 = scalar_select 0, %s25, %s23
  // Predicated region
  $region2: #{generator_forward.1} parent=0 // pred_check
    _
  $region3: #{generator_forward.1} parent=0 // pred_check_branch
    %28 = sbr.rel (0) target = $region5
  $region4: #{generator_forward.1} parent=0 // pred_region
    _
  $region5: #{generator_forward.1} parent=0 // pred_fallthru
    _
  // Predicated region
  $region6: #{generator_forward.1} parent=0 // pred_check
    _
  $region7: #{generator_forward.1} parent=0 // pred_check_branch
    %30 = sbr.rel (0) target = $region9
  $region8: #{generator_forward.1} parent=0 // pred_region
    _
  $region9: #{generator_forward.1} parent=0 // pred_fallthru
    _
  // Predicated region
  $region10: #{generator_forward.1} parent=0 // pred_check
    _
  $region11: #{generator_forward.1} parent=0 // pred_check_branch
    %32 = sbr.rel (0) target = $region13
  $region12: #{generator_forward.1} parent=0 // pred_region
    _
  $region13: #{generator_forward.1} parent=0 // pred_fallthru
    _
  // Predicated region
  $region14: #{generator_forward.1} parent=0 // pred_check
    _
  $region15: #{generator_forward.1} parent=0 // pred_check_branch
    %34 = sbr.rel (0) target = $region17
  $region16: #{generator_forward.1} parent=0 // pred_region
    _
  $region17: #{generator_forward.1} parent=0 // pred_fallthru
    _
  // Predicated region
  $region18: #{generator_forward.1} parent=0 // pred_check
    _
  $region19: #{generator_forward.1} parent=0 // pred_check_branch
    %36 = sbr.rel (0) target = $region21
  $region20: #{generator_forward.1} parent=0 // pred_region
    _
  $region21: #{generator_forward.1} parent=0 // pred_fallthru
    _
  // Predicated region
  $region22: #{generator_forward.1} parent=0 // pred_check
    _
  $region23: #{generator_forward.1} parent=0 // pred_check_branch
    %38 = sbr.rel (0) target = $region25
  $region24: #{generator_forward.1} parent=0 // pred_region
    _
  $region25: #{generator_forward.1} parent=0 // pred_fallthru
    _
  // Predicated region
  $region26: #{generator_forward.1} parent=0 // pred_check
    _
  $region27: #{generator_forward.1} parent=0 // pred_check_branch
    %40 = sbr.rel (0) target = $region29
  $region28: #{generator_forward.1} parent=0 // pred_region
    _
  $region29: #{generator_forward.1} parent=0 // pred_fallthru
    _
  // Predicated region
  $region30: #{generator_forward.1} parent=0 // pred_check
    _
  $region31: #{generator_forward.1} parent=0 // pred_check_branch
    %42 = sbr.rel (0) target = $region33
  $region32: #{generator_forward.1} parent=0 // pred_region
    _
  $region33: #{generator_forward.1} parent=0 // pred_fallthru
    _
  // Predicated region
  $region34: #{generator_forward.1} parent=0 // pred_check
    _
  $region35: #{generator_forward.1} parent=0 // pred_check_branch
    %44 = sbr.rel (0) target = $region37
  $region36: #{generator_forward.1} parent=0 // pred_region
    _
  $region37: #{generator_forward.1} parent=0 // pred_fallthru
    _
  // Predicated region
  $region38: #{generator_forward.1} parent=0 // pred_check
    _
  $region39: #{generator_forward.1} parent=0 // pred_check_branch
    %46 = sbr.rel (0) target = $region41
  $region40: #{generator_forward.1} parent=0 // pred_region
    _
  $region41: #{generator_forward.1} parent=0 // pred_fallthru
    _
  // Predicated region
  $region42: #{generator_forward.1} parent=0 // pred_check
    _
  $region43: #{generator_forward.1} parent=0 // pred_check_branch
    %48 = sbr.rel (0) target = $region45
  $region44: #{generator_forward.1} parent=0 // pred_region
    _
  $region45: #{generator_forward.1} parent=0 // pred_fallthru
    _
  // Predicated region
  $region46: #{generator_forward.1} parent=0 // pred_check
    _
  $region47: #{generator_forward.1} parent=0 // pred_check_branch
    %50 = sbr.rel (0) target = $region49
  $region48: #{generator_forward.1} parent=0 // pred_region
    _
  $region49: #{generator_forward.1} parent=0 // pred_fallthru
    _
  // Predicated region
  $region50: #{generator_forward.1} parent=0 // pred_check
    _
  $region51: #{generator_forward.1} parent=0 // pred_check_branch
    %52 = sbr.rel (0) target = $region53
  $region52: #{generator_forward.1} parent=0 // pred_region
    _
  $region53: #{generator_forward.1} parent=0 // pred_fallthru
    _
  // Predicated region
  $region54: #{generator_forward.1} parent=0 // pred_check
    _
  $region55: #{generator_forward.1} parent=0 // pred_check_branch
    %54 = sbr.rel (0) target = $region57
  $region56: #{generator_forward.1} parent=0 // pred_region
    _
  $region57: #{generator_forward.1} parent=0 // pred_fallthru
    _
  // Predicated region
  $region58: #{generator_forward.1} parent=0 // pred_check
    _
  $region59: #{generator_forward.1} parent=0 // pred_check_branch
    %56 = sbr.rel (0) target = $region61
  $region60: #{generator_forward.1} parent=0 // pred_region
    _
  $region61: #{generator_forward.1} parent=0 // pred_fallthru
    _
  // Predicated region
  $region62: #{generator_forward.1} parent=0 // pred_check
    _
  $region63: #{generator_forward.1} parent=0 // pred_check_branch
    %58 = sbr.rel (0) target = $region65
  $region64: #{generator_forward.1} parent=0 // pred_region
    _
  $region65: #{generator_forward.1} parent=0 // pred_fallthru
    _
  // Predicated region
  $region66: #{generator_forward.1} parent=0 // pred_check
    _
  $region67: #{generator_forward.1} parent=0 // pred_check_branch
    %60 = sbr.rel (0) target = $region69
  $region68: #{generator_forward.1} parent=0 // pred_region
    _
  $region69: #{generator_forward.1} parent=0 // pred_fallthru
    _
  // Predicated region
  $region70: #{generator_forward.1} parent=0 // pred_check
    _
  $region71: #{generator_forward.1} parent=0 // pred_check_branch
    %62 = sbr.rel (0) target = $region73
  $region72: #{generator_forward.1} parent=0 // pred_region
    _
  $region73: #{generator_forward.1} parent=0 // pred_fallthru
    _
  // Predicated region
  $region74: #{generator_forward.1} parent=0 // pred_check
    _
  $region75: #{generator_forward.1} parent=0 // pred_check_branch
    %64 = sbr.rel (0) target = $region77
  $region76: #{generator_forward.1} parent=0 // pred_region
    _
  $region77: #{generator_forward.1} parent=0 // pred_fallthru
    _
  // Predicated region
  $region78: #{generator_forward.1} parent=0 // pred_check
    _
  $region79: #{generator_forward.1} parent=0 // pred_check_branch
    %66 = sbr.rel (0) target = $region81
  $region80: #{generator_forward.1} parent=0 // pred_region
    _
  $region81: #{generator_forward.1} parent=0 // pred_fallthru
    _
  // Predicated region
  $region82: #{generator_forward.1} parent=0 // pred_check
    _
  $region83: #{generator_forward.1} parent=0 // pred_check_branch
    %68 = sbr.rel (0) target = $region85
  $region84: #{generator_forward.1} parent=0 // pred_region
    _
  $region85: #{generator_forward.1} parent=0 // pred_fallthru
    _
  // Predicated region
  $region86: #{generator_forward.1} parent=0 // pred_check
    _
  $region87: #{generator_forward.1} parent=0 // pred_check_branch
    %70 = sbr.rel (0) target = $region89
  $region88: #{generator_forward.1} parent=0 // pred_region
    _
  $region89: #{generator_forward.1} parent=0 // pred_fallthru
    _
  %v72 = vld [vmem:[%s0] sm:$0xff]
  %v73 = vld [vmem:[%s0 + $0x8] sm:$0xff]
  %v74 = vld [vmem:[%s0 + $0x10] sm:$0xff]
  %v75 = vld [vmem:[%s0 + $0x18] sm:$0xff]
  %v76 = vld [vmem:[%s0 + $0x20] sm:$0xff]
  %v77 = vld [vmem:[%s3] sm:$0x3]
  %vm78 = vcmask 15360
  %v80 = vsel %vm78, %v72, 0
  %v83 = vsel %vm78, %v73, 0
  %v86 = vsel %vm78, %v74, 0
  %v89 = vsel %vm78, %v75, 0
  %v92 = vsel %vm78, %v76, 0
  %vm94 = vcmask 1041408
  %v96 = vsel %vm94, %v77, 0
  %98 = vmatprep.subr.mxu0 0.0
  %99 = vmatpush1.msra.mxu0 %v96
  %100 = vmatprep.subr.mxu0 0.0
  %101 = vmatpush1.msra.mxu0 0.0
  %102 = vmatprep.subr.mxu0 0.0
  %103 = vmatpush1.msra.mxu0 0.0
  %104 = vmatprep.subr.mxu0 0.0
  %105 = vmatpush1.msra.mxu0 0.0
  %106 = vmatprep.subr.mxu0 0.0
  %107 = vmatpush1.msra.mxu0 0.0
  %108 = vmatprep.subr.mxu0 0.0
  %109 = vmatpush1.msra.mxu0 0.0
  %110 = vmatprep.subr.mxu0 0.0
  %111 = vmatpush1.msra.mxu0 0.0
  %112 = vmatprep.subr.mxu0 0.0
  %113 = vmatpush1.msra.mxu0 0.0
  %114 = vmatprep.subr.mxu0 0.0
  %115 = vmatpush1.msra.mxu0 0.0
  %116 = vmatprep.subr.mxu0 0.0
  %117 = vmatpush1.msra.mxu0 0.0
  %118 = vmatprep.subr.mxu0 0.0
  %119 = vmatpush1.msra.mxu0 0.0
  %120 = vmatprep.subr.mxu0 0.0
  %121 = vmatpush1.msra.mxu0 0.0
  %122 = vmatprep.subr.mxu0 0.0
  %123 = vmatpush1.msra.mxu0 0.0
  %124 = vmatprep.subr.mxu0 0.0
  %125 = vmatpush1.msra.mxu0 0.0
  %126 = vmatprep.subr.mxu0 0.0
  %127 = vmatpush1.msra.mxu0 0.0
  %128 = vmatprep.subr.mxu0 0.0
  %129 = vmatpush1.msra.mxu0 0.0
  %130 = vmatprep.subr.mxu0 0.0
  %131 = vmatpush1.msra.mxu0 0.0
  %132 = vmatprep.subr.mxu0 0.0
  %133 = vmatpush1.msra.mxu0 0.0
  %134 = vmatprep.subr.mxu0 0.0
  %135 = vmatpush1.msra.mxu0 0.0
  %136 = vmatprep.subr.mxu0 0.0
  %137 = vmatpush1.msra.mxu0 0.0
  %138 = vmatprep.subr.mxu0 0.0
  %139 = vmatpush1.msra.mxu0 0.0
  %140 = vmatprep.subr.mxu0 0.0
  %141 = vmatpush1.msra.mxu0 0.0
  %142 = vmatprep.subr.mxu0 0.0
  %143 = vmatpush1.msra.mxu0 0.0
  %144 = vmatprep.subr.mxu0 0.0
  %145 = vmatpush1.msra.mxu0 0.0
  %146 = vmatprep.subr.mxu0 0.0
  %147 = vmatpush1.msra.mxu0 0.0
  %148 = vmatprep.subr.mxu0 0.0
  %149 = vmatpush1.msra.mxu0 0.0
  %150 = vmatprep.subr.mxu0 0.0
  %151 = vmatpush1.msra.mxu0 0.0
  %152 = vmatprep.subr.mxu0 0.0
  %153 = vmatpush1.msra.mxu0 0.0
  %154 = vmatprep.subr.mxu0 0.0
  %155 = vmatpush1.msra.mxu0 0.0
  %156 = vmatprep.subr.mxu0 0.0
  %157 = vmatpush1.msra.mxu0 0.0
  %158 = vmatprep.subr.mxu0 0.0
  %159 = vmatpush1.msra.mxu0 0.0
  %160 = vmatprep.subr.mxu0 0.0
  %161 = vmatpush1.msra.mxu0 0.0
  %162 = vmatprep.mubr.f32.mxu0 0.0
  %163 = vmatmul.mubr.f32.gmra.mrb[0].mxu0 %v80
  %v164 = vpop.f32.mrb[0].mxu0
  %v165 = vadd.f32 0.0, %v164
  %v166 = vpop.f32.mrb[0].mxu0
  %167 = vmatprep.mubr.f32.mxu0 0.0
  %168 = vmatmul.mubr.f32.gmra.mrb[0].mxu0 %v83
  %v169 = vpop.f32.mrb[0].mxu0
  %v170 = vadd.f32 0.0, %v169
  %v171 = vpop.f32.mrb[0].mxu0
  %172 = vmatprep.mubr.f32.mxu0 0.0
  %173 = vmatmul.mubr.f32.gmra.mrb[0].mxu0 %v86
  %v174 = vpop.f32.mrb[0].mxu0
  %v175 = vadd.f32 0.0, %v174
  %v176 = vpop.f32.mrb[0].mxu0
  %177 = vmatprep.mubr.f32.mxu0 0.0
  %178 = vmatmul.mubr.f32.gmra.mrb[0].mxu0 %v89
  %v179 = vpop.f32.mrb[0].mxu0
  %v180 = vadd.f32 0.0, %v179
  %v181 = vpop.f32.mrb[0].mxu0
  %182 = vmatprep.mubr.f32.mxu0 0.0
  %183 = vmatmul.mubr.f32.gmra.mrb[0].mxu0 %v92
  %v184 = vpop.f32.mrb[0].mxu0
  %v185 = vadd.f32 0.0, %v184
  %v186 = vpop.f32.mrb[0].mxu0
  %187 = vdwg.mxu0
  %v188 = vld [vmem:[%s2] sm:$0xff]
  %v189 = vld [vmem:[%s2 + $0x8] sm:$0xff]
  %v190 = vld [vmem:[%s2 + $0x10] sm:$0xff]
  %v191 = vld [vmem:[%s2 + $0x18] sm:$0xff]
  %v192 = vld [vmem:[%s2 + $0x20] sm:$0xff]
  %v193 = vld [vmem:[%s2 + $0x28] sm:$0xff]
  %v194 = vld [vmem:[%s2 + $0x30] sm:$0xff]
  %v195 = vld [vmem:[%s2 + $0x38] sm:$0xff]
  %v196 = vld [vmem:[%s2 + $0x40] sm:$0xff]
  %v197 = vld [vmem:[%s2 + $0x48] sm:$0xff]
  %v198 = vld [vmem:[%s2 + $0x50] sm:$0xff]
  %v199 = vld [vmem:[%s2 + $0x58] sm:$0xff]
  %v200 = vld [vmem:[%s2 + $0x60] sm:$0xff]
  %v201 = vld [vmem:[%s2 + $0x68] sm:$0xff]
  %v202 = vld [vmem:[%s2 + $0x70] sm:$0xff]
  %v203 = vld [vmem:[%s2 + $0x78] sm:$0xff]
  %v204 = vld [vmem:[%s2 + $0x80] sm:$0xff]
  %v205 = vld [vmem:[%s2 + $0x88] sm:$0xff]
  %v206 = vld [vmem:[%s2 + $0x90] sm:$0xff]
  %v207 = vld [vmem:[%s2 + $0x98] sm:$0xff]
  %v208 = vld [vmem:[%s2 + $0xa0] sm:$0xff]
  %v209 = vld [vmem:[%s2 + $0xa8] sm:$0xff]
  %v210 = vld [vmem:[%s2 + $0xb0] sm:$0xff]
  %v211 = vld [vmem:[%s2 + $0xb8] sm:$0xff]
  %v212 = vld [vmem:[%s2 + $0xc0] sm:$0xff]
  %v213 = vld [vmem:[%s2 + $0xc8] sm:$0xff]
  %v214 = vld [vmem:[%s2 + $0xd0] sm:$0xff]
  %v215 = vld [vmem:[%s2 + $0xd8] sm:$0xff]
  %v216 = vld [vmem:[%s2 + $0xe0] sm:$0xff]
  %v217 = vld [vmem:[%s2 + $0xe8] sm:$0xff]
  %v218 = vld [vmem:[%s2 + $0xf0] sm:$0xff]
  %v219 = vld [vmem:[%s2 + $0xf8] sm:$0xff]
  %v220 = vld [vmem:[%s2 + $0x100] sm:$0xff]
  %v221 = vld [vmem:[%s2 + $0x108] sm:$0xff]
  %v222 = vld [vmem:[%s2 + $0x110] sm:$0xff]
  %v223 = vld [vmem:[%s2 + $0x118] sm:$0xff]
  %v224 = vld [vmem:[%s2 + $0x120] sm:$0xff]
  %v225 = vld [vmem:[%s2 + $0x128] sm:$0xff]
  %v226 = vld [vmem:[%s2 + $0x130] sm:$0xff]
  %v227 = vld [vmem:[%s2 + $0x138] sm:$0xff]
  %v228 = vld [vmem:[%s2 + $0x140] sm:$0xff]
  %v229 = vld [vmem:[%s2 + $0x148] sm:$0xff]
  %v230 = vld [vmem:[%s2 + $0x150] sm:$0xff]
  %v231 = vld [vmem:[%s2 + $0x158] sm:$0xff]
  %v232 = vld [vmem:[%s2 + $0x160] sm:$0xff]
  %v233 = vld [vmem:[%s2 + $0x168] sm:$0xff]
  %v234 = vld [vmem:[%s2 + $0x170] sm:$0xff]
  %v235 = vld [vmem:[%s2 + $0x178] sm:$0xff]
  %v236 = vld [vmem:[%s2 + $0x180] sm:$0xff]
  %v237 = vld [vmem:[%s2 + $0x188] sm:$0xff]
  %v238 = vld [vmem:[%s2 + $0x190] sm:$0xff]
  %v239 = vld [vmem:[%s2 + $0x198] sm:$0xff]
  %v240 = vld [vmem:[%s2 + $0x1a0] sm:$0xff]
  %v241 = vld [vmem:[%s2 + $0x1a8] sm:$0xff]
  %v242 = vld [vmem:[%s2 + $0x1b0] sm:$0xff]
  %v243 = vld [vmem:[%s2 + $0x1b8] sm:$0xff]
  %v244 = vld [vmem:[%s2 + $0x1c0] sm:$0xff]
  %v245 = vld [vmem:[%s2 + $0x1c8] sm:$0xff]
  %v246 = vld [vmem:[%s2 + $0x1d0] sm:$0xff]
  %v247 = vld [vmem:[%s2 + $0x1d8] sm:$0xff]
  %v248 = vld [vmem:[%s2 + $0x1e0] sm:$0xff]
  %v249 = vld [vmem:[%s2 + $0x1e8] sm:$0xff]
  %v250 = vld [vmem:[%s2 + $0x1f0] sm:$0xff]
  %v251 = vld [vmem:[%s2 + $0x1f8] sm:$0xff]
  %v252 = vld [vmem:[%s2 + $0x200] sm:$0xff]
  %v253 = vld [vmem:[%s2 + $0x208] sm:$0xff]
  %v254 = vld [vmem:[%s2 + $0x210] sm:$0xff]
  %v255 = vld [vmem:[%s2 + $0x218] sm:$0xff]
  %v256 = vld [vmem:[%s2 + $0x220] sm:$0xff]
  %v257 = vld [vmem:[%s2 + $0x228] sm:$0xff]
  %v258 = vld [vmem:[%s2 + $0x230] sm:$0xff]
  %v259 = vld [vmem:[%s2 + $0x238] sm:$0xff]
  %v260 = vld [vmem:[%s2 + $0x240] sm:$0xff]
  %v261 = vld [vmem:[%s2 + $0x248] sm:$0xff]
  %v262 = vld [vmem:[%s2 + $0x250] sm:$0xff]
  %v263 = vld [vmem:[%s2 + $0x258] sm:$0xff]
  %v264 = vld [vmem:[%s2 + $0x260] sm:$0xff]
  %v265 = vld [vmem:[%s2 + $0x268] sm:$0xff]
  %v266 = vld [vmem:[%s2 + $0x270] sm:$0xff]
  %v267 = vld [vmem:[%s2 + $0x278] sm:$0xff]
  %vm268 = vcmask 326656
  %v270 = vsel %vm268, %v188, 0
  %v273 = vsel %vm268, %v189, 0
  %v276 = vsel %vm268, %v190, 0
  %v279 = vsel %vm268, %v191, 0
  %v282 = vsel %vm268, %v192, 0
  %v285 = vsel %vm268, %v193, 0
  %v288 = vsel %vm268, %v194, 0
  %v291 = vsel %vm268, %v195, 0
  %v294 = vsel %vm268, %v196, 0
  %v297 = vsel %vm268, %v197, 0
  %v300 = vsel %vm268, %v198, 0
  %v303 = vsel %vm268, %v199, 0
  %v306 = vsel %vm268, %v200, 0
  %v309 = vsel %vm268, %v201, 0
  %v312 = vsel %vm268, %v202, 0
  %v315 = vsel %vm268, %v203, 0
  %v318 = vsel %vm268, %v204, 0
  %v321 = vsel %vm268, %v205, 0
  %v324 = vsel %vm268, %v206, 0
  %v327 = vsel %vm268, %v207, 0
  %v330 = vsel %vm268, %v208, 0
  %v333 = vsel %vm268, %v209, 0
  %v336 = vsel %vm268, %v210, 0
  %v339 = vsel %vm268, %v211, 0
  %v342 = vsel %vm268, %v212, 0
  %v345 = vsel %vm268, %v213, 0
  %v348 = vsel %vm268, %v214, 0
  %v351 = vsel %vm268, %v215, 0
  %v354 = vsel %vm268, %v216, 0
  %v357 = vsel %vm268, %v217, 0
  %v360 = vsel %vm268, %v218, 0
  %v363 = vsel %vm268, %v219, 0
  %v366 = vsel %vm268, %v220, 0
  %v369 = vsel %vm268, %v221, 0
  %v372 = vsel %vm268, %v222, 0
  %v375 = vsel %vm268, %v223, 0
  %v378 = vsel %vm268, %v224, 0
  %v381 = vsel %vm268, %v225, 0
  %v384 = vsel %vm268, %v226, 0
  %v387 = vsel %vm268, %v227, 0
  %v390 = vsel %vm268, %v228, 0
  %v393 = vsel %vm268, %v229, 0
  %v396 = vsel %vm268, %v230, 0
  %v399 = vsel %vm268, %v231, 0
  %v402 = vsel %vm268, %v232, 0
  %v405 = vsel %vm268, %v233, 0
  %v408 = vsel %vm268, %v234, 0
  %v411 = vsel %vm268, %v235, 0
  %v414 = vsel %vm268, %v236, 0
  %v417 = vsel %vm268, %v237, 0
  %v420 = vsel %vm268, %v238, 0
  %v423 = vsel %vm268, %v239, 0
  %v426 = vsel %vm268, %v240, 0
  %v429 = vsel %vm268, %v241, 0
  %v432 = vsel %vm268, %v242, 0
  %v435 = vsel %vm268, %v243, 0
  %v438 = vsel %vm268, %v244, 0
  %v441 = vsel %vm268, %v245, 0
  %v444 = vsel %vm268, %v246, 0
  %v447 = vsel %vm268, %v247, 0
  %v450 = vsel %vm268, %v248, 0
  %v453 = vsel %vm268, %v249, 0
  %v456 = vsel %vm268, %v250, 0
  %v459 = vsel %vm268, %v251, 0
  %v462 = vsel %vm268, %v252, 0
  %v465 = vsel %vm268, %v253, 0
  %v468 = vsel %vm268, %v254, 0
  %v471 = vsel %vm268, %v255, 0
  %v474 = vsel %vm268, %v256, 0
  %v477 = vsel %vm268, %v257, 0
  %v480 = vsel %vm268, %v258, 0
  %v483 = vsel %vm268, %v259, 0
  %v486 = vsel %vm268, %v260, 0
  %v489 = vsel %vm268, %v261, 0
  %v492 = vsel %vm268, %v262, 0
  %v495 = vsel %vm268, %v263, 0
  %v498 = vsel %vm268, %v264, 0
  %v501 = vsel %vm268, %v265, 0
  %v504 = vsel %vm268, %v266, 0
  %v507 = vsel %vm268, %v267, 0
  %509 = vmatprep.subr.mxu0 0.0
  %510 = vmatpush1.msra.mxu0 %v165
  %511 = vmatprep.subr.mxu0 0.0
  %512 = vmatpush1.msra.mxu0 %v170
  %513 = vmatprep.subr.mxu0 0.0
  %514 = vmatpush1.msra.mxu0 %v175
  %515 = vmatprep.subr.mxu0 0.0
  %516 = vmatpush1.msra.mxu0 %v180
  %517 = vmatprep.subr.mxu0 0.0
  %518 = vmatpush1.msra.mxu0 %v185
  %519 = vmatprep.subr.mxu0 0.0
  %520 = vmatpush1.msra.mxu0 0.0
  %521 = vmatprep.subr.mxu0 0.0
  %522 = vmatpush1.msra.mxu0 0.0
  %523 = vmatprep.subr.mxu0 0.0
  %524 = vmatpush1.msra.mxu0 0.0
  %525 = vmatprep.subr.mxu0 0.0
  %526 = vmatpush1.msra.mxu0 0.0
  %527 = vmatprep.subr.mxu0 0.0
  %528 = vmatpush1.msra.mxu0 0.0
  %529 = vmatprep.subr.mxu0 0.0
  %530 = vmatpush1.msra.mxu0 0.0
  %531 = vmatprep.subr.mxu0 0.0
  %532 = vmatpush1.msra.mxu0 0.0
  %533 = vmatprep.subr.mxu0 0.0
  %534 = vmatpush1.msra.mxu0 0.0
  %535 = vmatprep.subr.mxu0 0.0
  %536 = vmatpush1.msra.mxu0 0.0
  %537 = vmatprep.subr.mxu0 0.0
  %538 = vmatpush1.msra.mxu0 0.0
  %539 = vmatprep.subr.mxu0 0.0
  %540 = vmatpush1.msra.mxu0 0.0
  %541 = vmatprep.subr.mxu0 0.0
  %542 = vmatpush1.msra.mxu0 0.0
  %543 = vmatprep.subr.mxu0 0.0
  %544 = vmatpush1.msra.mxu0 0.0
  %545 = vmatprep.subr.mxu0 0.0
  %546 = vmatpush1.msra.mxu0 0.0
  %547 = vmatprep.subr.mxu0 0.0
  %548 = vmatpush1.msra.mxu0 0.0
  %549 = vmatprep.subr.mxu0 0.0
  %550 = vmatpush1.msra.mxu0 0.0
  %551 = vmatprep.subr.mxu0 0.0
  %552 = vmatpush1.msra.mxu0 0.0
  %553 = vmatprep.subr.mxu0 0.0
  %554 = vmatpush1.msra.mxu0 0.0
  %555 = vmatprep.subr.mxu0 0.0
  %556 = vmatpush1.msra.mxu0 0.0
  %557 = vmatprep.subr.mxu0 0.0
  %558 = vmatpush1.msra.mxu0 0.0
  %559 = vmatprep.subr.mxu0 0.0
  %560 = vmatpush1.msra.mxu0 0.0
  %561 = vmatprep.subr.mxu0 0.0
  %562 = vmatpush1.msra.mxu0 0.0
  %563 = vmatprep.subr.mxu0 0.0
  %564 = vmatpush1.msra.mxu0 0.0
  %565 = vmatprep.subr.mxu0 0.0
  %566 = vmatpush1.msra.mxu0 0.0
  %567 = vmatprep.subr.mxu0 0.0
  %568 = vmatpush1.msra.mxu0 0.0
  %569 = vmatprep.subr.mxu0 0.0
  %570 = vmatpush1.msra.mxu0 0.0
  %571 = vmatprep.subr.mxu0 0.0
  %572 = vmatpush1.msra.mxu0 0.0
  %573 = vmatprep.mubr.f32.mxu0 0.0
  %574 = vmatmul.mubr.f32.gmra.mrb[0].mxu0 %v270
  %v575 = vpop.f32.mrb[0].mxu0
  %v576 = vadd.f32 0.0, %v575
  %v577 = vpop.f32.mrb[0].mxu0
  %578 = vmatprep.mubr.f32.mxu0 0.0
  %579 = vmatmul.mubr.f32.gmra.mrb[0].mxu0 %v273
  %v580 = vpop.f32.mrb[0].mxu0
  %v581 = vadd.f32 0.0, %v580
  %v582 = vpop.f32.mrb[0].mxu0
  %583 = vmatprep.mubr.f32.mxu0 0.0
  %584 = vmatmul.mubr.f32.gmra.mrb[0].mxu0 %v276
  %v585 = vpop.f32.mrb[0].mxu0
  %v586 = vadd.f32 0.0, %v585
  %v587 = vpop.f32.mrb[0].mxu0
  %588 = vmatprep.mubr.f32.mxu0 0.0
  %589 = vmatmul.mubr.f32.gmra.mrb[0].mxu0 %v279
  %v590 = vpop.f32.mrb[0].mxu0
  %v591 = vadd.f32 0.0, %v590
  %v592 = vpop.f32.mrb[0].mxu0
  %593 = vmatprep.mubr.f32.mxu0 0.0
  %594 = vmatmul.mubr.f32.gmra.mrb[0].mxu0 %v282
  %v595 = vpop.f32.mrb[0].mxu0
  %v596 = vadd.f32 0.0, %v595
  %v597 = vpop.f32.mrb[0].mxu0
  %598 = vmatprep.mubr.f32.mxu0 0.0
  %599 = vmatmul.mubr.f32.gmra.mrb[0].mxu0 %v285
  %v600 = vpop.f32.mrb[0].mxu0
  %v601 = vadd.f32 0.0, %v600
  %v602 = vpop.f32.mrb[0].mxu0
  %603 = vmatprep.mubr.f32.mxu0 0.0
  %604 = vmatmul.mubr.f32.gmra.mrb[0].mxu0 %v288
  %v605 = vpop.f32.mrb[0].mxu0
  %v606 = vadd.f32 0.0, %v605
  %v607 = vpop.f32.mrb[0].mxu0
  %608 = vmatprep.mubr.f32.mxu0 0.0
  %609 = vmatmul.mubr.f32.gmra.mrb[0].mxu0 %v291
  %v610 = vpop.f32.mrb[0].mxu0
  %v611 = vadd.f32 0.0, %v610
  %v612 = vpop.f32.mrb[0].mxu0
  %613 = vmatprep.mubr.f32.mxu0 0.0
  %614 = vmatmul.mubr.f32.gmra.mrb[0].mxu0 %v294
  %v615 = vpop.f32.mrb[0].mxu0
  %v616 = vadd.f32 0.0, %v615
  %v617 = vpop.f32.mrb[0].mxu0
  %618 = vmatprep.mubr.f32.mxu0 0.0
  %619 = vmatmul.mubr.f32.gmra.mrb[0].mxu0 %v297
  %v620 = vpop.f32.mrb[0].mxu0
  %v621 = vadd.f32 0.0, %v620
  %v622 = vpop.f32.mrb[0].mxu0
  %623 = vmatprep.mubr.f32.mxu0 0.0
  %624 = vmatmul.mubr.f32.gmra.mrb[0].mxu0 %v300
  %v625 = vpop.f32.mrb[0].mxu0
  %v626 = vadd.f32 0.0, %v625
  %v627 = vpop.f32.mrb[0].mxu0
  %628 = vmatprep.mubr.f32.mxu0 0.0
  %629 = vmatmul.mubr.f32.gmra.mrb[0].mxu0 %v303
  %v630 = vpop.f32.mrb[0].mxu0
  %v631 = vadd.f32 0.0, %v630
  %v632 = vpop.f32.mrb[0].mxu0
  %633 = vmatprep.mubr.f32.mxu0 0.0
  %634 = vmatmul.mubr.f32.gmra.mrb[0].mxu0 %v306
  %v635 = vpop.f32.mrb[0].mxu0
  %v636 = vadd.f32 0.0, %v635
  %v637 = vpop.f32.mrb[0].mxu0
  %638 = vmatprep.mubr.f32.mxu0 0.0
  %639 = vmatmul.mubr.f32.gmra.mrb[0].mxu0 %v309
  %v640 = vpop.f32.mrb[0].mxu0
  %v641 = vadd.f32 0.0, %v640
  %v642 = vpop.f32.mrb[0].mxu0
  %643 = vmatprep.mubr.f32.mxu0 0.0
  %644 = vmatmul.mubr.f32.gmra.mrb[0].mxu0 %v312
  %v645 = vpop.f32.mrb[0].mxu0
  %v646 = vadd.f32 0.0, %v645
  %v647 = vpop.f32.mrb[0].mxu0
  %648 = vmatprep.mubr.f32.mxu0 0.0
  %649 = vmatmul.mubr.f32.gmra.mrb[0].mxu0 %v315
  %v650 = vpop.f32.mrb[0].mxu0
  %v651 = vadd.f32 0.0, %v650
  %v652 = vpop.f32.mrb[0].mxu0
  %653 = vmatprep.mubr.f32.mxu0 0.0
  %654 = vmatmul.mubr.f32.gmra.mrb[0].mxu0 %v318
  %v655 = vpop.f32.mrb[0].mxu0
  %v656 = vadd.f32 0.0, %v655
  %v657 = vpop.f32.mrb[0].mxu0
  %658 = vmatprep.mubr.f32.mxu0 0.0
  %659 = vmatmul.mubr.f32.gmra.mrb[0].mxu0 %v321
  %v660 = vpop.f32.mrb[0].mxu0
  %v661 = vadd.f32 0.0, %v660
  %v662 = vpop.f32.mrb[0].mxu0
  %663 = vmatprep.mubr.f32.mxu0 0.0
  %664 = vmatmul.mubr.f32.gmra.mrb[0].mxu0 %v324
  %v665 = vpop.f32.mrb[0].mxu0
  %v666 = vadd.f32 0.0, %v665
  %v667 = vpop.f32.mrb[0].mxu0
  %668 = vmatprep.mubr.f32.mxu0 0.0
  %669 = vmatmul.mubr.f32.gmra.mrb[0].mxu0 %v327
  %v670 = vpop.f32.mrb[0].mxu0
  %v671 = vadd.f32 0.0, %v670
  %v672 = vpop.f32.mrb[0].mxu0
  %673 = vmatprep.mubr.f32.mxu0 0.0
  %674 = vmatmul.mubr.f32.gmra.mrb[0].mxu0 %v330
  %v675 = vpop.f32.mrb[0].mxu0
  %v676 = vadd.f32 0.0, %v675
  %v677 = vpop.f32.mrb[0].mxu0
  %678 = vmatprep.mubr.f32.mxu0 0.0
  %679 = vmatmul.mubr.f32.gmra.mrb[0].mxu0 %v333
  %v680 = vpop.f32.mrb[0].mxu0
  %v681 = vadd.f32 0.0, %v680
  %v682 = vpop.f32.mrb[0].mxu0
  %683 = vmatprep.mubr.f32.mxu0 0.0
  %684 = vmatmul.mubr.f32.gmra.mrb[0].mxu0 %v336
  %v685 = vpop.f32.mrb[0].mxu0
  %v686 = vadd.f32 0.0, %v685
  %v687 = vpop.f32.mrb[0].mxu0
  %688 = vmatprep.mubr.f32.mxu0 0.0
  %689 = vmatmul.mubr.f32.gmra.mrb[0].mxu0 %v339
  %v690 = vpop.f32.mrb[0].mxu0
  %v691 = vadd.f32 0.0, %v690
  %v692 = vpop.f32.mrb[0].mxu0
  %693 = vmatprep.mubr.f32.mxu0 0.0
  %694 = vmatmul.mubr.f32.gmra.mrb[0].mxu0 %v342
  %v695 = vpop.f32.mrb[0].mxu0
  %v696 = vadd.f32 0.0, %v695
  %v697 = vpop.f32.mrb[0].mxu0
  %698 = vmatprep.mubr.f32.mxu0 0.0
  %699 = vmatmul.mubr.f32.gmra.mrb[0].mxu0 %v345
  %v700 = vpop.f32.mrb[0].mxu0
  %v701 = vadd.f32 0.0, %v700
  %v702 = vpop.f32.mrb[0].mxu0
  %703 = vmatprep.mubr.f32.mxu0 0.0
  %704 = vmatmul.mubr.f32.gmra.mrb[0].mxu0 %v348
  %v705 = vpop.f32.mrb[0].mxu0
  %v706 = vadd.f32 0.0, %v705
  %v707 = vpop.f32.mrb[0].mxu0
  %708 = vmatprep.mubr.f32.mxu0 0.0
  %709 = vmatmul.mubr.f32.gmra.mrb[0].mxu0 %v351
  %v710 = vpop.f32.mrb[0].mxu0
  %v711 = vadd.f32 0.0, %v710
  %v712 = vpop.f32.mrb[0].mxu0
  %713 = vmatprep.mubr.f32.mxu0 0.0
  %714 = vmatmul.mubr.f32.gmra.mrb[0].mxu0 %v354
  %v715 = vpop.f32.mrb[0].mxu0
  %v716 = vadd.f32 0.0, %v715
  %v717 = vpop.f32.mrb[0].mxu0
  %718 = vmatprep.mubr.f32.mxu0 0.0
  %719 = vmatmul.mubr.f32.gmra.mrb[0].mxu0 %v357
  %v720 = vpop.f32.mrb[0].mxu0
  %v721 = vadd.f32 0.0, %v720
  %v722 = vpop.f32.mrb[0].mxu0
  %723 = vmatprep.mubr.f32.mxu0 0.0
  %724 = vmatmul.mubr.f32.gmra.mrb[0].mxu0 %v360
  %v725 = vpop.f32.mrb[0].mxu0
  %v726 = vadd.f32 0.0, %v725
  %v727 = vpop.f32.mrb[0].mxu0
  %728 = vmatprep.mubr.f32.mxu0 0.0
  %729 = vmatmul.mubr.f32.gmra.mrb[0].mxu0 %v363
  %v730 = vpop.f32.mrb[0].mxu0
  %v731 = vadd.f32 0.0, %v730
  %v732 = vpop.f32.mrb[0].mxu0
  %733 = vmatprep.mubr.f32.mxu0 0.0
  %734 = vmatmul.mubr.f32.gmra.mrb[0].mxu0 %v366
  %v735 = vpop.f32.mrb[0].mxu0
  %v736 = vadd.f32 0.0, %v735
  %v737 = vpop.f32.mrb[0].mxu0
  %738 = vmatprep.mubr.f32.mxu0 0.0
  %739 = vmatmul.mubr.f32.gmra.mrb[0].mxu0 %v369
  %v740 = vpop.f32.mrb[0].mxu0
  %v741 = vadd.f32 0.0, %v740
  %v742 = vpop.f32.mrb[0].mxu0
  %743 = vmatprep.mubr.f32.mxu0 0.0
  %744 = vmatmul.mubr.f32.gmra.mrb[0].mxu0 %v372
  %v745 = vpop.f32.mrb[0].mxu0
  %v746 = vadd.f32 0.0, %v745
  %v747 = vpop.f32.mrb[0].mxu0
  %748 = vmatprep.mubr.f32.mxu0 0.0
  %749 = vmatmul.mubr.f32.gmra.mrb[0].mxu0 %v375
  %v750 = vpop.f32.mrb[0].mxu0
  %v751 = vadd.f32 0.0, %v750
  %v752 = vpop.f32.mrb[0].mxu0
  %753 = vmatprep.mubr.f32.mxu0 0.0
  %754 = vmatmul.mubr.f32.gmra.mrb[0].mxu0 %v378
  %v755 = vpop.f32.mrb[0].mxu0
  %v756 = vadd.f32 0.0, %v755
  %v757 = vpop.f32.mrb[0].mxu0
  %758 = vmatprep.mubr.f32.mxu0 0.0
  %759 = vmatmul.mubr.f32.gmra.mrb[0].mxu0 %v381
  %v760 = vpop.f32.mrb[0].mxu0
  %v761 = vadd.f32 0.0, %v760
  %v762 = vpop.f32.mrb[0].mxu0
  %763 = vmatprep.mubr.f32.mxu0 0.0
  %764 = vmatmul.mubr.f32.gmra.mrb[0].mxu0 %v384
  %v765 = vpop.f32.mrb[0].mxu0
  %v766 = vadd.f32 0.0, %v765
  %v767 = vpop.f32.mrb[0].mxu0
  %768 = vmatprep.mubr.f32.mxu0 0.0
  %769 = vmatmul.mubr.f32.gmra.mrb[0].mxu0 %v387
  %v770 = vpop.f32.mrb[0].mxu0
  %v771 = vadd.f32 0.0, %v770
  %v772 = vpop.f32.mrb[0].mxu0
  %773 = vmatprep.mubr.f32.mxu0 0.0
  %774 = vmatmul.mubr.f32.gmra.mrb[0].mxu0 %v390
  %v775 = vpop.f32.mrb[0].mxu0
  %v776 = vadd.f32 0.0, %v775
  %v777 = vpop.f32.mrb[0].mxu0
  %778 = vmatprep.mubr.f32.mxu0 0.0
  %779 = vmatmul.mubr.f32.gmra.mrb[0].mxu0 %v393
  %v780 = vpop.f32.mrb[0].mxu0
  %v781 = vadd.f32 0.0, %v780
  %v782 = vpop.f32.mrb[0].mxu0
  %783 = vmatprep.mubr.f32.mxu0 0.0
  %784 = vmatmul.mubr.f32.gmra.mrb[0].mxu0 %v396
  %v785 = vpop.f32.mrb[0].mxu0
  %v786 = vadd.f32 0.0, %v785
  %v787 = vpop.f32.mrb[0].mxu0
  %788 = vmatprep.mubr.f32.mxu0 0.0
  %789 = vmatmul.mubr.f32.gmra.mrb[0].mxu0 %v399
  %v790 = vpop.f32.mrb[0].mxu0
  %v791 = vadd.f32 0.0, %v790
  %v792 = vpop.f32.mrb[0].mxu0
  %793 = vmatprep.mubr.f32.mxu0 0.0
  %794 = vmatmul.mubr.f32.gmra.mrb[0].mxu0 %v402
  %v795 = vpop.f32.mrb[0].mxu0
  %v796 = vadd.f32 0.0, %v795
  %v797 = vpop.f32.mrb[0].mxu0
  %798 = vmatprep.mubr.f32.mxu0 0.0
  %799 = vmatmul.mubr.f32.gmra.mrb[0].mxu0 %v405
  %v800 = vpop.f32.mrb[0].mxu0
  %v801 = vadd.f32 0.0, %v800
  %v802 = vpop.f32.mrb[0].mxu0
  %803 = vmatprep.mubr.f32.mxu0 0.0
  %804 = vmatmul.mubr.f32.gmra.mrb[0].mxu0 %v408
  %v805 = vpop.f32.mrb[0].mxu0
  %v806 = vadd.f32 0.0, %v805
  %v807 = vpop.f32.mrb[0].mxu0
  %808 = vmatprep.mubr.f32.mxu0 0.0
  %809 = vmatmul.mubr.f32.gmra.mrb[0].mxu0 %v411
  %v810 = vpop.f32.mrb[0].mxu0
  %v811 = vadd.f32 0.0, %v810
  %v812 = vpop.f32.mrb[0].mxu0
  %813 = vmatprep.mubr.f32.mxu0 0.0
  %814 = vmatmul.mubr.f32.gmra.mrb[0].mxu0 %v414
  %v815 = vpop.f32.mrb[0].mxu0
  %v816 = vadd.f32 0.0, %v815
  %v817 = vpop.f32.mrb[0].mxu0
  %818 = vmatprep.mubr.f32.mxu0 0.0
  %819 = vmatmul.mubr.f32.gmra.mrb[0].mxu0 %v417
  %v820 = vpop.f32.mrb[0].mxu0
  %v821 = vadd.f32 0.0, %v820
  %v822 = vpop.f32.mrb[0].mxu0
  %823 = vmatprep.mubr.f32.mxu0 0.0
  %824 = vmatmul.mubr.f32.gmra.mrb[0].mxu0 %v420
  %v825 = vpop.f32.mrb[0].mxu0
  %v826 = vadd.f32 0.0, %v825
  %v827 = vpop.f32.mrb[0].mxu0
  %828 = vmatprep.mubr.f32.mxu0 0.0
  %829 = vmatmul.mubr.f32.gmra.mrb[0].mxu0 %v423
  %v830 = vpop.f32.mrb[0].mxu0
  %v831 = vadd.f32 0.0, %v830
  %v832 = vpop.f32.mrb[0].mxu0
  %833 = vmatprep.mubr.f32.mxu0 0.0
  %834 = vmatmul.mubr.f32.gmra.mrb[0].mxu0 %v426
  %v835 = vpop.f32.mrb[0].mxu0
  %v836 = vadd.f32 0.0, %v835
  %v837 = vpop.f32.mrb[0].mxu0
  %838 = vmatprep.mubr.f32.mxu0 0.0
  %839 = vmatmul.mubr.f32.gmra.mrb[0].mxu0 %v429
  %v840 = vpop.f32.mrb[0].mxu0
  %v841 = vadd.f32 0.0, %v840
  %v842 = vpop.f32.mrb[0].mxu0
  %843 = vmatprep.mubr.f32.mxu0 0.0
  %844 = vmatmul.mubr.f32.gmra.mrb[0].mxu0 %v432
  %v845 = vpop.f32.mrb[0].mxu0
  %v846 = vadd.f32 0.0, %v845
  %v847 = vpop.f32.mrb[0].mxu0
  %848 = vmatprep.mubr.f32.mxu0 0.0
  %849 = vmatmul.mubr.f32.gmra.mrb[0].mxu0 %v435
  %v850 = vpop.f32.mrb[0].mxu0
  %v851 = vadd.f32 0.0, %v850
  %v852 = vpop.f32.mrb[0].mxu0
  %853 = vmatprep.mubr.f32.mxu0 0.0
  %854 = vmatmul.mubr.f32.gmra.mrb[0].mxu0 %v438
  %v855 = vpop.f32.mrb[0].mxu0
  %v856 = vadd.f32 0.0, %v855
  %v857 = vpop.f32.mrb[0].mxu0
  %858 = vmatprep.mubr.f32.mxu0 0.0
  %859 = vmatmul.mubr.f32.gmra.mrb[0].mxu0 %v441
  %v860 = vpop.f32.mrb[0].mxu0
  %v861 = vadd.f32 0.0, %v860
  %v862 = vpop.f32.mrb[0].mxu0
  %863 = vmatprep.mubr.f32.mxu0 0.0
  %864 = vmatmul.mubr.f32.gmra.mrb[0].mxu0 %v444
  %v865 = vpop.f32.mrb[0].mxu0
  %v866 = vadd.f32 0.0, %v865
  %v867 = vpop.f32.mrb[0].mxu0
  %868 = vmatprep.mubr.f32.mxu0 0.0
  %869 = vmatmul.mubr.f32.gmra.mrb[0].mxu0 %v447
  %v870 = vpop.f32.mrb[0].mxu0
  %v871 = vadd.f32 0.0, %v870
  %v872 = vpop.f32.mrb[0].mxu0
  %873 = vmatprep.mubr.f32.mxu0 0.0
  %874 = vmatmul.mubr.f32.gmra.mrb[0].mxu0 %v450
  %v875 = vpop.f32.mrb[0].mxu0
  %v876 = vadd.f32 0.0, %v875
  %v877 = vpop.f32.mrb[0].mxu0
  %878 = vmatprep.mubr.f32.mxu0 0.0
  %879 = vmatmul.mubr.f32.gmra.mrb[0].mxu0 %v453
  %v880 = vpop.f32.mrb[0].mxu0
  %v881 = vadd.f32 0.0, %v880
  %v882 = vpop.f32.mrb[0].mxu0
  %883 = vmatprep.mubr.f32.mxu0 0.0
  %884 = vmatmul.mubr.f32.gmra.mrb[0].mxu0 %v456
  %v885 = vpop.f32.mrb[0].mxu0
  %v886 = vadd.f32 0.0, %v885
  %v887 = vpop.f32.mrb[0].mxu0
  %888 = vmatprep.mubr.f32.mxu0 0.0
  %889 = vmatmul.mubr.f32.gmra.mrb[0].mxu0 %v459
  %v890 = vpop.f32.mrb[0].mxu0
  %v891 = vadd.f32 0.0, %v890
  %v892 = vpop.f32.mrb[0].mxu0
  %893 = vmatprep.mubr.f32.mxu0 0.0
  %894 = vmatmul.mubr.f32.gmra.mrb[0].mxu0 %v462
  %v895 = vpop.f32.mrb[0].mxu0
  %v896 = vadd.f32 0.0, %v895
  %v897 = vpop.f32.mrb[0].mxu0
  %898 = vmatprep.mubr.f32.mxu0 0.0
  %899 = vmatmul.mubr.f32.gmra.mrb[0].mxu0 %v465
  %v900 = vpop.f32.mrb[0].mxu0
  %v901 = vadd.f32 0.0, %v900
  %v902 = vpop.f32.mrb[0].mxu0
  %903 = vmatprep.mubr.f32.mxu0 0.0
  %904 = vmatmul.mubr.f32.gmra.mrb[0].mxu0 %v468
  %v905 = vpop.f32.mrb[0].mxu0
  %v906 = vadd.f32 0.0, %v905
  %v907 = vpop.f32.mrb[0].mxu0
  %908 = vmatprep.mubr.f32.mxu0 0.0
  %909 = vmatmul.mubr.f32.gmra.mrb[0].mxu0 %v471
  %v910 = vpop.f32.mrb[0].mxu0
  %v911 = vadd.f32 0.0, %v910
  %v912 = vpop.f32.mrb[0].mxu0
  %913 = vmatprep.mubr.f32.mxu0 0.0
  %914 = vmatmul.mubr.f32.gmra.mrb[0].mxu0 %v474
  %v915 = vpop.f32.mrb[0].mxu0
  %v916 = vadd.f32 0.0, %v915
  %v917 = vpop.f32.mrb[0].mxu0
  %918 = vmatprep.mubr.f32.mxu0 0.0
  %919 = vmatmul.mubr.f32.gmra.mrb[0].mxu0 %v477
  %v920 = vpop.f32.mrb[0].mxu0
  %v921 = vadd.f32 0.0, %v920
  %v922 = vpop.f32.mrb[0].mxu0
  %923 = vmatprep.mubr.f32.mxu0 0.0
  %924 = vmatmul.mubr.f32.gmra.mrb[0].mxu0 %v480
  %v925 = vpop.f32.mrb[0].mxu0
  %v926 = vadd.f32 0.0, %v925
  %v927 = vpop.f32.mrb[0].mxu0
  %928 = vmatprep.mubr.f32.mxu0 0.0
  %929 = vmatmul.mubr.f32.gmra.mrb[0].mxu0 %v483
  %v930 = vpop.f32.mrb[0].mxu0
  %v931 = vadd.f32 0.0, %v930
  %v932 = vpop.f32.mrb[0].mxu0
  %933 = vmatprep.mubr.f32.mxu0 0.0
  %934 = vmatmul.mubr.f32.gmra.mrb[0].mxu0 %v486
  %v935 = vpop.f32.mrb[0].mxu0
  %v936 = vadd.f32 0.0, %v935
  %v937 = vpop.f32.mrb[0].mxu0
  %938 = vmatprep.mubr.f32.mxu0 0.0
  %939 = vmatmul.mubr.f32.gmra.mrb[0].mxu0 %v489
  %v940 = vpop.f32.mrb[0].mxu0
  %v941 = vadd.f32 0.0, %v940
  %v942 = vpop.f32.mrb[0].mxu0
  %943 = vmatprep.mubr.f32.mxu0 0.0
  %944 = vmatmul.mubr.f32.gmra.mrb[0].mxu0 %v492
  %v945 = vpop.f32.mrb[0].mxu0
  %v946 = vadd.f32 0.0, %v945
  %v947 = vpop.f32.mrb[0].mxu0
  %948 = vmatprep.mubr.f32.mxu0 0.0
  %949 = vmatmul.mubr.f32.gmra.mrb[0].mxu0 %v495
  %v950 = vpop.f32.mrb[0].mxu0
  %v951 = vadd.f32 0.0, %v950
  %v952 = vpop.f32.mrb[0].mxu0
  %953 = vmatprep.mubr.f32.mxu0 0.0
  %954 = vmatmul.mubr.f32.gmra.mrb[0].mxu0 %v498
  %v955 = vpop.f32.mrb[0].mxu0
  %v956 = vadd.f32 0.0, %v955
  %v957 = vpop.f32.mrb[0].mxu0
  %958 = vmatprep.mubr.f32.mxu0 0.0
  %959 = vmatmul.mubr.f32.gmra.mrb[0].mxu0 %v501
  %v960 = vpop.f32.mrb[0].mxu0
  %v961 = vadd.f32 0.0, %v960
  %v962 = vpop.f32.mrb[0].mxu0
  %963 = vmatprep.mubr.f32.mxu0 0.0
  %964 = vmatmul.mubr.f32.gmra.mrb[0].mxu0 %v504
  %v965 = vpop.f32.mrb[0].mxu0
  %v966 = vadd.f32 0.0, %v965
  %v967 = vpop.f32.mrb[0].mxu0
  %968 = vmatprep.mubr.f32.mxu0 0.0
  %969 = vmatmul.mubr.f32.gmra.mrb[0].mxu0 %v507
  %v970 = vpop.f32.mrb[0].mxu0
  %v971 = vadd.f32 0.0, %v970
  %v972 = vpop.f32.mrb[0].mxu0
  %973 = vdwg.mxu0
  %v974 = vld [vmem:[%s4] sm:$0xff]
  %v975 = vld [vmem:[%s4 + $0x8] sm:$0xff]
  %v976 = vld [vmem:[%s4 + $0x10] sm:$0xff]
  %v977 = vld [vmem:[%s4 + $0x18] sm:$0xff]
  %v978 = vld [vmem:[%s4 + $0x20] sm:$0xff]
  %v979 = vld [vmem:[%s4 + $0x28] sm:$0xff]
  %v980 = vld [vmem:[%s4 + $0x30] sm:$0xff]
  %v981 = vld [vmem:[%s4 + $0x38] sm:$0xff]
  %v982 = vld [vmem:[%s4 + $0x40] sm:$0xff]
  %v983 = vld [vmem:[%s4 + $0x48] sm:$0xff]
  %v984 = vld [vmem:[%s4 + $0x50] sm:$0xff]
  %v985 = vld [vmem:[%s4 + $0x58] sm:$0xff]
  %v986 = vld [vmem:[%s4 + $0x60] sm:$0xff]
  %v987 = vld [vmem:[%s4 + $0x68] sm:$0xff]
  %v988 = vld [vmem:[%s4 + $0x70] sm:$0xff]
  %v989 = vld [vmem:[%s4 + $0x78] sm:$0xff]
  %v990 = vld [vmem:[%s4 + $0x80] sm:$0xff]
  %v991 = vld [vmem:[%s4 + $0x88] sm:$0xff]
  %v992 = vld [vmem:[%s4 + $0x90] sm:$0xff]
  %v993 = vld [vmem:[%s4 + $0x98] sm:$0xff]
  %v994 = vld [vmem:[%s4 + $0xa0] sm:$0xff]
  %v995 = vld [vmem:[%s4 + $0xa8] sm:$0xff]
  %v996 = vld [vmem:[%s4 + $0xb0] sm:$0xff]
  %v997 = vld [vmem:[%s4 + $0xb8] sm:$0xff]
  %v998 = vld [vmem:[%s4 + $0xc0] sm:$0xff]
  %v999 = vld [vmem:[%s4 + $0xc8] sm:$0xff]
  %v1000 = vld [vmem:[%s4 + $0xd0] sm:$0xff]
  %v1001 = vld [vmem:[%s4 + $0xd8] sm:$0xff]
  %v1002 = vld [vmem:[%s4 + $0xe0] sm:$0xff]
  %v1003 = vld [vmem:[%s4 + $0xe8] sm:$0xff]
  %v1004 = vld [vmem:[%s4 + $0xf0] sm:$0xff]
  %v1005 = vld [vmem:[%s4 + $0xf8] sm:$0xff]
  %v1006 = vld [vmem:[%s4 + $0x100] sm:$0xff]
  %v1007 = vld [vmem:[%s4 + $0x108] sm:$0xff]
  %v1008 = vld [vmem:[%s4 + $0x110] sm:$0xff]
  %v1009 = vld [vmem:[%s4 + $0x118] sm:$0xff]
  %v1010 = vld [vmem:[%s4 + $0x120] sm:$0xff]
  %v1011 = vld [vmem:[%s4 + $0x128] sm:$0xff]
  %v1012 = vld [vmem:[%s4 + $0x130] sm:$0xff]
  %v1013 = vld [vmem:[%s4 + $0x138] sm:$0xff]
  %v1014 = vld [vmem:[%s4 + $0x140] sm:$0xff]
  %v1015 = vld [vmem:[%s4 + $0x148] sm:$0xff]
  %v1016 = vld [vmem:[%s4 + $0x150] sm:$0xff]
  %v1017 = vld [vmem:[%s4 + $0x158] sm:$0xff]
  %v1018 = vld [vmem:[%s4 + $0x160] sm:$0xff]
  %v1019 = vld [vmem:[%s4 + $0x168] sm:$0xff]
  %v1020 = vld [vmem:[%s4 + $0x170] sm:$0xff]
  %v1021 = vld [vmem:[%s4 + $0x178] sm:$0xff]
  %v1022 = vld [vmem:[%s4 + $0x180] sm:$0xff]
  %v1023 = vld [vmem:[%s4 + $0x188] sm:$0xff]
  %v1024 = vld [vmem:[%s4 + $0x190] sm:$0xff]
  %v1025 = vld [vmem:[%s4 + $0x198] sm:$0xff]
  %v1026 = vld [vmem:[%s4 + $0x1a0] sm:$0xff]
  %v1027 = vld [vmem:[%s4 + $0x1a8] sm:$0xff]
  %v1028 = vld [vmem:[%s4 + $0x1b0] sm:$0xff]
  %v1029 = vld [vmem:[%s4 + $0x1b8] sm:$0xff]
  %v1030 = vld [vmem:[%s4 + $0x1c0] sm:$0xff]
  %v1031 = vld [vmem:[%s4 + $0x1c8] sm:$0xff]
  %v1032 = vld [vmem:[%s4 + $0x1d0] sm:$0xff]
  %v1033 = vld [vmem:[%s4 + $0x1d8] sm:$0xff]
  %v1034 = vld [vmem:[%s4 + $0x1e0] sm:$0xff]
  %v1035 = vld [vmem:[%s4 + $0x1e8] sm:$0xff]
  %v1036 = vld [vmem:[%s4 + $0x1f0] sm:$0xff]
  %v1037 = vld [vmem:[%s4 + $0x1f8] sm:$0xff]
  %v1038 = vld [vmem:[%s4 + $0x200] sm:$0xff]
  %v1039 = vld [vmem:[%s4 + $0x208] sm:$0xff]
  %v1040 = vld [vmem:[%s4 + $0x210] sm:$0xff]
  %v1041 = vld [vmem:[%s4 + $0x218] sm:$0xff]
  %v1042 = vld [vmem:[%s4 + $0x220] sm:$0xff]
  %v1043 = vld [vmem:[%s4 + $0x228] sm:$0xff]
  %v1044 = vld [vmem:[%s4 + $0x230] sm:$0xff]
  %v1045 = vld [vmem:[%s4 + $0x238] sm:$0xff]
  %v1046 = vld [vmem:[%s4 + $0x240] sm:$0xff]
  %v1047 = vld [vmem:[%s4 + $0x248] sm:$0xff]
  %v1048 = vld [vmem:[%s4 + $0x250] sm:$0xff]
  %v1049 = vld [vmem:[%s4 + $0x258] sm:$0xff]
  %v1050 = vld [vmem:[%s4 + $0x260] sm:$0xff]
  %v1051 = vld [vmem:[%s4 + $0x268] sm:$0xff]
  %v1052 = vld [vmem:[%s4 + $0x270] sm:$0xff]
  %v1053 = vld [vmem:[%s4 + $0x278] sm:$0xff]
  %v1054 = vmul.f32 %v974, %v576
  %v1055 = vmul.f32 %v975, %v581
  %v1056 = vmul.f32 %v976, %v586
  %v1057 = vmul.f32 %v977, %v591
  %v1058 = vmul.f32 %v978, %v596
  %v1059 = vmul.f32 %v979, %v601
  %v1060 = vmul.f32 %v980, %v606
  %v1061 = vmul.f32 %v981, %v611
  %v1062 = vmul.f32 %v982, %v616
  %v1063 = vmul.f32 %v983, %v621
  %v1064 = vmul.f32 %v984, %v626
  %v1065 = vmul.f32 %v985, %v631
  %v1066 = vmul.f32 %v986, %v636
  %v1067 = vmul.f32 %v987, %v641
  %v1068 = vmul.f32 %v988, %v646
  %v1069 = vmul.f32 %v989, %v651
  %v1070 = vmul.f32 %v990, %v656
  %v1071 = vmul.f32 %v991, %v661
  %v1072 = vmul.f32 %v992, %v666
  %v1073 = vmul.f32 %v993, %v671
  %v1074 = vmul.f32 %v994, %v676
  %v1075 = vmul.f32 %v995, %v681
  %v1076 = vmul.f32 %v996, %v686
  %v1077 = vmul.f32 %v997, %v691
  %v1078 = vmul.f32 %v998, %v696
  %v1079 = vmul.f32 %v999, %v701
  %v1080 = vmul.f32 %v1000, %v706
  %v1081 = vmul.f32 %v1001, %v711
  %v1082 = vmul.f32 %v1002, %v716
  %v1083 = vmul.f32 %v1003, %v721
  %v1084 = vmul.f32 %v1004, %v726
  %v1085 = vmul.f32 %v1005, %v731
  %v1086 = vmul.f32 %v1006, %v736
  %v1087 = vmul.f32 %v1007, %v741
  %v1088 = vmul.f32 %v1008, %v746
  %v1089 = vmul.f32 %v1009, %v751
  %v1090 = vmul.f32 %v1010, %v756
  %v1091 = vmul.f32 %v1011, %v761
  %v1092 = vmul.f32 %v1012, %v766
  %v1093 = vmul.f32 %v1013, %v771
  %v1094 = vmul.f32 %v1014, %v776
  %v1095 = vmul.f32 %v1015, %v781
  %v1096 = vmul.f32 %v1016, %v786
  %v1097 = vmul.f32 %v1017, %v791
  %v1098 = vmul.f32 %v1018, %v796
  %v1099 = vmul.f32 %v1019, %v801
  %v1100 = vmul.f32 %v1020, %v806
  %v1101 = vmul.f32 %v1021, %v811
  %v1102 = vmul.f32 %v1022, %v816
  %v1103 = vmul.f32 %v1023, %v821
  %v1104 = vmul.f32 %v1024, %v826
  %v1105 = vmul.f32 %v1025, %v831
  %v1106 = vmul.f32 %v1026, %v836
  %v1107 = vmul.f32 %v1027, %v841
  %v1108 = vmul.f32 %v1028, %v846
  %v1109 = vmul.f32 %v1029, %v851
  %v1110 = vmul.f32 %v1030, %v856
  %v1111 = vmul.f32 %v1031, %v861
  %v1112 = vmul.f32 %v1032, %v866
  %v1113 = vmul.f32 %v1033, %v871
  %v1114 = vmul.f32 %v1034, %v876
  %v1115 = vmul.f32 %v1035, %v881
  %v1116 = vmul.f32 %v1036, %v886
  %v1117 = vmul.f32 %v1037, %v891
  %v1118 = vmul.f32 %v1038, %v896
  %v1119 = vmul.f32 %v1039, %v901
  %v1120 = vmul.f32 %v1040, %v906
  %v1121 = vmul.f32 %v1041, %v911
  %v1122 = vmul.f32 %v1042, %v916
  %v1123 = vmul.f32 %v1043, %v921
  %v1124 = vmul.f32 %v1044, %v926
  %v1125 = vmul.f32 %v1045, %v931
  %v1126 = vmul.f32 %v1046, %v936
  %v1127 = vmul.f32 %v1047, %v941
  %v1128 = vmul.f32 %v1048, %v946
  %v1129 = vmul.f32 %v1049, %v951
  %v1130 = vmul.f32 %v1050, %v956
  %v1131 = vmul.f32 %v1051, %v961
  %v1132 = vmul.f32 %v1052, %v966
  %v1133 = vmul.f32 %v1053, %v971
  %v1134 = vld [vmem:[%s1] sm:$0xff]
  %v1135 = vld [vmem:[%s1 + $0x8] sm:$0xff]
  %v1136 = vld [vmem:[%s1 + $0x10] sm:$0xff]
  %v1137 = vld [vmem:[%s1 + $0x18] sm:$0xff]
  %v1138 = vld [vmem:[%s1 + $0x20] sm:$0xff]
  %v1139 = vld [vmem:[%s1 + $0x28] sm:$0xff]
  %v1140 = vld [vmem:[%s1 + $0x30] sm:$0xff]
  %v1141 = vld [vmem:[%s1 + $0x38] sm:$0xff]
  %v1142 = vld [vmem:[%s1 + $0x40] sm:$0xff]
  %v1143 = vld [vmem:[%s1 + $0x48] sm:$0xff]
  %v1144 = vld [vmem:[%s1 + $0x50] sm:$0xff]
  %v1145 = vld [vmem:[%s1 + $0x58] sm:$0xff]
  %v1146 = vld [vmem:[%s1 + $0x60] sm:$0xff]
  %v1147 = vld [vmem:[%s1 + $0x68] sm:$0xff]
  %v1148 = vld [vmem:[%s1 + $0x70] sm:$0xff]
  %v1149 = vld [vmem:[%s1 + $0x78] sm:$0xff]
  %v1150 = vld [vmem:[%s1 + $0x80] sm:$0xff]
  %v1151 = vld [vmem:[%s1 + $0x88] sm:$0xff]
  %v1152 = vld [vmem:[%s1 + $0x90] sm:$0xff]
  %v1153 = vld [vmem:[%s1 + $0x98] sm:$0xff]
  %v1154 = vld [vmem:[%s1 + $0xa0] sm:$0xff]
  %v1155 = vld [vmem:[%s1 + $0xa8] sm:$0xff]
  %v1156 = vld [vmem:[%s1 + $0xb0] sm:$0xff]
  %v1157 = vld [vmem:[%s1 + $0xb8] sm:$0xff]
  %v1158 = vld [vmem:[%s1 + $0xc0] sm:$0xff]
  %v1159 = vld [vmem:[%s1 + $0xc8] sm:$0xff]
  %v1160 = vld [vmem:[%s1 + $0xd0] sm:$0xff]
  %v1161 = vld [vmem:[%s1 + $0xd8] sm:$0xff]
  %v1162 = vld [vmem:[%s1 + $0xe0] sm:$0xff]
  %v1163 = vld [vmem:[%s1 + $0xe8] sm:$0xff]
  %v1164 = vld [vmem:[%s1 + $0xf0] sm:$0xff]
  %v1165 = vld [vmem:[%s1 + $0xf8] sm:$0xff]
  %v1166 = vld [vmem:[%s1 + $0x100] sm:$0xff]
  %v1167 = vld [vmem:[%s1 + $0x108] sm:$0xff]
  %v1168 = vld [vmem:[%s1 + $0x110] sm:$0xff]
  %v1169 = vld [vmem:[%s1 + $0x118] sm:$0xff]
  %v1170 = vld [vmem:[%s1 + $0x120] sm:$0xff]
  %v1171 = vld [vmem:[%s1 + $0x128] sm:$0xff]
  %v1172 = vld [vmem:[%s1 + $0x130] sm:$0xff]
  %v1173 = vld [vmem:[%s1 + $0x138] sm:$0xff]
  %v1174 = vld [vmem:[%s5] sm:$0xff]
  %v1175 = vld [vmem:[%s5 + $0x8] sm:$0xff]
  %v1176 = vld [vmem:[%s5 + $0x10] sm:$0xff]
  %v1177 = vld [vmem:[%s5 + $0x18] sm:$0xff]
  %v1178 = vld [vmem:[%s5 + $0x20] sm:$0xff]
  %v1179 = vld [vmem:[%s5 + $0x28] sm:$0xff]
  %v1180 = vld [vmem:[%s5 + $0x30] sm:$0xff]
  %v1181 = vld [vmem:[%s5 + $0x38] sm:$0xff]
  %1182 = vmatprep.subr.mxu0 0.0
  %1183 = vmatpush1.msra.mxu0 %v1054
  %1184 = vmatprep.subr.mxu0 0.0
  %1185 = vmatpush1.msra.mxu0 %v1055
  %1186 = vmatprep.subr.mxu0 0.0
  %1187 = vmatpush1.msra.mxu0 %v1056
  %1188 = vmatprep.subr.mxu0 0.0
  %1189 = vmatpush1.msra.mxu0 %v1057
  %1190 = vmatprep.subr.mxu0 0.0
  %1191 = vmatpush1.msra.mxu0 %v1058
  %1192 = vmatprep.subr.mxu0 0.0
  %1193 = vmatpush1.msra.mxu0 %v1059
  %1194 = vmatprep.subr.mxu0 0.0
  %1195 = vmatpush1.msra.mxu0 %v1060
  %1196 = vmatprep.subr.mxu0 0.0
  %1197 = vmatpush1.msra.mxu0 %v1061
  %1198 = vmatprep.subr.mxu0 0.0
  %1199 = vmatpush1.msra.mxu0 %v1062
  %1200 = vmatprep.subr.mxu0 0.0
  %1201 = vmatpush1.msra.mxu0 %v1063
  %1202 = vmatprep.subr.mxu0 0.0
  %1203 = vmatpush1.msra.mxu0 %v1064
  %1204 = vmatprep.subr.mxu0 0.0
  %1205 = vmatpush1.msra.mxu0 %v1065
  %1206 = vmatprep.subr.mxu0 0.0
  %1207 = vmatpush1.msra.mxu0 %v1066
  %1208 = vmatprep.subr.mxu0 0.0
  %1209 = vmatpush1.msra.mxu0 %v1067
  %1210 = vmatprep.subr.mxu0 0.0
  %1211 = vmatpush1.msra.mxu0 %v1068
  %1212 = vmatprep.subr.mxu0 0.0
  %1213 = vmatpush1.msra.mxu0 %v1069
  %1214 = vmatprep.subr.mxu0 0.0
  %1215 = vmatpush1.msra.mxu0 %v1070
  %1216 = vmatprep.subr.mxu0 0.0
  %1217 = vmatpush1.msra.mxu0 %v1071
  %1218 = vmatprep.subr.mxu0 0.0
  %1219 = vmatpush1.msra.mxu0 %v1072
  %1220 = vmatprep.subr.mxu0 0.0
  %1221 = vmatpush1.msra.mxu0 %v1073
  %1222 = vmatprep.subr.mxu0 0.0
  %1223 = vmatpush1.msra.mxu0 %v1074
  %1224 = vmatprep.subr.mxu0 0.0
  %1225 = vmatpush1.msra.mxu0 %v1075
  %1226 = vmatprep.subr.mxu0 0.0
  %1227 = vmatpush1.msra.mxu0 %v1076
  %1228 = vmatprep.subr.mxu0 0.0
  %1229 = vmatpush1.msra.mxu0 %v1077
  %1230 = vmatprep.subr.mxu0 0.0
  %1231 = vmatpush1.msra.mxu0 %v1078
  %1232 = vmatprep.subr.mxu0 0.0
  %1233 = vmatpush1.msra.mxu0 %v1079
  %1234 = vmatprep.subr.mxu0 0.0
  %1235 = vmatpush1.msra.mxu0 %v1080
  %1236 = vmatprep.subr.mxu0 0.0
  %1237 = vmatpush1.msra.mxu0 %v1081
  %1238 = vmatprep.subr.mxu0 0.0
  %1239 = vmatpush1.msra.mxu0 %v1082
  %1240 = vmatprep.subr.mxu0 0.0
  %1241 = vmatpush1.msra.mxu0 %v1083
  %1242 = vmatprep.subr.mxu0 0.0
  %1243 = vmatpush1.msra.mxu0 %v1084
  %1244 = vmatprep.subr.mxu0 0.0
  %1245 = vmatpush1.msra.mxu0 %v1085
  %1246 = vmatprep.mubr.f32.mxu0 %v1135
  %1247 = vmatmul.mubr.f32.gmra.mrb[0].mxu0 %v1134
  %v1248 = vpop.f32.mrb[0].mxu0
  %v1249 = vadd.f32 %v1174, %v1248
  %v1250 = vpop.f32.mrb[0].mxu0
  %1251 = vmatprep.mubr.f32.mxu0 %v1140
  %1252 = vmatmul.mubr.f32.gmra.mrb[0].mxu0 %v1139
  %v1253 = vpop.f32.mrb[0].mxu0
  %v1254 = vadd.f32 %v1175, %v1253
  %v1255 = vpop.f32.mrb[0].mxu0
  %1256 = vmatprep.mubr.f32.mxu0 %v1145
  %1257 = vmatmul.mubr.f32.gmra.mrb[0].mxu0 %v1144
  %v1258 = vpop.f32.mrb[0].mxu0
  %v1259 = vadd.f32 %v1176, %v1258
  %v1260 = vpop.f32.mrb[0].mxu0
  %1261 = vmatprep.mubr.f32.mxu0 %v1150
  %1262 = vmatmul.mubr.f32.gmra.mrb[0].mxu0 %v1149
  %v1263 = vpop.f32.mrb[0].mxu0
  %v1264 = vadd.f32 %v1177, %v1263
  %v1265 = vpop.f32.mrb[0].mxu0
  %1266 = vmatprep.mubr.f32.mxu0 %v1155
  %1267 = vmatmul.mubr.f32.gmra.mrb[0].mxu0 %v1154
  %v1268 = vpop.f32.mrb[0].mxu0
  %v1269 = vadd.f32 %v1178, %v1268
  %v1270 = vpop.f32.mrb[0].mxu0
  %1271 = vmatprep.mubr.f32.mxu0 %v1160
  %1272 = vmatmul.mubr.f32.gmra.mrb[0].mxu0 %v1159
  %v1273 = vpop.f32.mrb[0].mxu0
  %v1274 = vadd.f32 %v1179, %v1273
  %v1275 = vpop.f32.mrb[0].mxu0
  %1276 = vmatprep.mubr.f32.mxu0 %v1165
  %1277 = vmatmul.mubr.f32.gmra.mrb[0].mxu0 %v1164
  %v1278 = vpop.f32.mrb[0].mxu0
  %v1279 = vadd.f32 %v1180, %v1278
  %v1280 = vpop.f32.mrb[0].mxu0
  %1281 = vmatprep.mubr.f32.mxu0 %v1170
  %1282 = vmatmul.mubr.f32.gmra.mrb[0].mxu0 %v1169
  %v1283 = vpop.f32.mrb[0].mxu0
  %v1284 = vadd.f32 %v1181, %v1283
  %v1285 = vpop.f32.mrb[0].mxu0
  %1286 = vdwg.mxu0
  %1287 = vmatprep.subr.mxu0 0.0
  %1288 = vmatpush1.msra.mxu0 %v1086
  %1289 = vmatprep.subr.mxu0 0.0
  %1290 = vmatpush1.msra.mxu0 %v1087
  %1291 = vmatprep.subr.mxu0 0.0
  %1292 = vmatpush1.msra.mxu0 %v1088
  %1293 = vmatprep.subr.mxu0 0.0
  %1294 = vmatpush1.msra.mxu0 %v1089
  %1295 = vmatprep.subr.mxu0 0.0
  %1296 = vmatpush1.msra.mxu0 %v1090
  %1297 = vmatprep.subr.mxu0 0.0
  %1298 = vmatpush1.msra.mxu0 %v1091
  %1299 = vmatprep.subr.mxu0 0.0
  %1300 = vmatpush1.msra.mxu0 %v1092
  %1301 = vmatprep.subr.mxu0 0.0
  %1302 = vmatpush1.msra.mxu0 %v1093
  %1303 = vmatprep.subr.mxu0 0.0
  %1304 = vmatpush1.msra.mxu0 %v1094
  %1305 = vmatprep.subr.mxu0 0.0
  %1306 = vmatpush1.msra.mxu0 %v1095
  %1307 = vmatprep.subr.mxu0 0.0
  %1308 = vmatpush1.msra.mxu0 %v1096
  %1309 = vmatprep.subr.mxu0 0.0
  %1310 = vmatpush1.msra.mxu0 %v1097
  %1311 = vmatprep.subr.mxu0 0.0
  %1312 = vmatpush1.msra.mxu0 %v1098
  %1313 = vmatprep.subr.mxu0 0.0
  %1314 = vmatpush1.msra.mxu0 %v1099
  %1315 = vmatprep.subr.mxu0 0.0
  %1316 = vmatpush1.msra.mxu0 %v1100
  %1317 = vmatprep.subr.mxu0 0.0
  %1318 = vmatpush1.msra.mxu0 %v1101
  %1319 = vmatprep.subr.mxu0 0.0
  %1320 = vmatpush1.msra.mxu0 %v1102
  %1321 = vmatprep.subr.mxu0 0.0
  %1322 = vmatpush1.msra.mxu0 %v1103
  %1323 = vmatprep.subr.mxu0 0.0
  %1324 = vmatpush1.msra.mxu0 %v1104
  %1325 = vmatprep.subr.mxu0 0.0
  %1326 = vmatpush1.msra.mxu0 %v1105
  %1327 = vmatprep.subr.mxu0 0.0
  %1328 = vmatpush1.msra.mxu0 %v1106
  %1329 = vmatprep.subr.mxu0 0.0
  %1330 = vmatpush1.msra.mxu0 %v1107
  %1331 = vmatprep.subr.mxu0 0.0
  %1332 = vmatpush1.msra.mxu0 %v1108
  %1333 = vmatprep.subr.mxu0 0.0
  %1334 = vmatpush1.msra.mxu0 %v1109
  %1335 = vmatprep.subr.mxu0 0.0
  %1336 = vmatpush1.msra.mxu0 %v1110
  %1337 = vmatprep.subr.mxu0 0.0
  %1338 = vmatpush1.msra.mxu0 %v1111
  %1339 = vmatprep.subr.mxu0 0.0
  %1340 = vmatpush1.msra.mxu0 %v1112
  %1341 = vmatprep.subr.mxu0 0.0
  %1342 = vmatpush1.msra.mxu0 %v1113
  %1343 = vmatprep.subr.mxu0 0.0
  %1344 = vmatpush1.msra.mxu0 %v1114
  %1345 = vmatprep.subr.mxu0 0.0
  %1346 = vmatpush1.msra.mxu0 %v1115
  %1347 = vmatprep.subr.mxu0 0.0
  %1348 = vmatpush1.msra.mxu0 %v1116
  %1349 = vmatprep.subr.mxu0 0.0
  %1350 = vmatpush1.msra.mxu0 %v1117
  %1351 = vmatprep.mubr.f32.mxu0 %v1137
  %1352 = vmatmul.mubr.f32.gmra.mrb[0].mxu0 %v1136
  %v1353 = vpop.f32.mrb[0].mxu0
  %v1354 = vadd.f32 %v1249, %v1353
  %v1355 = vpop.f32.mrb[0].mxu0
  %1356 = vmatprep.mubr.f32.mxu0 %v1142
  %1357 = vmatmul.mubr.f32.gmra.mrb[0].mxu0 %v1141
  %v1358 = vpop.f32.mrb[0].mxu0
  %v1359 = vadd.f32 %v1254, %v1358
  %v1360 = vpop.f32.mrb[0].mxu0
  %1361 = vmatprep.mubr.f32.mxu0 %v1147
  %1362 = vmatmul.mubr.f32.gmra.mrb[0].mxu0 %v1146
  %v1363 = vpop.f32.mrb[0].mxu0
  %v1364 = vadd.f32 %v1259, %v1363
  %v1365 = vpop.f32.mrb[0].mxu0
  %1366 = vmatprep.mubr.f32.mxu0 %v1152
  %1367 = vmatmul.mubr.f32.gmra.mrb[0].mxu0 %v1151
  %v1368 = vpop.f32.mrb[0].mxu0
  %v1369 = vadd.f32 %v1264, %v1368
  %v1370 = vpop.f32.mrb[0].mxu0
  %1371 = vmatprep.mubr.f32.mxu0 %v1157
  %1372 = vmatmul.mubr.f32.gmra.mrb[0].mxu0 %v1156
  %v1373 = vpop.f32.mrb[0].mxu0
  %v1374 = vadd.f32 %v1269, %v1373
  %v1375 = vpop.f32.mrb[0].mxu0
  %1376 = vmatprep.mubr.f32.mxu0 %v1162
  %1377 = vmatmul.mubr.f32.gmra.mrb[0].mxu0 %v1161
  %v1378 = vpop.f32.mrb[0].mxu0
  %v1379 = vadd.f32 %v1274, %v1378
  %v1380 = vpop.f32.mrb[0].mxu0
  %1381 = vmatprep.mubr.f32.mxu0 %v1167
  %1382 = vmatmul.mubr.f32.gmra.mrb[0].mxu0 %v1166
  %v1383 = vpop.f32.mrb[0].mxu0
  %v1384 = vadd.f32 %v1279, %v1383
  %v1385 = vpop.f32.mrb[0].mxu0
  %1386 = vmatprep.mubr.f32.mxu0 %v1172
  %1387 = vmatmul.mubr.f32.gmra.mrb[0].mxu0 %v1171
  %v1388 = vpop.f32.mrb[0].mxu0
  %v1389 = vadd.f32 %v1284, %v1388
  %v1390 = vpop.f32.mrb[0].mxu0
  %1391 = vdwg.mxu0
  %1392 = vmatprep.subr.mxu0 0.0
  %1393 = vmatpush1.msra.mxu0 %v1118
  %1394 = vmatprep.subr.mxu0 0.0
  %1395 = vmatpush1.msra.mxu0 %v1119
  %1396 = vmatprep.subr.mxu0 0.0
  %1397 = vmatpush1.msra.mxu0 %v1120
  %1398 = vmatprep.subr.mxu0 0.0
  %1399 = vmatpush1.msra.mxu0 %v1121
  %1400 = vmatprep.subr.mxu0 0.0
  %1401 = vmatpush1.msra.mxu0 %v1122
  %1402 = vmatprep.subr.mxu0 0.0
  %1403 = vmatpush1.msra.mxu0 %v1123
  %1404 = vmatprep.subr.mxu0 0.0
  %1405 = vmatpush1.msra.mxu0 %v1124
  %1406 = vmatprep.subr.mxu0 0.0
  %1407 = vmatpush1.msra.mxu0 %v1125
  %1408 = vmatprep.subr.mxu0 0.0
  %1409 = vmatpush1.msra.mxu0 %v1126
  %1410 = vmatprep.subr.mxu0 0.0
  %1411 = vmatpush1.msra.mxu0 %v1127
  %1412 = vmatprep.subr.mxu0 0.0
  %1413 = vmatpush1.msra.mxu0 %v1128
  %1414 = vmatprep.subr.mxu0 0.0
  %1415 = vmatpush1.msra.mxu0 %v1129
  %1416 = vmatprep.subr.mxu0 0.0
  %1417 = vmatpush1.msra.mxu0 %v1130
  %1418 = vmatprep.subr.mxu0 0.0
  %1419 = vmatpush1.msra.mxu0 %v1131
  %1420 = vmatprep.subr.mxu0 0.0
  %1421 = vmatpush1.msra.mxu0 %v1132
  %1422 = vmatprep.subr.mxu0 0.0
  %1423 = vmatpush1.msra.mxu0 %v1133
  %1424 = vmatprep.subr.mxu0 0.0
  %1425 = vmatpush1.msra.mxu0 0.0
  %1426 = vmatprep.subr.mxu0 0.0
  %1427 = vmatpush1.msra.mxu0 0.0
  %1428 = vmatprep.subr.mxu0 0.0
  %1429 = vmatpush1.msra.mxu0 0.0
  %1430 = vmatprep.subr.mxu0 0.0
  %1431 = vmatpush1.msra.mxu0 0.0
  %1432 = vmatprep.subr.mxu0 0.0
  %1433 = vmatpush1.msra.mxu0 0.0
  %1434 = vmatprep.subr.mxu0 0.0
  %1435 = vmatpush1.msra.mxu0 0.0
  %1436 = vmatprep.subr.mxu0 0.0
  %1437 = vmatpush1.msra.mxu0 0.0
  %1438 = vmatprep.subr.mxu0 0.0
  %1439 = vmatpush1.msra.mxu0 0.0
  %1440 = vmatprep.subr.mxu0 0.0
  %1441 = vmatpush1.msra.mxu0 0.0
  %1442 = vmatprep.subr.mxu0 0.0
  %1443 = vmatpush1.msra.mxu0 0.0
  %1444 = vmatprep.subr.mxu0 0.0
  %1445 = vmatpush1.msra.mxu0 0.0
  %1446 = vmatprep.subr.mxu0 0.0
  %1447 = vmatpush1.msra.mxu0 0.0
  %1448 = vmatprep.subr.mxu0 0.0
  %1449 = vmatpush1.msra.mxu0 0.0
  %1450 = vmatprep.subr.mxu0 0.0
  %1451 = vmatpush1.msra.mxu0 0.0
  %1452 = vmatprep.subr.mxu0 0.0
  %1453 = vmatpush1.msra.mxu0 0.0
  %1454 = vmatprep.subr.mxu0 0.0
  %1455 = vmatpush1.msra.mxu0 0.0
  %1456 = vmatprep.mubr.f32.mxu0 0.0
  %1457 = vmatmul.mubr.f32.gmra.mrb[0].mxu0 %v1138
  %v1458 = vpop.f32.mrb[0].mxu0
  %v1459 = vadd.f32 %v1354, %v1458
  %v1460 = vpop.f32.mrb[0].mxu0
  %1461 = vmatprep.mubr.f32.mxu0 0.0
  %1462 = vmatmul.mubr.f32.gmra.mrb[0].mxu0 %v1143
  %v1463 = vpop.f32.mrb[0].mxu0
  %v1464 = vadd.f32 %v1359, %v1463
  %v1465 = vpop.f32.mrb[0].mxu0
  %1466 = vmatprep.mubr.f32.mxu0 0.0
  %1467 = vmatmul.mubr.f32.gmra.mrb[0].mxu0 %v1148
  %v1468 = vpop.f32.mrb[0].mxu0
  %v1469 = vadd.f32 %v1364, %v1468
  %v1470 = vpop.f32.mrb[0].mxu0
  %1471 = vmatprep.mubr.f32.mxu0 0.0
  %1472 = vmatmul.mubr.f32.gmra.mrb[0].mxu0 %v1153
  %v1473 = vpop.f32.mrb[0].mxu0
  %v1474 = vadd.f32 %v1369, %v1473
  %v1475 = vpop.f32.mrb[0].mxu0
  %1476 = vmatprep.mubr.f32.mxu0 0.0
  %1477 = vmatmul.mubr.f32.gmra.mrb[0].mxu0 %v1158
  %v1478 = vpop.f32.mrb[0].mxu0
  %v1479 = vadd.f32 %v1374, %v1478
  %v1480 = vpop.f32.mrb[0].mxu0
  %1481 = vmatprep.mubr.f32.mxu0 0.0
  %1482 = vmatmul.mubr.f32.gmra.mrb[0].mxu0 %v1163
  %v1483 = vpop.f32.mrb[0].mxu0
  %v1484 = vadd.f32 %v1379, %v1483
  %v1485 = vpop.f32.mrb[0].mxu0
  %1486 = vmatprep.mubr.f32.mxu0 0.0
  %1487 = vmatmul.mubr.f32.gmra.mrb[0].mxu0 %v1168
  %v1488 = vpop.f32.mrb[0].mxu0
  %v1489 = vadd.f32 %v1384, %v1488
  %v1490 = vpop.f32.mrb[0].mxu0
  %1491 = vmatprep.mubr.f32.mxu0 0.0
  %1492 = vmatmul.mubr.f32.gmra.mrb[0].mxu0 %v1173
  %v1493 = vpop.f32.mrb[0].mxu0
  %v1494 = vadd.f32 %v1389, %v1493
  %v1495 = vpop.f32.mrb[0].mxu0
  %1496 = vdwg.mxu0
  %v1497 = vld [vmem:[%s6] sm:$0xff]
  %v1498 = vld [vmem:[%s6 + $0x8] sm:$0xff]
  %v1499 = vld [vmem:[%s6 + $0x10] sm:$0xff]
  %v1500 = vld [vmem:[%s6 + $0x18] sm:$0xff]
  %v1501 = vld [vmem:[%s6 + $0x20] sm:$0xff]
  %v1502 = vld [vmem:[%s6 + $0x28] sm:$0xff]
  %v1503 = vld [vmem:[%s6 + $0x30] sm:$0xff]
  %v1504 = vld [vmem:[%s6 + $0x38] sm:$0xff]
  %v1505 = vld [vmem:[%s7] sm:$0xff]
  %v1506 = vld [vmem:[%s7 + $0x8] sm:$0xff]
  %v1507 = vld [vmem:[%s7 + $0x10] sm:$0xff]
  %v1508 = vld [vmem:[%s7 + $0x18] sm:$0xff]
  %v1509 = vld [vmem:[%s7 + $0x20] sm:$0xff]
  %v1510 = vld [vmem:[%s7 + $0x28] sm:$0xff]
  %v1511 = vld [vmem:[%s7 + $0x30] sm:$0xff]
  %v1512 = vld [vmem:[%s7 + $0x38] sm:$0xff]
  %vm1513 = vcmask 261120
  %v1514 = vsel %vm1513, %v1459, 0.0
  %1515 = vadd.xlane.f32.xlu0 %v1514
  %v1516 = vpop.xlane.xlu0 %1515
  %v1517 = vsel %vm1513, %v1464, 0.0
  %1518 = vadd.xlane.f32.xlu0 %v1517
  %v1519 = vpop.xlane.xlu0 %1518
  %v1520 = vsel %vm1513, %v1469, 0.0
  %1521 = vadd.xlane.f32.xlu0 %v1520
  %v1522 = vpop.xlane.xlu0 %1521
  %v1523 = vsel %vm1513, %v1474, 0.0
  %1524 = vadd.xlane.f32.xlu0 %v1523
  %v1525 = vpop.xlane.xlu0 %1524
  %v1526 = vsel %vm1513, %v1479, 0.0
  %1527 = vadd.xlane.f32.xlu0 %v1526
  %v1528 = vpop.xlane.xlu0 %1527
  %v1529 = vsel %vm1513, %v1484, 0.0
  %1530 = vadd.xlane.f32.xlu0 %v1529
  %v1531 = vpop.xlane.xlu0 %1530
  %v1532 = vsel %vm1513, %v1489, 0.0
  %1533 = vadd.xlane.f32.xlu0 %v1532
  %v1534 = vpop.xlane.xlu0 %1533
  %v1535 = vsel %vm1513, %v1494, 0.0
  %1536 = vadd.xlane.f32.xlu0 %v1535
  %v1537 = vpop.xlane.xlu0 %1536
  %v1538 = vmul.f32 %v1516, 0.03125
  %v1539 = vmul.f32 %v1519, 0.03125
  %v1540 = vmul.f32 %v1522, 0.03125
  %v1541 = vmul.f32 %v1525, 0.03125
  %v1542 = vmul.f32 %v1528, 0.03125
  %v1543 = vmul.f32 %v1531, 0.03125
  %v1544 = vmul.f32 %v1534, 0.03125
  %v1545 = vmul.f32 %v1537, 0.03125
  %v1546 = vmul.f32 %v1459, %v1459
  %v1547 = vmul.f32 %v1464, %v1464
  %v1548 = vmul.f32 %v1469, %v1469
  %v1549 = vmul.f32 %v1474, %v1474
  %v1550 = vmul.f32 %v1479, %v1479
  %v1551 = vmul.f32 %v1484, %v1484
  %v1552 = vmul.f32 %v1489, %v1489
  %v1553 = vmul.f32 %v1494, %v1494
  %v1554 = vsel %vm1513, %v1546, 0.0
  %1555 = vadd.xlane.f32.xlu0 %v1554
  %v1556 = vpop.xlane.xlu0 %1555
  %v1557 = vsel %vm1513, %v1547, 0.0
  %1558 = vadd.xlane.f32.xlu0 %v1557
  %v1559 = vpop.xlane.xlu0 %1558
  %v1560 = vsel %vm1513, %v1548, 0.0
  %1561 = vadd.xlane.f32.xlu0 %v1560
  %v1562 = vpop.xlane.xlu0 %1561
  %v1563 = vsel %vm1513, %v1549, 0.0
  %1564 = vadd.xlane.f32.xlu0 %v1563
  %v1565 = vpop.xlane.xlu0 %1564
  %v1566 = vsel %vm1513, %v1550, 0.0
  %1567 = vadd.xlane.f32.xlu0 %v1566
  %v1568 = vpop.xlane.xlu0 %1567
  %v1569 = vsel %vm1513, %v1551, 0.0
  %1570 = vadd.xlane.f32.xlu0 %v1569
  %v1571 = vpop.xlane.xlu0 %1570
  %v1572 = vsel %vm1513, %v1552, 0.0
  %1573 = vadd.xlane.f32.xlu0 %v1572
  %v1574 = vpop.xlane.xlu0 %1573
  %v1575 = vsel %vm1513, %v1553, 0.0
  %1576 = vadd.xlane.f32.xlu0 %v1575
  %v1577 = vpop.xlane.xlu0 %1576
  %v1578 = vmul.f32 %v1556, 0.03125
  %v1579 = vmul.f32 %v1559, 0.03125
  %v1580 = vmul.f32 %v1562, 0.03125
  %v1581 = vmul.f32 %v1565, 0.03125
  %v1582 = vmul.f32 %v1568, 0.03125
  %v1583 = vmul.f32 %v1571, 0.03125
  %v1584 = vmul.f32 %v1574, 0.03125
  %v1585 = vmul.f32 %v1577, 0.03125
  %v1586 = vmul.f32 %v1538, %v1538
  %v1587 = vmul.f32 %v1539, %v1539
  %v1588 = vmul.f32 %v1540, %v1540
  %v1589 = vmul.f32 %v1541, %v1541
  %v1590 = vmul.f32 %v1542, %v1542
  %v1591 = vmul.f32 %v1543, %v1543
  %v1592 = vmul.f32 %v1544, %v1544
  %v1593 = vmul.f32 %v1545, %v1545
  %v1594 = vsub.f32 %v1578, %v1586
  %v1595 = vsub.f32 %v1579, %v1587
  %v1596 = vsub.f32 %v1580, %v1588
  %v1597 = vsub.f32 %v1581, %v1589
  %v1598 = vsub.f32 %v1582, %v1590
  %v1599 = vsub.f32 %v1583, %v1591
  %v1600 = vsub.f32 %v1584, %v1592
  %v1601 = vsub.f32 %v1585, %v1593
  %v1602 = vsub.f32 %v1459, %v1538
  %v1603 = vsub.f32 %v1464, %v1539
  %v1604 = vsub.f32 %v1469, %v1540
  %v1605 = vsub.f32 %v1474, %v1541
  %v1606 = vsub.f32 %v1479, %v1542
  %v1607 = vsub.f32 %v1484, %v1543
  %v1608 = vsub.f32 %v1489, %v1544
  %v1609 = vsub.f32 %v1494, %v1545
  %1611 = vset.pattern.permute.xlu0 0
  %1612 = vperm.xlu0 %1611, %v1497
  %v1613 = vpop.permute.xlu0 %1612
  %1616 = vset.pattern.permute.xlu0 0
  %1617 = vperm.xlu0 %1616, %v1498
  %v1618 = vpop.permute.xlu0 %1617
  %1621 = vset.pattern.permute.xlu0 0
  %1622 = vperm.xlu0 %1621, %v1499
  %v1623 = vpop.permute.xlu0 %1622
  %1626 = vset.pattern.permute.xlu0 0
  %1627 = vperm.xlu0 %1626, %v1500
  %v1628 = vpop.permute.xlu0 %1627
  %1631 = vset.pattern.permute.xlu0 0
  %1632 = vperm.xlu0 %1631, %v1501
  %v1633 = vpop.permute.xlu0 %1632
  %1636 = vset.pattern.permute.xlu0 0
  %1637 = vperm.xlu0 %1636, %v1502
  %v1638 = vpop.permute.xlu0 %1637
  %1641 = vset.pattern.permute.xlu0 0
  %1642 = vperm.xlu0 %1641, %v1503
  %v1643 = vpop.permute.xlu0 %1642
  %1646 = vset.pattern.permute.xlu0 0
  %1647 = vperm.xlu0 %1646, %v1504
  %v1648 = vpop.permute.xlu0 %1647
  %v1650 = vmul.f32 %v1613, %v1602
  %v1651 = vmul.f32 %v1618, %v1603
  %v1652 = vmul.f32 %v1623, %v1604
  %v1653 = vmul.f32 %v1628, %v1605
  %v1654 = vmul.f32 %v1633, %v1606
  %v1655 = vmul.f32 %v1638, %v1607
  %v1656 = vmul.f32 %v1643, %v1608
  %v1657 = vmul.f32 %v1648, %v1609
  %v1658 = vadd.f32 %v1594, 1e-05
  %v1659 = vadd.f32 %v1595, 1e-05
  %v1660 = vadd.f32 %v1596, 1e-05
  %v1661 = vadd.f32 %v1597, 1e-05
  %v1662 = vadd.f32 %v1598, 1e-05
  %v1663 = vadd.f32 %v1599, 1e-05
  %v1664 = vadd.f32 %v1600, 1e-05
  %v1665 = vadd.f32 %v1601, 1e-05
  %v1666 = vrsqrt.pop %v1658
  %v1667 = vrsqrt.pop %v1659
  %v1668 = vrsqrt.pop %v1660
  %v1669 = vrsqrt.pop %v1661
  %v1670 = vrsqrt.pop %v1662
  %v1671 = vrsqrt.pop %v1663
  %v1672 = vrsqrt.pop %v1664
  %v1673 = vrsqrt.pop %v1665
  %v1674 = vmul.f32 %v1650, %v1666
  %v1675 = vmul.f32 %v1651, %v1667
  %v1676 = vmul.f32 %v1652, %v1668
  %v1677 = vmul.f32 %v1653, %v1669
  %v1678 = vmul.f32 %v1654, %v1670
  %v1679 = vmul.f32 %v1655, %v1671
  %v1680 = vmul.f32 %v1656, %v1672
  %v1681 = vmul.f32 %v1657, %v1673
  %1683 = vset.pattern.permute.xlu0 0
  %1684 = vperm.xlu0 %1683, %v1505
  %v1685 = vpop.permute.xlu0 %1684
  %1688 = vset.pattern.permute.xlu0 0
  %1689 = vperm.xlu0 %1688, %v1506
  %v1690 = vpop.permute.xlu0 %1689
  %1693 = vset.pattern.permute.xlu0 0
  %1694 = vperm.xlu0 %1693, %v1507
  %v1695 = vpop.permute.xlu0 %1694
  %1698 = vset.pattern.permute.xlu0 0
  %1699 = vperm.xlu0 %1698, %v1508
  %v1700 = vpop.permute.xlu0 %1699
  %1703 = vset.pattern.permute.xlu0 0
  %1704 = vperm.xlu0 %1703, %v1509
  %v1705 = vpop.permute.xlu0 %1704
  %1708 = vset.pattern.permute.xlu0 0
  %1709 = vperm.xlu0 %1708, %v1510
  %v1710 = vpop.permute.xlu0 %1709
  %1713 = vset.pattern.permute.xlu0 0
  %1714 = vperm.xlu0 %1713, %v1511
  %v1715 = vpop.permute.xlu0 %1714
  %1718 = vset.pattern.permute.xlu0 0
  %1719 = vperm.xlu0 %1718, %v1512
  %v1720 = vpop.permute.xlu0 %1719
  %v1722 = vadd.f32 %v1674, %v1685
  %v1723 = vadd.f32 %v1675, %v1690
  %v1724 = vadd.f32 %v1676, %v1695
  %v1725 = vadd.f32 %v1677, %v1700
  %v1726 = vadd.f32 %v1678, %v1705
  %v1727 = vadd.f32 %v1679, %v1710
  %v1728 = vadd.f32 %v1680, %v1715
  %v1729 = vadd.f32 %v1681, %v1720
  %v1730 = vld [vmem:[%s8] sm:$0xff]
  %v1731 = vld [vmem:[%s8 + $0x8] sm:$0xff]
  %v1732 = vld [vmem:[%s8 + $0x10] sm:$0xff]
  %v1733 = vld [vmem:[%s8 + $0x18] sm:$0xff]
  %v1735 = vsel %vm1513, %v1722, 0
  %v1738 = vsel %vm1513, %v1723, 0
  %v1741 = vsel %vm1513, %v1724, 0
  %v1744 = vsel %vm1513, %v1725, 0
  %v1747 = vsel %vm1513, %v1726, 0
  %v1750 = vsel %vm1513, %v1727, 0
  %v1753 = vsel %vm1513, %v1728, 0
  %v1756 = vsel %vm1513, %v1729, 0
  %1758 = vmatprep.subr.mxu0 0.0
  %1759 = vmatpush1.msra.mxu0 %v1730
  %1760 = vmatprep.subr.mxu0 0.0
  %1761 = vmatpush1.msra.mxu0 %v1731
  %1762 = vmatprep.subr.mxu0 0.0
  %1763 = vmatpush1.msra.mxu0 %v1732
  %1764 = vmatprep.subr.mxu0 0.0
  %1765 = vmatpush1.msra.mxu0 %v1733
  %1766 = vmatprep.subr.mxu0 0.0
  %1767 = vmatpush1.msra.mxu0 0.0
  %1768 = vmatprep.subr.mxu0 0.0
  %1769 = vmatpush1.msra.mxu0 0.0
  %1770 = vmatprep.subr.mxu0 0.0
  %1771 = vmatpush1.msra.mxu0 0.0
  %1772 = vmatprep.subr.mxu0 0.0
  %1773 = vmatpush1.msra.mxu0 0.0
  %1774 = vmatprep.subr.mxu0 0.0
  %1775 = vmatpush1.msra.mxu0 0.0
  %1776 = vmatprep.subr.mxu0 0.0
  %1777 = vmatpush1.msra.mxu0 0.0
  %1778 = vmatprep.subr.mxu0 0.0
  %1779 = vmatpush1.msra.mxu0 0.0
  %1780 = vmatprep.subr.mxu0 0.0
  %1781 = vmatpush1.msra.mxu0 0.0
  %1782 = vmatprep.subr.mxu0 0.0
  %1783 = vmatpush1.msra.mxu0 0.0
  %1784 = vmatprep.subr.mxu0 0.0
  %1785 = vmatpush1.msra.mxu0 0.0
  %1786 = vmatprep.subr.mxu0 0.0
  %1787 = vmatpush1.msra.mxu0 0.0
  %1788 = vmatprep.subr.mxu0 0.0
  %1789 = vmatpush1.msra.mxu0 0.0
  %1790 = vmatprep.subr.mxu0 0.0
  %1791 = vmatpush1.msra.mxu0 0.0
  %1792 = vmatprep.subr.mxu0 0.0
  %1793 = vmatpush1.msra.mxu0 0.0
  %1794 = vmatprep.subr.mxu0 0.0
  %1795 = vmatpush1.msra.mxu0 0.0
  %1796 = vmatprep.subr.mxu0 0.0
  %1797 = vmatpush1.msra.mxu0 0.0
  %1798 = vmatprep.subr.mxu0 0.0
  %1799 = vmatpush1.msra.mxu0 0.0
  %1800 = vmatprep.subr.mxu0 0.0
  %1801 = vmatpush1.msra.mxu0 0.0
  %1802 = vmatprep.subr.mxu0 0.0
  %1803 = vmatpush1.msra.mxu0 0.0
  %1804 = vmatprep.subr.mxu0 0.0
  %1805 = vmatpush1.msra.mxu0 0.0
  %1806 = vmatprep.subr.mxu0 0.0
  %1807 = vmatpush1.msra.mxu0 0.0
  %1808 = vmatprep.subr.mxu0 0.0
  %1809 = vmatpush1.msra.mxu0 0.0
  %1810 = vmatprep.subr.mxu0 0.0
  %1811 = vmatpush1.msra.mxu0 0.0
  %1812 = vmatprep.subr.mxu0 0.0
  %1813 = vmatpush1.msra.mxu0 0.0
  %1814 = vmatprep.subr.mxu0 0.0
  %1815 = vmatpush1.msra.mxu0 0.0
  %1816 = vmatprep.subr.mxu0 0.0
  %1817 = vmatpush1.msra.mxu0 0.0
  %1818 = vmatprep.subr.mxu0 0.0
  %1819 = vmatpush1.msra.mxu0 0.0
  %1820 = vmatprep.subr.mxu0 0.0
  %1821 = vmatpush1.msra.mxu0 0.0
  %1822 = vmatprep.mubr.f32.mxu0 0.0
  %1823 = vmatmul.mubr.f32.gmra.mrb[0].mxu0 %v1735
  %v1824 = vpop.f32.mrb[0].mxu0
  %v1825 = vadd.f32 0.0, %v1824
  %v1826 = vpop.f32.mrb[0].mxu0
  %1827 = vmatprep.mubr.f32.mxu0 0.0
  %1828 = vmatmul.mubr.f32.gmra.mrb[0].mxu0 %v1738
  %v1829 = vpop.f32.mrb[0].mxu0
  %v1830 = vadd.f32 0.0, %v1829
  %v1831 = vpop.f32.mrb[0].mxu0
  %1832 = vmatprep.mubr.f32.mxu0 0.0
  %1833 = vmatmul.mubr.f32.gmra.mrb[0].mxu0 %v1741
  %v1834 = vpop.f32.mrb[0].mxu0
  %v1835 = vadd.f32 0.0, %v1834
  %v1836 = vpop.f32.mrb[0].mxu0
  %1837 = vmatprep.mubr.f32.mxu0 0.0
  %1838 = vmatmul.mubr.f32.gmra.mrb[0].mxu0 %v1744
  %v1839 = vpop.f32.mrb[0].mxu0
  %v1840 = vadd.f32 0.0, %v1839
  %v1841 = vpop.f32.mrb[0].mxu0
  %1842 = vmatprep.mubr.f32.mxu0 0.0
  %1843 = vmatmul.mubr.f32.gmra.mrb[0].mxu0 %v1747
  %v1844 = vpop.f32.mrb[0].mxu0
  %v1845 = vadd.f32 0.0, %v1844
  %v1846 = vpop.f32.mrb[0].mxu0
  %1847 = vmatprep.mubr.f32.mxu0 0.0
  %1848 = vmatmul.mubr.f32.gmra.mrb[0].mxu0 %v1750
  %v1849 = vpop.f32.mrb[0].mxu0
  %v1850 = vadd.f32 0.0, %v1849
  %v1851 = vpop.f32.mrb[0].mxu0
  %1852 = vmatprep.mubr.f32.mxu0 0.0
  %1853 = vmatmul.mubr.f32.gmra.mrb[0].mxu0 %v1753
  %v1854 = vpop.f32.mrb[0].mxu0
  %v1855 = vadd.f32 0.0, %v1854
  %v1856 = vpop.f32.mrb[0].mxu0
  %1857 = vmatprep.mubr.f32.mxu0 0.0
  %1858 = vmatmul.mubr.f32.gmra.mrb[0].mxu0 %v1756
  %v1859 = vpop.f32.mrb[0].mxu0
  %v1860 = vadd.f32 0.0, %v1859
  %v1861 = vpop.f32.mrb[0].mxu0
  %1862 = vdwg.mxu0
  %v1863 = vld [vmem:[%s9] sm:$0xff]
  %v1864 = vld [vmem:[%s9 + $0x8] sm:$0xff]
  %v1865 = vld [vmem:[%s9 + $0x10] sm:$0xf]
  %v1866 = vld [vmem:[%s9 + $0x14] sm:$0xff]
  %v1867 = vld [vmem:[%s9 + $0x1c] sm:$0xff]
  %v1868 = vld [vmem:[%s9 + $0x24] sm:$0xf]
  %v1869 = vld [vmem:[%s9 + $0x28] sm:$0xff]
  %v1870 = vld [vmem:[%s9 + $0x30] sm:$0xff]
  %v1871 = vld [vmem:[%s9 + $0x38] sm:$0xf]
  %v1872 = vld [vmem:[%s9 + $0x3c] sm:$0xff]
  %v1873 = vld [vmem:[%s9 + $0x44] sm:$0xff]
  %v1874 = vld [vmem:[%s9 + $0x4c] sm:$0xf]
  %v1875 = vld [vmem:[%s9 + $0x50] sm:$0xff]
  %v1876 = vld [vmem:[%s9 + $0x58] sm:$0xff]
  %v1877 = vld [vmem:[%s9 + $0x60] sm:$0xf]
  %v1878 = vld [vmem:[%s9 + $0x64] sm:$0xff]
  %v1879 = vld [vmem:[%s9 + $0x6c] sm:$0xff]
  %v1880 = vld [vmem:[%s9 + $0x74] sm:$0xf]
  %v1881 = vld [vmem:[%s9 + $0x78] sm:$0xff]
  %v1882 = vld [vmem:[%s9 + $0x80] sm:$0xff]
  %v1883 = vld [vmem:[%s9 + $0x88] sm:$0xf]
  %v1884 = vld [vmem:[%s9 + $0x8c] sm:$0xff]
  %v1885 = vld [vmem:[%s9 + $0x94] sm:$0xff]
  %v1886 = vld [vmem:[%s9 + $0x9c] sm:$0xf]
  %v1887 = vld [vmem:[%s10] sm:$0xff]
  %v1888 = vld [vmem:[%s10 + $0x8] sm:$0xff]
  %v1889 = vld [vmem:[%s10 + $0x10] sm:$0xff]
  %v1890 = vld [vmem:[%s10 + $0x18] sm:$0xff]
  %v1891 = vld [vmem:[%s10 + $0x20] sm:$0xff]
  %v1892 = vld [vmem:[%s10 + $0x28] sm:$0xff]
  %v1893 = vld [vmem:[%s10 + $0x30] sm:$0xff]
  %v1894 = vld [vmem:[%s10 + $0x38] sm:$0xff]
  %v1895 = vld [vmem:[%s11] sm:$0xff]
  %v1896 = vld [vmem:[%s11 + $0x8] sm:$0x1]
  %1905 = vrot.lane.b32.xlu0 %v1825, 9
  %v1906 = vpop.permute.xlu0 %1905
  %1907 = vrot.lane.b32.xlu0 %v1830, 9
  %v1908 = vpop.permute.xlu0 %1907
  %1909 = vrot.lane.b32.xlu0 %v1835, 9
  %v1910 = vpop.permute.xlu0 %1909
  %1911 = vrot.lane.b32.xlu0 %v1840, 9
  %v1912 = vpop.permute.xlu0 %1911
  %1913 = vrot.lane.b32.xlu0 %v1845, 9
  %v1914 = vpop.permute.xlu0 %1913
  %1915 = vrot.lane.b32.xlu0 %v1850, 9
  %v1916 = vpop.permute.xlu0 %1915
  %1917 = vrot.lane.b32.xlu0 %v1855, 9
  %v1918 = vpop.permute.xlu0 %1917
  %1919 = vrot.lane.b32.xlu0 %v1860, 9
  %v1920 = vpop.permute.xlu0 %1919
  %vm1929 = vcmask 72704
  %v1930 = vsel %vm1929, 0.0, %v1906
  %v1931 = vsel %vm1929, 0.0, %v1908
  %v1932 = vsel %vm1929, 0.0, %v1910
  %v1933 = vsel %vm1929, 0.0, %v1912
  %v1934 = vsel %vm1929, 0.0, %v1914
  %v1935 = vsel %vm1929, 0.0, %v1916
  %v1936 = vsel %vm1929, 0.0, %v1918
  %v1937 = vsel %vm1929, 0.0, %v1920
  %v1938 = vlaneseq
  %v1939 = vshrl.u32 %v1938, 7
  %v1940 = vsub.s32 0, %v1939
  %v1941 = vrot.slane %v1895, %v1940
  %v1942 = vmul.f32 %v1930, %v1941
  %v1943 = vmul.f32 %v1931, %v1941
  %v1944 = vmul.f32 %v1932, %v1941
  %v1945 = vmul.f32 %v1933, %v1941
  %v1946 = vmul.f32 %v1934, %v1941
  %v1947 = vmul.f32 %v1935, %v1941
  %v1948 = vmul.f32 %v1936, %v1941
  %v1949 = vmul.f32 %v1937, %v1941
  %1950 = vrot.lane.b32.xlu0 %v1825, 8
  %v1951 = vpop.permute.xlu0 %1950
  %1952 = vrot.lane.b32.xlu0 %v1830, 8
  %v1953 = vpop.permute.xlu0 %1952
  %1954 = vrot.lane.b32.xlu0 %v1835, 8
  %v1955 = vpop.permute.xlu0 %1954
  %1956 = vrot.lane.b32.xlu0 %v1840, 8
  %v1957 = vpop.permute.xlu0 %1956
  %1958 = vrot.lane.b32.xlu0 %v1845, 8
  %v1959 = vpop.permute.xlu0 %1958
  %1960 = vrot.lane.b32.xlu0 %v1850, 8
  %v1961 = vpop.permute.xlu0 %1960
  %1962 = vrot.lane.b32.xlu0 %v1855, 8
  %v1963 = vpop.permute.xlu0 %1962
  %1964 = vrot.lane.b32.xlu0 %v1860, 8
  %v1965 = vpop.permute.xlu0 %1964
  %vm1974 = vcmask 64512
  %v1975 = vsel %vm1974, 0.0, %v1951
  %v1976 = vsel %vm1974, 0.0, %v1953
  %v1977 = vsel %vm1974, 0.0, %v1955
  %v1978 = vsel %vm1974, 0.0, %v1957
  %v1979 = vsel %vm1974, 0.0, %v1959
  %v1980 = vsel %vm1974, 0.0, %v1961
  %v1981 = vsel %vm1974, 0.0, %v1963
  %v1982 = vsel %vm1974, 0.0, %v1965
  %v1983 = vlaneseq
  %v1984 = vshrl.u32 %v1983, 7
  %v1985 = vsub.s32 1, %v1984
  %v1986 = vrot.slane %v1895, %v1985
  %v1987 = vmul.f32 %v1975, %v1986
  %v1988 = vmul.f32 %v1976, %v1986
  %v1989 = vmul.f32 %v1977, %v1986
  %v1990 = vmul.f32 %v1978, %v1986
  %v1991 = vmul.f32 %v1979, %v1986
  %v1992 = vmul.f32 %v1980, %v1986
  %v1993 = vmul.f32 %v1981, %v1986
  %v1994 = vmul.f32 %v1982, %v1986
  %1995 = vrot.lane.b32.xlu0 %v1825, 7
  %v1996 = vpop.permute.xlu0 %1995
  %1997 = vrot.lane.b32.xlu0 %v1830, 7
  %v1998 = vpop.permute.xlu0 %1997
  %1999 = vrot.lane.b32.xlu0 %v1835, 7
  %v2000 = vpop.permute.xlu0 %1999
  %2001 = vrot.lane.b32.xlu0 %v1840, 7
  %v2002 = vpop.permute.xlu0 %2001
  %2003 = vrot.lane.b32.xlu0 %v1845, 7
  %v2004 = vpop.permute.xlu0 %2003
  %2005 = vrot.lane.b32.xlu0 %v1850, 7
  %v2006 = vpop.permute.xlu0 %2005
  %2007 = vrot.lane.b32.xlu0 %v1855, 7
  %v2008 = vpop.permute.xlu0 %2007
  %2009 = vrot.lane.b32.xlu0 %v1860, 7
  %v2010 = vpop.permute.xlu0 %2009
  %vm2019 = vcmask 56320
  %v2020 = vsel %vm2019, 0.0, %v1996
  %v2021 = vsel %vm2019, 0.0, %v1998
  %v2022 = vsel %vm2019, 0.0, %v2000
  %v2023 = vsel %vm2019, 0.0, %v2002
  %v2024 = vsel %vm2019, 0.0, %v2004
  %v2025 = vsel %vm2019, 0.0, %v2006
  %v2026 = vsel %vm2019, 0.0, %v2008
  %v2027 = vsel %vm2019, 0.0, %v2010
  %v2028 = vlaneseq
  %v2029 = vshrl.u32 %v2028, 7
  %v2030 = vsub.s32 2, %v2029
  %v2031 = vrot.slane %v1895, %v2030
  %v2032 = vmul.f32 %v2020, %v2031
  %v2033 = vmul.f32 %v2021, %v2031
  %v2034 = vmul.f32 %v2022, %v2031
  %v2035 = vmul.f32 %v2023, %v2031
  %v2036 = vmul.f32 %v2024, %v2031
  %v2037 = vmul.f32 %v2025, %v2031
  %v2038 = vmul.f32 %v2026, %v2031
  %v2039 = vmul.f32 %v2027, %v2031
  %2040 = vrot.lane.b32.xlu0 %v1825, 1
  %v2041 = vpop.permute.xlu0 %2040
  %2042 = vrot.lane.b32.xlu0 %v1830, 1
  %v2043 = vpop.permute.xlu0 %2042
  %2044 = vrot.lane.b32.xlu0 %v1835, 1
  %v2045 = vpop.permute.xlu0 %2044
  %2046 = vrot.lane.b32.xlu0 %v1840, 1
  %v2047 = vpop.permute.xlu0 %2046
  %2048 = vrot.lane.b32.xlu0 %v1845, 1
  %v2049 = vpop.permute.xlu0 %2048
  %2050 = vrot.lane.b32.xlu0 %v1850, 1
  %v2051 = vpop.permute.xlu0 %2050
  %2052 = vrot.lane.b32.xlu0 %v1855, 1
  %v2053 = vpop.permute.xlu0 %2052
  %2054 = vrot.lane.b32.xlu0 %v1860, 1
  %v2055 = vpop.permute.xlu0 %2054
  %vm2064 = vcmask 7168
  %v2065 = vsel %vm2064, 0.0, %v2041
  %v2066 = vsel %vm2064, 0.0, %v2043
  %v2067 = vsel %vm2064, 0.0, %v2045
  %v2068 = vsel %vm2064, 0.0, %v2047
  %v2069 = vsel %vm2064, 0.0, %v2049
  %v2070 = vsel %vm2064, 0.0, %v2051
  %v2071 = vsel %vm2064, 0.0, %v2053
  %v2072 = vsel %vm2064, 0.0, %v2055
  %v2073 = vlaneseq
  %v2074 = vshrl.u32 %v2073, 7
  %v2075 = vsub.s32 3, %v2074
  %v2076 = vrot.slane %v1895, %v2075
  %v2077 = vmul.f32 %v2065, %v2076
  %v2078 = vmul.f32 %v2066, %v2076
  %v2079 = vmul.f32 %v2067, %v2076
  %v2080 = vmul.f32 %v2068, %v2076
  %v2081 = vmul.f32 %v2069, %v2076
  %v2082 = vmul.f32 %v2070, %v2076
  %v2083 = vmul.f32 %v2071, %v2076
  %v2084 = vmul.f32 %v2072, %v2076
  %v2085 = vlaneseq
  %v2086 = vshrl.u32 %v2085, 7
  %v2087 = vsub.s32 4, %v2086
  %v2088 = vrot.slane %v1895, %v2087
  %v2089 = vmul.f32 %v1825, %v2088
  %v2090 = vmul.f32 %v1830, %v2088
  %v2091 = vmul.f32 %v1835, %v2088
  %v2092 = vmul.f32 %v1840, %v2088
  %v2093 = vmul.f32 %v1845, %v2088
  %v2094 = vmul.f32 %v1850, %v2088
  %v2095 = vmul.f32 %v1855, %v2088
  %v2096 = vmul.f32 %v1860, %v2088
  %2097 = vrot.lane.b32.xlu0 %v1825, 127
  %v2098 = vpop.permute.xlu0 %2097
  %2099 = vrot.lane.b32.xlu0 %v1830, 127
  %v2100 = vpop.permute.xlu0 %2099
  %2101 = vrot.lane.b32.xlu0 %v1835, 127
  %v2102 = vpop.permute.xlu0 %2101
  %2103 = vrot.lane.b32.xlu0 %v1840, 127
  %v2104 = vpop.permute.xlu0 %2103
  %2105 = vrot.lane.b32.xlu0 %v1845, 127
  %v2106 = vpop.permute.xlu0 %2105
  %2107 = vrot.lane.b32.xlu0 %v1850, 127
  %v2108 = vpop.permute.xlu0 %2107
  %2109 = vrot.lane.b32.xlu0 %v1855, 127
  %v2110 = vpop.permute.xlu0 %2109
  %2111 = vrot.lane.b32.xlu0 %v1860, 127
  %v2112 = vpop.permute.xlu0 %2111
  %vm2121 = vcmask 1039360
  %v2122 = vsel %vm2121, %v2098, 0.0
  %v2123 = vsel %vm2121, %v2100, 0.0
  %v2124 = vsel %vm2121, %v2102, 0.0
  %v2125 = vsel %vm2121, %v2104, 0.0
  %v2126 = vsel %vm2121, %v2106, 0.0
  %v2127 = vsel %vm2121, %v2108, 0.0
  %v2128 = vsel %vm2121, %v2110, 0.0
  %v2129 = vsel %vm2121, %v2112, 0.0
  %v2130 = vlaneseq
  %v2131 = vshrl.u32 %v2130, 7
  %v2132 = vsub.s32 5, %v2131
  %v2133 = vrot.slane %v1895, %v2132
  %v2134 = vmul.f32 %v2122, %v2133
  %v2135 = vmul.f32 %v2123, %v2133
  %v2136 = vmul.f32 %v2124, %v2133
  %v2137 = vmul.f32 %v2125, %v2133
  %v2138 = vmul.f32 %v2126, %v2133
  %v2139 = vmul.f32 %v2127, %v2133
  %v2140 = vmul.f32 %v2128, %v2133
  %v2141 = vmul.f32 %v2129, %v2133
  %2142 = vrot.lane.b32.xlu0 %v1825, 121
  %v2143 = vpop.permute.xlu0 %2142
  %2144 = vrot.lane.b32.xlu0 %v1830, 121
  %v2145 = vpop.permute.xlu0 %2144
  %2146 = vrot.lane.b32.xlu0 %v1835, 121
  %v2147 = vpop.permute.xlu0 %2146
  %2148 = vrot.lane.b32.xlu0 %v1840, 121
  %v2149 = vpop.permute.xlu0 %2148
  %2150 = vrot.lane.b32.xlu0 %v1845, 121
  %v2151 = vpop.permute.xlu0 %2150
  %2152 = vrot.lane.b32.xlu0 %v1850, 121
  %v2153 = vpop.permute.xlu0 %2152
  %2154 = vrot.lane.b32.xlu0 %v1855, 121
  %v2155 = vpop.permute.xlu0 %2154
  %2156 = vrot.lane.b32.xlu0 %v1860, 121
  %v2157 = vpop.permute.xlu0 %2156
  %vm2166 = vcmask 990208
  %v2167 = vsel %vm2166, %v2143, 0.0
  %v2168 = vsel %vm2166, %v2145, 0.0
  %v2169 = vsel %vm2166, %v2147, 0.0
  %v2170 = vsel %vm2166, %v2149, 0.0
  %v2171 = vsel %vm2166, %v2151, 0.0
  %v2172 = vsel %vm2166, %v2153, 0.0
  %v2173 = vsel %vm2166, %v2155, 0.0
  %v2174 = vsel %vm2166, %v2157, 0.0
  %v2175 = vlaneseq
  %v2176 = vshrl.u32 %v2175, 7
  %v2177 = vsub.s32 6, %v2176
  %v2178 = vrot.slane %v1895, %v2177
  %v2179 = vmul.f32 %v2167, %v2178
  %v2180 = vmul.f32 %v2168, %v2178
  %v2181 = vmul.f32 %v2169, %v2178
  %v2182 = vmul.f32 %v2170, %v2178
  %v2183 = vmul.f32 %v2171, %v2178
  %v2184 = vmul.f32 %v2172, %v2178
  %v2185 = vmul.f32 %v2173, %v2178
  %v2186 = vmul.f32 %v2174, %v2178
  %2187 = vrot.lane.b32.xlu0 %v1825, 120
  %v2188 = vpop.permute.xlu0 %2187
  %2189 = vrot.lane.b32.xlu0 %v1830, 120
  %v2190 = vpop.permute.xlu0 %2189
  %2191 = vrot.lane.b32.xlu0 %v1835, 120
  %v2192 = vpop.permute.xlu0 %2191
  %2193 = vrot.lane.b32.xlu0 %v1840, 120
  %v2194 = vpop.permute.xlu0 %2193
  %2195 = vrot.lane.b32.xlu0 %v1845, 120
  %v2196 = vpop.permute.xlu0 %2195
  %2197 = vrot.lane.b32.xlu0 %v1850, 120
  %v2198 = vpop.permute.xlu0 %2197
  %2199 = vrot.lane.b32.xlu0 %v1855, 120
  %v2200 = vpop.permute.xlu0 %2199
  %2201 = vrot.lane.b32.xlu0 %v1860, 120
  %v2202 = vpop.permute.xlu0 %2201
  %vm2211 = vcmask 982016
  %v2212 = vsel %vm2211, %v2188, 0.0
  %v2213 = vsel %vm2211, %v2190, 0.0
  %v2214 = vsel %vm2211, %v2192, 0.0
  %v2215 = vsel %vm2211, %v2194, 0.0
  %v2216 = vsel %vm2211, %v2196, 0.0
  %v2217 = vsel %vm2211, %v2198, 0.0
  %v2218 = vsel %vm2211, %v2200, 0.0
  %v2219 = vsel %vm2211, %v2202, 0.0
  %v2220 = vlaneseq
  %v2221 = vshrl.u32 %v2220, 7
  %v2222 = vsub.s32 7, %v2221
  %v2223 = vrot.slane %v1895, %v2222
  %v2224 = vmul.f32 %v2212, %v2223
  %v2225 = vmul.f32 %v2213, %v2223
  %v2226 = vmul.f32 %v2214, %v2223
  %v2227 = vmul.f32 %v2215, %v2223
  %v2228 = vmul.f32 %v2216, %v2223
  %v2229 = vmul.f32 %v2217, %v2223
  %v2230 = vmul.f32 %v2218, %v2223
  %v2231 = vmul.f32 %v2219, %v2223
  %2232 = vrot.lane.b32.xlu0 %v1825, 119
  %v2233 = vpop.permute.xlu0 %2232
  %2234 = vrot.lane.b32.xlu0 %v1830, 119
  %v2235 = vpop.permute.xlu0 %2234
  %2236 = vrot.lane.b32.xlu0 %v1835, 119
  %v2237 = vpop.permute.xlu0 %2236
  %2238 = vrot.lane.b32.xlu0 %v1840, 119
  %v2239 = vpop.permute.xlu0 %2238
  %2240 = vrot.lane.b32.xlu0 %v1845, 119
  %v2241 = vpop.permute.xlu0 %2240
  %2242 = vrot.lane.b32.xlu0 %v1850, 119
  %v2243 = vpop.permute.xlu0 %2242
  %2244 = vrot.lane.b32.xlu0 %v1855, 119
  %v2245 = vpop.permute.xlu0 %2244
  %2246 = vrot.lane.b32.xlu0 %v1860, 119
  %v2247 = vpop.permute.xlu0 %2246
  %vm2256 = vcmask 973824
  %v2257 = vsel %vm2256, %v2233, 0.0
  %v2258 = vsel %vm2256, %v2235, 0.0
  %v2259 = vsel %vm2256, %v2237, 0.0
  %v2260 = vsel %vm2256, %v2239, 0.0
  %v2261 = vsel %vm2256, %v2241, 0.0
  %v2262 = vsel %vm2256, %v2243, 0.0
  %v2263 = vsel %vm2256, %v2245, 0.0
  %v2264 = vsel %vm2256, %v2247, 0.0
  %v2265 = vlaneseq
  %v2266 = vshrl.u32 %v2265, 7
  %v2267 = vsub.s32 0, %v2266
  %v2268 = vrot.slane %v1896, %v2267
  %v2269 = vmul.f32 %v2257, %v2268
  %v2270 = vmul.f32 %v2258, %v2268
  %v2271 = vmul.f32 %v2259, %v2268
  %v2272 = vmul.f32 %v2260, %v2268
  %v2273 = vmul.f32 %v2261, %v2268
  %v2274 = vmul.f32 %v2262, %v2268
  %v2275 = vmul.f32 %v2263, %v2268
  %v2276 = vmul.f32 %v2264, %v2268
  %v2277 = vpack.c.bf16 %v1943, %v1942
  %v2278 = vpack.c.bf16 %v1945, %v1944
  %v2279 = vpack.c.bf16 %v1947, %v1946
  %v2280 = vpack.c.bf16 %v1949, %v1948
  %v2281 = vpack.c.bf16 %v1988, %v1987
  %v2282 = vpack.c.bf16 %v1990, %v1989
  %v2283 = vpack.c.bf16 %v1992, %v1991
  %v2284 = vpack.c.bf16 %v1994, %v1993
  %v2285 = vpack.c.bf16 %v2033, %v2032
  %v2286 = vpack.c.bf16 %v2035, %v2034
  %v2287 = vpack.c.bf16 %v2037, %v2036
  %v2288 = vpack.c.bf16 %v2039, %v2038
  %v2289 = vpack.c.bf16 %v2078, %v2077
  %v2290 = vpack.c.bf16 %v2080, %v2079
  %v2291 = vpack.c.bf16 %v2082, %v2081
  %v2292 = vpack.c.bf16 %v2084, %v2083
  %v2293 = vpack.c.bf16 %v2090, %v2089
  %v2294 = vpack.c.bf16 %v2092, %v2091
  %v2295 = vpack.c.bf16 %v2094, %v2093
  %v2296 = vpack.c.bf16 %v2096, %v2095
  %v2297 = vpack.c.bf16 %v2135, %v2134
  %v2298 = vpack.c.bf16 %v2137, %v2136
  %v2299 = vpack.c.bf16 %v2139, %v2138
  %v2300 = vpack.c.bf16 %v2141, %v2140
  %v2301 = vpack.c.bf16 %v2180, %v2179
  %v2302 = vpack.c.bf16 %v2182, %v2181
  %v2303 = vpack.c.bf16 %v2184, %v2183
  %v2304 = vpack.c.bf16 %v2186, %v2185
  %v2305 = vpack.c.bf16 %v2225, %v2224
  %v2306 = vpack.c.bf16 %v2227, %v2226
  %v2307 = vpack.c.bf16 %v2229, %v2228
  %v2308 = vpack.c.bf16 %v2231, %v2230
  %v2309 = vpack.c.bf16 %v2270, %v2269
  %v2310 = vpack.c.bf16 %v2272, %v2271
  %v2311 = vpack.c.bf16 %v2274, %v2273
  %v2312 = vpack.c.bf16 %v2276, %v2275
  %2314 = vset.pattern.permute.xlu0 0
  %2315 = vperm.xlu0 %2314, %v1887
  %v2316 = vpop.permute.xlu0 %2315
  %2319 = vset.pattern.permute.xlu0 0
  %2320 = vperm.xlu0 %2319, %v1888
  %v2321 = vpop.permute.xlu0 %2320
  %2324 = vset.pattern.permute.xlu0 0
  %2325 = vperm.xlu0 %2324, %v1889
  %v2326 = vpop.permute.xlu0 %2325
  %2329 = vset.pattern.permute.xlu0 0
  %2330 = vperm.xlu0 %2329, %v1890
  %v2331 = vpop.permute.xlu0 %2330
  %2334 = vset.pattern.permute.xlu0 0
  %2335 = vperm.xlu0 %2334, %v1891
  %v2336 = vpop.permute.xlu0 %2335
  %2339 = vset.pattern.permute.xlu0 0
  %2340 = vperm.xlu0 %2339, %v1892
  %v2341 = vpop.permute.xlu0 %2340
  %2344 = vset.pattern.permute.xlu0 0
  %2345 = vperm.xlu0 %2344, %v1893
  %v2346 = vpop.permute.xlu0 %2345
  %2349 = vset.pattern.permute.xlu0 0
  %2350 = vperm.xlu0 %2349, %v1894
  %v2351 = vpop.permute.xlu0 %2350
  %v2377 = vunpack.c.l.b16 %v1863
  %v2378 = vunpack.c.h.b16 %v1863
  %v2379 = vunpack.c.l.b16 %v1864
  %v2380 = vunpack.c.h.b16 %v1864
  %v2381 = vunpack.c.l.b16 %v1865
  %v2382 = vunpack.c.l.b16 %v1866
  %v2383 = vunpack.c.h.b16 %v1866
  %v2384 = vunpack.c.l.b16 %v1867
  %v2385 = vunpack.c.h.b16 %v1867
  %v2386 = vunpack.c.l.b16 %v1868
  %v2387 = vunpack.c.l.b16 %v1869
  %v2388 = vunpack.c.h.b16 %v1869
  %v2389 = vunpack.c.l.b16 %v1870
  %v2390 = vunpack.c.h.b16 %v1870
  %v2391 = vunpack.c.l.b16 %v1871
  %v2392 = vunpack.c.l.b16 %v1872
  %v2393 = vunpack.c.h.b16 %v1872
  %v2394 = vunpack.c.l.b16 %v1873
  %v2395 = vunpack.c.h.b16 %v1873
  %v2396 = vunpack.c.l.b16 %v1874
  %v2397 = vunpack.c.l.b16 %v1875
  %v2398 = vunpack.c.h.b16 %v1875
  %v2399 = vunpack.c.l.b16 %v1876
  %v2400 = vunpack.c.h.b16 %v1876
  %v2401 = vunpack.c.l.b16 %v1877
  %v2402 = vunpack.c.l.b16 %v1878
  %v2403 = vunpack.c.h.b16 %v1878
  %v2404 = vunpack.c.l.b16 %v1879
  %v2405 = vunpack.c.h.b16 %v1879
  %v2406 = vunpack.c.l.b16 %v1880
  %v2407 = vunpack.c.l.b16 %v1881
  %v2408 = vunpack.c.h.b16 %v1881
  %v2409 = vunpack.c.l.b16 %v1882
  %v2410 = vunpack.c.h.b16 %v1882
  %v2411 = vunpack.c.l.b16 %v1883
  %v2412 = vunpack.c.l.b16 %v1884
  %v2413 = vunpack.c.h.b16 %v1884
  %v2414 = vunpack.c.l.b16 %v1885
  %v2415 = vunpack.c.h.b16 %v1885
  %v2416 = vunpack.c.l.b16 %v1886
  %v2417 = vpack.c.b16 %v2382, %v2377
  %v2418 = vpack.c.b16 %v2383, %v2378
  %v2419 = vpack.c.b16 %v2384, %v2379
  %v2420 = vpack.c.b16 %v2385, %v2380
  %v2421 = vpack.c.b16 %v2386, %v2381
  %v2422 = vpack.c.b16 %v2392, %v2387
  %v2423 = vpack.c.b16 %v2393, %v2388
  %v2424 = vpack.c.b16 %v2394, %v2389
  %v2425 = vpack.c.b16 %v2395, %v2390
  %v2426 = vpack.c.b16 %v2396, %v2391
  %v2427 = vpack.c.b16 %v2402, %v2397
  %v2428 = vpack.c.b16 %v2403, %v2398
  %v2429 = vpack.c.b16 %v2404, %v2399
  %v2430 = vpack.c.b16 %v2405, %v2400
  %v2431 = vpack.c.b16 %v2406, %v2401
  %v2432 = vpack.c.b16 %v2412, %v2407
  %v2433 = vpack.c.b16 %v2413, %v2408
  %v2434 = vpack.c.b16 %v2414, %v2409
  %v2435 = vpack.c.b16 %v2415, %v2410
  %v2436 = vpack.c.b16 %v2416, %v2411
  %vm2453 = vcmask 523264
  %v2455 = vsel %vm2453, %v2421, 0
  %v2458 = vsel %vm2453, %v2426, 0
  %v2461 = vsel %vm2453, %v2431, 0
  %v2464 = vsel %vm2453, %v2436, 0
  %2466 = vmatprep.subr.bf16.mxu0 0
  %2467 = vmatpush1.bf16.msra.mxu0 %v2277
  %2468 = vmatprep.subr.bf16.mxu0 0
  %2469 = vmatpush1.bf16.msra.mxu0 %v2278
  %2470 = vmatprep.subr.bf16.mxu0 0
  %2471 = vmatpush1.bf16.msra.mxu0 %v2279
  %2472 = vmatprep.subr.bf16.mxu0 0
  %2473 = vmatpush1.bf16.msra.mxu0 %v2280
  %2474 = vmatprep.subr.bf16.mxu0 0
  %2475 = vmatpush1.bf16.msra.mxu0 %v2281
  %2476 = vmatprep.subr.bf16.mxu0 0
  %2477 = vmatpush1.bf16.msra.mxu0 %v2282
  %2478 = vmatprep.subr.bf16.mxu0 0
  %2479 = vmatpush1.bf16.msra.mxu0 %v2283
  %2480 = vmatprep.subr.bf16.mxu0 0
  %2481 = vmatpush1.bf16.msra.mxu0 %v2284
  %2482 = vmatprep.subr.bf16.mxu0 0
  %2483 = vmatpush1.bf16.msra.mxu0 %v2285
  %2484 = vmatprep.subr.bf16.mxu0 0
  %2485 = vmatpush1.bf16.msra.mxu0 %v2286
  %2486 = vmatprep.subr.bf16.mxu0 0
  %2487 = vmatpush1.bf16.msra.mxu0 %v2287
  %2488 = vmatprep.subr.bf16.mxu0 0
  %2489 = vmatpush1.bf16.msra.mxu0 %v2288
  %2490 = vmatprep.subr.bf16.mxu0 0
  %2491 = vmatpush1.bf16.msra.mxu0 %v2289
  %2492 = vmatprep.subr.bf16.mxu0 0
  %2493 = vmatpush1.bf16.msra.mxu0 %v2290
  %2494 = vmatprep.subr.bf16.mxu0 0
  %2495 = vmatpush1.bf16.msra.mxu0 %v2291
  %2496 = vmatprep.subr.bf16.mxu0 0
  %2497 = vmatpush1.bf16.msra.mxu0 %v2292
  %2498 = vmatprep.mubr.bf16.mxu0 %v2418
  %2499 = vmatmul.mubr.bf16.gmra.mrb[0].mxu0 %v2417
  %v2500 = vpop.f32.mrb[0].mxu0
  %v2501 = vadd.f32 %v2316, %v2500
  %v2502 = vpop.f32.mrb[0].mxu0
  %v2503 = vpop.f32.mrb[0].mxu0
  %v2504 = vadd.f32 %v2321, %v2503
  %v2505 = vpop.f32.mrb[0].mxu0
  %2506 = vmatprep.mubr.bf16.mxu0 %v2423
  %2507 = vmatmul.mubr.bf16.gmra.mrb[0].mxu0 %v2422
  %v2508 = vpop.f32.mrb[0].mxu0
  %v2509 = vadd.f32 %v2326, %v2508
  %v2510 = vpop.f32.mrb[0].mxu0
  %v2511 = vpop.f32.mrb[0].mxu0
  %v2512 = vadd.f32 %v2331, %v2511
  %v2513 = vpop.f32.mrb[0].mxu0
  %2514 = vmatprep.mubr.bf16.mxu0 %v2428
  %2515 = vmatmul.mubr.bf16.gmra.mrb[0].mxu0 %v2427
  %v2516 = vpop.f32.mrb[0].mxu0
  %v2517 = vadd.f32 %v2336, %v2516
  %v2518 = vpop.f32.mrb[0].mxu0
  %v2519 = vpop.f32.mrb[0].mxu0
  %v2520 = vadd.f32 %v2341, %v2519
  %v2521 = vpop.f32.mrb[0].mxu0
  %2522 = vmatprep.mubr.bf16.mxu0 %v2433
  %2523 = vmatmul.mubr.bf16.gmra.mrb[0].mxu0 %v2432
  %v2524 = vpop.f32.mrb[0].mxu0
  %v2525 = vadd.f32 %v2346, %v2524
  %v2526 = vpop.f32.mrb[0].mxu0
  %v2527 = vpop.f32.mrb[0].mxu0
  %v2528 = vadd.f32 %v2351, %v2527
  %v2529 = vpop.f32.mrb[0].mxu0
  %2530 = vdwg.mxu0
  %2531 = vmatprep.subr.bf16.mxu0 0
  %2532 = vmatpush1.bf16.msra.mxu0 %v2293
  %2533 = vmatprep.subr.bf16.mxu0 0
  %2534 = vmatpush1.bf16.msra.mxu0 %v2294
  %2535 = vmatprep.subr.bf16.mxu0 0
  %2536 = vmatpush1.bf16.msra.mxu0 %v2295
  %2537 = vmatprep.subr.bf16.mxu0 0
  %2538 = vmatpush1.bf16.msra.mxu0 %v2296
  %2539 = vmatprep.subr.bf16.mxu0 0
  %2540 = vmatpush1.bf16.msra.mxu0 %v2297
  %2541 = vmatprep.subr.bf16.mxu0 0
  %2542 = vmatpush1.bf16.msra.mxu0 %v2298
  %2543 = vmatprep.subr.bf16.mxu0 0
  %2544 = vmatpush1.bf16.msra.mxu0 %v2299
  %2545 = vmatprep.subr.bf16.mxu0 0
  %2546 = vmatpush1.bf16.msra.mxu0 %v2300
  %2547 = vmatprep.subr.bf16.mxu0 0
  %2548 = vmatpush1.bf16.msra.mxu0 %v2301
  %2549 = vmatprep.subr.bf16.mxu0 0
  %2550 = vmatpush1.bf16.msra.mxu0 %v2302
  %2551 = vmatprep.subr.bf16.mxu0 0
  %2552 = vmatpush1.bf16.msra.mxu0 %v2303
  %2553 = vmatprep.subr.bf16.mxu0 0
  %2554 = vmatpush1.bf16.msra.mxu0 %v2304
  %2555 = vmatprep.subr.bf16.mxu0 0
  %2556 = vmatpush1.bf16.msra.mxu0 %v2305
  %2557 = vmatprep.subr.bf16.mxu0 0
  %2558 = vmatpush1.bf16.msra.mxu0 %v2306
  %2559 = vmatprep.subr.bf16.mxu0 0
  %2560 = vmatpush1.bf16.msra.mxu0 %v2307
  %2561 = vmatprep.subr.bf16.mxu0 0
  %2562 = vmatpush1.bf16.msra.mxu0 %v2308
  %2563 = vmatprep.mubr.bf16.mxu0 %v2420
  %2564 = vmatmul.mubr.bf16.gmra.mrb[0].mxu0 %v2419
  %v2565 = vpop.f32.mrb[0].mxu0
  %v2566 = vadd.f32 %v2501, %v2565
  %v2567 = vpop.f32.mrb[0].mxu0
  %v2568 = vpop.f32.mrb[0].mxu0
  %v2569 = vadd.f32 %v2504, %v2568
  %v2570 = vpop.f32.mrb[0].mxu0
  %2571 = vmatprep.mubr.bf16.mxu0 %v2425
  %2572 = vmatmul.mubr.bf16.gmra.mrb[0].mxu0 %v2424
  %v2573 = vpop.f32.mrb[0].mxu0
  %v2574 = vadd.f32 %v2509, %v2573
  %v2575 = vpop.f32.mrb[0].mxu0
  %v2576 = vpop.f32.mrb[0].mxu0
  %v2577 = vadd.f32 %v2512, %v2576
  %v2578 = vpop.f32.mrb[0].mxu0
  %2579 = vmatprep.mubr.bf16.mxu0 %v2430
  %2580 = vmatmul.mubr.bf16.gmra.mrb[0].mxu0 %v2429
  %v2581 = vpop.f32.mrb[0].mxu0
  %v2582 = vadd.f32 %v2517, %v2581
  %v2583 = vpop.f32.mrb[0].mxu0
  %v2584 = vpop.f32.mrb[0].mxu0
  %v2585 = vadd.f32 %v2520, %v2584
  %v2586 = vpop.f32.mrb[0].mxu0
  %2587 = vmatprep.mubr.bf16.mxu0 %v2435
  %2588 = vmatmul.mubr.bf16.gmra.mrb[0].mxu0 %v2434
  %v2589 = vpop.f32.mrb[0].mxu0
  %v2590 = vadd.f32 %v2525, %v2589
  %v2591 = vpop.f32.mrb[0].mxu0
  %v2592 = vpop.f32.mrb[0].mxu0
  %v2593 = vadd.f32 %v2528, %v2592
  %v2594 = vpop.f32.mrb[0].mxu0
  %2595 = vdwg.mxu0
  %2596 = vmatprep.subr.bf16.mxu0 0
  %2597 = vmatpush1.bf16.msra.mxu0 %v2309
  %2598 = vmatprep.subr.bf16.mxu0 0
  %2599 = vmatpush1.bf16.msra.mxu0 %v2310
  %2600 = vmatprep.subr.bf16.mxu0 0
  %2601 = vmatpush1.bf16.msra.mxu0 %v2311
  %2602 = vmatprep.subr.bf16.mxu0 0
  %2603 = vmatpush1.bf16.msra.mxu0 %v2312
  %2604 = vmatprep.subr.bf16.mxu0 0
  %2605 = vmatpush1.bf16.msra.mxu0 0
  %2606 = vmatprep.subr.bf16.mxu0 0
  %2607 = vmatpush1.bf16.msra.mxu0 0
  %2608 = vmatprep.subr.bf16.mxu0 0
  %2609 = vmatpush1.bf16.msra.mxu0 0
  %2610 = vmatprep.subr.bf16.mxu0 0
  %2611 = vmatpush1.bf16.msra.mxu0 0
  %2612 = vmatprep.subr.bf16.mxu0 0
  %2613 = vmatpush1.bf16.msra.mxu0 0
  %2614 = vmatprep.subr.bf16.mxu0 0
  %2615 = vmatpush1.bf16.msra.mxu0 0
  %2616 = vmatprep.subr.bf16.mxu0 0
  %2617 = vmatpush1.bf16.msra.mxu0 0
  %2618 = vmatprep.subr.bf16.mxu0 0
  %2619 = vmatpush1.bf16.msra.mxu0 0
  %2620 = vmatprep.subr.bf16.mxu0 0
  %2621 = vmatpush1.bf16.msra.mxu0 0
  %2622 = vmatprep.subr.bf16.mxu0 0
  %2623 = vmatpush1.bf16.msra.mxu0 0
  %2624 = vmatprep.subr.bf16.mxu0 0
  %2625 = vmatpush1.bf16.msra.mxu0 0
  %2626 = vmatprep.subr.bf16.mxu0 0
  %2627 = vmatpush1.bf16.msra.mxu0 0
  %2628 = vmatprep.mubr.bf16.mxu0 0
  %2629 = vmatmul.mubr.bf16.gmra.mrb[0].mxu0 %v2455
  %v2630 = vpop.f32.mrb[0].mxu0
  %v2631 = vadd.f32 %v2566, %v2630
  %v2632 = vpop.f32.mrb[0].mxu0
  %v2633 = vpop.f32.mrb[0].mxu0
  %v2634 = vadd.f32 %v2569, %v2633
  %v2635 = vpop.f32.mrb[0].mxu0
  %2636 = vmatprep.mubr.bf16.mxu0 0
  %2637 = vmatmul.mubr.bf16.gmra.mrb[0].mxu0 %v2458
  %v2638 = vpop.f32.mrb[0].mxu0
  %v2639 = vadd.f32 %v2574, %v2638
  %v2640 = vpop.f32.mrb[0].mxu0
  %v2641 = vpop.f32.mrb[0].mxu0
  %v2642 = vadd.f32 %v2577, %v2641
  %v2643 = vpop.f32.mrb[0].mxu0
  %2644 = vmatprep.mubr.bf16.mxu0 0
  %2645 = vmatmul.mubr.bf16.gmra.mrb[0].mxu0 %v2461
  %v2646 = vpop.f32.mrb[0].mxu0
  %v2647 = vadd.f32 %v2582, %v2646
  %v2648 = vpop.f32.mrb[0].mxu0
  %v2649 = vpop.f32.mrb[0].mxu0
  %v2650 = vadd.f32 %v2585, %v2649
  %v2651 = vpop.f32.mrb[0].mxu0
  %2652 = vmatprep.mubr.bf16.mxu0 0
  %2653 = vmatmul.mubr.bf16.gmra.mrb[0].mxu0 %v2464
  %v2654 = vpop.f32.mrb[0].mxu0
  %v2655 = vadd.f32 %v2590, %v2654
  %v2656 = vpop.f32.mrb[0].mxu0
  %v2657 = vpop.f32.mrb[0].mxu0
  %v2658 = vadd.f32 %v2593, %v2657
  %v2659 = vpop.f32.mrb[0].mxu0
  %2660 = vdwg.mxu0
  %v2661 = vld [vmem:[%s12] sm:$0xff]
  %v2662 = vld [vmem:[%s12 + $0x8] sm:$0xff]
  %v2663 = vld [vmem:[%s12 + $0x10] sm:$0xff]
  %v2664 = vld [vmem:[%s12 + $0x18] sm:$0xff]
  %v2665 = vld [vmem:[%s12 + $0x20] sm:$0xff]
  %v2666 = vld [vmem:[%s12 + $0x28] sm:$0xff]
  %v2667 = vld [vmem:[%s12 + $0x30] sm:$0xff]
  %v2668 = vld [vmem:[%s12 + $0x38] sm:$0xff]
  %v2669 = vld [vmem:[%s13] sm:$0xff]
  %v2670 = vld [vmem:[%s13 + $0x8] sm:$0xff]
  %v2671 = vld [vmem:[%s13 + $0x10] sm:$0xff]
  %v2672 = vld [vmem:[%s13 + $0x18] sm:$0xff]
  %v2673 = vld [vmem:[%s13 + $0x20] sm:$0xff]
  %v2674 = vld [vmem:[%s13 + $0x28] sm:$0xff]
  %v2675 = vld [vmem:[%s13 + $0x30] sm:$0xff]
  %v2676 = vld [vmem:[%s13 + $0x38] sm:$0xff]
  %2677 = vadd.xlane.f32.xlu0 %v2631
  %v2678 = vpop.xlane.xlu0 %2677
  %2679 = vadd.xlane.f32.xlu0 %v2634
  %v2680 = vpop.xlane.xlu0 %2679
  %2681 = vadd.xlane.f32.xlu0 %v2639
  %v2682 = vpop.xlane.xlu0 %2681
  %2683 = vadd.xlane.f32.xlu0 %v2642
  %v2684 = vpop.xlane.xlu0 %2683
  %2685 = vadd.xlane.f32.xlu0 %v2647
  %v2686 = vpop.xlane.xlu0 %2685
  %2687 = vadd.xlane.f32.xlu0 %v2650
  %v2688 = vpop.xlane.xlu0 %2687
  %2689 = vadd.xlane.f32.xlu0 %v2655
  %v2690 = vpop.xlane.xlu0 %2689
  %2691 = vadd.xlane.f32.xlu0 %v2658
  %v2692 = vpop.xlane.xlu0 %2691
  %v2693 = vmul.f32 %v2678, 0.0078125
  %v2694 = vmul.f32 %v2680, 0.0078125
  %v2695 = vmul.f32 %v2682, 0.0078125
  %v2696 = vmul.f32 %v2684, 0.0078125
  %v2697 = vmul.f32 %v2686, 0.0078125
  %v2698 = vmul.f32 %v2688, 0.0078125
  %v2699 = vmul.f32 %v2690, 0.0078125
  %v2700 = vmul.f32 %v2692, 0.0078125
  %v2701 = vmul.f32 %v2631, %v2631
  %v2702 = vmul.f32 %v2634, %v2634
  %v2703 = vmul.f32 %v2639, %v2639
  %v2704 = vmul.f32 %v2642, %v2642
  %v2705 = vmul.f32 %v2647, %v2647
  %v2706 = vmul.f32 %v2650, %v2650
  %v2707 = vmul.f32 %v2655, %v2655
  %v2708 = vmul.f32 %v2658, %v2658
  %2709 = vadd.xlane.f32.xlu0 %v2701
  %v2710 = vpop.xlane.xlu0 %2709
  %2711 = vadd.xlane.f32.xlu0 %v2702
  %v2712 = vpop.xlane.xlu0 %2711
  %2713 = vadd.xlane.f32.xlu0 %v2703
  %v2714 = vpop.xlane.xlu0 %2713
  %2715 = vadd.xlane.f32.xlu0 %v2704
  %v2716 = vpop.xlane.xlu0 %2715
  %2717 = vadd.xlane.f32.xlu0 %v2705
  %v2718 = vpop.xlane.xlu0 %2717
  %2719 = vadd.xlane.f32.xlu0 %v2706
  %v2720 = vpop.xlane.xlu0 %2719
  %2721 = vadd.xlane.f32.xlu0 %v2707
  %v2722 = vpop.xlane.xlu0 %2721
  %2723 = vadd.xlane.f32.xlu0 %v2708
  %v2724 = vpop.xlane.xlu0 %2723
  %v2725 = vmul.f32 %v2710, 0.0078125
  %v2726 = vmul.f32 %v2712, 0.0078125
  %v2727 = vmul.f32 %v2714, 0.0078125
  %v2728 = vmul.f32 %v2716, 0.0078125
  %v2729 = vmul.f32 %v2718, 0.0078125
  %v2730 = vmul.f32 %v2720, 0.0078125
  %v2731 = vmul.f32 %v2722, 0.0078125
  %v2732 = vmul.f32 %v2724, 0.0078125
  %v2733 = vmul.f32 %v2693, %v2693
  %v2734 = vmul.f32 %v2694, %v2694
  %v2735 = vmul.f32 %v2695, %v2695
  %v2736 = vmul.f32 %v2696, %v2696
  %v2737 = vmul.f32 %v2697, %v2697
  %v2738 = vmul.f32 %v2698, %v2698
  %v2739 = vmul.f32 %v2699, %v2699
  %v2740 = vmul.f32 %v2700, %v2700
  %v2741 = vsub.f32 %v2725, %v2733
  %v2742 = vsub.f32 %v2726, %v2734
  %v2743 = vsub.f32 %v2727, %v2735
  %v2744 = vsub.f32 %v2728, %v2736
  %v2745 = vsub.f32 %v2729, %v2737
  %v2746 = vsub.f32 %v2730, %v2738
  %v2747 = vsub.f32 %v2731, %v2739
  %v2748 = vsub.f32 %v2732, %v2740
  %v2749 = vsub.f32 %v2631, %v2693
  %v2750 = vsub.f32 %v2634, %v2694
  %v2751 = vsub.f32 %v2639, %v2695
  %v2752 = vsub.f32 %v2642, %v2696
  %v2753 = vsub.f32 %v2647, %v2697
  %v2754 = vsub.f32 %v2650, %v2698
  %v2755 = vsub.f32 %v2655, %v2699
  %v2756 = vsub.f32 %v2658, %v2700
  %2758 = vset.pattern.permute.xlu0 0
  %2759 = vperm.xlu0 %2758, %v2661
  %v2760 = vpop.permute.xlu0 %2759
  %2763 = vset.pattern.permute.xlu0 0
  %2764 = vperm.xlu0 %2763, %v2662
  %v2765 = vpop.permute.xlu0 %2764
  %2768 = vset.pattern.permute.xlu0 0
  %2769 = vperm.xlu0 %2768, %v2663
  %v2770 = vpop.permute.xlu0 %2769
  %2773 = vset.pattern.permute.xlu0 0
  %2774 = vperm.xlu0 %2773, %v2664
  %v2775 = vpop.permute.xlu0 %2774
  %2778 = vset.pattern.permute.xlu0 0
  %2779 = vperm.xlu0 %2778, %v2665
  %v2780 = vpop.permute.xlu0 %2779
  %2783 = vset.pattern.permute.xlu0 0
  %2784 = vperm.xlu0 %2783, %v2666
  %v2785 = vpop.permute.xlu0 %2784
  %2788 = vset.pattern.permute.xlu0 0
  %2789 = vperm.xlu0 %2788, %v2667
  %v2790 = vpop.permute.xlu0 %2789
  %2793 = vset.pattern.permute.xlu0 0
  %2794 = vperm.xlu0 %2793, %v2668
  %v2795 = vpop.permute.xlu0 %2794
  %v2797 = vmul.f32 %v2760, %v2749
  %v2798 = vmul.f32 %v2765, %v2750
  %v2799 = vmul.f32 %v2770, %v2751
  %v2800 = vmul.f32 %v2775, %v2752
  %v2801 = vmul.f32 %v2780, %v2753
  %v2802 = vmul.f32 %v2785, %v2754
  %v2803 = vmul.f32 %v2790, %v2755
  %v2804 = vmul.f32 %v2795, %v2756
  %v2805 = vadd.f32 %v2741, 0.8
  %v2806 = vadd.f32 %v2742, 0.8
  %v2807 = vadd.f32 %v2743, 0.8
  %v2808 = vadd.f32 %v2744, 0.8
  %v2809 = vadd.f32 %v2745, 0.8
  %v2810 = vadd.f32 %v2746, 0.8
  %v2811 = vadd.f32 %v2747, 0.8
  %v2812 = vadd.f32 %v2748, 0.8
  %v2813 = vrsqrt.pop %v2805
  %v2814 = vrsqrt.pop %v2806
  %v2815 = vrsqrt.pop %v2807
  %v2816 = vrsqrt.pop %v2808
  %v2817 = vrsqrt.pop %v2809
  %v2818 = vrsqrt.pop %v2810
  %v2819 = vrsqrt.pop %v2811
  %v2820 = vrsqrt.pop %v2812
  %v2821 = vmul.f32 %v2797, %v2813
  %v2822 = vmul.f32 %v2798, %v2814
  %v2823 = vmul.f32 %v2799, %v2815
  %v2824 = vmul.f32 %v2800, %v2816
  %v2825 = vmul.f32 %v2801, %v2817
  %v2826 = vmul.f32 %v2802, %v2818
  %v2827 = vmul.f32 %v2803, %v2819
  %v2828 = vmul.f32 %v2804, %v2820
  %2830 = vset.pattern.permute.xlu0 0
  %2831 = vperm.xlu0 %2830, %v2669
  %v2832 = vpop.permute.xlu0 %2831
  %2835 = vset.pattern.permute.xlu0 0
  %2836 = vperm.xlu0 %2835, %v2670
  %v2837 = vpop.permute.xlu0 %2836
  %2840 = vset.pattern.permute.xlu0 0
  %2841 = vperm.xlu0 %2840, %v2671
  %v2842 = vpop.permute.xlu0 %2841
  %2845 = vset.pattern.permute.xlu0 0
  %2846 = vperm.xlu0 %2845, %v2672
  %v2847 = vpop.permute.xlu0 %2846
  %2850 = vset.pattern.permute.xlu0 0
  %2851 = vperm.xlu0 %2850, %v2673
  %v2852 = vpop.permute.xlu0 %2851
  %2855 = vset.pattern.permute.xlu0 0
  %2856 = vperm.xlu0 %2855, %v2674
  %v2857 = vpop.permute.xlu0 %2856
  %2860 = vset.pattern.permute.xlu0 0
  %2861 = vperm.xlu0 %2860, %v2675
  %v2862 = vpop.permute.xlu0 %2861
  %2865 = vset.pattern.permute.xlu0 0
  %2866 = vperm.xlu0 %2865, %v2676
  %v2867 = vpop.permute.xlu0 %2866
  %v2869 = vadd.f32 %v2821, %v2832
  %v2870 = vadd.f32 %v2822, %v2837
  %v2871 = vadd.f32 %v2823, %v2842
  %v2872 = vadd.f32 %v2824, %v2847
  %v2873 = vadd.f32 %v2825, %v2852
  %v2874 = vadd.f32 %v2826, %v2857
  %v2875 = vadd.f32 %v2827, %v2862
  %v2876 = vadd.f32 %v2828, %v2867
  %vm2877 = vcmp.gt.f32.partialorder %v2869, 0.0
  %vm2878 = vcmp.gt.f32.partialorder %v2870, 0.0
  %vm2879 = vcmp.gt.f32.partialorder %v2871, 0.0
  %vm2880 = vcmp.gt.f32.partialorder %v2872, 0.0
  %vm2881 = vcmp.gt.f32.partialorder %v2873, 0.0
  %vm2882 = vcmp.gt.f32.partialorder %v2874, 0.0
  %vm2883 = vcmp.gt.f32.partialorder %v2875, 0.0
  %vm2884 = vcmp.gt.f32.partialorder %v2876, 0.0
  %v2885 = vmul.f32 %v2869, 0.2
  %v2886 = vmul.f32 %v2870, 0.2
  %v2887 = vmul.f32 %v2871, 0.2
  %v2888 = vmul.f32 %v2872, 0.2
  %v2889 = vmul.f32 %v2873, 0.2
  %v2890 = vmul.f32 %v2874, 0.2
  %v2891 = vmul.f32 %v2875, 0.2
  %v2892 = vmul.f32 %v2876, 0.2
  %v2893 = vsel %vm2877, %v2869, %v2885
  %v2894 = vsel %vm2878, %v2870, %v2886
  %v2895 = vsel %vm2879, %v2871, %v2887
  %v2896 = vsel %vm2880, %v2872, %v2888
  %v2897 = vsel %vm2881, %v2873, %v2889
  %v2898 = vsel %vm2882, %v2874, %v2890
  %v2899 = vsel %vm2883, %v2875, %v2891
  %v2900 = vsel %vm2884, %v2876, %v2892
  %v2901 = vld [vmem:[%s14] sm:$0xff]
  %v2902 = vld [vmem:[%s14 + $0x8] sm:$0xff]
  %v2903 = vld [vmem:[%s14 + $0x10] sm:$0xff]
  %v2904 = vld [vmem:[%s14 + $0x18] sm:$0xff]
  %v2905 = vld [vmem:[%s14 + $0x20] sm:$0xff]
  %v2906 = vld [vmem:[%s14 + $0x28] sm:$0xff]
  %v2907 = vld [vmem:[%s14 + $0x30] sm:$0xff]
  %v2908 = vld [vmem:[%s14 + $0x38] sm:$0xff]
  %v2909 = vld [vmem:[%s14 + $0x40] sm:$0xff]
  %v2910 = vld [vmem:[%s14 + $0x48] sm:$0xff]
  %v2911 = vld [vmem:[%s14 + $0x50] sm:$0xff]
  %v2912 = vld [vmem:[%s14 + $0x58] sm:$0xff]
  %v2913 = vld [vmem:[%s14 + $0x60] sm:$0xff]
  %v2914 = vld [vmem:[%s14 + $0x68] sm:$0xff]
  %v2915 = vld [vmem:[%s14 + $0x70] sm:$0xff]
  %v2916 = vld [vmem:[%s14 + $0x78] sm:$0xff]
  %v2917 = vld [vmem:[%s14 + $0x80] sm:$0xff]
  %v2918 = vld [vmem:[%s14 + $0x88] sm:$0xff]
  %v2919 = vld [vmem:[%s14 + $0x90] sm:$0xff]
  %v2920 = vld [vmem:[%s14 + $0x98] sm:$0xff]
  %v2921 = vld [vmem:[%s14 + $0xa0] sm:$0xff]
  %v2922 = vld [vmem:[%s14 + $0xa8] sm:$0xff]
  %v2923 = vld [vmem:[%s14 + $0xb0] sm:$0xff]
  %v2924 = vld [vmem:[%s14 + $0xb8] sm:$0xff]
  %v2925 = vld [vmem:[%s14 + $0xc0] sm:$0xff]
  %v2926 = vld [vmem:[%s14 + $0xc8] sm:$0xff]
  %v2927 = vld [vmem:[%s14 + $0xd0] sm:$0xff]
  %v2928 = vld [vmem:[%s14 + $0xd8] sm:$0xff]
  %v2929 = vld [vmem:[%s14 + $0xe0] sm:$0xff]
  %v2930 = vld [vmem:[%s14 + $0xe8] sm:$0xff]
  %v2931 = vld [vmem:[%s14 + $0xf0] sm:$0xff]
  %v2932 = vld [vmem:[%s14 + $0xf8] sm:$0xff]
  %v2933 = vld [vmem:[%s14 + $0x100] sm:$0xff]
  %v2934 = vld [vmem:[%s14 + $0x108] sm:$0xff]
  %v2935 = vld [vmem:[%s14 + $0x110] sm:$0xff]
  %v2936 = vld [vmem:[%s14 + $0x118] sm:$0xff]
  %v2937 = vld [vmem:[%s14 + $0x120] sm:$0xff]
  %v2938 = vld [vmem:[%s14 + $0x128] sm:$0xff]
  %v2939 = vld [vmem:[%s14 + $0x130] sm:$0xff]
  %v2940 = vld [vmem:[%s14 + $0x138] sm:$0xff]
  %v2941 = vld [vmem:[%s14 + $0x140] sm:$0xff]
  %v2942 = vld [vmem:[%s14 + $0x148] sm:$0xff]
  %v2943 = vld [vmem:[%s14 + $0x150] sm:$0xff]
  %v2944 = vld [vmem:[%s14 + $0x158] sm:$0xff]
  %v2945 = vld [vmem:[%s14 + $0x160] sm:$0xff]
  %v2946 = vld [vmem:[%s14 + $0x168] sm:$0xff]
  %v2947 = vld [vmem:[%s14 + $0x170] sm:$0xff]
  %v2948 = vld [vmem:[%s14 + $0x178] sm:$0xff]
  %v2949 = vld [vmem:[%s14 + $0x180] sm:$0xff]
  %v2950 = vld [vmem:[%s14 + $0x188] sm:$0xff]
  %v2951 = vld [vmem:[%s14 + $0x190] sm:$0xff]
  %v2952 = vld [vmem:[%s14 + $0x198] sm:$0xff]
  %v2953 = vld [vmem:[%s14 + $0x1a0] sm:$0xff]
  %v2954 = vld [vmem:[%s14 + $0x1a8] sm:$0xff]
  %v2955 = vld [vmem:[%s14 + $0x1b0] sm:$0xff]
  %v2956 = vld [vmem:[%s14 + $0x1b8] sm:$0xff]
  %v2957 = vld [vmem:[%s14 + $0x1c0] sm:$0xff]
  %v2958 = vld [vmem:[%s14 + $0x1c8] sm:$0xff]
  %v2959 = vld [vmem:[%s14 + $0x1d0] sm:$0xff]
  %v2960 = vld [vmem:[%s14 + $0x1d8] sm:$0xff]
  %v2961 = vld [vmem:[%s14 + $0x1e0] sm:$0xff]
  %v2962 = vld [vmem:[%s14 + $0x1e8] sm:$0xff]
  %v2963 = vld [vmem:[%s14 + $0x1f0] sm:$0xff]
  %v2964 = vld [vmem:[%s14 + $0x1f8] sm:$0xff]
  %2965 = vmatprep.subr.mxu0 %v2902
  %2966 = vmatpush1.msra.mxu0 %v2901
  %2967 = vmatprep.subr.mxu0 %v2906
  %2968 = vmatpush1.msra.mxu0 %v2905
  %2969 = vmatprep.subr.mxu0 %v2910
  %2970 = vmatpush1.msra.mxu0 %v2909
  %2971 = vmatprep.subr.mxu0 %v2914
  %2972 = vmatpush1.msra.mxu0 %v2913
  %2973 = vmatprep.subr.mxu0 %v2918
  %2974 = vmatpush1.msra.mxu0 %v2917
  %2975 = vmatprep.subr.mxu0 %v2922
  %2976 = vmatpush1.msra.mxu0 %v2921
  %2977 = vmatprep.subr.mxu0 %v2926
  %2978 = vmatpush1.msra.mxu0 %v2925
  %2979 = vmatprep.subr.mxu0 %v2930
  %2980 = vmatpush1.msra.mxu0 %v2929
  %2981 = vmatprep.subr.mxu0 %v2934
  %2982 = vmatpush1.msra.mxu0 %v2933
  %2983 = vmatprep.subr.mxu0 %v2938
  %2984 = vmatpush1.msra.mxu0 %v2937
  %2985 = vmatprep.subr.mxu0 %v2942
  %2986 = vmatpush1.msra.mxu0 %v2941
  %2987 = vmatprep.subr.mxu0 %v2946
  %2988 = vmatpush1.msra.mxu0 %v2945
  %2989 = vmatprep.subr.mxu0 %v2950
  %2990 = vmatpush1.msra.mxu0 %v2949
  %2991 = vmatprep.subr.mxu0 %v2954
  %2992 = vmatpush1.msra.mxu0 %v2953
  %2993 = vmatprep.subr.mxu0 %v2958
  %2994 = vmatpush1.msra.mxu0 %v2957
  %2995 = vmatprep.subr.mxu0 %v2962
  %2996 = vmatpush1.msra.mxu0 %v2961
  %2997 = vmatprep.subr.mxu0 0.0
  %2998 = vmatpush1.msra.mxu0 0.0
  %2999 = vmatprep.subr.mxu0 0.0
  %3000 = vmatpush1.msra.mxu0 0.0
  %3001 = vmatprep.subr.mxu0 0.0
  %3002 = vmatpush1.msra.mxu0 0.0
  %3003 = vmatprep.subr.mxu0 0.0
  %3004 = vmatpush1.msra.mxu0 0.0
  %3005 = vmatprep.subr.mxu0 0.0
  %3006 = vmatpush1.msra.mxu0 0.0
  %3007 = vmatprep.subr.mxu0 0.0
  %3008 = vmatpush1.msra.mxu0 0.0
  %3009 = vmatprep.subr.mxu0 0.0
  %3010 = vmatpush1.msra.mxu0 0.0
  %3011 = vmatprep.subr.mxu0 0.0
  %3012 = vmatpush1.msra.mxu0 0.0
  %3013 = vmatprep.subr.mxu0 0.0
  %3014 = vmatpush1.msra.mxu0 0.0
  %3015 = vmatprep.subr.mxu0 0.0
  %3016 = vmatpush1.msra.mxu0 0.0
  %3017 = vmatprep.subr.mxu0 0.0
  %3018 = vmatpush1.msra.mxu0 0.0
  %3019 = vmatprep.subr.mxu0 0.0
  %3020 = vmatpush1.msra.mxu0 0.0
  %3021 = vmatprep.subr.mxu0 0.0
  %3022 = vmatpush1.msra.mxu0 0.0
  %3023 = vmatprep.subr.mxu0 0.0
  %3024 = vmatpush1.msra.mxu0 0.0
  %3025 = vmatprep.subr.mxu0 0.0
  %3026 = vmatpush1.msra.mxu0 0.0
  %3027 = vmatprep.subr.mxu0 0.0
  %3028 = vmatpush1.msra.mxu0 0.0
  %3029 = vmatprep.mubr.f32.mxu0 0.0
  %3030 = vmatmul.mubr.f32.gmra.mrb[0].mxu0 %v2893
  %v3031 = vpop.f32.mrb[0].mxu0
  %v3032 = vadd.f32 0.0, %v3031
  %v3033 = vpop.f32.mrb[0].mxu0
  %v3034 = vadd.f32 0.0, %v3033
  %3035 = vmatprep.mubr.f32.mxu0 0.0
  %3036 = vmatmul.mubr.f32.gmra.mrb[0].mxu0 %v2894
  %v3037 = vpop.f32.mrb[0].mxu0
  %v3038 = vadd.f32 0.0, %v3037
  %v3039 = vpop.f32.mrb[0].mxu0
  %v3040 = vadd.f32 0.0, %v3039
  %3041 = vmatprep.mubr.f32.mxu0 0.0
  %3042 = vmatmul.mubr.f32.gmra.mrb[0].mxu0 %v2895
  %v3043 = vpop.f32.mrb[0].mxu0
  %v3044 = vadd.f32 0.0, %v3043
  %v3045 = vpop.f32.mrb[0].mxu0
  %v3046 = vadd.f32 0.0, %v3045
  %3047 = vmatprep.mubr.f32.mxu0 0.0
  %3048 = vmatmul.mubr.f32.gmra.mrb[0].mxu0 %v2896
  %v3049 = vpop.f32.mrb[0].mxu0
  %v3050 = vadd.f32 0.0, %v3049
  %v3051 = vpop.f32.mrb[0].mxu0
  %v3052 = vadd.f32 0.0, %v3051
  %3053 = vmatprep.mubr.f32.mxu0 0.0
  %3054 = vmatmul.mubr.f32.gmra.mrb[0].mxu0 %v2897
  %v3055 = vpop.f32.mrb[0].mxu0
  %v3056 = vadd.f32 0.0, %v3055
  %v3057 = vpop.f32.mrb[0].mxu0
  %v3058 = vadd.f32 0.0, %v3057
  %3059 = vmatprep.mubr.f32.mxu0 0.0
  %3060 = vmatmul.mubr.f32.gmra.mrb[0].mxu0 %v2898
  %v3061 = vpop.f32.mrb[0].mxu0
  %v3062 = vadd.f32 0.0, %v3061
  %v3063 = vpop.f32.mrb[0].mxu0
  %v3064 = vadd.f32 0.0, %v3063
  %3065 = vmatprep.mubr.f32.mxu0 0.0
  %3066 = vmatmul.mubr.f32.gmra.mrb[0].mxu0 %v2899
  %v3067 = vpop.f32.mrb[0].mxu0
  %v3068 = vadd.f32 0.0, %v3067
  %v3069 = vpop.f32.mrb[0].mxu0
  %v3070 = vadd.f32 0.0, %v3069
  %3071 = vmatprep.mubr.f32.mxu0 0.0
  %3072 = vmatmul.mubr.f32.gmra.mrb[0].mxu0 %v2900
  %v3073 = vpop.f32.mrb[0].mxu0
  %v3074 = vadd.f32 0.0, %v3073
  %v3075 = vpop.f32.mrb[0].mxu0
  %v3076 = vadd.f32 0.0, %v3075
  %3077 = vdwg.mxu0
  %3078 = vmatprep.subr.mxu0 %v2904
  %3079 = vmatpush1.msra.mxu0 %v2903
  %3080 = vmatprep.subr.mxu0 %v2908
  %3081 = vmatpush1.msra.mxu0 %v2907
  %3082 = vmatprep.subr.mxu0 %v2912
  %3083 = vmatpush1.msra.mxu0 %v2911
  %3084 = vmatprep.subr.mxu0 %v2916
  %3085 = vmatpush1.msra.mxu0 %v2915
  %3086 = vmatprep.subr.mxu0 %v2920
  %3087 = vmatpush1.msra.mxu0 %v2919
  %3088 = vmatprep.subr.mxu0 %v2924
  %3089 = vmatpush1.msra.mxu0 %v2923
  %3090 = vmatprep.subr.mxu0 %v2928
  %3091 = vmatpush1.msra.mxu0 %v2927
  %3092 = vmatprep.subr.mxu0 %v2932
  %3093 = vmatpush1.msra.mxu0 %v2931
  %3094 = vmatprep.subr.mxu0 %v2936
  %3095 = vmatpush1.msra.mxu0 %v2935
  %3096 = vmatprep.subr.mxu0 %v2940
  %3097 = vmatpush1.msra.mxu0 %v2939
  %3098 = vmatprep.subr.mxu0 %v2944
  %3099 = vmatpush1.msra.mxu0 %v2943
  %3100 = vmatprep.subr.mxu0 %v2948
  %3101 = vmatpush1.msra.mxu0 %v2947
  %3102 = vmatprep.subr.mxu0 %v2952
  %3103 = vmatpush1.msra.mxu0 %v2951
  %3104 = vmatprep.subr.mxu0 %v2956
  %3105 = vmatpush1.msra.mxu0 %v2955
  %3106 = vmatprep.subr.mxu0 %v2960
  %3107 = vmatpush1.msra.mxu0 %v2959
  %3108 = vmatprep.subr.mxu0 %v2964
  %3109 = vmatpush1.msra.mxu0 %v2963
  %3110 = vmatprep.subr.mxu0 0.0
  %3111 = vmatpush1.msra.mxu0 0.0
  %3112 = vmatprep.subr.mxu0 0.0
  %3113 = vmatpush1.msra.mxu0 0.0
  %3114 = vmatprep.subr.mxu0 0.0
  %3115 = vmatpush1.msra.mxu0 0.0
  %3116 = vmatprep.subr.mxu0 0.0
  %3117 = vmatpush1.msra.mxu0 0.0
  %3118 = vmatprep.subr.mxu0 0.0
  %3119 = vmatpush1.msra.mxu0 0.0
  %3120 = vmatprep.subr.mxu0 0.0
  %3121 = vmatpush1.msra.mxu0 0.0
  %3122 = vmatprep.subr.mxu0 0.0
  %3123 = vmatpush1.msra.mxu0 0.0
  %3124 = vmatprep.subr.mxu0 0.0
  %3125 = vmatpush1.msra.mxu0 0.0
  %3126 = vmatprep.subr.mxu0 0.0
  %3127 = vmatpush1.msra.mxu0 0.0
  %3128 = vmatprep.subr.mxu0 0.0
  %3129 = vmatpush1.msra.mxu0 0.0
  %3130 = vmatprep.subr.mxu0 0.0
  %3131 = vmatpush1.msra.mxu0 0.0
  %3132 = vmatprep.subr.mxu0 0.0
  %3133 = vmatpush1.msra.mxu0 0.0
  %3134 = vmatprep.subr.mxu0 0.0
  %3135 = vmatpush1.msra.mxu0 0.0
  %3136 = vmatprep.subr.mxu0 0.0
  %3137 = vmatpush1.msra.mxu0 0.0
  %3138 = vmatprep.subr.mxu0 0.0
  %3139 = vmatpush1.msra.mxu0 0.0
  %3140 = vmatprep.subr.mxu0 0.0
  %3141 = vmatpush1.msra.mxu0 0.0
  %3142 = vmatprep.mubr.f32.mxu0 0.0
  %3143 = vmatmul.mubr.f32.gmra.mrb[0].mxu0 %v2893
  %v3144 = vpop.f32.mrb[0].mxu0
  %v3145 = vadd.f32 0.0, %v3144
  %v3146 = vpop.f32.mrb[0].mxu0
  %v3147 = vadd.f32 0.0, %v3146
  %3148 = vmatprep.mubr.f32.mxu0 0.0
  %3149 = vmatmul.mubr.f32.gmra.mrb[0].mxu0 %v2894
  %v3150 = vpop.f32.mrb[0].mxu0
  %v3151 = vadd.f32 0.0, %v3150
  %v3152 = vpop.f32.mrb[0].mxu0
  %v3153 = vadd.f32 0.0, %v3152
  %3154 = vmatprep.mubr.f32.mxu0 0.0
  %3155 = vmatmul.mubr.f32.gmra.mrb[0].mxu0 %v2895
  %v3156 = vpop.f32.mrb[0].mxu0
  %v3157 = vadd.f32 0.0, %v3156
  %v3158 = vpop.f32.mrb[0].mxu0
  %v3159 = vadd.f32 0.0, %v3158
  %3160 = vmatprep.mubr.f32.mxu0 0.0
  %3161 = vmatmul.mubr.f32.gmra.mrb[0].mxu0 %v2896
  %v3162 = vpop.f32.mrb[0].mxu0
  %v3163 = vadd.f32 0.0, %v3162
  %v3164 = vpop.f32.mrb[0].mxu0
  %v3165 = vadd.f32 0.0, %v3164
  %3166 = vmatprep.mubr.f32.mxu0 0.0
  %3167 = vmatmul.mubr.f32.gmra.mrb[0].mxu0 %v2897
  %v3168 = vpop.f32.mrb[0].mxu0
  %v3169 = vadd.f32 0.0, %v3168
  %v3170 = vpop.f32.mrb[0].mxu0
  %v3171 = vadd.f32 0.0, %v3170
  %3172 = vmatprep.mubr.f32.mxu0 0.0
  %3173 = vmatmul.mubr.f32.gmra.mrb[0].mxu0 %v2898
  %v3174 = vpop.f32.mrb[0].mxu0
  %v3175 = vadd.f32 0.0, %v3174
  %v3176 = vpop.f32.mrb[0].mxu0
  %v3177 = vadd.f32 0.0, %v3176
  %3178 = vmatprep.mubr.f32.mxu0 0.0
  %3179 = vmatmul.mubr.f32.gmra.mrb[0].mxu0 %v2899
  %v3180 = vpop.f32.mrb[0].mxu0
  %v3181 = vadd.f32 0.0, %v3180
  %v3182 = vpop.f32.mrb[0].mxu0
  %v3183 = vadd.f32 0.0, %v3182
  %3184 = vmatprep.mubr.f32.mxu0 0.0
  %3185 = vmatmul.mubr.f32.gmra.mrb[0].mxu0 %v2900
  %v3186 = vpop.f32.mrb[0].mxu0
  %v3187 = vadd.f32 0.0, %v3186
  %v3188 = vpop.f32.mrb[0].mxu0
  %v3189 = vadd.f32 0.0, %v3188
  %3190 = vdwg.mxu0
  %v3191 = vld [vmem:[%s15] sm:$0xff]
  %v3192 = vld [vmem:[%s15 + $0x8] sm:$0xff]
  %v3193 = vld [vmem:[%s15 + $0x10] sm:$0xf]
  %v3194 = vld [vmem:[%s15 + $0x14] sm:$0xff]
  %v3195 = vld [vmem:[%s15 + $0x1c] sm:$0xff]
  %v3196 = vld [vmem:[%s15 + $0x24] sm:$0xf]
  %v3197 = vld [vmem:[%s15 + $0x28] sm:$0xff]
  %v3198 = vld [vmem:[%s15 + $0x30] sm:$0xff]
  %v3199 = vld [vmem:[%s15 + $0x38] sm:$0xf]
  %v3200 = vld [vmem:[%s15 + $0x3c] sm:$0xff]
  %v3201 = vld [vmem:[%s15 + $0x44] sm:$0xff]
  %v3202 = vld [vmem:[%s15 + $0x4c] sm:$0xf]
  %v3203 = vld [vmem:[%s16] sm:$0xff]
  %v3204 = vld [vmem:[%s16 + $0x8] sm:$0xff]
  %v3205 = vld [vmem:[%s16 + $0x10] sm:$0xff]
  %v3206 = vld [vmem:[%s16 + $0x18] sm:$0xff]
  %v3207 = vld [vmem:[%s17] sm:$0xff]
  %v3208 = vld [vmem:[%s17 + $0x8] sm:$0xff]
  %v3209 = vld [vmem:[%s17 + $0x10] sm:$0xff]
  %v3210 = vld [vmem:[%s17 + $0x18] sm:$0xff]
  %v3211 = vld [vmem:[%s17 + $0x20] sm:$0x1]
  %v3212 = vld [vmem:[%s17 + $0x28] sm:$0x1]
  %v3213 = vld [vmem:[%s17 + $0x30] sm:$0x1]
  %v3214 = vld [vmem:[%s17 + $0x38] sm:$0x1]
  %3247 = vrot.lane.b32.xlu0 %v3032, 17
  %v3248 = vpop.permute.xlu0 %3247
  %3249 = vrot.lane.b32.xlu0 %v3034, 17
  %v3250 = vpop.permute.xlu0 %3249
  %3251 = vrot.lane.b32.xlu0 %v3145, 17
  %v3252 = vpop.permute.xlu0 %3251
  %3253 = vrot.lane.b32.xlu0 %v3147, 17
  %v3254 = vpop.permute.xlu0 %3253
  %3255 = vrot.lane.b32.xlu0 %v3038, 17
  %v3256 = vpop.permute.xlu0 %3255
  %3257 = vrot.lane.b32.xlu0 %v3040, 17
  %v3258 = vpop.permute.xlu0 %3257
  %3259 = vrot.lane.b32.xlu0 %v3151, 17
  %v3260 = vpop.permute.xlu0 %3259
  %3261 = vrot.lane.b32.xlu0 %v3153, 17
  %v3262 = vpop.permute.xlu0 %3261
  %3263 = vrot.lane.b32.xlu0 %v3044, 17
  %v3264 = vpop.permute.xlu0 %3263
  %3265 = vrot.lane.b32.xlu0 %v3046, 17
  %v3266 = vpop.permute.xlu0 %3265
  %3267 = vrot.lane.b32.xlu0 %v3157, 17
  %v3268 = vpop.permute.xlu0 %3267
  %3269 = vrot.lane.b32.xlu0 %v3159, 17
  %v3270 = vpop.permute.xlu0 %3269
  %3271 = vrot.lane.b32.xlu0 %v3050, 17
  %v3272 = vpop.permute.xlu0 %3271
  %3273 = vrot.lane.b32.xlu0 %v3052, 17
  %v3274 = vpop.permute.xlu0 %3273
  %3275 = vrot.lane.b32.xlu0 %v3163, 17
  %v3276 = vpop.permute.xlu0 %3275
  %3277 = vrot.lane.b32.xlu0 %v3165, 17
  %v3278 = vpop.permute.xlu0 %3277
  %3279 = vrot.lane.b32.xlu0 %v3056, 17
  %v3280 = vpop.permute.xlu0 %3279
  %3281 = vrot.lane.b32.xlu0 %v3058, 17
  %v3282 = vpop.permute.xlu0 %3281
  %3283 = vrot.lane.b32.xlu0 %v3169, 17
  %v3284 = vpop.permute.xlu0 %3283
  %3285 = vrot.lane.b32.xlu0 %v3171, 17
  %v3286 = vpop.permute.xlu0 %3285
  %3287 = vrot.lane.b32.xlu0 %v3062, 17
  %v3288 = vpop.permute.xlu0 %3287
  %3289 = vrot.lane.b32.xlu0 %v3064, 17
  %v3290 = vpop.permute.xlu0 %3289
  %3291 = vrot.lane.b32.xlu0 %v3175, 17
  %v3292 = vpop.permute.xlu0 %3291
  %3293 = vrot.lane.b32.xlu0 %v3177, 17
  %v3294 = vpop.permute.xlu0 %3293
  %3295 = vrot.lane.b32.xlu0 %v3068, 17
  %v3296 = vpop.permute.xlu0 %3295
  %3297 = vrot.lane.b32.xlu0 %v3070, 17
  %v3298 = vpop.permute.xlu0 %3297
  %3299 = vrot.lane.b32.xlu0 %v3181, 17
  %v3300 = vpop.permute.xlu0 %3299
  %3301 = vrot.lane.b32.xlu0 %v3183, 17
  %v3302 = vpop.permute.xlu0 %3301
  %3303 = vrot.lane.b32.xlu0 %v3074, 17
  %v3304 = vpop.permute.xlu0 %3303
  %3305 = vrot.lane.b32.xlu0 %v3076, 17
  %v3306 = vpop.permute.xlu0 %3305
  %3307 = vrot.lane.b32.xlu0 %v3187, 17
  %v3308 = vpop.permute.xlu0 %3307
  %3309 = vrot.lane.b32.xlu0 %v3189, 17
  %v3310 = vpop.permute.xlu0 %3309
  %vm3311 = vcmask 138240
  %v3312 = vsel %vm3311, %v3248, %v3250
  %v3313 = vsel %vm3311, %v3250, %v3252
  %v3314 = vsel %vm3311, %v3252, %v3254
  %v3315 = vsel %vm3311, %v3256, %v3258
  %v3316 = vsel %vm3311, %v3258, %v3260
  %v3317 = vsel %vm3311, %v3260, %v3262
  %v3318 = vsel %vm3311, %v3264, %v3266
  %v3319 = vsel %vm3311, %v3266, %v3268
  %v3320 = vsel %vm3311, %v3268, %v3270
  %v3321 = vsel %vm3311, %v3272, %v3274
  %v3322 = vsel %vm3311, %v3274, %v3276
  %v3323 = vsel %vm3311, %v3276, %v3278
  %v3324 = vsel %vm3311, %v3280, %v3282
  %v3325 = vsel %vm3311, %v3282, %v3284
  %v3326 = vsel %vm3311, %v3284, %v3286
  %v3327 = vsel %vm3311, %v3288, %v3290
  %v3328 = vsel %vm3311, %v3290, %v3292
  %v3329 = vsel %vm3311, %v3292, %v3294
  %v3330 = vsel %vm3311, %v3296, %v3298
  %v3331 = vsel %vm3311, %v3298, %v3300
  %v3332 = vsel %vm3311, %v3300, %v3302
  %v3333 = vsel %vm3311, %v3304, %v3306
  %v3334 = vsel %vm3311, %v3306, %v3308
  %v3335 = vsel %vm3311, %v3308, %v3310
  %v3368 = vsel %vm3311, 0.0, %v3248
  %v3369 = vsel %vm3311, 0.0, %v3256
  %v3370 = vsel %vm3311, 0.0, %v3264
  %v3371 = vsel %vm3311, 0.0, %v3272
  %v3372 = vsel %vm3311, 0.0, %v3280
  %v3373 = vsel %vm3311, 0.0, %v3288
  %v3374 = vsel %vm3311, 0.0, %v3296
  %v3375 = vsel %vm3311, 0.0, %v3304
  %v3376 = vlaneseq
  %v3377 = vshrl.u32 %v3376, 7
  %v3378 = vsub.s32 0, %v3377
  %v3379 = vrot.slane %v3207, %v3378
  %v3380 = vlaneseq
  %v3381 = vshrl.u32 %v3380, 7
  %v3382 = vsub.s32 0, %v3381
  %v3383 = vrot.slane %v3208, %v3382
  %v3384 = vlaneseq
  %v3385 = vshrl.u32 %v3384, 7
  %v3386 = vsub.s32 0, %v3385
  %v3387 = vrot.slane %v3209, %v3386
  %v3388 = vlaneseq
  %v3389 = vshrl.u32 %v3388, 7
  %v3390 = vsub.s32 0, %v3389
  %v3391 = vrot.slane %v3210, %v3390
  %v3392 = vmul.f32 %v3368, %v3379
  %v3393 = vmul.f32 %v3312, %v3383
  %v3394 = vmul.f32 %v3313, %v3387
  %v3395 = vmul.f32 %v3314, %v3391
  %v3396 = vmul.f32 %v3369, %v3379
  %v3397 = vmul.f32 %v3315, %v3383
  %v3398 = vmul.f32 %v3316, %v3387
  %v3399 = vmul.f32 %v3317, %v3391
  %v3400 = vmul.f32 %v3370, %v3379
  %v3401 = vmul.f32 %v3318, %v3383
  %v3402 = vmul.f32 %v3319, %v3387
  %v3403 = vmul.f32 %v3320, %v3391
  %v3404 = vmul.f32 %v3371, %v3379
  %v3405 = vmul.f32 %v3321, %v3383
  %v3406 = vmul.f32 %v3322, %v3387
  %v3407 = vmul.f32 %v3323, %v3391
  %v3408 = vmul.f32 %v3372, %v3379
  %v3409 = vmul.f32 %v3324, %v3383
  %v3410 = vmul.f32 %v3325, %v3387
  %v3411 = vmul.f32 %v3326, %v3391
  %v3412 = vmul.f32 %v3373, %v3379
  %v3413 = vmul.f32 %v3327, %v3383
  %v3414 = vmul.f32 %v3328, %v3387
  %v3415 = vmul.f32 %v3329, %v3391
  %v3416 = vmul.f32 %v3374, %v3379
  %v3417 = vmul.f32 %v3330, %v3383
  %v3418 = vmul.f32 %v3331, %v3387
  %v3419 = vmul.f32 %v3332, %v3391
  %v3420 = vmul.f32 %v3375, %v3379
  %v3421 = vmul.f32 %v3333, %v3383
  %v3422 = vmul.f32 %v3334, %v3387
  %v3423 = vmul.f32 %v3335, %v3391
  %3424 = vrot.lane.b32.xlu0 %v3032, 16
  %v3425 = vpop.permute.xlu0 %3424
  %3426 = vrot.lane.b32.xlu0 %v3034, 16
  %v3427 = vpop.permute.xlu0 %3426
  %3428 = vrot.lane.b32.xlu0 %v3145, 16
  %v3429 = vpop.permute.xlu0 %3428
  %3430 = vrot.lane.b32.xlu0 %v3147, 16
  %v3431 = vpop.permute.xlu0 %3430
  %3432 = vrot.lane.b32.xlu0 %v3038, 16
  %v3433 = vpop.permute.xlu0 %3432
  %3434 = vrot.lane.b32.xlu0 %v3040, 16
  %v3435 = vpop.permute.xlu0 %3434
  %3436 = vrot.lane.b32.xlu0 %v3151, 16
  %v3437 = vpop.permute.xlu0 %3436
  %3438 = vrot.lane.b32.xlu0 %v3153, 16
  %v3439 = vpop.permute.xlu0 %3438
  %3440 = vrot.lane.b32.xlu0 %v3044, 16
  %v3441 = vpop.permute.xlu0 %3440
  %3442 = vrot.lane.b32.xlu0 %v3046, 16
  %v3443 = vpop.permute.xlu0 %3442
  %3444 = vrot.lane.b32.xlu0 %v3157, 16
  %v3445 = vpop.permute.xlu0 %3444
  %3446 = vrot.lane.b32.xlu0 %v3159, 16
  %v3447 = vpop.permute.xlu0 %3446
  %3448 = vrot.lane.b32.xlu0 %v3050, 16
  %v3449 = vpop.permute.xlu0 %3448
  %3450 = vrot.lane.b32.xlu0 %v3052, 16
  %v3451 = vpop.permute.xlu0 %3450
  %3452 = vrot.lane.b32.xlu0 %v3163, 16
  %v3453 = vpop.permute.xlu0 %3452
  %3454 = vrot.lane.b32.xlu0 %v3165, 16
  %v3455 = vpop.permute.xlu0 %3454
  %3456 = vrot.lane.b32.xlu0 %v3056, 16
  %v3457 = vpop.permute.xlu0 %3456
  %3458 = vrot.lane.b32.xlu0 %v3058, 16
  %v3459 = vpop.permute.xlu0 %3458
  %3460 = vrot.lane.b32.xlu0 %v3169, 16
  %v3461 = vpop.permute.xlu0 %3460
  %3462 = vrot.lane.b32.xlu0 %v3171, 16
  %v3463 = vpop.permute.xlu0 %3462
  %3464 = vrot.lane.b32.xlu0 %v3062, 16
  %v3465 = vpop.permute.xlu0 %3464
  %3466 = vrot.lane.b32.xlu0 %v3064, 16
  %v3467 = vpop.permute.xlu0 %3466
  %3468 = vrot.lane.b32.xlu0 %v3175, 16
  %v3469 = vpop.permute.xlu0 %3468
  %3470 = vrot.lane.b32.xlu0 %v3177, 16
  %v3471 = vpop.permute.xlu0 %3470
  %3472 = vrot.lane.b32.xlu0 %v3068, 16
  %v3473 = vpop.permute.xlu0 %3472
  %3474 = vrot.lane.b32.xlu0 %v3070, 16
  %v3475 = vpop.permute.xlu0 %3474
  %3476 = vrot.lane.b32.xlu0 %v3181, 16
  %v3477 = vpop.permute.xlu0 %3476
  %3478 = vrot.lane.b32.xlu0 %v3183, 16
  %v3479 = vpop.permute.xlu0 %3478
  %3480 = vrot.lane.b32.xlu0 %v3074, 16
  %v3481 = vpop.permute.xlu0 %3480
  %3482 = vrot.lane.b32.xlu0 %v3076, 16
  %v3483 = vpop.permute.xlu0 %3482
  %3484 = vrot.lane.b32.xlu0 %v3187, 16
  %v3485 = vpop.permute.xlu0 %3484
  %3486 = vrot.lane.b32.xlu0 %v3189, 16
  %v3487 = vpop.permute.xlu0 %3486
  %vm3488 = vcmask 130048
  %v3489 = vsel %vm3488, %v3425, %v3427
  %v3490 = vsel %vm3488, %v3427, %v3429
  %v3491 = vsel %vm3488, %v3429, %v3431
  %v3492 = vsel %vm3488, %v3433, %v3435
  %v3493 = vsel %vm3488, %v3435, %v3437
  %v3494 = vsel %vm3488, %v3437, %v3439
  %v3495 = vsel %vm3488, %v3441, %v3443
  %v3496 = vsel %vm3488, %v3443, %v3445
  %v3497 = vsel %vm3488, %v3445, %v3447
  %v3498 = vsel %vm3488, %v3449, %v3451
  %v3499 = vsel %vm3488, %v3451, %v3453
  %v3500 = vsel %vm3488, %v3453, %v3455
  %v3501 = vsel %vm3488, %v3457, %v3459
  %v3502 = vsel %vm3488, %v3459, %v3461
  %v3503 = vsel %vm3488, %v3461, %v3463
  %v3504 = vsel %vm3488, %v3465, %v3467
  %v3505 = vsel %vm3488, %v3467, %v3469
  %v3506 = vsel %vm3488, %v3469, %v3471
  %v3507 = vsel %vm3488, %v3473, %v3475
  %v3508 = vsel %vm3488, %v3475, %v3477
  %v3509 = vsel %vm3488, %v3477, %v3479
  %v3510 = vsel %vm3488, %v3481, %v3483
  %v3511 = vsel %vm3488, %v3483, %v3485
  %v3512 = vsel %vm3488, %v3485, %v3487
  %v3545 = vsel %vm3488, 0.0, %v3425
  %v3546 = vsel %vm3488, 0.0, %v3433
  %v3547 = vsel %vm3488, 0.0, %v3441
  %v3548 = vsel %vm3488, 0.0, %v3449
  %v3549 = vsel %vm3488, 0.0, %v3457
  %v3550 = vsel %vm3488, 0.0, %v3465
  %v3551 = vsel %vm3488, 0.0, %v3473
  %v3552 = vsel %vm3488, 0.0, %v3481
  %v3553 = vlaneseq
  %v3554 = vshrl.u32 %v3553, 7
  %v3555 = vsub.s32 1, %v3554
  %v3556 = vrot.slane %v3207, %v3555
  %v3557 = vlaneseq
  %v3558 = vshrl.u32 %v3557, 7
  %v3559 = vsub.s32 1, %v3558
  %v3560 = vrot.slane %v3208, %v3559
  %v3561 = vlaneseq
  %v3562 = vshrl.u32 %v3561, 7
  %v3563 = vsub.s32 1, %v3562
  %v3564 = vrot.slane %v3209, %v3563
  %v3565 = vlaneseq
  %v3566 = vshrl.u32 %v3565, 7
  %v3567 = vsub.s32 1, %v3566
  %v3568 = vrot.slane %v3210, %v3567
  %v3569 = vmul.f32 %v3545, %v3556
  %v3570 = vmul.f32 %v3489, %v3560
  %v3571 = vmul.f32 %v3490, %v3564
  %v3572 = vmul.f32 %v3491, %v3568
  %v3573 = vmul.f32 %v3546, %v3556
  %v3574 = vmul.f32 %v3492, %v3560
  %v3575 = vmul.f32 %v3493, %v3564
  %v3576 = vmul.f32 %v3494, %v3568
  %v3577 = vmul.f32 %v3547, %v3556
  %v3578 = vmul.f32 %v3495, %v3560
  %v3579 = vmul.f32 %v3496, %v3564
  %v3580 = vmul.f32 %v3497, %v3568
  %v3581 = vmul.f32 %v3548, %v3556
  %v3582 = vmul.f32 %v3498, %v3560
  %v3583 = vmul.f32 %v3499, %v3564
  %v3584 = vmul.f32 %v3500, %v3568
  %v3585 = vmul.f32 %v3549, %v3556
  %v3586 = vmul.f32 %v3501, %v3560
  %v3587 = vmul.f32 %v3502, %v3564
  %v3588 = vmul.f32 %v3503, %v3568
  %v3589 = vmul.f32 %v3550, %v3556
  %v3590 = vmul.f32 %v3504, %v3560
  %v3591 = vmul.f32 %v3505, %v3564
  %v3592 = vmul.f32 %v3506, %v3568
  %v3593 = vmul.f32 %v3551, %v3556
  %v3594 = vmul.f32 %v3507, %v3560
  %v3595 = vmul.f32 %v3508, %v3564
  %v3596 = vmul.f32 %v3509, %v3568
  %v3597 = vmul.f32 %v3552, %v3556
  %v3598 = vmul.f32 %v3510, %v3560
  %v3599 = vmul.f32 %v3511, %v3564
  %v3600 = vmul.f32 %v3512, %v3568
  %3601 = vrot.lane.b32.xlu0 %v3032, 15
  %v3602 = vpop.permute.xlu0 %3601
  %3603 = vrot.lane.b32.xlu0 %v3034, 15
  %v3604 = vpop.permute.xlu0 %3603
  %3605 = vrot.lane.b32.xlu0 %v3145, 15
  %v3606 = vpop.permute.xlu0 %3605
  %3607 = vrot.lane.b32.xlu0 %v3147, 15
  %v3608 = vpop.permute.xlu0 %3607
  %3609 = vrot.lane.b32.xlu0 %v3038, 15
  %v3610 = vpop.permute.xlu0 %3609
  %3611 = vrot.lane.b32.xlu0 %v3040, 15
  %v3612 = vpop.permute.xlu0 %3611
  %3613 = vrot.lane.b32.xlu0 %v3151, 15
  %v3614 = vpop.permute.xlu0 %3613
  %3615 = vrot.lane.b32.xlu0 %v3153, 15
  %v3616 = vpop.permute.xlu0 %3615
  %3617 = vrot.lane.b32.xlu0 %v3044, 15
  %v3618 = vpop.permute.xlu0 %3617
  %3619 = vrot.lane.b32.xlu0 %v3046, 15
  %v3620 = vpop.permute.xlu0 %3619
  %3621 = vrot.lane.b32.xlu0 %v3157, 15
  %v3622 = vpop.permute.xlu0 %3621
  %3623 = vrot.lane.b32.xlu0 %v3159, 15
  %v3624 = vpop.permute.xlu0 %3623
  %3625 = vrot.lane.b32.xlu0 %v3050, 15
  %v3626 = vpop.permute.xlu0 %3625
  %3627 = vrot.lane.b32.xlu0 %v3052, 15
  %v3628 = vpop.permute.xlu0 %3627
  %3629 = vrot.lane.b32.xlu0 %v3163, 15
  %v3630 = vpop.permute.xlu0 %3629
  %3631 = vrot.lane.b32.xlu0 %v3165, 15
  %v3632 = vpop.permute.xlu0 %3631
  %3633 = vrot.lane.b32.xlu0 %v3056, 15
  %v3634 = vpop.permute.xlu0 %3633
  %3635 = vrot.lane.b32.xlu0 %v3058, 15
  %v3636 = vpop.permute.xlu0 %3635
  %3637 = vrot.lane.b32.xlu0 %v3169, 15
  %v3638 = vpop.permute.xlu0 %3637
  %3639 = vrot.lane.b32.xlu0 %v3171, 15
  %v3640 = vpop.permute.xlu0 %3639
  %3641 = vrot.lane.b32.xlu0 %v3062, 15
  %v3642 = vpop.permute.xlu0 %3641
  %3643 = vrot.lane.b32.xlu0 %v3064, 15
  %v3644 = vpop.permute.xlu0 %3643
  %3645 = vrot.lane.b32.xlu0 %v3175, 15
  %v3646 = vpop.permute.xlu0 %3645
  %3647 = vrot.lane.b32.xlu0 %v3177, 15
  %v3648 = vpop.permute.xlu0 %3647
  %3649 = vrot.lane.b32.xlu0 %v3068, 15
  %v3650 = vpop.permute.xlu0 %3649
  %3651 = vrot.lane.b32.xlu0 %v3070, 15
  %v3652 = vpop.permute.xlu0 %3651
  %3653 = vrot.lane.b32.xlu0 %v3181, 15
  %v3654 = vpop.permute.xlu0 %3653
  %3655 = vrot.lane.b32.xlu0 %v3183, 15
  %v3656 = vpop.permute.xlu0 %3655
  %3657 = vrot.lane.b32.xlu0 %v3074, 15
  %v3658 = vpop.permute.xlu0 %3657
  %3659 = vrot.lane.b32.xlu0 %v3076, 15
  %v3660 = vpop.permute.xlu0 %3659
  %3661 = vrot.lane.b32.xlu0 %v3187, 15
  %v3662 = vpop.permute.xlu0 %3661
  %3663 = vrot.lane.b32.xlu0 %v3189, 15
  %v3664 = vpop.permute.xlu0 %3663
  %vm3665 = vcmask 121856
  %v3666 = vsel %vm3665, %v3602, %v3604
  %v3667 = vsel %vm3665, %v3604, %v3606
  %v3668 = vsel %vm3665, %v3606, %v3608
  %v3669 = vsel %vm3665, %v3610, %v3612
  %v3670 = vsel %vm3665, %v3612, %v3614
  %v3671 = vsel %vm3665, %v3614, %v3616
  %v3672 = vsel %vm3665, %v3618, %v3620
  %v3673 = vsel %vm3665, %v3620, %v3622
  %v3674 = vsel %vm3665, %v3622, %v3624
  %v3675 = vsel %vm3665, %v3626, %v3628
  %v3676 = vsel %vm3665, %v3628, %v3630
  %v3677 = vsel %vm3665, %v3630, %v3632
  %v3678 = vsel %vm3665, %v3634, %v3636
  %v3679 = vsel %vm3665, %v3636, %v3638
  %v3680 = vsel %vm3665, %v3638, %v3640
  %v3681 = vsel %vm3665, %v3642, %v3644
  %v3682 = vsel %vm3665, %v3644, %v3646
  %v3683 = vsel %vm3665, %v3646, %v3648
  %v3684 = vsel %vm3665, %v3650, %v3652
  %v3685 = vsel %vm3665, %v3652, %v3654
  %v3686 = vsel %vm3665, %v3654, %v3656
  %v3687 = vsel %vm3665, %v3658, %v3660
  %v3688 = vsel %vm3665, %v3660, %v3662
  %v3689 = vsel %vm3665, %v3662, %v3664
  %v3722 = vsel %vm3665, 0.0, %v3602
  %v3723 = vsel %vm3665, 0.0, %v3610
  %v3724 = vsel %vm3665, 0.0, %v3618
  %v3725 = vsel %vm3665, 0.0, %v3626
  %v3726 = vsel %vm3665, 0.0, %v3634
  %v3727 = vsel %vm3665, 0.0, %v3642
  %v3728 = vsel %vm3665, 0.0, %v3650
  %v3729 = vsel %vm3665, 0.0, %v3658
  %v3730 = vlaneseq
  %v3731 = vshrl.u32 %v3730, 7
  %v3732 = vsub.s32 2, %v3731
  %v3733 = vrot.slane %v3207, %v3732
  %v3734 = vlaneseq
  %v3735 = vshrl.u32 %v3734, 7
  %v3736 = vsub.s32 2, %v3735
  %v3737 = vrot.slane %v3208, %v3736
  %v3738 = vlaneseq
  %v3739 = vshrl.u32 %v3738, 7
  %v3740 = vsub.s32 2, %v3739
  %v3741 = vrot.slane %v3209, %v3740
  %v3742 = vlaneseq
  %v3743 = vshrl.u32 %v3742, 7
  %v3744 = vsub.s32 2, %v3743
  %v3745 = vrot.slane %v3210, %v3744
  %v3746 = vmul.f32 %v3722, %v3733
  %v3747 = vmul.f32 %v3666, %v3737
  %v3748 = vmul.f32 %v3667, %v3741
  %v3749 = vmul.f32 %v3668, %v3745
  %v3750 = vmul.f32 %v3723, %v3733
  %v3751 = vmul.f32 %v3669, %v3737
  %v3752 = vmul.f32 %v3670, %v3741
  %v3753 = vmul.f32 %v3671, %v3745
  %v3754 = vmul.f32 %v3724, %v3733
  %v3755 = vmul.f32 %v3672, %v3737
  %v3756 = vmul.f32 %v3673, %v3741
  %v3757 = vmul.f32 %v3674, %v3745
  %v3758 = vmul.f32 %v3725, %v3733
  %v3759 = vmul.f32 %v3675, %v3737
  %v3760 = vmul.f32 %v3676, %v3741
  %v3761 = vmul.f32 %v3677, %v3745
  %v3762 = vmul.f32 %v3726, %v3733
  %v3763 = vmul.f32 %v3678, %v3737
  %v3764 = vmul.f32 %v3679, %v3741
  %v3765 = vmul.f32 %v3680, %v3745
  %v3766 = vmul.f32 %v3727, %v3733
  %v3767 = vmul.f32 %v3681, %v3737
  %v3768 = vmul.f32 %v3682, %v3741
  %v3769 = vmul.f32 %v3683, %v3745
  %v3770 = vmul.f32 %v3728, %v3733
  %v3771 = vmul.f32 %v3684, %v3737
  %v3772 = vmul.f32 %v3685, %v3741
  %v3773 = vmul.f32 %v3686, %v3745
  %v3774 = vmul.f32 %v3729, %v3733
  %v3775 = vmul.f32 %v3687, %v3737
  %v3776 = vmul.f32 %v3688, %v3741
  %v3777 = vmul.f32 %v3689, %v3745
  %3778 = vrot.lane.b32.xlu0 %v3032, 1
  %v3779 = vpop.permute.xlu0 %3778
  %3780 = vrot.lane.b32.xlu0 %v3034, 1
  %v3781 = vpop.permute.xlu0 %3780
  %3782 = vrot.lane.b32.xlu0 %v3145, 1
  %v3783 = vpop.permute.xlu0 %3782
  %3784 = vrot.lane.b32.xlu0 %v3147, 1
  %v3785 = vpop.permute.xlu0 %3784
  %3786 = vrot.lane.b32.xlu0 %v3038, 1
  %v3787 = vpop.permute.xlu0 %3786
  %3788 = vrot.lane.b32.xlu0 %v3040, 1
  %v3789 = vpop.permute.xlu0 %3788
  %3790 = vrot.lane.b32.xlu0 %v3151, 1
  %v3791 = vpop.permute.xlu0 %3790
  %3792 = vrot.lane.b32.xlu0 %v3153, 1
  %v3793 = vpop.permute.xlu0 %3792
  %3794 = vrot.lane.b32.xlu0 %v3044, 1
  %v3795 = vpop.permute.xlu0 %3794
  %3796 = vrot.lane.b32.xlu0 %v3046, 1
  %v3797 = vpop.permute.xlu0 %3796
  %3798 = vrot.lane.b32.xlu0 %v3157, 1
  %v3799 = vpop.permute.xlu0 %3798
  %3800 = vrot.lane.b32.xlu0 %v3159, 1
  %v3801 = vpop.permute.xlu0 %3800
  %3802 = vrot.lane.b32.xlu0 %v3050, 1
  %v3803 = vpop.permute.xlu0 %3802
  %3804 = vrot.lane.b32.xlu0 %v3052, 1
  %v3805 = vpop.permute.xlu0 %3804
  %3806 = vrot.lane.b32.xlu0 %v3163, 1
  %v3807 = vpop.permute.xlu0 %3806
  %3808 = vrot.lane.b32.xlu0 %v3165, 1
  %v3809 = vpop.permute.xlu0 %3808
  %3810 = vrot.lane.b32.xlu0 %v3056, 1
  %v3811 = vpop.permute.xlu0 %3810
  %3812 = vrot.lane.b32.xlu0 %v3058, 1
  %v3813 = vpop.permute.xlu0 %3812
  %3814 = vrot.lane.b32.xlu0 %v3169, 1
  %v3815 = vpop.permute.xlu0 %3814
  %3816 = vrot.lane.b32.xlu0 %v3171, 1
  %v3817 = vpop.permute.xlu0 %3816
  %3818 = vrot.lane.b32.xlu0 %v3062, 1
  %v3819 = vpop.permute.xlu0 %3818
  %3820 = vrot.lane.b32.xlu0 %v3064, 1
  %v3821 = vpop.permute.xlu0 %3820
  %3822 = vrot.lane.b32.xlu0 %v3175, 1
  %v3823 = vpop.permute.xlu0 %3822
  %3824 = vrot.lane.b32.xlu0 %v3177, 1
  %v3825 = vpop.permute.xlu0 %3824
  %3826 = vrot.lane.b32.xlu0 %v3068, 1
  %v3827 = vpop.permute.xlu0 %3826
  %3828 = vrot.lane.b32.xlu0 %v3070, 1
  %v3829 = vpop.permute.xlu0 %3828
  %3830 = vrot.lane.b32.xlu0 %v3181, 1
  %v3831 = vpop.permute.xlu0 %3830
  %3832 = vrot.lane.b32.xlu0 %v3183, 1
  %v3833 = vpop.permute.xlu0 %3832
  %3834 = vrot.lane.b32.xlu0 %v3074, 1
  %v3835 = vpop.permute.xlu0 %3834
  %3836 = vrot.lane.b32.xlu0 %v3076, 1
  %v3837 = vpop.permute.xlu0 %3836
  %3838 = vrot.lane.b32.xlu0 %v3187, 1
  %v3839 = vpop.permute.xlu0 %3838
  %3840 = vrot.lane.b32.xlu0 %v3189, 1
  %v3841 = vpop.permute.xlu0 %3840
  %v3842 = vsel %vm2064, %v3779, %v3781
  %v3843 = vsel %vm2064, %v3781, %v3783
  %v3844 = vsel %vm2064, %v3783, %v3785
  %v3845 = vsel %vm2064, %v3787, %v3789
  %v3846 = vsel %vm2064, %v3789, %v3791
  %v3847 = vsel %vm2064, %v3791, %v3793
  %v3848 = vsel %vm2064, %v3795, %v3797
  %v3849 = vsel %vm2064, %v3797, %v3799
  %v3850 = vsel %vm2064, %v3799, %v3801
  %v3851 = vsel %vm2064, %v3803, %v3805
  %v3852 = vsel %vm2064, %v3805, %v3807
  %v3853 = vsel %vm2064, %v3807, %v3809
  %v3854 = vsel %vm2064, %v3811, %v3813
  %v3855 = vsel %vm2064, %v3813, %v3815
  %v3856 = vsel %vm2064, %v3815, %v3817
  %v3857 = vsel %vm2064, %v3819, %v3821
  %v3858 = vsel %vm2064, %v3821, %v3823
  %v3859 = vsel %vm2064, %v3823, %v3825
  %v3860 = vsel %vm2064, %v3827, %v3829
  %v3861 = vsel %vm2064, %v3829, %v3831
  %v3862 = vsel %vm2064, %v3831, %v3833
  %v3863 = vsel %vm2064, %v3835, %v3837
  %v3864 = vsel %vm2064, %v3837, %v3839
  %v3865 = vsel %vm2064, %v3839, %v3841
  %v3898 = vsel %vm2064, 0.0, %v3779
  %v3899 = vsel %vm2064, 0.0, %v3787
  %v3900 = vsel %vm2064, 0.0, %v3795
  %v3901 = vsel %vm2064, 0.0, %v3803
  %v3902 = vsel %vm2064, 0.0, %v3811
  %v3903 = vsel %vm2064, 0.0, %v3819
  %v3904 = vsel %vm2064, 0.0, %v3827
  %v3905 = vsel %vm2064, 0.0, %v3835
  %v3906 = vlaneseq
  %v3907 = vshrl.u32 %v3906, 7
  %v3908 = vsub.s32 3, %v3907
  %v3909 = vrot.slane %v3207, %v3908
  %v3910 = vlaneseq
  %v3911 = vshrl.u32 %v3910, 7
  %v3912 = vsub.s32 3, %v3911
  %v3913 = vrot.slane %v3208, %v3912
  %v3914 = vlaneseq
  %v3915 = vshrl.u32 %v3914, 7
  %v3916 = vsub.s32 3, %v3915
  %v3917 = vrot.slane %v3209, %v3916
  %v3918 = vlaneseq
  %v3919 = vshrl.u32 %v3918, 7
  %v3920 = vsub.s32 3, %v3919
  %v3921 = vrot.slane %v3210, %v3920
  %v3922 = vmul.f32 %v3898, %v3909
  %v3923 = vmul.f32 %v3842, %v3913
  %v3924 = vmul.f32 %v3843, %v3917
  %v3925 = vmul.f32 %v3844, %v3921
  %v3926 = vmul.f32 %v3899, %v3909
  %v3927 = vmul.f32 %v3845, %v3913
  %v3928 = vmul.f32 %v3846, %v3917
  %v3929 = vmul.f32 %v3847, %v3921
  %v3930 = vmul.f32 %v3900, %v3909
  %v3931 = vmul.f32 %v3848, %v3913
  %v3932 = vmul.f32 %v3849, %v3917
  %v3933 = vmul.f32 %v3850, %v3921
  %v3934 = vmul.f32 %v3901, %v3909
  %v3935 = vmul.f32 %v3851, %v3913
  %v3936 = vmul.f32 %v3852, %v3917
  %v3937 = vmul.f32 %v3853, %v3921
  %v3938 = vmul.f32 %v3902, %v3909
  %v3939 = vmul.f32 %v3854, %v3913
  %v3940 = vmul.f32 %v3855, %v3917
  %v3941 = vmul.f32 %v3856, %v3921
  %v3942 = vmul.f32 %v3903, %v3909
  %v3943 = vmul.f32 %v3857, %v3913
  %v3944 = vmul.f32 %v3858, %v3917
  %v3945 = vmul.f32 %v3859, %v3921
  %v3946 = vmul.f32 %v3904, %v3909
  %v3947 = vmul.f32 %v3860, %v3913
  %v3948 = vmul.f32 %v3861, %v3917
  %v3949 = vmul.f32 %v3862, %v3921
  %v3950 = vmul.f32 %v3905, %v3909
  %v3951 = vmul.f32 %v3863, %v3913
  %v3952 = vmul.f32 %v3864, %v3917
  %v3953 = vmul.f32 %v3865, %v3921
  %v3954 = vlaneseq
  %v3955 = vshrl.u32 %v3954, 7
  %v3956 = vsub.s32 4, %v3955
  %v3957 = vrot.slane %v3207, %v3956
  %v3958 = vlaneseq
  %v3959 = vshrl.u32 %v3958, 7
  %v3960 = vsub.s32 4, %v3959
  %v3961 = vrot.slane %v3208, %v3960
  %v3962 = vlaneseq
  %v3963 = vshrl.u32 %v3962, 7
  %v3964 = vsub.s32 4, %v3963
  %v3965 = vrot.slane %v3209, %v3964
  %v3966 = vlaneseq
  %v3967 = vshrl.u32 %v3966, 7
  %v3968 = vsub.s32 4, %v3967
  %v3969 = vrot.slane %v3210, %v3968
  %v3970 = vmul.f32 %v3032, %v3957
  %v3971 = vmul.f32 %v3034, %v3961
  %v3972 = vmul.f32 %v3145, %v3965
  %v3973 = vmul.f32 %v3147, %v3969
  %v3974 = vmul.f32 %v3038, %v3957
  %v3975 = vmul.f32 %v3040, %v3961
  %v3976 = vmul.f32 %v3151, %v3965
  %v3977 = vmul.f32 %v3153, %v3969
  %v3978 = vmul.f32 %v3044, %v3957
  %v3979 = vmul.f32 %v3046, %v3961
  %v3980 = vmul.f32 %v3157, %v3965
  %v3981 = vmul.f32 %v3159, %v3969
  %v3982 = vmul.f32 %v3050, %v3957
  %v3983 = vmul.f32 %v3052, %v3961
  %v3984 = vmul.f32 %v3163, %v3965
  %v3985 = vmul.f32 %v3165, %v3969
  %v3986 = vmul.f32 %v3056, %v3957
  %v3987 = vmul.f32 %v3058, %v3961
  %v3988 = vmul.f32 %v3169, %v3965
  %v3989 = vmul.f32 %v3171, %v3969
  %v3990 = vmul.f32 %v3062, %v3957
  %v3991 = vmul.f32 %v3064, %v3961
  %v3992 = vmul.f32 %v3175, %v3965
  %v3993 = vmul.f32 %v3177, %v3969
  %v3994 = vmul.f32 %v3068, %v3957
  %v3995 = vmul.f32 %v3070, %v3961
  %v3996 = vmul.f32 %v3181, %v3965
  %v3997 = vmul.f32 %v3183, %v3969
  %v3998 = vmul.f32 %v3074, %v3957
  %v3999 = vmul.f32 %v3076, %v3961
  %v4000 = vmul.f32 %v3187, %v3965
  %v4001 = vmul.f32 %v3189, %v3969
  %4002 = vrot.lane.b32.xlu0 %v3032, 127
  %v4003 = vpop.permute.xlu0 %4002
  %4004 = vrot.lane.b32.xlu0 %v3034, 127
  %v4005 = vpop.permute.xlu0 %4004
  %4006 = vrot.lane.b32.xlu0 %v3145, 127
  %v4007 = vpop.permute.xlu0 %4006
  %4008 = vrot.lane.b32.xlu0 %v3147, 127
  %v4009 = vpop.permute.xlu0 %4008
  %4010 = vrot.lane.b32.xlu0 %v3038, 127
  %v4011 = vpop.permute.xlu0 %4010
  %4012 = vrot.lane.b32.xlu0 %v3040, 127
  %v4013 = vpop.permute.xlu0 %4012
  %4014 = vrot.lane.b32.xlu0 %v3151, 127
  %v4015 = vpop.permute.xlu0 %4014
  %4016 = vrot.lane.b32.xlu0 %v3153, 127
  %v4017 = vpop.permute.xlu0 %4016
  %4018 = vrot.lane.b32.xlu0 %v3044, 127
  %v4019 = vpop.permute.xlu0 %4018
  %4020 = vrot.lane.b32.xlu0 %v3046, 127
  %v4021 = vpop.permute.xlu0 %4020
  %4022 = vrot.lane.b32.xlu0 %v3157, 127
  %v4023 = vpop.permute.xlu0 %4022
  %4024 = vrot.lane.b32.xlu0 %v3159, 127
  %v4025 = vpop.permute.xlu0 %4024
  %4026 = vrot.lane.b32.xlu0 %v3050, 127
  %v4027 = vpop.permute.xlu0 %4026
  %4028 = vrot.lane.b32.xlu0 %v3052, 127
  %v4029 = vpop.permute.xlu0 %4028
  %4030 = vrot.lane.b32.xlu0 %v3163, 127
  %v4031 = vpop.permute.xlu0 %4030
  %4032 = vrot.lane.b32.xlu0 %v3165, 127
  %v4033 = vpop.permute.xlu0 %4032
  %4034 = vrot.lane.b32.xlu0 %v3056, 127
  %v4035 = vpop.permute.xlu0 %4034
  %4036 = vrot.lane.b32.xlu0 %v3058, 127
  %v4037 = vpop.permute.xlu0 %4036
  %4038 = vrot.lane.b32.xlu0 %v3169, 127
  %v4039 = vpop.permute.xlu0 %4038
  %4040 = vrot.lane.b32.xlu0 %v3171, 127
  %v4041 = vpop.permute.xlu0 %4040
  %4042 = vrot.lane.b32.xlu0 %v3062, 127
  %v4043 = vpop.permute.xlu0 %4042
  %4044 = vrot.lane.b32.xlu0 %v3064, 127
  %v4045 = vpop.permute.xlu0 %4044
  %4046 = vrot.lane.b32.xlu0 %v3175, 127
  %v4047 = vpop.permute.xlu0 %4046
  %4048 = vrot.lane.b32.xlu0 %v3177, 127
  %v4049 = vpop.permute.xlu0 %4048
  %4050 = vrot.lane.b32.xlu0 %v3068, 127
  %v4051 = vpop.permute.xlu0 %4050
  %4052 = vrot.lane.b32.xlu0 %v3070, 127
  %v4053 = vpop.permute.xlu0 %4052
  %4054 = vrot.lane.b32.xlu0 %v3181, 127
  %v4055 = vpop.permute.xlu0 %4054
  %4056 = vrot.lane.b32.xlu0 %v3183, 127
  %v4057 = vpop.permute.xlu0 %4056
  %4058 = vrot.lane.b32.xlu0 %v3074, 127
  %v4059 = vpop.permute.xlu0 %4058
  %4060 = vrot.lane.b32.xlu0 %v3076, 127
  %v4061 = vpop.permute.xlu0 %4060
  %4062 = vrot.lane.b32.xlu0 %v3187, 127
  %v4063 = vpop.permute.xlu0 %4062
  %4064 = vrot.lane.b32.xlu0 %v3189, 127
  %v4065 = vpop.permute.xlu0 %4064
  %v4066 = vsel %vm2121, %v4003, %v4005
  %v4067 = vsel %vm2121, %v4005, %v4007
  %v4068 = vsel %vm2121, %v4007, %v4009
  %v4069 = vsel %vm2121, %v4011, %v4013
  %v4070 = vsel %vm2121, %v4013, %v4015
  %v4071 = vsel %vm2121, %v4015, %v4017
  %v4072 = vsel %vm2121, %v4019, %v4021
  %v4073 = vsel %vm2121, %v4021, %v4023
  %v4074 = vsel %vm2121, %v4023, %v4025
  %v4075 = vsel %vm2121, %v4027, %v4029
  %v4076 = vsel %vm2121, %v4029, %v4031
  %v4077 = vsel %vm2121, %v4031, %v4033
  %v4078 = vsel %vm2121, %v4035, %v4037
  %v4079 = vsel %vm2121, %v4037, %v4039
  %v4080 = vsel %vm2121, %v4039, %v4041
  %v4081 = vsel %vm2121, %v4043, %v4045
  %v4082 = vsel %vm2121, %v4045, %v4047
  %v4083 = vsel %vm2121, %v4047, %v4049
  %v4084 = vsel %vm2121, %v4051, %v4053
  %v4085 = vsel %vm2121, %v4053, %v4055
  %v4086 = vsel %vm2121, %v4055, %v4057
  %v4087 = vsel %vm2121, %v4059, %v4061
  %v4088 = vsel %vm2121, %v4061, %v4063
  %v4089 = vsel %vm2121, %v4063, %v4065
  %v4122 = vsel %vm2121, %v4009, 0.0
  %v4123 = vsel %vm2121, %v4017, 0.0
  %v4124 = vsel %vm2121, %v4025, 0.0
  %v4125 = vsel %vm2121, %v4033, 0.0
  %v4126 = vsel %vm2121, %v4041, 0.0
  %v4127 = vsel %vm2121, %v4049, 0.0
  %v4128 = vsel %vm2121, %v4057, 0.0
  %v4129 = vsel %vm2121, %v4065, 0.0
  %v4130 = vlaneseq
  %v4131 = vshrl.u32 %v4130, 7
  %v4132 = vsub.s32 5, %v4131
  %v4133 = vrot.slane %v3207, %v4132
  %v4134 = vlaneseq
  %v4135 = vshrl.u32 %v4134, 7
  %v4136 = vsub.s32 5, %v4135
  %v4137 = vrot.slane %v3208, %v4136
  %v4138 = vlaneseq
  %v4139 = vshrl.u32 %v4138, 7
  %v4140 = vsub.s32 5, %v4139
  %v4141 = vrot.slane %v3209, %v4140
  %v4142 = vlaneseq
  %v4143 = vshrl.u32 %v4142, 7
  %v4144 = vsub.s32 5, %v4143
  %v4145 = vrot.slane %v3210, %v4144
  %v4146 = vmul.f32 %v4066, %v4133
  %v4147 = vmul.f32 %v4067, %v4137
  %v4148 = vmul.f32 %v4068, %v4141
  %v4149 = vmul.f32 %v4122, %v4145
  %v4150 = vmul.f32 %v4069, %v4133
  %v4151 = vmul.f32 %v4070, %v4137
  %v4152 = vmul.f32 %v4071, %v4141
  %v4153 = vmul.f32 %v4123, %v4145
  %v4154 = vmul.f32 %v4072, %v4133
  %v4155 = vmul.f32 %v4073, %v4137
  %v4156 = vmul.f32 %v4074, %v4141
  %v4157 = vmul.f32 %v4124, %v4145
  %v4158 = vmul.f32 %v4075, %v4133
  %v4159 = vmul.f32 %v4076, %v4137
  %v4160 = vmul.f32 %v4077, %v4141
  %v4161 = vmul.f32 %v4125, %v4145
  %v4162 = vmul.f32 %v4078, %v4133
  %v4163 = vmul.f32 %v4079, %v4137
  %v4164 = vmul.f32 %v4080, %v4141
  %v4165 = vmul.f32 %v4126, %v4145
  %v4166 = vmul.f32 %v4081, %v4133
  %v4167 = vmul.f32 %v4082, %v4137
  %v4168 = vmul.f32 %v4083, %v4141
  %v4169 = vmul.f32 %v4127, %v4145
  %v4170 = vmul.f32 %v4084, %v4133
  %v4171 = vmul.f32 %v4085, %v4137
  %v4172 = vmul.f32 %v4086, %v4141
  %v4173 = vmul.f32 %v4128, %v4145
  %v4174 = vmul.f32 %v4087, %v4133
  %v4175 = vmul.f32 %v4088, %v4137
  %v4176 = vmul.f32 %v4089, %v4141
  %v4177 = vmul.f32 %v4129, %v4145
  %4178 = vrot.lane.b32.xlu0 %v3032, 113
  %v4179 = vpop.permute.xlu0 %4178
  %4180 = vrot.lane.b32.xlu0 %v3034, 113
  %v4181 = vpop.permute.xlu0 %4180
  %4182 = vrot.lane.b32.xlu0 %v3145, 113
  %v4183 = vpop.permute.xlu0 %4182
  %4184 = vrot.lane.b32.xlu0 %v3147, 113
  %v4185 = vpop.permute.xlu0 %4184
  %4186 = vrot.lane.b32.xlu0 %v3038, 113
  %v4187 = vpop.permute.xlu0 %4186
  %4188 = vrot.lane.b32.xlu0 %v3040, 113
  %v4189 = vpop.permute.xlu0 %4188
  %4190 = vrot.lane.b32.xlu0 %v3151, 113
  %v4191 = vpop.permute.xlu0 %4190
  %4192 = vrot.lane.b32.xlu0 %v3153, 113
  %v4193 = vpop.permute.xlu0 %4192
  %4194 = vrot.lane.b32.xlu0 %v3044, 113
  %v4195 = vpop.permute.xlu0 %4194
  %4196 = vrot.lane.b32.xlu0 %v3046, 113
  %v4197 = vpop.permute.xlu0 %4196
  %4198 = vrot.lane.b32.xlu0 %v3157, 113
  %v4199 = vpop.permute.xlu0 %4198
  %4200 = vrot.lane.b32.xlu0 %v3159, 113
  %v4201 = vpop.permute.xlu0 %4200
  %4202 = vrot.lane.b32.xlu0 %v3050, 113
  %v4203 = vpop.permute.xlu0 %4202
  %4204 = vrot.lane.b32.xlu0 %v3052, 113
  %v4205 = vpop.permute.xlu0 %4204
  %4206 = vrot.lane.b32.xlu0 %v3163, 113
  %v4207 = vpop.permute.xlu0 %4206
  %4208 = vrot.lane.b32.xlu0 %v3165, 113
  %v4209 = vpop.permute.xlu0 %4208
  %4210 = vrot.lane.b32.xlu0 %v3056, 113
  %v4211 = vpop.permute.xlu0 %4210
  %4212 = vrot.lane.b32.xlu0 %v3058, 113
  %v4213 = vpop.permute.xlu0 %4212
  %4214 = vrot.lane.b32.xlu0 %v3169, 113
  %v4215 = vpop.permute.xlu0 %4214
  %4216 = vrot.lane.b32.xlu0 %v3171, 113
  %v4217 = vpop.permute.xlu0 %4216
  %4218 = vrot.lane.b32.xlu0 %v3062, 113
  %v4219 = vpop.permute.xlu0 %4218
  %4220 = vrot.lane.b32.xlu0 %v3064, 113
  %v4221 = vpop.permute.xlu0 %4220
  %4222 = vrot.lane.b32.xlu0 %v3175, 113
  %v4223 = vpop.permute.xlu0 %4222
  %4224 = vrot.lane.b32.xlu0 %v3177, 113
  %v4225 = vpop.permute.xlu0 %4224
  %4226 = vrot.lane.b32.xlu0 %v3068, 113
  %v4227 = vpop.permute.xlu0 %4226
  %4228 = vrot.lane.b32.xlu0 %v3070, 113
  %v4229 = vpop.permute.xlu0 %4228
  %4230 = vrot.lane.b32.xlu0 %v3181, 113
  %v4231 = vpop.permute.xlu0 %4230
  %4232 = vrot.lane.b32.xlu0 %v3183, 113
  %v4233 = vpop.permute.xlu0 %4232
  %4234 = vrot.lane.b32.xlu0 %v3074, 113
  %v4235 = vpop.permute.xlu0 %4234
  %4236 = vrot.lane.b32.xlu0 %v3076, 113
  %v4237 = vpop.permute.xlu0 %4236
  %4238 = vrot.lane.b32.xlu0 %v3187, 113
  %v4239 = vpop.permute.xlu0 %4238
  %4240 = vrot.lane.b32.xlu0 %v3189, 113
  %v4241 = vpop.permute.xlu0 %4240
  %vm4242 = vcmask 924672
  %v4243 = vsel %vm4242, %v4179, %v4181
  %v4244 = vsel %vm4242, %v4181, %v4183
  %v4245 = vsel %vm4242, %v4183, %v4185
  %v4246 = vsel %vm4242, %v4187, %v4189
  %v4247 = vsel %vm4242, %v4189, %v4191
  %v4248 = vsel %vm4242, %v4191, %v4193
  %v4249 = vsel %vm4242, %v4195, %v4197
  %v4250 = vsel %vm4242, %v4197, %v4199
  %v4251 = vsel %vm4242, %v4199, %v4201
  %v4252 = vsel %vm4242, %v4203, %v4205
  %v4253 = vsel %vm4242, %v4205, %v4207
  %v4254 = vsel %vm4242, %v4207, %v4209
  %v4255 = vsel %vm4242, %v4211, %v4213
  %v4256 = vsel %vm4242, %v4213, %v4215
  %v4257 = vsel %vm4242, %v4215, %v4217
  %v4258 = vsel %vm4242, %v4219, %v4221
  %v4259 = vsel %vm4242, %v4221, %v4223
  %v4260 = vsel %vm4242, %v4223, %v4225
  %v4261 = vsel %vm4242, %v4227, %v4229
  %v4262 = vsel %vm4242, %v4229, %v4231
  %v4263 = vsel %vm4242, %v4231, %v4233
  %v4264 = vsel %vm4242, %v4235, %v4237
  %v4265 = vsel %vm4242, %v4237, %v4239
  %v4266 = vsel %vm4242, %v4239, %v4241
  %v4299 = vsel %vm4242, %v4185, 0.0
  %v4300 = vsel %vm4242, %v4193, 0.0
  %v4301 = vsel %vm4242, %v4201, 0.0
  %v4302 = vsel %vm4242, %v4209, 0.0
  %v4303 = vsel %vm4242, %v4217, 0.0
  %v4304 = vsel %vm4242, %v4225, 0.0
  %v4305 = vsel %vm4242, %v4233, 0.0
  %v4306 = vsel %vm4242, %v4241, 0.0
  %v4307 = vlaneseq
  %v4308 = vshrl.u32 %v4307, 7
  %v4309 = vsub.s32 6, %v4308
  %v4310 = vrot.slane %v3207, %v4309
  %v4311 = vlaneseq
  %v4312 = vshrl.u32 %v4311, 7
  %v4313 = vsub.s32 6, %v4312
  %v4314 = vrot.slane %v3208, %v4313
  %v4315 = vlaneseq
  %v4316 = vshrl.u32 %v4315, 7
  %v4317 = vsub.s32 6, %v4316
  %v4318 = vrot.slane %v3209, %v4317
  %v4319 = vlaneseq
  %v4320 = vshrl.u32 %v4319, 7
  %v4321 = vsub.s32 6, %v4320
  %v4322 = vrot.slane %v3210, %v4321
  %v4323 = vmul.f32 %v4243, %v4310
  %v4324 = vmul.f32 %v4244, %v4314
  %v4325 = vmul.f32 %v4245, %v4318
  %v4326 = vmul.f32 %v4299, %v4322
  %v4327 = vmul.f32 %v4246, %v4310
  %v4328 = vmul.f32 %v4247, %v4314
  %v4329 = vmul.f32 %v4248, %v4318
  %v4330 = vmul.f32 %v4300, %v4322
  %v4331 = vmul.f32 %v4249, %v4310
  %v4332 = vmul.f32 %v4250, %v4314
  %v4333 = vmul.f32 %v4251, %v4318
  %v4334 = vmul.f32 %v4301, %v4322
  %v4335 = vmul.f32 %v4252, %v4310
  %v4336 = vmul.f32 %v4253, %v4314
  %v4337 = vmul.f32 %v4254, %v4318
  %v4338 = vmul.f32 %v4302, %v4322
  %v4339 = vmul.f32 %v4255, %v4310
  %v4340 = vmul.f32 %v4256, %v4314
  %v4341 = vmul.f32 %v4257, %v4318
  %v4342 = vmul.f32 %v4303, %v4322
  %v4343 = vmul.f32 %v4258, %v4310
  %v4344 = vmul.f32 %v4259, %v4314
  %v4345 = vmul.f32 %v4260, %v4318
  %v4346 = vmul.f32 %v4304, %v4322
  %v4347 = vmul.f32 %v4261, %v4310
  %v4348 = vmul.f32 %v4262, %v4314
  %v4349 = vmul.f32 %v4263, %v4318
  %v4350 = vmul.f32 %v4305, %v4322
  %v4351 = vmul.f32 %v4264, %v4310
  %v4352 = vmul.f32 %v4265, %v4314
  %v4353 = vmul.f32 %v4266, %v4318
  %v4354 = vmul.f32 %v4306, %v4322
  %4355 = vrot.lane.b32.xlu0 %v3032, 112
  %v4356 = vpop.permute.xlu0 %4355
  %4357 = vrot.lane.b32.xlu0 %v3034, 112
  %v4358 = vpop.permute.xlu0 %4357
  %4359 = vrot.lane.b32.xlu0 %v3145, 112
  %v4360 = vpop.permute.xlu0 %4359
  %4361 = vrot.lane.b32.xlu0 %v3147, 112
  %v4362 = vpop.permute.xlu0 %4361
  %4363 = vrot.lane.b32.xlu0 %v3038, 112
  %v4364 = vpop.permute.xlu0 %4363
  %4365 = vrot.lane.b32.xlu0 %v3040, 112
  %v4366 = vpop.permute.xlu0 %4365
  %4367 = vrot.lane.b32.xlu0 %v3151, 112
  %v4368 = vpop.permute.xlu0 %4367
  %4369 = vrot.lane.b32.xlu0 %v3153, 112
  %v4370 = vpop.permute.xlu0 %4369
  %4371 = vrot.lane.b32.xlu0 %v3044, 112
  %v4372 = vpop.permute.xlu0 %4371
  %4373 = vrot.lane.b32.xlu0 %v3046, 112
  %v4374 = vpop.permute.xlu0 %4373
  %4375 = vrot.lane.b32.xlu0 %v3157, 112
  %v4376 = vpop.permute.xlu0 %4375
  %4377 = vrot.lane.b32.xlu0 %v3159, 112
  %v4378 = vpop.permute.xlu0 %4377
  %4379 = vrot.lane.b32.xlu0 %v3050, 112
  %v4380 = vpop.permute.xlu0 %4379
  %4381 = vrot.lane.b32.xlu0 %v3052, 112
  %v4382 = vpop.permute.xlu0 %4381
  %4383 = vrot.lane.b32.xlu0 %v3163, 112
  %v4384 = vpop.permute.xlu0 %4383
  %4385 = vrot.lane.b32.xlu0 %v3165, 112
  %v4386 = vpop.permute.xlu0 %4385
  %4387 = vrot.lane.b32.xlu0 %v3056, 112
  %v4388 = vpop.permute.xlu0 %4387
  %4389 = vrot.lane.b32.xlu0 %v3058, 112
  %v4390 = vpop.permute.xlu0 %4389
  %4391 = vrot.lane.b32.xlu0 %v3169, 112
  %v4392 = vpop.permute.xlu0 %4391
  %4393 = vrot.lane.b32.xlu0 %v3171, 112
  %v4394 = vpop.permute.xlu0 %4393
  %4395 = vrot.lane.b32.xlu0 %v3062, 112
  %v4396 = vpop.permute.xlu0 %4395
  %4397 = vrot.lane.b32.xlu0 %v3064, 112
  %v4398 = vpop.permute.xlu0 %4397
  %4399 = vrot.lane.b32.xlu0 %v3175, 112
  %v4400 = vpop.permute.xlu0 %4399
  %4401 = vrot.lane.b32.xlu0 %v3177, 112
  %v4402 = vpop.permute.xlu0 %4401
  %4403 = vrot.lane.b32.xlu0 %v3068, 112
  %v4404 = vpop.permute.xlu0 %4403
  %4405 = vrot.lane.b32.xlu0 %v3070, 112
  %v4406 = vpop.permute.xlu0 %4405
  %4407 = vrot.lane.b32.xlu0 %v3181, 112
  %v4408 = vpop.permute.xlu0 %4407
  %4409 = vrot.lane.b32.xlu0 %v3183, 112
  %v4410 = vpop.permute.xlu0 %4409
  %4411 = vrot.lane.b32.xlu0 %v3074, 112
  %v4412 = vpop.permute.xlu0 %4411
  %4413 = vrot.lane.b32.xlu0 %v3076, 112
  %v4414 = vpop.permute.xlu0 %4413
  %4415 = vrot.lane.b32.xlu0 %v3187, 112
  %v4416 = vpop.permute.xlu0 %4415
  %4417 = vrot.lane.b32.xlu0 %v3189, 112
  %v4418 = vpop.permute.xlu0 %4417
  %vm4419 = vcmask 916480
  %v4420 = vsel %vm4419, %v4356, %v4358
  %v4421 = vsel %vm4419, %v4358, %v4360
  %v4422 = vsel %vm4419, %v4360, %v4362
  %v4423 = vsel %vm4419, %v4364, %v4366
  %v4424 = vsel %vm4419, %v4366, %v4368
  %v4425 = vsel %vm4419, %v4368, %v4370
  %v4426 = vsel %vm4419, %v4372, %v4374
  %v4427 = vsel %vm4419, %v4374, %v4376
  %v4428 = vsel %vm4419, %v4376, %v4378
  %v4429 = vsel %vm4419, %v4380, %v4382
  %v4430 = vsel %vm4419, %v4382, %v4384
  %v4431 = vsel %vm4419, %v4384, %v4386
  %v4432 = vsel %vm4419, %v4388, %v4390
  %v4433 = vsel %vm4419, %v4390, %v4392
  %v4434 = vsel %vm4419, %v4392, %v4394
  %v4435 = vsel %vm4419, %v4396, %v4398
  %v4436 = vsel %vm4419, %v4398, %v4400
  %v4437 = vsel %vm4419, %v4400, %v4402
  %v4438 = vsel %vm4419, %v4404, %v4406
  %v4439 = vsel %vm4419, %v4406, %v4408
  %v4440 = vsel %vm4419, %v4408, %v4410
  %v4441 = vsel %vm4419, %v4412, %v4414
  %v4442 = vsel %vm4419, %v4414, %v4416
  %v4443 = vsel %vm4419, %v4416, %v4418
  %v4476 = vsel %vm4419, %v4362, 0.0
  %v4477 = vsel %vm4419, %v4370, 0.0
  %v4478 = vsel %vm4419, %v4378, 0.0
  %v4479 = vsel %vm4419, %v4386, 0.0
  %v4480 = vsel %vm4419, %v4394, 0.0
  %v4481 = vsel %vm4419, %v4402, 0.0
  %v4482 = vsel %vm4419, %v4410, 0.0
  %v4483 = vsel %vm4419, %v4418, 0.0
  %v4484 = vlaneseq
  %v4485 = vshrl.u32 %v4484, 7
  %v4486 = vsub.s32 7, %v4485
  %v4487 = vrot.slane %v3207, %v4486
  %v4488 = vlaneseq
  %v4489 = vshrl.u32 %v4488, 7
  %v4490 = vsub.s32 7, %v4489
  %v4491 = vrot.slane %v3208, %v4490
  %v4492 = vlaneseq
  %v4493 = vshrl.u32 %v4492, 7
  %v4494 = vsub.s32 7, %v4493
  %v4495 = vrot.slane %v3209, %v4494
  %v4496 = vlaneseq
  %v4497 = vshrl.u32 %v4496, 7
  %v4498 = vsub.s32 7, %v4497
  %v4499 = vrot.slane %v3210, %v4498
  %v4500 = vmul.f32 %v4420, %v4487
  %v4501 = vmul.f32 %v4421, %v4491
  %v4502 = vmul.f32 %v4422, %v4495
  %v4503 = vmul.f32 %v4476, %v4499
  %v4504 = vmul.f32 %v4423, %v4487
  %v4505 = vmul.f32 %v4424, %v4491
  %v4506 = vmul.f32 %v4425, %v4495
  %v4507 = vmul.f32 %v4477, %v4499
  %v4508 = vmul.f32 %v4426, %v4487
  %v4509 = vmul.f32 %v4427, %v4491
  %v4510 = vmul.f32 %v4428, %v4495
  %v4511 = vmul.f32 %v4478, %v4499
  %v4512 = vmul.f32 %v4429, %v4487
  %v4513 = vmul.f32 %v4430, %v4491
  %v4514 = vmul.f32 %v4431, %v4495
  %v4515 = vmul.f32 %v4479, %v4499
  %v4516 = vmul.f32 %v4432, %v4487
  %v4517 = vmul.f32 %v4433, %v4491
  %v4518 = vmul.f32 %v4434, %v4495
  %v4519 = vmul.f32 %v4480, %v4499
  %v4520 = vmul.f32 %v4435, %v4487
  %v4521 = vmul.f32 %v4436, %v4491
  %v4522 = vmul.f32 %v4437, %v4495
  %v4523 = vmul.f32 %v4481, %v4499
  %v4524 = vmul.f32 %v4438, %v4487
  %v4525 = vmul.f32 %v4439, %v4491
  %v4526 = vmul.f32 %v4440, %v4495
  %v4527 = vmul.f32 %v4482, %v4499
  %v4528 = vmul.f32 %v4441, %v4487
  %v4529 = vmul.f32 %v4442, %v4491
  %v4530 = vmul.f32 %v4443, %v4495
  %v4531 = vmul.f32 %v4483, %v4499
  %4532 = vrot.lane.b32.xlu0 %v3032, 111
  %v4533 = vpop.permute.xlu0 %4532
  %4534 = vrot.lane.b32.xlu0 %v3034, 111
  %v4535 = vpop.permute.xlu0 %4534
  %4536 = vrot.lane.b32.xlu0 %v3145, 111
  %v4537 = vpop.permute.xlu0 %4536
  %4538 = vrot.lane.b32.xlu0 %v3147, 111
  %v4539 = vpop.permute.xlu0 %4538
  %4540 = vrot.lane.b32.xlu0 %v3038, 111
  %v4541 = vpop.permute.xlu0 %4540
  %4542 = vrot.lane.b32.xlu0 %v3040, 111
  %v4543 = vpop.permute.xlu0 %4542
  %4544 = vrot.lane.b32.xlu0 %v3151, 111
  %v4545 = vpop.permute.xlu0 %4544
  %4546 = vrot.lane.b32.xlu0 %v3153, 111
  %v4547 = vpop.permute.xlu0 %4546
  %4548 = vrot.lane.b32.xlu0 %v3044, 111
  %v4549 = vpop.permute.xlu0 %4548
  %4550 = vrot.lane.b32.xlu0 %v3046, 111
  %v4551 = vpop.permute.xlu0 %4550
  %4552 = vrot.lane.b32.xlu0 %v3157, 111
  %v4553 = vpop.permute.xlu0 %4552
  %4554 = vrot.lane.b32.xlu0 %v3159, 111
  %v4555 = vpop.permute.xlu0 %4554
  %4556 = vrot.lane.b32.xlu0 %v3050, 111
  %v4557 = vpop.permute.xlu0 %4556
  %4558 = vrot.lane.b32.xlu0 %v3052, 111
  %v4559 = vpop.permute.xlu0 %4558
  %4560 = vrot.lane.b32.xlu0 %v3163, 111
  %v4561 = vpop.permute.xlu0 %4560
  %4562 = vrot.lane.b32.xlu0 %v3165, 111
  %v4563 = vpop.permute.xlu0 %4562
  %4564 = vrot.lane.b32.xlu0 %v3056, 111
  %v4565 = vpop.permute.xlu0 %4564
  %4566 = vrot.lane.b32.xlu0 %v3058, 111
  %v4567 = vpop.permute.xlu0 %4566
  %4568 = vrot.lane.b32.xlu0 %v3169, 111
  %v4569 = vpop.permute.xlu0 %4568
  %4570 = vrot.lane.b32.xlu0 %v3171, 111
  %v4571 = vpop.permute.xlu0 %4570
  %4572 = vrot.lane.b32.xlu0 %v3062, 111
  %v4573 = vpop.permute.xlu0 %4572
  %4574 = vrot.lane.b32.xlu0 %v3064, 111
  %v4575 = vpop.permute.xlu0 %4574
  %4576 = vrot.lane.b32.xlu0 %v3175, 111
  %v4577 = vpop.permute.xlu0 %4576
  %4578 = vrot.lane.b32.xlu0 %v3177, 111
  %v4579 = vpop.permute.xlu0 %4578
  %4580 = vrot.lane.b32.xlu0 %v3068, 111
  %v4581 = vpop.permute.xlu0 %4580
  %4582 = vrot.lane.b32.xlu0 %v3070, 111
  %v4583 = vpop.permute.xlu0 %4582
  %4584 = vrot.lane.b32.xlu0 %v3181, 111
  %v4585 = vpop.permute.xlu0 %4584
  %4586 = vrot.lane.b32.xlu0 %v3183, 111
  %v4587 = vpop.permute.xlu0 %4586
  %4588 = vrot.lane.b32.xlu0 %v3074, 111
  %v4589 = vpop.permute.xlu0 %4588
  %4590 = vrot.lane.b32.xlu0 %v3076, 111
  %v4591 = vpop.permute.xlu0 %4590
  %4592 = vrot.lane.b32.xlu0 %v3187, 111
  %v4593 = vpop.permute.xlu0 %4592
  %4594 = vrot.lane.b32.xlu0 %v3189, 111
  %v4595 = vpop.permute.xlu0 %4594
  %vm4596 = vcmask 908288
  %v4597 = vsel %vm4596, %v4533, %v4535
  %v4598 = vsel %vm4596, %v4535, %v4537
  %v4599 = vsel %vm4596, %v4537, %v4539
  %v4600 = vsel %vm4596, %v4541, %v4543
  %v4601 = vsel %vm4596, %v4543, %v4545
  %v4602 = vsel %vm4596, %v4545, %v4547
  %v4603 = vsel %vm4596, %v4549, %v4551
  %v4604 = vsel %vm4596, %v4551, %v4553
  %v4605 = vsel %vm4596, %v4553, %v4555
  %v4606 = vsel %vm4596, %v4557, %v4559
  %v4607 = vsel %vm4596, %v4559, %v4561
  %v4608 = vsel %vm4596, %v4561, %v4563
  %v4609 = vsel %vm4596, %v4565, %v4567
  %v4610 = vsel %vm4596, %v4567, %v4569
  %v4611 = vsel %vm4596, %v4569, %v4571
  %v4612 = vsel %vm4596, %v4573, %v4575
  %v4613 = vsel %vm4596, %v4575, %v4577
  %v4614 = vsel %vm4596, %v4577, %v4579
  %v4615 = vsel %vm4596, %v4581, %v4583
  %v4616 = vsel %vm4596, %v4583, %v4585
  %v4617 = vsel %vm4596, %v4585, %v4587
  %v4618 = vsel %vm4596, %v4589, %v4591
  %v4619 = vsel %vm4596, %v4591, %v4593
  %v4620 = vsel %vm4596, %v4593, %v4595
  %v4653 = vsel %vm4596, %v4539, 0.0
  %v4654 = vsel %vm4596, %v4547, 0.0
  %v4655 = vsel %vm4596, %v4555, 0.0
  %v4656 = vsel %vm4596, %v4563, 0.0
  %v4657 = vsel %vm4596, %v4571, 0.0
  %v4658 = vsel %vm4596, %v4579, 0.0
  %v4659 = vsel %vm4596, %v4587, 0.0
  %v4660 = vsel %vm4596, %v4595, 0.0
  %v4661 = vlaneseq
  %v4662 = vshrl.u32 %v4661, 7
  %v4663 = vsub.s32 0, %v4662
  %v4664 = vrot.slane %v3211, %v4663
  %v4665 = vlaneseq
  %v4666 = vshrl.u32 %v4665, 7
  %v4667 = vsub.s32 0, %v4666
  %v4668 = vrot.slane %v3212, %v4667
  %v4669 = vlaneseq
  %v4670 = vshrl.u32 %v4669, 7
  %v4671 = vsub.s32 0, %v4670
  %v4672 = vrot.slane %v3213, %v4671
  %v4673 = vlaneseq
  %v4674 = vshrl.u32 %v4673, 7
  %v4675 = vsub.s32 0, %v4674
  %v4676 = vrot.slane %v3214, %v4675
  %v4677 = vmul.f32 %v4597, %v4664
  %v4678 = vmul.f32 %v4598, %v4668
  %v4679 = vmul.f32 %v4599, %v4672
  %v4680 = vmul.f32 %v4653, %v4676
  %v4681 = vmul.f32 %v4600, %v4664
  %v4682 = vmul.f32 %v4601, %v4668
  %v4683 = vmul.f32 %v4602, %v4672
  %v4684 = vmul.f32 %v4654, %v4676
  %v4685 = vmul.f32 %v4603, %v4664
  %v4686 = vmul.f32 %v4604, %v4668
  %v4687 = vmul.f32 %v4605, %v4672
  %v4688 = vmul.f32 %v4655, %v4676
  %v4689 = vmul.f32 %v4606, %v4664
  %v4690 = vmul.f32 %v4607, %v4668
  %v4691 = vmul.f32 %v4608, %v4672
  %v4692 = vmul.f32 %v4656, %v4676
  %v4693 = vmul.f32 %v4609, %v4664
  %v4694 = vmul.f32 %v4610, %v4668
  %v4695 = vmul.f32 %v4611, %v4672
  %v4696 = vmul.f32 %v4657, %v4676
  %v4697 = vmul.f32 %v4612, %v4664
  %v4698 = vmul.f32 %v4613, %v4668
  %v4699 = vmul.f32 %v4614, %v4672
  %v4700 = vmul.f32 %v4658, %v4676
  %v4701 = vmul.f32 %v4615, %v4664
  %v4702 = vmul.f32 %v4616, %v4668
  %v4703 = vmul.f32 %v4617, %v4672
  %v4704 = vmul.f32 %v4659, %v4676
  %v4705 = vmul.f32 %v4618, %v4664
  %v4706 = vmul.f32 %v4619, %v4668
  %v4707 = vmul.f32 %v4620, %v4672
  %v4708 = vmul.f32 %v4660, %v4676
  %v4709 = vpack.c.bf16 %v3396, %v3392
  %v4710 = vpack.c.bf16 %v3397, %v3393
  %v4711 = vpack.c.bf16 %v3398, %v3394
  %v4712 = vpack.c.bf16 %v3399, %v3395
  %v4713 = vpack.c.bf16 %v3404, %v3400
  %v4714 = vpack.c.bf16 %v3405, %v3401
  %v4715 = vpack.c.bf16 %v3406, %v3402
  %v4716 = vpack.c.bf16 %v3407, %v3403
  %v4717 = vpack.c.bf16 %v3412, %v3408
  %v4718 = vpack.c.bf16 %v3413, %v3409
  %v4719 = vpack.c.bf16 %v3414, %v3410
  %v4720 = vpack.c.bf16 %v3415, %v3411
  %v4721 = vpack.c.bf16 %v3420, %v3416
  %v4722 = vpack.c.bf16 %v3421, %v3417
  %v4723 = vpack.c.bf16 %v3422, %v3418
  %v4724 = vpack.c.bf16 %v3423, %v3419
  %v4725 = vpack.c.bf16 %v3573, %v3569
  %v4726 = vpack.c.bf16 %v3574, %v3570
  %v4727 = vpack.c.bf16 %v3575, %v3571
  %v4728 = vpack.c.bf16 %v3576, %v3572
  %v4729 = vpack.c.bf16 %v3581, %v3577
  %v4730 = vpack.c.bf16 %v3582, %v3578
  %v4731 = vpack.c.bf16 %v3583, %v3579
  %v4732 = vpack.c.bf16 %v3584, %v3580
  %v4733 = vpack.c.bf16 %v3589, %v3585
  %v4734 = vpack.c.bf16 %v3590, %v3586
  %v4735 = vpack.c.bf16 %v3591, %v3587
  %v4736 = vpack.c.bf16 %v3592, %v3588
  %v4737 = vpack.c.bf16 %v3597, %v3593
  %v4738 = vpack.c.bf16 %v3598, %v3594
  %v4739 = vpack.c.bf16 %v3599, %v3595
  %v4740 = vpack.c.bf16 %v3600, %v3596
  %v4741 = vpack.c.bf16 %v3750, %v3746
  %v4742 = vpack.c.bf16 %v3751, %v3747
  %v4743 = vpack.c.bf16 %v3752, %v3748
  %v4744 = vpack.c.bf16 %v3753, %v3749
  %v4745 = vpack.c.bf16 %v3758, %v3754
  %v4746 = vpack.c.bf16 %v3759, %v3755
  %v4747 = vpack.c.bf16 %v3760, %v3756
  %v4748 = vpack.c.bf16 %v3761, %v3757
  %v4749 = vpack.c.bf16 %v3766, %v3762
  %v4750 = vpack.c.bf16 %v3767, %v3763
  %v4751 = vpack.c.bf16 %v3768, %v3764
  %v4752 = vpack.c.bf16 %v3769, %v3765
  %v4753 = vpack.c.bf16 %v3774, %v3770
  %v4754 = vpack.c.bf16 %v3775, %v3771
  %v4755 = vpack.c.bf16 %v3776, %v3772
  %v4756 = vpack.c.bf16 %v3777, %v3773
  %v4757 = vpack.c.bf16 %v3926, %v3922
  %v4758 = vpack.c.bf16 %v3927, %v3923
  %v4759 = vpack.c.bf16 %v3928, %v3924
  %v4760 = vpack.c.bf16 %v3929, %v3925
  %v4761 = vpack.c.bf16 %v3934, %v3930
  %v4762 = vpack.c.bf16 %v3935, %v3931
  %v4763 = vpack.c.bf16 %v3936, %v3932
  %v4764 = vpack.c.bf16 %v3937, %v3933
  %v4765 = vpack.c.bf16 %v3942, %v3938
  %v4766 = vpack.c.bf16 %v3943, %v3939
  %v4767 = vpack.c.bf16 %v3944, %v3940
  %v4768 = vpack.c.bf16 %v3945, %v3941
  %v4769 = vpack.c.bf16 %v3950, %v3946
  %v4770 = vpack.c.bf16 %v3951, %v3947
  %v4771 = vpack.c.bf16 %v3952, %v3948
  %v4772 = vpack.c.bf16 %v3953, %v3949
  %v4773 = vpack.c.bf16 %v3974, %v3970
  %v4774 = vpack.c.bf16 %v3975, %v3971
  %v4775 = vpack.c.bf16 %v3976, %v3972
  %v4776 = vpack.c.bf16 %v3977, %v3973
  %v4777 = vpack.c.bf16 %v3982, %v3978
  %v4778 = vpack.c.bf16 %v3983, %v3979
  %v4779 = vpack.c.bf16 %v3984, %v3980
  %v4780 = vpack.c.bf16 %v3985, %v3981
  %v4781 = vpack.c.bf16 %v3990, %v3986
  %v4782 = vpack.c.bf16 %v3991, %v3987
  %v4783 = vpack.c.bf16 %v3992, %v3988
  %v4784 = vpack.c.bf16 %v3993, %v3989
  %v4785 = vpack.c.bf16 %v3998, %v3994
  %v4786 = vpack.c.bf16 %v3999, %v3995
  %v4787 = vpack.c.bf16 %v4000, %v3996
  %v4788 = vpack.c.bf16 %v4001, %v3997
  %v4789 = vpack.c.bf16 %v4150, %v4146
  %v4790 = vpack.c.bf16 %v4151, %v4147
  %v4791 = vpack.c.bf16 %v4152, %v4148
  %v4792 = vpack.c.bf16 %v4153, %v4149
  %v4793 = vpack.c.bf16 %v4158, %v4154
  %v4794 = vpack.c.bf16 %v4159, %v4155
  %v4795 = vpack.c.bf16 %v4160, %v4156
  %v4796 = vpack.c.bf16 %v4161, %v4157
  %v4797 = vpack.c.bf16 %v4166, %v4162
  %v4798 = vpack.c.bf16 %v4167, %v4163
  %v4799 = vpack.c.bf16 %v4168, %v4164
  %v4800 = vpack.c.bf16 %v4169, %v4165
  %v4801 = vpack.c.bf16 %v4174, %v4170
  %v4802 = vpack.c.bf16 %v4175, %v4171
  %v4803 = vpack.c.bf16 %v4176, %v4172
  %v4804 = vpack.c.bf16 %v4177, %v4173
  %v4805 = vpack.c.bf16 %v4327, %v4323
  %v4806 = vpack.c.bf16 %v4328, %v4324
  %v4807 = vpack.c.bf16 %v4329, %v4325
  %v4808 = vpack.c.bf16 %v4330, %v4326
  %v4809 = vpack.c.bf16 %v4335, %v4331
  %v4810 = vpack.c.bf16 %v4336, %v4332
  %v4811 = vpack.c.bf16 %v4337, %v4333
  %v4812 = vpack.c.bf16 %v4338, %v4334
  %v4813 = vpack.c.bf16 %v4343, %v4339
  %v4814 = vpack.c.bf16 %v4344, %v4340
  %v4815 = vpack.c.bf16 %v4345, %v4341
  %v4816 = vpack.c.bf16 %v4346, %v4342
  %v4817 = vpack.c.bf16 %v4351, %v4347
  %v4818 = vpack.c.bf16 %v4352, %v4348
  %v4819 = vpack.c.bf16 %v4353, %v4349
  %v4820 = vpack.c.bf16 %v4354, %v4350
  %v4821 = vpack.c.bf16 %v4504, %v4500
  %v4822 = vpack.c.bf16 %v4505, %v4501
  %v4823 = vpack.c.bf16 %v4506, %v4502
  %v4824 = vpack.c.bf16 %v4507, %v4503
  %v4825 = vpack.c.bf16 %v4512, %v4508
  %v4826 = vpack.c.bf16 %v4513, %v4509
  %v4827 = vpack.c.bf16 %v4514, %v4510
  %v4828 = vpack.c.bf16 %v4515, %v4511
  %v4829 = vpack.c.bf16 %v4520, %v4516
  %v4830 = vpack.c.bf16 %v4521, %v4517
  %v4831 = vpack.c.bf16 %v4522, %v4518
  %v4832 = vpack.c.bf16 %v4523, %v4519
  %v4833 = vpack.c.bf16 %v4528, %v4524
  %v4834 = vpack.c.bf16 %v4529, %v4525
  %v4835 = vpack.c.bf16 %v4530, %v4526
  %v4836 = vpack.c.bf16 %v4531, %v4527
  %v4837 = vpack.c.bf16 %v4681, %v4677
  %v4838 = vpack.c.bf16 %v4682, %v4678
  %v4839 = vpack.c.bf16 %v4683, %v4679
  %v4840 = vpack.c.bf16 %v4684, %v4680
  %v4841 = vpack.c.bf16 %v4689, %v4685
  %v4842 = vpack.c.bf16 %v4690, %v4686
  %v4843 = vpack.c.bf16 %v4691, %v4687
  %v4844 = vpack.c.bf16 %v4692, %v4688
  %v4845 = vpack.c.bf16 %v4697, %v4693
  %v4846 = vpack.c.bf16 %v4698, %v4694
  %v4847 = vpack.c.bf16 %v4699, %v4695
  %v4848 = vpack.c.bf16 %v4700, %v4696
  %v4849 = vpack.c.bf16 %v4705, %v4701
  %v4850 = vpack.c.bf16 %v4706, %v4702
  %v4851 = vpack.c.bf16 %v4707, %v4703
  %v4852 = vpack.c.bf16 %v4708, %v4704
  %4854 = vset.pattern.permute.xlu0 0
  %4855 = vperm.xlu0 %4854, %v3203
  %v4856 = vpop.permute.xlu0 %4855
  %4859 = vset.pattern.permute.xlu0 0
  %4860 = vperm.xlu0 %4859, %v3204
  %v4861 = vpop.permute.xlu0 %4860
  %4864 = vset.pattern.permute.xlu0 0
  %4865 = vperm.xlu0 %4864, %v3205
  %v4866 = vpop.permute.xlu0 %4865
  %4869 = vset.pattern.permute.xlu0 0
  %4870 = vperm.xlu0 %4869, %v3206
  %v4871 = vpop.permute.xlu0 %4870
  %v4885 = vunpack.c.l.b16 %v3191
  %v4886 = vunpack.c.h.b16 %v3191
  %v4887 = vunpack.c.l.b16 %v3192
  %v4888 = vunpack.c.h.b16 %v3192
  %v4889 = vunpack.c.l.b16 %v3193
  %v4890 = vunpack.c.l.b16 %v3194
  %v4891 = vunpack.c.h.b16 %v3194
  %v4892 = vunpack.c.l.b16 %v3195
  %v4893 = vunpack.c.h.b16 %v3195
  %v4894 = vunpack.c.l.b16 %v3196
  %v4895 = vunpack.c.l.b16 %v3197
  %v4896 = vunpack.c.h.b16 %v3197
  %v4897 = vunpack.c.l.b16 %v3198
  %v4898 = vunpack.c.h.b16 %v3198
  %v4899 = vunpack.c.l.b16 %v3199
  %v4900 = vunpack.c.l.b16 %v3200
  %v4901 = vunpack.c.h.b16 %v3200
  %v4902 = vunpack.c.l.b16 %v3201
  %v4903 = vunpack.c.h.b16 %v3201
  %v4904 = vunpack.c.l.b16 %v3202
  %v4905 = vpack.c.b16 %v4890, %v4885
  %v4906 = vpack.c.b16 %v4891, %v4886
  %v4907 = vpack.c.b16 %v4892, %v4887
  %v4908 = vpack.c.b16 %v4893, %v4888
  %v4909 = vpack.c.b16 %v4894, %v4889
  %v4910 = vpack.c.b16 %v4900, %v4895
  %v4911 = vpack.c.b16 %v4901, %v4896
  %v4912 = vpack.c.b16 %v4902, %v4897
  %v4913 = vpack.c.b16 %v4903, %v4898
  %v4914 = vpack.c.b16 %v4904, %v4899
  %v4924 = vsel %vm2453, %v4909, 0
  %v4927 = vsel %vm2453, %v4914, 0
  %4929 = vmatprep.subr.bf16.mxu0 %v4710
  %4930 = vmatpush1.bf16.msra.mxu0 %v4709
  %4931 = vmatprep.subr.bf16.mxu0 %v4714
  %4932 = vmatpush1.bf16.msra.mxu0 %v4713
  %4933 = vmatprep.subr.bf16.mxu0 %v4718
  %4934 = vmatpush1.bf16.msra.mxu0 %v4717
  %4935 = vmatprep.subr.bf16.mxu0 %v4722
  %4936 = vmatpush1.bf16.msra.mxu0 %v4721
  %4937 = vmatprep.subr.bf16.mxu0 %v4726
  %4938 = vmatpush1.bf16.msra.mxu0 %v4725
  %4939 = vmatprep.subr.bf16.mxu0 %v4730
  %4940 = vmatpush1.bf16.msra.mxu0 %v4729
  %4941 = vmatprep.subr.bf16.mxu0 %v4734
  %4942 = vmatpush1.bf16.msra.mxu0 %v4733
  %4943 = vmatprep.subr.bf16.mxu0 %v4738
  %4944 = vmatpush1.bf16.msra.mxu0 %v4737
  %4945 = vmatprep.subr.bf16.mxu0 %v4742
  %4946 = vmatpush1.bf16.msra.mxu0 %v4741
  %4947 = vmatprep.subr.bf16.mxu0 %v4746
  %4948 = vmatpush1.bf16.msra.mxu0 %v4745
  %4949 = vmatprep.subr.bf16.mxu0 %v4750
  %4950 = vmatpush1.bf16.msra.mxu0 %v4749
  %4951 = vmatprep.subr.bf16.mxu0 %v4754
  %4952 = vmatpush1.bf16.msra.mxu0 %v4753
  %4953 = vmatprep.subr.bf16.mxu0 %v4758
  %4954 = vmatpush1.bf16.msra.mxu0 %v4757
  %4955 = vmatprep.subr.bf16.mxu0 %v4762
  %4956 = vmatpush1.bf16.msra.mxu0 %v4761
  %4957 = vmatprep.subr.bf16.mxu0 %v4766
  %4958 = vmatpush1.bf16.msra.mxu0 %v4765
  %4959 = vmatprep.subr.bf16.mxu0 %v4770
  %4960 = vmatpush1.bf16.msra.mxu0 %v4769
  %4961 = vmatprep.mubr.bf16.mxu0 %v4906
  %4962 = vmatmul.mubr.bf16.gmra.mrb[0].mxu0 %v4905
  %v4963 = vpop.f32.mrb[0].mxu0
  %v4964 = vadd.f32 %v4856, %v4963
  %v4965 = vpop.f32.mrb[0].mxu0
  %v4966 = vadd.f32 %v4856, %v4965
  %v4967 = vpop.f32.mrb[0].mxu0
  %v4968 = vadd.f32 %v4861, %v4967
  %v4969 = vpop.f32.mrb[0].mxu0
  %v4970 = vadd.f32 %v4861, %v4969
  %4971 = vmatprep.mubr.bf16.mxu0 %v4911
  %4972 = vmatmul.mubr.bf16.gmra.mrb[0].mxu0 %v4910
  %v4973 = vpop.f32.mrb[0].mxu0
  %v4974 = vadd.f32 %v4866, %v4973
  %v4975 = vpop.f32.mrb[0].mxu0
  %v4976 = vadd.f32 %v4866, %v4975
  %v4977 = vpop.f32.mrb[0].mxu0
  %v4978 = vadd.f32 %v4871, %v4977
  %v4979 = vpop.f32.mrb[0].mxu0
  %v4980 = vadd.f32 %v4871, %v4979
  %4981 = vdwg.mxu0
  %4982 = vmatprep.subr.bf16.mxu0 %v4774
  %4983 = vmatpush1.bf16.msra.mxu0 %v4773
  %4984 = vmatprep.subr.bf16.mxu0 %v4778
  %4985 = vmatpush1.bf16.msra.mxu0 %v4777
  %4986 = vmatprep.subr.bf16.mxu0 %v4782
  %4987 = vmatpush1.bf16.msra.mxu0 %v4781
  %4988 = vmatprep.subr.bf16.mxu0 %v4786
  %4989 = vmatpush1.bf16.msra.mxu0 %v4785
  %4990 = vmatprep.subr.bf16.mxu0 %v4790
  %4991 = vmatpush1.bf16.msra.mxu0 %v4789
  %4992 = vmatprep.subr.bf16.mxu0 %v4794
  %4993 = vmatpush1.bf16.msra.mxu0 %v4793
  %4994 = vmatprep.subr.bf16.mxu0 %v4798
  %4995 = vmatpush1.bf16.msra.mxu0 %v4797
  %4996 = vmatprep.subr.bf16.mxu0 %v4802
  %4997 = vmatpush1.bf16.msra.mxu0 %v4801
  %4998 = vmatprep.subr.bf16.mxu0 %v4806
  %4999 = vmatpush1.bf16.msra.mxu0 %v4805
  %5000 = vmatprep.subr.bf16.mxu0 %v4810
  %5001 = vmatpush1.bf16.msra.mxu0 %v4809
  %5002 = vmatprep.subr.bf16.mxu0 %v4814
  %5003 = vmatpush1.bf16.msra.mxu0 %v4813
  %5004 = vmatprep.subr.bf16.mxu0 %v4818
  %5005 = vmatpush1.bf16.msra.mxu0 %v4817
  %5006 = vmatprep.subr.bf16.mxu0 %v4822
  %5007 = vmatpush1.bf16.msra.mxu0 %v4821
  %5008 = vmatprep.subr.bf16.mxu0 %v4826
  %5009 = vmatpush1.bf16.msra.mxu0 %v4825
  %5010 = vmatprep.subr.bf16.mxu0 %v4830
  %5011 = vmatpush1.bf16.msra.mxu0 %v4829
  %5012 = vmatprep.subr.bf16.mxu0 %v4834
  %5013 = vmatpush1.bf16.msra.mxu0 %v4833
  %5014 = vmatprep.mubr.bf16.mxu0 %v4908
  %5015 = vmatmul.mubr.bf16.gmra.mrb[0].mxu0 %v4907
  %v5016 = vpop.f32.mrb[0].mxu0
  %v5017 = vadd.f32 %v4964, %v5016
  %v5018 = vpop.f32.mrb[0].mxu0
  %v5019 = vadd.f32 %v4966, %v5018
  %v5020 = vpop.f32.mrb[0].mxu0
  %v5021 = vadd.f32 %v4968, %v5020
  %v5022 = vpop.f32.mrb[0].mxu0
  %v5023 = vadd.f32 %v4970, %v5022
  %5024 = vmatprep.mubr.bf16.mxu0 %v4913
  %5025 = vmatmul.mubr.bf16.gmra.mrb[0].mxu0 %v4912
  %v5026 = vpop.f32.mrb[0].mxu0
  %v5027 = vadd.f32 %v4974, %v5026
  %v5028 = vpop.f32.mrb[0].mxu0
  %v5029 = vadd.f32 %v4976, %v5028
  %v5030 = vpop.f32.mrb[0].mxu0
  %v5031 = vadd.f32 %v4978, %v5030
  %v5032 = vpop.f32.mrb[0].mxu0
  %v5033 = vadd.f32 %v4980, %v5032
  %5034 = vdwg.mxu0
  %5035 = vmatprep.subr.bf16.mxu0 %v4838
  %5036 = vmatpush1.bf16.msra.mxu0 %v4837
  %5037 = vmatprep.subr.bf16.mxu0 %v4842
  %5038 = vmatpush1.bf16.msra.mxu0 %v4841
  %5039 = vmatprep.subr.bf16.mxu0 %v4846
  %5040 = vmatpush1.bf16.msra.mxu0 %v4845
  %5041 = vmatprep.subr.bf16.mxu0 %v4850
  %5042 = vmatpush1.bf16.msra.mxu0 %v4849
  %5043 = vmatprep.subr.bf16.mxu0 0
  %5044 = vmatpush1.bf16.msra.mxu0 0
  %5045 = vmatprep.subr.bf16.mxu0 0
  %5046 = vmatpush1.bf16.msra.mxu0 0
  %5047 = vmatprep.subr.bf16.mxu0 0
  %5048 = vmatpush1.bf16.msra.mxu0 0
  %5049 = vmatprep.subr.bf16.mxu0 0
  %5050 = vmatpush1.bf16.msra.mxu0 0
  %5051 = vmatprep.subr.bf16.mxu0 0
  %5052 = vmatpush1.bf16.msra.mxu0 0
  %5053 = vmatprep.subr.bf16.mxu0 0
  %5054 = vmatpush1.bf16.msra.mxu0 0
  %5055 = vmatprep.subr.bf16.mxu0 0
  %5056 = vmatpush1.bf16.msra.mxu0 0
  %5057 = vmatprep.subr.bf16.mxu0 0
  %5058 = vmatpush1.bf16.msra.mxu0 0
  %5059 = vmatprep.subr.bf16.mxu0 0
  %5060 = vmatpush1.bf16.msra.mxu0 0
  %5061 = vmatprep.subr.bf16.mxu0 0
  %5062 = vmatpush1.bf16.msra.mxu0 0
  %5063 = vmatprep.subr.bf16.mxu0 0
  %5064 = vmatpush1.bf16.msra.mxu0 0
  %5065 = vmatprep.subr.bf16.mxu0 0
  %5066 = vmatpush1.bf16.msra.mxu0 0
  %5067 = vmatprep.mubr.bf16.mxu0 0
  %5068 = vmatmul.mubr.bf16.gmra.mrb[0].mxu0 %v4924
  %v5069 = vpop.f32.mrb[0].mxu0
  %v5070 = vadd.f32 %v5017, %v5069
  %v5071 = vpop.f32.mrb[0].mxu0
  %v5072 = vadd.f32 %v5019, %v5071
  %v5073 = vpop.f32.mrb[0].mxu0
  %v5074 = vadd.f32 %v5021, %v5073
  %v5075 = vpop.f32.mrb[0].mxu0
  %v5076 = vadd.f32 %v5023, %v5075
  %5077 = vmatprep.mubr.bf16.mxu0 0
  %5078 = vmatmul.mubr.bf16.gmra.mrb[0].mxu0 %v4927
  %v5079 = vpop.f32.mrb[0].mxu0
  %v5080 = vadd.f32 %v5027, %v5079
  %v5081 = vpop.f32.mrb[0].mxu0
  %v5082 = vadd.f32 %v5029, %v5081
  %v5083 = vpop.f32.mrb[0].mxu0
  %v5084 = vadd.f32 %v5031, %v5083
  %v5085 = vpop.f32.mrb[0].mxu0
  %v5086 = vadd.f32 %v5033, %v5085
  %5087 = vdwg.mxu0
  %5088 = vmatprep.subr.bf16.mxu0 %v4712
  %5089 = vmatpush1.bf16.msra.mxu0 %v4711
  %5090 = vmatprep.subr.bf16.mxu0 %v4716
  %5091 = vmatpush1.bf16.msra.mxu0 %v4715
  %5092 = vmatprep.subr.bf16.mxu0 %v4720
  %5093 = vmatpush1.bf16.msra.mxu0 %v4719
  %5094 = vmatprep.subr.bf16.mxu0 %v4724
  %5095 = vmatpush1.bf16.msra.mxu0 %v4723
  %5096 = vmatprep.subr.bf16.mxu0 %v4728
  %5097 = vmatpush1.bf16.msra.mxu0 %v4727
  %5098 = vmatprep.subr.bf16.mxu0 %v4732
  %5099 = vmatpush1.bf16.msra.mxu0 %v4731
  %5100 = vmatprep.subr.bf16.mxu0 %v4736
  %5101 = vmatpush1.bf16.msra.mxu0 %v4735
  %5102 = vmatprep.subr.bf16.mxu0 %v4740
  %5103 = vmatpush1.bf16.msra.mxu0 %v4739
  %5104 = vmatprep.subr.bf16.mxu0 %v4744
  %5105 = vmatpush1.bf16.msra.mxu0 %v4743
  %5106 = vmatprep.subr.bf16.mxu0 %v4748
  %5107 = vmatpush1.bf16.msra.mxu0 %v4747
  %5108 = vmatprep.subr.bf16.mxu0 %v4752
  %5109 = vmatpush1.bf16.msra.mxu0 %v4751
  %5110 = vmatprep.subr.bf16.mxu0 %v4756
  %5111 = vmatpush1.bf16.msra.mxu0 %v4755
  %5112 = vmatprep.subr.bf16.mxu0 %v4760
  %5113 = vmatpush1.bf16.msra.mxu0 %v4759
  %5114 = vmatprep.subr.bf16.mxu0 %v4764
  %5115 = vmatpush1.bf16.msra.mxu0 %v4763
  %5116 = vmatprep.subr.bf16.mxu0 %v4768
  %5117 = vmatpush1.bf16.msra.mxu0 %v4767
  %5118 = vmatprep.subr.bf16.mxu0 %v4772
  %5119 = vmatpush1.bf16.msra.mxu0 %v4771
  %5120 = vmatprep.mubr.bf16.mxu0 %v4906
  %5121 = vmatmul.mubr.bf16.gmra.mrb[0].mxu0 %v4905
  %v5122 = vpop.f32.mrb[0].mxu0
  %v5123 = vadd.f32 %v4856, %v5122
  %v5124 = vpop.f32.mrb[0].mxu0
  %v5125 = vadd.f32 %v4856, %v5124
  %v5126 = vpop.f32.mrb[0].mxu0
  %v5127 = vadd.f32 %v4861, %v5126
  %v5128 = vpop.f32.mrb[0].mxu0
  %v5129 = vadd.f32 %v4861, %v5128
  %5130 = vmatprep.mubr.bf16.mxu0 %v4911
  %5131 = vmatmul.mubr.bf16.gmra.mrb[0].mxu0 %v4910
  %v5132 = vpop.f32.mrb[0].mxu0
  %v5133 = vadd.f32 %v4866, %v5132
  %v5134 = vpop.f32.mrb[0].mxu0
  %v5135 = vadd.f32 %v4866, %v5134
  %v5136 = vpop.f32.mrb[0].mxu0
  %v5137 = vadd.f32 %v4871, %v5136
  %v5138 = vpop.f32.mrb[0].mxu0
  %v5139 = vadd.f32 %v4871, %v5138
  %5140 = vdwg.mxu0
  %5141 = vmatprep.subr.bf16.mxu0 %v4776
  %5142 = vmatpush1.bf16.msra.mxu0 %v4775
  %5143 = vmatprep.subr.bf16.mxu0 %v4780
  %5144 = vmatpush1.bf16.msra.mxu0 %v4779
  %5145 = vmatprep.subr.bf16.mxu0 %v4784
  %5146 = vmatpush1.bf16.msra.mxu0 %v4783
  %5147 = vmatprep.subr.bf16.mxu0 %v4788
  %5148 = vmatpush1.bf16.msra.mxu0 %v4787
  %5149 = vmatprep.subr.bf16.mxu0 %v4792
  %5150 = vmatpush1.bf16.msra.mxu0 %v4791
  %5151 = vmatprep.subr.bf16.mxu0 %v4796
  %5152 = vmatpush1.bf16.msra.mxu0 %v4795
  %5153 = vmatprep.subr.bf16.mxu0 %v4800
  %5154 = vmatpush1.bf16.msra.mxu0 %v4799
  %5155 = vmatprep.subr.bf16.mxu0 %v4804
  %5156 = vmatpush1.bf16.msra.mxu0 %v4803
  %5157 = vmatprep.subr.bf16.mxu0 %v4808
  %5158 = vmatpush1.bf16.msra.mxu0 %v4807
  %5159 = vmatprep.subr.bf16.mxu0 %v4812
  %5160 = vmatpush1.bf16.msra.mxu0 %v4811
  %5161 = vmatprep.subr.bf16.mxu0 %v4816
  %5162 = vmatpush1.bf16.msra.mxu0 %v4815
  %5163 = vmatprep.subr.bf16.mxu0 %v4820
  %5164 = vmatpush1.bf16.msra.mxu0 %v4819
  %5165 = vmatprep.subr.bf16.mxu0 %v4824
  %5166 = vmatpush1.bf16.msra.mxu0 %v4823
  %5167 = vmatprep.subr.bf16.mxu0 %v4828
  %5168 = vmatpush1.bf16.msra.mxu0 %v4827
  %5169 = vmatprep.subr.bf16.mxu0 %v4832
  %5170 = vmatpush1.bf16.msra.mxu0 %v4831
  %5171 = vmatprep.subr.bf16.mxu0 %v4836
  %5172 = vmatpush1.bf16.msra.mxu0 %v4835
  %5173 = vmatprep.mubr.bf16.mxu0 %v4908
  %5174 = vmatmul.mubr.bf16.gmra.mrb[0].mxu0 %v4907
  %v5175 = vpop.f32.mrb[0].mxu0
  %v5176 = vadd.f32 %v5123, %v5175
  %v5177 = vpop.f32.mrb[0].mxu0
  %v5178 = vadd.f32 %v5125, %v5177
  %v5179 = vpop.f32.mrb[0].mxu0
  %v5180 = vadd.f32 %v5127, %v5179
  %v5181 = vpop.f32.mrb[0].mxu0
  %v5182 = vadd.f32 %v5129, %v5181
  %5183 = vmatprep.mubr.bf16.mxu0 %v4913
  %5184 = vmatmul.mubr.bf16.gmra.mrb[0].mxu0 %v4912
  %v5185 = vpop.f32.mrb[0].mxu0
  %v5186 = vadd.f32 %v5133, %v5185
  %v5187 = vpop.f32.mrb[0].mxu0
  %v5188 = vadd.f32 %v5135, %v5187
  %v5189 = vpop.f32.mrb[0].mxu0
  %v5190 = vadd.f32 %v5137, %v5189
  %v5191 = vpop.f32.mrb[0].mxu0
  %v5192 = vadd.f32 %v5139, %v5191
  %5193 = vdwg.mxu0
  %5194 = vmatprep.subr.bf16.mxu0 %v4840
  %5195 = vmatpush1.bf16.msra.mxu0 %v4839
  %5196 = vmatprep.subr.bf16.mxu0 %v4844
  %5197 = vmatpush1.bf16.msra.mxu0 %v4843
  %5198 = vmatprep.subr.bf16.mxu0 %v4848
  %5199 = vmatpush1.bf16.msra.mxu0 %v4847
  %5200 = vmatprep.subr.bf16.mxu0 %v4852
  %5201 = vmatpush1.bf16.msra.mxu0 %v4851
  %5202 = vmatprep.subr.bf16.mxu0 0
  %5203 = vmatpush1.bf16.msra.mxu0 0
  %5204 = vmatprep.subr.bf16.mxu0 0
  %5205 = vmatpush1.bf16.msra.mxu0 0
  %5206 = vmatprep.subr.bf16.mxu0 0
  %5207 = vmatpush1.bf16.msra.mxu0 0
  %5208 = vmatprep.subr.bf16.mxu0 0
  %5209 = vmatpush1.bf16.msra.mxu0 0
  %5210 = vmatprep.subr.bf16.mxu0 0
  %5211 = vmatpush1.bf16.msra.mxu0 0
  %5212 = vmatprep.subr.bf16.mxu0 0
  %5213 = vmatpush1.bf16.msra.mxu0 0
  %5214 = vmatprep.subr.bf16.mxu0 0
  %5215 = vmatpush1.bf16.msra.mxu0 0
  %5216 = vmatprep.subr.bf16.mxu0 0
  %5217 = vmatpush1.bf16.msra.mxu0 0
  %5218 = vmatprep.subr.bf16.mxu0 0
  %5219 = vmatpush1.bf16.msra.mxu0 0
  %5220 = vmatprep.subr.bf16.mxu0 0
  %5221 = vmatpush1.bf16.msra.mxu0 0
  %5222 = vmatprep.subr.bf16.mxu0 0
  %5223 = vmatpush1.bf16.msra.mxu0 0
  %5224 = vmatprep.subr.bf16.mxu0 0
  %5225 = vmatpush1.bf16.msra.mxu0 0
  %5226 = vmatprep.mubr.bf16.mxu0 0
  %5227 = vmatmul.mubr.bf16.gmra.mrb[0].mxu0 %v4924
  %v5228 = vpop.f32.mrb[0].mxu0
  %v5229 = vadd.f32 %v5176, %v5228
  %v5230 = vpop.f32.mrb[0].mxu0
  %v5231 = vadd.f32 %v5178, %v5230
  %v5232 = vpop.f32.mrb[0].mxu0
  %v5233 = vadd.f32 %v5180, %v5232
  %v5234 = vpop.f32.mrb[0].mxu0
  %v5235 = vadd.f32 %v5182, %v5234
  %5236 = vmatprep.mubr.bf16.mxu0 0
  %5237 = vmatmul.mubr.bf16.gmra.mrb[0].mxu0 %v4927
  %v5238 = vpop.f32.mrb[0].mxu0
  %v5239 = vadd.f32 %v5186, %v5238
  %v5240 = vpop.f32.mrb[0].mxu0
  %v5241 = vadd.f32 %v5188, %v5240
  %v5242 = vpop.f32.mrb[0].mxu0
  %v5243 = vadd.f32 %v5190, %v5242
  %v5244 = vpop.f32.mrb[0].mxu0
  %v5245 = vadd.f32 %v5192, %v5244
  %5246 = vdwg.mxu0
  %v5247 = vld [vmem:[%s18] sm:$0xff]
  %v5248 = vld [vmem:[%s18 + $0x8] sm:$0xff]
  %v5249 = vld [vmem:[%s18 + $0x10] sm:$0xff]
  %v5250 = vld [vmem:[%s18 + $0x18] sm:$0xff]
  %v5251 = vld [vmem:[%s19] sm:$0xff]
  %v5252 = vld [vmem:[%s19 + $0x8] sm:$0xff]
  %v5253 = vld [vmem:[%s19 + $0x10] sm:$0xff]
  %v5254 = vld [vmem:[%s19 + $0x18] sm:$0xff]
  %v5255 = vadd.f32 %v5070, %v5072
  %v5256 = vadd.f32 %v5255, %v5229
  %v5257 = vadd.f32 %v5256, %v5231
  %5258 = vadd.xlane.f32.xlu0 %v5257
  %v5259 = vpop.xlane.xlu0 %5258
  %v5260 = vadd.f32 %v5074, %v5076
  %v5261 = vadd.f32 %v5260, %v5233
  %v5262 = vadd.f32 %v5261, %v5235
  %5263 = vadd.xlane.f32.xlu0 %v5262
  %v5264 = vpop.xlane.xlu0 %5263
  %v5265 = vadd.f32 %v5080, %v5082
  %v5266 = vadd.f32 %v5265, %v5239
  %v5267 = vadd.f32 %v5266, %v5241
  %5268 = vadd.xlane.f32.xlu0 %v5267
  %v5269 = vpop.xlane.xlu0 %5268
  %v5270 = vadd.f32 %v5084, %v5086
  %v5271 = vadd.f32 %v5270, %v5243
  %v5272 = vadd.f32 %v5271, %v5245
  %5273 = vadd.xlane.f32.xlu0 %v5272
  %v5274 = vpop.xlane.xlu0 %5273
  %v5275 = vmul.f32 %v5259, 0.001953125
  %v5276 = vmul.f32 %v5264, 0.001953125
  %v5277 = vmul.f32 %v5269, 0.001953125
  %v5278 = vmul.f32 %v5274, 0.001953125
  %v5279 = vmul.f32 %v5070, %v5070
  %v5280 = vmul.f32 %v5072, %v5072
  %v5281 = vmul.f32 %v5229, %v5229
  %v5282 = vmul.f32 %v5231, %v5231
  %v5283 = vmul.f32 %v5074, %v5074
  %v5284 = vmul.f32 %v5076, %v5076
  %v5285 = vmul.f32 %v5233, %v5233
  %v5286 = vmul.f32 %v5235, %v5235
  %v5287 = vmul.f32 %v5080, %v5080
  %v5288 = vmul.f32 %v5082, %v5082
  %v5289 = vmul.f32 %v5239, %v5239
  %v5290 = vmul.f32 %v5241, %v5241
  %v5291 = vmul.f32 %v5084, %v5084
  %v5292 = vmul.f32 %v5086, %v5086
  %v5293 = vmul.f32 %v5243, %v5243
  %v5294 = vmul.f32 %v5245, %v5245
  %v5295 = vadd.f32 %v5279, %v5280
  %v5296 = vadd.f32 %v5295, %v5281
  %v5297 = vadd.f32 %v5296, %v5282
  %5298 = vadd.xlane.f32.xlu0 %v5297
  %v5299 = vpop.xlane.xlu0 %5298
  %v5300 = vadd.f32 %v5283, %v5284
  %v5301 = vadd.f32 %v5300, %v5285
  %v5302 = vadd.f32 %v5301, %v5286
  %5303 = vadd.xlane.f32.xlu0 %v5302
  %v5304 = vpop.xlane.xlu0 %5303
  %v5305 = vadd.f32 %v5287, %v5288
  %v5306 = vadd.f32 %v5305, %v5289
  %v5307 = vadd.f32 %v5306, %v5290
  %5308 = vadd.xlane.f32.xlu0 %v5307
  %v5309 = vpop.xlane.xlu0 %5308
  %v5310 = vadd.f32 %v5291, %v5292
  %v5311 = vadd.f32 %v5310, %v5293
  %v5312 = vadd.f32 %v5311, %v5294
  %5313 = vadd.xlane.f32.xlu0 %v5312
  %v5314 = vpop.xlane.xlu0 %5313
  %v5315 = vmul.f32 %v5299, 0.001953125
  %v5316 = vmul.f32 %v5304, 0.001953125
  %v5317 = vmul.f32 %v5309, 0.001953125
  %v5318 = vmul.f32 %v5314, 0.001953125
  %v5319 = vmul.f32 %v5275, %v5275
  %v5320 = vmul.f32 %v5276, %v5276
  %v5321 = vmul.f32 %v5277, %v5277
  %v5322 = vmul.f32 %v5278, %v5278
  %v5323 = vsub.f32 %v5315, %v5319
  %v5324 = vsub.f32 %v5316, %v5320
  %v5325 = vsub.f32 %v5317, %v5321
  %v5326 = vsub.f32 %v5318, %v5322
  %v5327 = vsub.f32 %v5070, %v5275
  %v5328 = vsub.f32 %v5072, %v5275
  %v5329 = vsub.f32 %v5229, %v5275
  %v5330 = vsub.f32 %v5231, %v5275
  %v5331 = vsub.f32 %v5074, %v5276
  %v5332 = vsub.f32 %v5076, %v5276
  %v5333 = vsub.f32 %v5233, %v5276
  %v5334 = vsub.f32 %v5235, %v5276
  %v5335 = vsub.f32 %v5080, %v5277
  %v5336 = vsub.f32 %v5082, %v5277
  %v5337 = vsub.f32 %v5239, %v5277
  %v5338 = vsub.f32 %v5241, %v5277
  %v5339 = vsub.f32 %v5084, %v5278
  %v5340 = vsub.f32 %v5086, %v5278
  %v5341 = vsub.f32 %v5243, %v5278
  %v5342 = vsub.f32 %v5245, %v5278
  %5344 = vset.pattern.permute.xlu0 0
  %5345 = vperm.xlu0 %5344, %v5247
  %v5346 = vpop.permute.xlu0 %5345
  %5349 = vset.pattern.permute.xlu0 0
  %5350 = vperm.xlu0 %5349, %v5248
  %v5351 = vpop.permute.xlu0 %5350
  %5354 = vset.pattern.permute.xlu0 0
  %5355 = vperm.xlu0 %5354, %v5249
  %v5356 = vpop.permute.xlu0 %5355
  %5359 = vset.pattern.permute.xlu0 0
  %5360 = vperm.xlu0 %5359, %v5250
  %v5361 = vpop.permute.xlu0 %5360
  %v5363 = vmul.f32 %v5346, %v5327
  %v5364 = vmul.f32 %v5346, %v5328
  %v5365 = vmul.f32 %v5346, %v5329
  %v5366 = vmul.f32 %v5346, %v5330
  %v5367 = vmul.f32 %v5351, %v5331
  %v5368 = vmul.f32 %v5351, %v5332
  %v5369 = vmul.f32 %v5351, %v5333
  %v5370 = vmul.f32 %v5351, %v5334
  %v5371 = vmul.f32 %v5356, %v5335
  %v5372 = vmul.f32 %v5356, %v5336
  %v5373 = vmul.f32 %v5356, %v5337
  %v5374 = vmul.f32 %v5356, %v5338
  %v5375 = vmul.f32 %v5361, %v5339
  %v5376 = vmul.f32 %v5361, %v5340
  %v5377 = vmul.f32 %v5361, %v5341
  %v5378 = vmul.f32 %v5361, %v5342
  %v5379 = vadd.f32 %v5323, 0.8
  %v5380 = vadd.f32 %v5324, 0.8
  %v5381 = vadd.f32 %v5325, 0.8
  %v5382 = vadd.f32 %v5326, 0.8
  %v5383 = vrsqrt.pop %v5379
  %v5384 = vrsqrt.pop %v5380
  %v5385 = vrsqrt.pop %v5381
  %v5386 = vrsqrt.pop %v5382
  %v5387 = vmul.f32 %v5363, %v5383
  %v5388 = vmul.f32 %v5364, %v5383
  %v5389 = vmul.f32 %v5365, %v5383
  %v5390 = vmul.f32 %v5366, %v5383
  %v5391 = vmul.f32 %v5367, %v5384
  %v5392 = vmul.f32 %v5368, %v5384
  %v5393 = vmul.f32 %v5369, %v5384
  %v5394 = vmul.f32 %v5370, %v5384
  %v5395 = vmul.f32 %v5371, %v5385
  %v5396 = vmul.f32 %v5372, %v5385
  %v5397 = vmul.f32 %v5373, %v5385
  %v5398 = vmul.f32 %v5374, %v5385
  %v5399 = vmul.f32 %v5375, %v5386
  %v5400 = vmul.f32 %v5376, %v5386
  %v5401 = vmul.f32 %v5377, %v5386
  %v5402 = vmul.f32 %v5378, %v5386
  %5404 = vset.pattern.permute.xlu0 0
  %5405 = vperm.xlu0 %5404, %v5251
  %v5406 = vpop.permute.xlu0 %5405
  %5409 = vset.pattern.permute.xlu0 0
  %5410 = vperm.xlu0 %5409, %v5252
  %v5411 = vpop.permute.xlu0 %5410
  %5414 = vset.pattern.permute.xlu0 0
  %5415 = vperm.xlu0 %5414, %v5253
  %v5416 = vpop.permute.xlu0 %5415
  %5419 = vset.pattern.permute.xlu0 0
  %5420 = vperm.xlu0 %5419, %v5254
  %v5421 = vpop.permute.xlu0 %5420
  %v5423 = vadd.f32 %v5387, %v5406
  %v5424 = vadd.f32 %v5388, %v5406
  %v5425 = vadd.f32 %v5389, %v5406
  %v5426 = vadd.f32 %v5390, %v5406
  %v5427 = vadd.f32 %v5391, %v5411
  %v5428 = vadd.f32 %v5392, %v5411
  %v5429 = vadd.f32 %v5393, %v5411
  %v5430 = vadd.f32 %v5394, %v5411
  %v5431 = vadd.f32 %v5395, %v5416
  %v5432 = vadd.f32 %v5396, %v5416
  %v5433 = vadd.f32 %v5397, %v5416
  %v5434 = vadd.f32 %v5398, %v5416
  %v5435 = vadd.f32 %v5399, %v5421
  %v5436 = vadd.f32 %v5400, %v5421
  %v5437 = vadd.f32 %v5401, %v5421
  %v5438 = vadd.f32 %v5402, %v5421
  %vm5439 = vcmp.gt.f32.partialorder %v5423, 0.0
  %vm5440 = vcmp.gt.f32.partialorder %v5424, 0.0
  %vm5441 = vcmp.gt.f32.partialorder %v5425, 0.0
  %vm5442 = vcmp.gt.f32.partialorder %v5426, 0.0
  %vm5443 = vcmp.gt.f32.partialorder %v5427, 0.0
  %vm5444 = vcmp.gt.f32.partialorder %v5428, 0.0
  %vm5445 = vcmp.gt.f32.partialorder %v5429, 0.0
  %vm5446 = vcmp.gt.f32.partialorder %v5430, 0.0
  %vm5447 = vcmp.gt.f32.partialorder %v5431, 0.0
  %vm5448 = vcmp.gt.f32.partialorder %v5432, 0.0
  %vm5449 = vcmp.gt.f32.partialorder %v5433, 0.0
  %vm5450 = vcmp.gt.f32.partialorder %v5434, 0.0
  %vm5451 = vcmp.gt.f32.partialorder %v5435, 0.0
  %vm5452 = vcmp.gt.f32.partialorder %v5436, 0.0
  %vm5453 = vcmp.gt.f32.partialorder %v5437, 0.0
  %vm5454 = vcmp.gt.f32.partialorder %v5438, 0.0
  %v5455 = vmul.f32 %v5423, 0.2
  %v5456 = vmul.f32 %v5424, 0.2
  %v5457 = vmul.f32 %v5425, 0.2
  %v5458 = vmul.f32 %v5426, 0.2
  %v5459 = vmul.f32 %v5427, 0.2
  %v5460 = vmul.f32 %v5428, 0.2
  %v5461 = vmul.f32 %v5429, 0.2
  %v5462 = vmul.f32 %v5430, 0.2
  %v5463 = vmul.f32 %v5431, 0.2
  %v5464 = vmul.f32 %v5432, 0.2
  %v5465 = vmul.f32 %v5433, 0.2
  %v5466 = vmul.f32 %v5434, 0.2
  %v5467 = vmul.f32 %v5435, 0.2
  %v5468 = vmul.f32 %v5436, 0.2
  %v5469 = vmul.f32 %v5437, 0.2
  %v5470 = vmul.f32 %v5438, 0.2
  %v5471 = vsel %vm5439, %v5423, %v5455
  %v5472 = vsel %vm5440, %v5424, %v5456
  %v5473 = vsel %vm5441, %v5425, %v5457
  %v5474 = vsel %vm5442, %v5426, %v5458
  %v5475 = vsel %vm5443, %v5427, %v5459
  %v5476 = vsel %vm5444, %v5428, %v5460
  %v5477 = vsel %vm5445, %v5429, %v5461
  %v5478 = vsel %vm5446, %v5430, %v5462
  %v5479 = vsel %vm5447, %v5431, %v5463
  %v5480 = vsel %vm5448, %v5432, %v5464
  %v5481 = vsel %vm5449, %v5433, %v5465
  %v5482 = vsel %vm5450, %v5434, %v5466
  %v5483 = vsel %vm5451, %v5435, %v5467
  %v5484 = vsel %vm5452, %v5436, %v5468
  %v5485 = vsel %vm5453, %v5437, %v5469
  %v5486 = vsel %vm5454, %v5438, %v5470
  %v5487 = vld [vmem:[%s20] sm:$0x3f]
  %v5488 = vld [vmem:[%s21] sm:$0x7]
  %5505 = vrot.lane.b32.xlu0 %v5471, 17
  %v5506 = vpop.permute.xlu0 %5505
  %5507 = vrot.lane.b32.xlu0 %v5472, 17
  %v5508 = vpop.permute.xlu0 %5507
  %5509 = vrot.lane.b32.xlu0 %v5473, 17
  %v5510 = vpop.permute.xlu0 %5509
  %5511 = vrot.lane.b32.xlu0 %v5474, 17
  %v5512 = vpop.permute.xlu0 %5511
  %5513 = vrot.lane.b32.xlu0 %v5475, 17
  %v5514 = vpop.permute.xlu0 %5513
  %5515 = vrot.lane.b32.xlu0 %v5476, 17
  %v5516 = vpop.permute.xlu0 %5515
  %5517 = vrot.lane.b32.xlu0 %v5477, 17
  %v5518 = vpop.permute.xlu0 %5517
  %5519 = vrot.lane.b32.xlu0 %v5478, 17
  %v5520 = vpop.permute.xlu0 %5519
  %5521 = vrot.lane.b32.xlu0 %v5479, 17
  %v5522 = vpop.permute.xlu0 %5521
  %5523 = vrot.lane.b32.xlu0 %v5480, 17
  %v5524 = vpop.permute.xlu0 %5523
  %5525 = vrot.lane.b32.xlu0 %v5481, 17
  %v5526 = vpop.permute.xlu0 %5525
  %5527 = vrot.lane.b32.xlu0 %v5482, 17
  %v5528 = vpop.permute.xlu0 %5527
  %5529 = vrot.lane.b32.xlu0 %v5483, 17
  %v5530 = vpop.permute.xlu0 %5529
  %5531 = vrot.lane.b32.xlu0 %v5484, 17
  %v5532 = vpop.permute.xlu0 %5531
  %5533 = vrot.lane.b32.xlu0 %v5485, 17
  %v5534 = vpop.permute.xlu0 %5533
  %5535 = vrot.lane.b32.xlu0 %v5486, 17
  %v5536 = vpop.permute.xlu0 %5535
  %v5537 = vsel %vm3311, %v5506, %v5508
  %v5538 = vsel %vm3311, %v5508, %v5510
  %v5539 = vsel %vm3311, %v5510, %v5512
  %v5540 = vsel %vm3311, %v5514, %v5516
  %v5541 = vsel %vm3311, %v5516, %v5518
  %v5542 = vsel %vm3311, %v5518, %v5520
  %v5543 = vsel %vm3311, %v5522, %v5524
  %v5544 = vsel %vm3311, %v5524, %v5526
  %v5545 = vsel %vm3311, %v5526, %v5528
  %v5546 = vsel %vm3311, %v5530, %v5532
  %v5547 = vsel %vm3311, %v5532, %v5534
  %v5548 = vsel %vm3311, %v5534, %v5536
  %v5565 = vsel %vm3311, 0.0, %v5506
  %v5566 = vsel %vm3311, 0.0, %v5514
  %v5567 = vsel %vm3311, 0.0, %v5522
  %v5568 = vsel %vm3311, 0.0, %v5530
  %v5569 = vmul.f32 %v5565, %v3379
  %v5570 = vmul.f32 %v5537, %v3383
  %v5571 = vmul.f32 %v5538, %v3387
  %v5572 = vmul.f32 %v5539, %v3391
  %v5573 = vmul.f32 %v5566, %v3379
  %v5574 = vmul.f32 %v5540, %v3383
  %v5575 = vmul.f32 %v5541, %v3387
  %v5576 = vmul.f32 %v5542, %v3391
  %v5577 = vmul.f32 %v5567, %v3379
  %v5578 = vmul.f32 %v5543, %v3383
  %v5579 = vmul.f32 %v5544, %v3387
  %v5580 = vmul.f32 %v5545, %v3391
  %v5581 = vmul.f32 %v5568, %v3379
  %v5582 = vmul.f32 %v5546, %v3383
  %v5583 = vmul.f32 %v5547, %v3387
  %v5584 = vmul.f32 %v5548, %v3391
  %5585 = vrot.lane.b32.xlu0 %v5471, 16
  %v5586 = vpop.permute.xlu0 %5585
  %5587 = vrot.lane.b32.xlu0 %v5472, 16
  %v5588 = vpop.permute.xlu0 %5587
  %5589 = vrot.lane.b32.xlu0 %v5473, 16
  %v5590 = vpop.permute.xlu0 %5589
  %5591 = vrot.lane.b32.xlu0 %v5474, 16
  %v5592 = vpop.permute.xlu0 %5591
  %5593 = vrot.lane.b32.xlu0 %v5475, 16
  %v5594 = vpop.permute.xlu0 %5593
  %5595 = vrot.lane.b32.xlu0 %v5476, 16
  %v5596 = vpop.permute.xlu0 %5595
  %5597 = vrot.lane.b32.xlu0 %v5477, 16
  %v5598 = vpop.permute.xlu0 %5597
  %5599 = vrot.lane.b32.xlu0 %v5478, 16
  %v5600 = vpop.permute.xlu0 %5599
  %5601 = vrot.lane.b32.xlu0 %v5479, 16
  %v5602 = vpop.permute.xlu0 %5601
  %5603 = vrot.lane.b32.xlu0 %v5480, 16
  %v5604 = vpop.permute.xlu0 %5603
  %5605 = vrot.lane.b32.xlu0 %v5481, 16
  %v5606 = vpop.permute.xlu0 %5605
  %5607 = vrot.lane.b32.xlu0 %v5482, 16
  %v5608 = vpop.permute.xlu0 %5607
  %5609 = vrot.lane.b32.xlu0 %v5483, 16
  %v5610 = vpop.permute.xlu0 %5609
  %5611 = vrot.lane.b32.xlu0 %v5484, 16
  %v5612 = vpop.permute.xlu0 %5611
  %5613 = vrot.lane.b32.xlu0 %v5485, 16
  %v5614 = vpop.permute.xlu0 %5613
  %5615 = vrot.lane.b32.xlu0 %v5486, 16
  %v5616 = vpop.permute.xlu0 %5615
  %v5617 = vsel %vm3488, %v5586, %v5588
  %v5618 = vsel %vm3488, %v5588, %v5590
  %v5619 = vsel %vm3488, %v5590, %v5592
  %v5620 = vsel %vm3488, %v5594, %v5596
  %v5621 = vsel %vm3488, %v5596, %v5598
  %v5622 = vsel %vm3488, %v5598, %v5600
  %v5623 = vsel %vm3488, %v5602, %v5604
  %v5624 = vsel %vm3488, %v5604, %v5606
  %v5625 = vsel %vm3488, %v5606, %v5608
  %v5626 = vsel %vm3488, %v5610, %v5612
  %v5627 = vsel %vm3488, %v5612, %v5614
  %v5628 = vsel %vm3488, %v5614, %v5616
  %v5645 = vsel %vm3488, 0.0, %v5586
  %v5646 = vsel %vm3488, 0.0, %v5594
  %v5647 = vsel %vm3488, 0.0, %v5602
  %v5648 = vsel %vm3488, 0.0, %v5610
  %v5649 = vmul.f32 %v5645, %v3556
  %v5650 = vmul.f32 %v5617, %v3560
  %v5651 = vmul.f32 %v5618, %v3564
  %v5652 = vmul.f32 %v5619, %v3568
  %v5653 = vmul.f32 %v5646, %v3556
  %v5654 = vmul.f32 %v5620, %v3560
  %v5655 = vmul.f32 %v5621, %v3564
  %v5656 = vmul.f32 %v5622, %v3568
  %v5657 = vmul.f32 %v5647, %v3556
  %v5658 = vmul.f32 %v5623, %v3560
  %v5659 = vmul.f32 %v5624, %v3564
  %v5660 = vmul.f32 %v5625, %v3568
  %v5661 = vmul.f32 %v5648, %v3556
  %v5662 = vmul.f32 %v5626, %v3560
  %v5663 = vmul.f32 %v5627, %v3564
  %v5664 = vmul.f32 %v5628, %v3568
  %5665 = vrot.lane.b32.xlu0 %v5471, 15
  %v5666 = vpop.permute.xlu0 %5665
  %5667 = vrot.lane.b32.xlu0 %v5472, 15
  %v5668 = vpop.permute.xlu0 %5667
  %5669 = vrot.lane.b32.xlu0 %v5473, 15
  %v5670 = vpop.permute.xlu0 %5669
  %5671 = vrot.lane.b32.xlu0 %v5474, 15
  %v5672 = vpop.permute.xlu0 %5671
  %5673 = vrot.lane.b32.xlu0 %v5475, 15
  %v5674 = vpop.permute.xlu0 %5673
  %5675 = vrot.lane.b32.xlu0 %v5476, 15
  %v5676 = vpop.permute.xlu0 %5675
  %5677 = vrot.lane.b32.xlu0 %v5477, 15
  %v5678 = vpop.permute.xlu0 %5677
  %5679 = vrot.lane.b32.xlu0 %v5478, 15
  %v5680 = vpop.permute.xlu0 %5679
  %5681 = vrot.lane.b32.xlu0 %v5479, 15
  %v5682 = vpop.permute.xlu0 %5681
  %5683 = vrot.lane.b32.xlu0 %v5480, 15
  %v5684 = vpop.permute.xlu0 %5683
  %5685 = vrot.lane.b32.xlu0 %v5481, 15
  %v5686 = vpop.permute.xlu0 %5685
  %5687 = vrot.lane.b32.xlu0 %v5482, 15
  %v5688 = vpop.permute.xlu0 %5687
  %5689 = vrot.lane.b32.xlu0 %v5483, 15
  %v5690 = vpop.permute.xlu0 %5689
  %5691 = vrot.lane.b32.xlu0 %v5484, 15
  %v5692 = vpop.permute.xlu0 %5691
  %5693 = vrot.lane.b32.xlu0 %v5485, 15
  %v5694 = vpop.permute.xlu0 %5693
  %5695 = vrot.lane.b32.xlu0 %v5486, 15
  %v5696 = vpop.permute.xlu0 %5695
  %v5697 = vsel %vm3665, %v5666, %v5668
  %v5698 = vsel %vm3665, %v5668, %v5670
  %v5699 = vsel %vm3665, %v5670, %v5672
  %v5700 = vsel %vm3665, %v5674, %v5676
  %v5701 = vsel %vm3665, %v5676, %v5678
  %v5702 = vsel %vm3665, %v5678, %v5680
  %v5703 = vsel %vm3665, %v5682, %v5684
  %v5704 = vsel %vm3665, %v5684, %v5686
  %v5705 = vsel %vm3665, %v5686, %v5688
  %v5706 = vsel %vm3665, %v5690, %v5692
  %v5707 = vsel %vm3665, %v5692, %v5694
  %v5708 = vsel %vm3665, %v5694, %v5696
  %v5725 = vsel %vm3665, 0.0, %v5666
  %v5726 = vsel %vm3665, 0.0, %v5674
  %v5727 = vsel %vm3665, 0.0, %v5682
  %v5728 = vsel %vm3665, 0.0, %v5690
  %v5729 = vmul.f32 %v5725, %v3733
  %v5730 = vmul.f32 %v5697, %v3737
  %v5731 = vmul.f32 %v5698, %v3741
  %v5732 = vmul.f32 %v5699, %v3745
  %v5733 = vmul.f32 %v5726, %v3733
  %v5734 = vmul.f32 %v5700, %v3737
  %v5735 = vmul.f32 %v5701, %v3741
  %v5736 = vmul.f32 %v5702, %v3745
  %v5737 = vmul.f32 %v5727, %v3733
  %v5738 = vmul.f32 %v5703, %v3737
  %v5739 = vmul.f32 %v5704, %v3741
  %v5740 = vmul.f32 %v5705, %v3745
  %v5741 = vmul.f32 %v5728, %v3733
  %v5742 = vmul.f32 %v5706, %v3737
  %v5743 = vmul.f32 %v5707, %v3741
  %v5744 = vmul.f32 %v5708, %v3745
  %5745 = vrot.lane.b32.xlu0 %v5471, 1
  %v5746 = vpop.permute.xlu0 %5745
  %5747 = vrot.lane.b32.xlu0 %v5472, 1
  %v5748 = vpop.permute.xlu0 %5747
  %5749 = vrot.lane.b32.xlu0 %v5473, 1
  %v5750 = vpop.permute.xlu0 %5749
  %5751 = vrot.lane.b32.xlu0 %v5474, 1
  %v5752 = vpop.permute.xlu0 %5751
  %5753 = vrot.lane.b32.xlu0 %v5475, 1
  %v5754 = vpop.permute.xlu0 %5753
  %5755 = vrot.lane.b32.xlu0 %v5476, 1
  %v5756 = vpop.permute.xlu0 %5755
  %5757 = vrot.lane.b32.xlu0 %v5477, 1
  %v5758 = vpop.permute.xlu0 %5757
  %5759 = vrot.lane.b32.xlu0 %v5478, 1
  %v5760 = vpop.permute.xlu0 %5759
  %5761 = vrot.lane.b32.xlu0 %v5479, 1
  %v5762 = vpop.permute.xlu0 %5761
  %5763 = vrot.lane.b32.xlu0 %v5480, 1
  %v5764 = vpop.permute.xlu0 %5763
  %5765 = vrot.lane.b32.xlu0 %v5481, 1
  %v5766 = vpop.permute.xlu0 %5765
  %5767 = vrot.lane.b32.xlu0 %v5482, 1
  %v5768 = vpop.permute.xlu0 %5767
  %5769 = vrot.lane.b32.xlu0 %v5483, 1
  %v5770 = vpop.permute.xlu0 %5769
  %5771 = vrot.lane.b32.xlu0 %v5484, 1
  %v5772 = vpop.permute.xlu0 %5771
  %5773 = vrot.lane.b32.xlu0 %v5485, 1
  %v5774 = vpop.permute.xlu0 %5773
  %5775 = vrot.lane.b32.xlu0 %v5486, 1
  %v5776 = vpop.permute.xlu0 %5775
  %v5777 = vsel %vm2064, %v5746, %v5748
  %v5778 = vsel %vm2064, %v5748, %v5750
  %v5779 = vsel %vm2064, %v5750, %v5752
  %v5780 = vsel %vm2064, %v5754, %v5756
  %v5781 = vsel %vm2064, %v5756, %v5758
  %v5782 = vsel %vm2064, %v5758, %v5760
  %v5783 = vsel %vm2064, %v5762, %v5764
  %v5784 = vsel %vm2064, %v5764, %v5766
  %v5785 = vsel %vm2064, %v5766, %v5768
  %v5786 = vsel %vm2064, %v5770, %v5772
  %v5787 = vsel %vm2064, %v5772, %v5774
  %v5788 = vsel %vm2064, %v5774, %v5776
  %v5805 = vsel %vm2064, 0.0, %v5746
  %v5806 = vsel %vm2064, 0.0, %v5754
  %v5807 = vsel %vm2064, 0.0, %v5762
  %v5808 = vsel %vm2064, 0.0, %v5770
  %v5809 = vmul.f32 %v5805, %v3909
  %v5810 = vmul.f32 %v5777, %v3913
  %v5811 = vmul.f32 %v5778, %v3917
  %v5812 = vmul.f32 %v5779, %v3921
  %v5813 = vmul.f32 %v5806, %v3909
  %v5814 = vmul.f32 %v5780, %v3913
  %v5815 = vmul.f32 %v5781, %v3917
  %v5816 = vmul.f32 %v5782, %v3921
  %v5817 = vmul.f32 %v5807, %v3909
  %v5818 = vmul.f32 %v5783, %v3913
  %v5819 = vmul.f32 %v5784, %v3917
  %v5820 = vmul.f32 %v5785, %v3921
  %v5821 = vmul.f32 %v5808, %v3909
  %v5822 = vmul.f32 %v5786, %v3913
  %v5823 = vmul.f32 %v5787, %v3917
  %v5824 = vmul.f32 %v5788, %v3921
  %v5825 = vmul.f32 %v5471, %v3957
  %v5826 = vmul.f32 %v5472, %v3961
  %v5827 = vmul.f32 %v5473, %v3965
  %v5828 = vmul.f32 %v5474, %v3969
  %v5829 = vmul.f32 %v5475, %v3957
  %v5830 = vmul.f32 %v5476, %v3961
  %v5831 = vmul.f32 %v5477, %v3965
  %v5832 = vmul.f32 %v5478, %v3969
  %v5833 = vmul.f32 %v5479, %v3957
  %v5834 = vmul.f32 %v5480, %v3961
  %v5835 = vmul.f32 %v5481, %v3965
  %v5836 = vmul.f32 %v5482, %v3969
  %v5837 = vmul.f32 %v5483, %v3957
  %v5838 = vmul.f32 %v5484, %v3961
  %v5839 = vmul.f32 %v5485, %v3965
  %v5840 = vmul.f32 %v5486, %v3969
  %5841 = vrot.lane.b32.xlu0 %v5471, 127
  %v5842 = vpop.permute.xlu0 %5841
  %5843 = vrot.lane.b32.xlu0 %v5472, 127
  %v5844 = vpop.permute.xlu0 %5843
  %5845 = vrot.lane.b32.xlu0 %v5473, 127
  %v5846 = vpop.permute.xlu0 %5845
  %5847 = vrot.lane.b32.xlu0 %v5474, 127
  %v5848 = vpop.permute.xlu0 %5847
  %5849 = vrot.lane.b32.xlu0 %v5475, 127
  %v5850 = vpop.permute.xlu0 %5849
  %5851 = vrot.lane.b32.xlu0 %v5476, 127
  %v5852 = vpop.permute.xlu0 %5851
  %5853 = vrot.lane.b32.xlu0 %v5477, 127
  %v5854 = vpop.permute.xlu0 %5853
  %5855 = vrot.lane.b32.xlu0 %v5478, 127
  %v5856 = vpop.permute.xlu0 %5855
  %5857 = vrot.lane.b32.xlu0 %v5479, 127
  %v5858 = vpop.permute.xlu0 %5857
  %5859 = vrot.lane.b32.xlu0 %v5480, 127
  %v5860 = vpop.permute.xlu0 %5859
  %5861 = vrot.lane.b32.xlu0 %v5481, 127
  %v5862 = vpop.permute.xlu0 %5861
  %5863 = vrot.lane.b32.xlu0 %v5482, 127
  %v5864 = vpop.permute.xlu0 %5863
  %5865 = vrot.lane.b32.xlu0 %v5483, 127
  %v5866 = vpop.permute.xlu0 %5865
  %5867 = vrot.lane.b32.xlu0 %v5484, 127
  %v5868 = vpop.permute.xlu0 %5867
  %5869 = vrot.lane.b32.xlu0 %v5485, 127
  %v5870 = vpop.permute.xlu0 %5869
  %5871 = vrot.lane.b32.xlu0 %v5486, 127
  %v5872 = vpop.permute.xlu0 %5871
  %v5873 = vsel %vm2121, %v5842, %v5844
  %v5874 = vsel %vm2121, %v5844, %v5846
  %v5875 = vsel %vm2121, %v5846, %v5848
  %v5876 = vsel %vm2121, %v5850, %v5852
  %v5877 = vsel %vm2121, %v5852, %v5854
  %v5878 = vsel %vm2121, %v5854, %v5856
  %v5879 = vsel %vm2121, %v5858, %v5860
  %v5880 = vsel %vm2121, %v5860, %v5862
  %v5881 = vsel %vm2121, %v5862, %v5864
  %v5882 = vsel %vm2121, %v5866, %v5868
  %v5883 = vsel %vm2121, %v5868, %v5870
  %v5884 = vsel %vm2121, %v5870, %v5872
  %v5901 = vsel %vm2121, %v5848, 0.0
  %v5902 = vsel %vm2121, %v5856, 0.0
  %v5903 = vsel %vm2121, %v5864, 0.0
  %v5904 = vsel %vm2121, %v5872, 0.0
  %v5905 = vmul.f32 %v5873, %v4133
  %v5906 = vmul.f32 %v5874, %v4137
  %v5907 = vmul.f32 %v5875, %v4141
  %v5908 = vmul.f32 %v5901, %v4145
  %v5909 = vmul.f32 %v5876, %v4133
  %v5910 = vmul.f32 %v5877, %v4137
  %v5911 = vmul.f32 %v5878, %v4141
  %v5912 = vmul.f32 %v5902, %v4145
  %v5913 = vmul.f32 %v5879, %v4133
  %v5914 = vmul.f32 %v5880, %v4137
  %v5915 = vmul.f32 %v5881, %v4141
  %v5916 = vmul.f32 %v5903, %v4145
  %v5917 = vmul.f32 %v5882, %v4133
  %v5918 = vmul.f32 %v5883, %v4137
  %v5919 = vmul.f32 %v5884, %v4141
  %v5920 = vmul.f32 %v5904, %v4145
  %5921 = vrot.lane.b32.xlu0 %v5471, 113
  %v5922 = vpop.permute.xlu0 %5921
  %5923 = vrot.lane.b32.xlu0 %v5472, 113
  %v5924 = vpop.permute.xlu0 %5923
  %5925 = vrot.lane.b32.xlu0 %v5473, 113
  %v5926 = vpop.permute.xlu0 %5925
  %5927 = vrot.lane.b32.xlu0 %v5474, 113
  %v5928 = vpop.permute.xlu0 %5927
  %5929 = vrot.lane.b32.xlu0 %v5475, 113
  %v5930 = vpop.permute.xlu0 %5929
  %5931 = vrot.lane.b32.xlu0 %v5476, 113
  %v5932 = vpop.permute.xlu0 %5931
  %5933 = vrot.lane.b32.xlu0 %v5477, 113
  %v5934 = vpop.permute.xlu0 %5933
  %5935 = vrot.lane.b32.xlu0 %v5478, 113
  %v5936 = vpop.permute.xlu0 %5935
  %5937 = vrot.lane.b32.xlu0 %v5479, 113
  %v5938 = vpop.permute.xlu0 %5937
  %5939 = vrot.lane.b32.xlu0 %v5480, 113
  %v5940 = vpop.permute.xlu0 %5939
  %5941 = vrot.lane.b32.xlu0 %v5481, 113
  %v5942 = vpop.permute.xlu0 %5941
  %5943 = vrot.lane.b32.xlu0 %v5482, 113
  %v5944 = vpop.permute.xlu0 %5943
  %5945 = vrot.lane.b32.xlu0 %v5483, 113
  %v5946 = vpop.permute.xlu0 %5945
  %5947 = vrot.lane.b32.xlu0 %v5484, 113
  %v5948 = vpop.permute.xlu0 %5947
  %5949 = vrot.lane.b32.xlu0 %v5485, 113
  %v5950 = vpop.permute.xlu0 %5949
  %5951 = vrot.lane.b32.xlu0 %v5486, 113
  %v5952 = vpop.permute.xlu0 %5951
  %v5953 = vsel %vm4242, %v5922, %v5924
  %v5954 = vsel %vm4242, %v5924, %v5926
  %v5955 = vsel %vm4242, %v5926, %v5928
  %v5956 = vsel %vm4242, %v5930, %v5932
  %v5957 = vsel %vm4242, %v5932, %v5934
  %v5958 = vsel %vm4242, %v5934, %v5936
  %v5959 = vsel %vm4242, %v5938, %v5940
  %v5960 = vsel %vm4242, %v5940, %v5942
  %v5961 = vsel %vm4242, %v5942, %v5944
  %v5962 = vsel %vm4242, %v5946, %v5948
  %v5963 = vsel %vm4242, %v5948, %v5950
  %v5964 = vsel %vm4242, %v5950, %v5952
  %v5981 = vsel %vm4242, %v5928, 0.0
  %v5982 = vsel %vm4242, %v5936, 0.0
  %v5983 = vsel %vm4242, %v5944, 0.0
  %v5984 = vsel %vm4242, %v5952, 0.0
  %v5985 = vmul.f32 %v5953, %v4310
  %v5986 = vmul.f32 %v5954, %v4314
  %v5987 = vmul.f32 %v5955, %v4318
  %v5988 = vmul.f32 %v5981, %v4322
  %v5989 = vmul.f32 %v5956, %v4310
  %v5990 = vmul.f32 %v5957, %v4314
  %v5991 = vmul.f32 %v5958, %v4318
  %v5992 = vmul.f32 %v5982, %v4322
  %v5993 = vmul.f32 %v5959, %v4310
  %v5994 = vmul.f32 %v5960, %v4314
  %v5995 = vmul.f32 %v5961, %v4318
  %v5996 = vmul.f32 %v5983, %v4322
  %v5997 = vmul.f32 %v5962, %v4310
  %v5998 = vmul.f32 %v5963, %v4314
  %v5999 = vmul.f32 %v5964, %v4318
  %v6000 = vmul.f32 %v5984, %v4322
  %6001 = vrot.lane.b32.xlu0 %v5471, 112
  %v6002 = vpop.permute.xlu0 %6001
  %6003 = vrot.lane.b32.xlu0 %v5472, 112
  %v6004 = vpop.permute.xlu0 %6003
  %6005 = vrot.lane.b32.xlu0 %v5473, 112
  %v6006 = vpop.permute.xlu0 %6005
  %6007 = vrot.lane.b32.xlu0 %v5474, 112
  %v6008 = vpop.permute.xlu0 %6007
  %6009 = vrot.lane.b32.xlu0 %v5475, 112
  %v6010 = vpop.permute.xlu0 %6009
  %6011 = vrot.lane.b32.xlu0 %v5476, 112
  %v6012 = vpop.permute.xlu0 %6011
  %6013 = vrot.lane.b32.xlu0 %v5477, 112
  %v6014 = vpop.permute.xlu0 %6013
  %6015 = vrot.lane.b32.xlu0 %v5478, 112
  %v6016 = vpop.permute.xlu0 %6015
  %6017 = vrot.lane.b32.xlu0 %v5479, 112
  %v6018 = vpop.permute.xlu0 %6017
  %6019 = vrot.lane.b32.xlu0 %v5480, 112
  %v6020 = vpop.permute.xlu0 %6019
  %6021 = vrot.lane.b32.xlu0 %v5481, 112
  %v6022 = vpop.permute.xlu0 %6021
  %6023 = vrot.lane.b32.xlu0 %v5482, 112
  %v6024 = vpop.permute.xlu0 %6023
  %6025 = vrot.lane.b32.xlu0 %v5483, 112
  %v6026 = vpop.permute.xlu0 %6025
  %6027 = vrot.lane.b32.xlu0 %v5484, 112
  %v6028 = vpop.permute.xlu0 %6027
  %6029 = vrot.lane.b32.xlu0 %v5485, 112
  %v6030 = vpop.permute.xlu0 %6029
  %6031 = vrot.lane.b32.xlu0 %v5486, 112
  %v6032 = vpop.permute.xlu0 %6031
  %v6033 = vsel %vm4419, %v6002, %v6004
  %v6034 = vsel %vm4419, %v6004, %v6006
  %v6035 = vsel %vm4419, %v6006, %v6008
  %v6036 = vsel %vm4419, %v6010, %v6012
  %v6037 = vsel %vm4419, %v6012, %v6014
  %v6038 = vsel %vm4419, %v6014, %v6016
  %v6039 = vsel %vm4419, %v6018, %v6020
  %v6040 = vsel %vm4419, %v6020, %v6022
  %v6041 = vsel %vm4419, %v6022, %v6024
  %v6042 = vsel %vm4419, %v6026, %v6028
  %v6043 = vsel %vm4419, %v6028, %v6030
  %v6044 = vsel %vm4419, %v6030, %v6032
  %v6061 = vsel %vm4419, %v6008, 0.0
  %v6062 = vsel %vm4419, %v6016, 0.0
  %v6063 = vsel %vm4419, %v6024, 0.0
  %v6064 = vsel %vm4419, %v6032, 0.0
  %v6065 = vmul.f32 %v6033, %v4487
  %v6066 = vmul.f32 %v6034, %v4491
  %v6067 = vmul.f32 %v6035, %v4495
  %v6068 = vmul.f32 %v6061, %v4499
  %v6069 = vmul.f32 %v6036, %v4487
  %v6070 = vmul.f32 %v6037, %v4491
  %v6071 = vmul.f32 %v6038, %v4495
  %v6072 = vmul.f32 %v6062, %v4499
  %v6073 = vmul.f32 %v6039, %v4487
  %v6074 = vmul.f32 %v6040, %v4491
  %v6075 = vmul.f32 %v6041, %v4495
  %v6076 = vmul.f32 %v6063, %v4499
  %v6077 = vmul.f32 %v6042, %v4487
  %v6078 = vmul.f32 %v6043, %v4491
  %v6079 = vmul.f32 %v6044, %v4495
  %v6080 = vmul.f32 %v6064, %v4499
  %6081 = vrot.lane.b32.xlu0 %v5471, 111
  %v6082 = vpop.permute.xlu0 %6081
  %6083 = vrot.lane.b32.xlu0 %v5472, 111
  %v6084 = vpop.permute.xlu0 %6083
  %6085 = vrot.lane.b32.xlu0 %v5473, 111
  %v6086 = vpop.permute.xlu0 %6085
  %6087 = vrot.lane.b32.xlu0 %v5474, 111
  %v6088 = vpop.permute.xlu0 %6087
  %6089 = vrot.lane.b32.xlu0 %v5475, 111
  %v6090 = vpop.permute.xlu0 %6089
  %6091 = vrot.lane.b32.xlu0 %v5476, 111
  %v6092 = vpop.permute.xlu0 %6091
  %6093 = vrot.lane.b32.xlu0 %v5477, 111
  %v6094 = vpop.permute.xlu0 %6093
  %6095 = vrot.lane.b32.xlu0 %v5478, 111
  %v6096 = vpop.permute.xlu0 %6095
  %6097 = vrot.lane.b32.xlu0 %v5479, 111
  %v6098 = vpop.permute.xlu0 %6097
  %6099 = vrot.lane.b32.xlu0 %v5480, 111
  %v6100 = vpop.permute.xlu0 %6099
  %6101 = vrot.lane.b32.xlu0 %v5481, 111
  %v6102 = vpop.permute.xlu0 %6101
  %6103 = vrot.lane.b32.xlu0 %v5482, 111
  %v6104 = vpop.permute.xlu0 %6103
  %6105 = vrot.lane.b32.xlu0 %v5483, 111
  %v6106 = vpop.permute.xlu0 %6105
  %6107 = vrot.lane.b32.xlu0 %v5484, 111
  %v6108 = vpop.permute.xlu0 %6107
  %6109 = vrot.lane.b32.xlu0 %v5485, 111
  %v6110 = vpop.permute.xlu0 %6109
  %6111 = vrot.lane.b32.xlu0 %v5486, 111
  %v6112 = vpop.permute.xlu0 %6111
  %v6113 = vsel %vm4596, %v6082, %v6084
  %v6114 = vsel %vm4596, %v6084, %v6086
  %v6115 = vsel %vm4596, %v6086, %v6088
  %v6116 = vsel %vm4596, %v6090, %v6092
  %v6117 = vsel %vm4596, %v6092, %v6094
  %v6118 = vsel %vm4596, %v6094, %v6096
  %v6119 = vsel %vm4596, %v6098, %v6100
  %v6120 = vsel %vm4596, %v6100, %v6102
  %v6121 = vsel %vm4596, %v6102, %v6104
  %v6122 = vsel %vm4596, %v6106, %v6108
  %v6123 = vsel %vm4596, %v6108, %v6110
  %v6124 = vsel %vm4596, %v6110, %v6112
  %v6141 = vsel %vm4596, %v6088, 0.0
  %v6142 = vsel %vm4596, %v6096, 0.0
  %v6143 = vsel %vm4596, %v6104, 0.0
  %v6144 = vsel %vm4596, %v6112, 0.0
  %v6145 = vmul.f32 %v6113, %v4664
  %v6146 = vmul.f32 %v6114, %v4668
  %v6147 = vmul.f32 %v6115, %v4672
  %v6148 = vmul.f32 %v6141, %v4676
  %v6149 = vmul.f32 %v6116, %v4664
  %v6150 = vmul.f32 %v6117, %v4668
  %v6151 = vmul.f32 %v6118, %v4672
  %v6152 = vmul.f32 %v6142, %v4676
  %v6153 = vmul.f32 %v6119, %v4664
  %v6154 = vmul.f32 %v6120, %v4668
  %v6155 = vmul.f32 %v6121, %v4672
  %v6156 = vmul.f32 %v6143, %v4676
  %v6157 = vmul.f32 %v6122, %v4664
  %v6158 = vmul.f32 %v6123, %v4668
  %v6159 = vmul.f32 %v6124, %v4672
  %v6160 = vmul.f32 %v6144, %v4676
  %v6161 = vpack.c.bf16 %v5573, %v5569
  %v6162 = vpack.c.bf16 %v5574, %v5570
  %v6163 = vpack.c.bf16 %v5575, %v5571
  %v6164 = vpack.c.bf16 %v5576, %v5572
  %v6165 = vpack.c.bf16 %v5581, %v5577
  %v6166 = vpack.c.bf16 %v5582, %v5578
  %v6167 = vpack.c.bf16 %v5583, %v5579
  %v6168 = vpack.c.bf16 %v5584, %v5580
  %v6169 = vpack.c.bf16 %v5653, %v5649
  %v6170 = vpack.c.bf16 %v5654, %v5650
  %v6171 = vpack.c.bf16 %v5655, %v5651
  %v6172 = vpack.c.bf16 %v5656, %v5652
  %v6173 = vpack.c.bf16 %v5661, %v5657
  %v6174 = vpack.c.bf16 %v5662, %v5658
  %v6175 = vpack.c.bf16 %v5663, %v5659
  %v6176 = vpack.c.bf16 %v5664, %v5660
  %v6177 = vpack.c.bf16 %v5733, %v5729
  %v6178 = vpack.c.bf16 %v5734, %v5730
  %v6179 = vpack.c.bf16 %v5735, %v5731
  %v6180 = vpack.c.bf16 %v5736, %v5732
  %v6181 = vpack.c.bf16 %v5741, %v5737
  %v6182 = vpack.c.bf16 %v5742, %v5738
  %v6183 = vpack.c.bf16 %v5743, %v5739
  %v6184 = vpack.c.bf16 %v5744, %v5740
  %v6185 = vpack.c.bf16 %v5813, %v5809
  %v6186 = vpack.c.bf16 %v5814, %v5810
  %v6187 = vpack.c.bf16 %v5815, %v5811
  %v6188 = vpack.c.bf16 %v5816, %v5812
  %v6189 = vpack.c.bf16 %v5821, %v5817
  %v6190 = vpack.c.bf16 %v5822, %v5818
  %v6191 = vpack.c.bf16 %v5823, %v5819
  %v6192 = vpack.c.bf16 %v5824, %v5820
  %v6193 = vpack.c.bf16 %v5829, %v5825
  %v6194 = vpack.c.bf16 %v5830, %v5826
  %v6195 = vpack.c.bf16 %v5831, %v5827
  %v6196 = vpack.c.bf16 %v5832, %v5828
  %v6197 = vpack.c.bf16 %v5837, %v5833
  %v6198 = vpack.c.bf16 %v5838, %v5834
  %v6199 = vpack.c.bf16 %v5839, %v5835
  %v6200 = vpack.c.bf16 %v5840, %v5836
  %v6201 = vpack.c.bf16 %v5909, %v5905
  %v6202 = vpack.c.bf16 %v5910, %v5906
  %v6203 = vpack.c.bf16 %v5911, %v5907
  %v6204 = vpack.c.bf16 %v5912, %v5908
  %v6205 = vpack.c.bf16 %v5917, %v5913
  %v6206 = vpack.c.bf16 %v5918, %v5914
  %v6207 = vpack.c.bf16 %v5919, %v5915
  %v6208 = vpack.c.bf16 %v5920, %v5916
  %v6209 = vpack.c.bf16 %v5989, %v5985
  %v6210 = vpack.c.bf16 %v5990, %v5986
  %v6211 = vpack.c.bf16 %v5991, %v5987
  %v6212 = vpack.c.bf16 %v5992, %v5988
  %v6213 = vpack.c.bf16 %v5997, %v5993
  %v6214 = vpack.c.bf16 %v5998, %v5994
  %v6215 = vpack.c.bf16 %v5999, %v5995
  %v6216 = vpack.c.bf16 %v6000, %v5996
  %v6217 = vpack.c.bf16 %v6069, %v6065
  %v6218 = vpack.c.bf16 %v6070, %v6066
  %v6219 = vpack.c.bf16 %v6071, %v6067
  %v6220 = vpack.c.bf16 %v6072, %v6068
  %v6221 = vpack.c.bf16 %v6077, %v6073
  %v6222 = vpack.c.bf16 %v6078, %v6074
  %v6223 = vpack.c.bf16 %v6079, %v6075
  %v6224 = vpack.c.bf16 %v6080, %v6076
  %v6225 = vpack.c.bf16 %v6149, %v6145
  %v6226 = vpack.c.bf16 %v6150, %v6146
  %v6227 = vpack.c.bf16 %v6151, %v6147
  %v6228 = vpack.c.bf16 %v6152, %v6148
  %v6229 = vpack.c.bf16 %v6157, %v6153
  %v6230 = vpack.c.bf16 %v6158, %v6154
  %v6231 = vpack.c.bf16 %v6159, %v6155
  %v6232 = vpack.c.bf16 %v6160, %v6156
  %6234 = vset.pattern.permute.xlu0 0
  %6235 = vperm.xlu0 %6234, %v5488
  %v6236 = vpop.permute.xlu0 %6235
  %v6239 = vcombine.high %v5487, %v5487
  %v6241 = vunpack.c.l.s4 1983009808
  %v6242 = vunpack.c.0.s8 %v6241
  %v6243 = vlaneseq
  %v6244 = vshrl.u32 %v6243, 7
  %v6245 = vsub.s32 %v6242, %v6244
  %v6246 = vrot.slane %v5487, %v6245
  %v6248 = vunpack.c.l.s4 1983009808
  %v6249 = vunpack.c.0.s8 %v6248
  %v6250 = vlaneseq
  %v6251 = vshrl.u32 %v6250, 7
  %v6252 = vsub.s32 %v6249, %v6251
  %v6253 = vrot.slane %v6239, %v6252
  %v6254 = vcombine.high %v6246, %v6246
  %v6258 = vsel %vm1513, %v6253, 0
  %6260 = vmatprep.subr.bf16.mxu0 %v6162
  %6261 = vmatpush1.bf16.msra.mxu0 %v6161
  %6262 = vmatprep.subr.bf16.mxu0 %v6166
  %6263 = vmatpush1.bf16.msra.mxu0 %v6165
  %6264 = vmatprep.subr.bf16.mxu0 %v6170
  %6265 = vmatpush1.bf16.msra.mxu0 %v6169
  %6266 = vmatprep.subr.bf16.mxu0 %v6174
  %6267 = vmatpush1.bf16.msra.mxu0 %v6173
  %6268 = vmatprep.subr.bf16.mxu0 %v6178
  %6269 = vmatpush1.bf16.msra.mxu0 %v6177
  %6270 = vmatprep.subr.bf16.mxu0 %v6182
  %6271 = vmatpush1.bf16.msra.mxu0 %v6181
  %6272 = vmatprep.subr.bf16.mxu0 %v6186
  %6273 = vmatpush1.bf16.msra.mxu0 %v6185
  %6274 = vmatprep.subr.bf16.mxu0 %v6190
  %6275 = vmatpush1.bf16.msra.mxu0 %v6189
  %6276 = vmatprep.subr.bf16.mxu0 %v6194
  %6277 = vmatpush1.bf16.msra.mxu0 %v6193
  %6278 = vmatprep.subr.bf16.mxu0 %v6198
  %6279 = vmatpush1.bf16.msra.mxu0 %v6197
  %6280 = vmatprep.subr.bf16.mxu0 %v6202
  %6281 = vmatpush1.bf16.msra.mxu0 %v6201
  %6282 = vmatprep.subr.bf16.mxu0 %v6206
  %6283 = vmatpush1.bf16.msra.mxu0 %v6205
  %6284 = vmatprep.subr.bf16.mxu0 %v6210
  %6285 = vmatpush1.bf16.msra.mxu0 %v6209
  %6286 = vmatprep.subr.bf16.mxu0 %v6214
  %6287 = vmatpush1.bf16.msra.mxu0 %v6213
  %6288 = vmatprep.subr.bf16.mxu0 %v6218
  %6289 = vmatpush1.bf16.msra.mxu0 %v6217
  %6290 = vmatprep.subr.bf16.mxu0 %v6222
  %6291 = vmatpush1.bf16.msra.mxu0 %v6221
  %6292 = vmatprep.mubr.bf16.mxu0 %v6254
  %6293 = vmatmul.mubr.bf16.gmra.mrb[0].mxu0 %v6246
  %v6294 = vpop.f32.mrb[0].mxu0
  %v6295 = vadd.f32 %v6236, %v6294
  %v6296 = vpop.f32.mrb[0].mxu0
  %v6297 = vadd.f32 %v6236, %v6296
  %v6298 = vpop.f32.mrb[0].mxu0
  %v6299 = vpop.f32.mrb[0].mxu0
  %6300 = vdwg.mxu0
  %6301 = vmatprep.subr.bf16.mxu0 %v6226
  %6302 = vmatpush1.bf16.msra.mxu0 %v6225
  %6303 = vmatprep.subr.bf16.mxu0 %v6230
  %6304 = vmatpush1.bf16.msra.mxu0 %v6229
  %6305 = vmatprep.subr.bf16.mxu0 0
  %6306 = vmatpush1.bf16.msra.mxu0 0
  %6307 = vmatprep.subr.bf16.mxu0 0
  %6308 = vmatpush1.bf16.msra.mxu0 0
  %6309 = vmatprep.subr.bf16.mxu0 0
  %6310 = vmatpush1.bf16.msra.mxu0 0
  %6311 = vmatprep.subr.bf16.mxu0 0
  %6312 = vmatpush1.bf16.msra.mxu0 0
  %6313 = vmatprep.subr.bf16.mxu0 0
  %6314 = vmatpush1.bf16.msra.mxu0 0
  %6315 = vmatprep.subr.bf16.mxu0 0
  %6316 = vmatpush1.bf16.msra.mxu0 0
  %6317 = vmatprep.subr.bf16.mxu0 0
  %6318 = vmatpush1.bf16.msra.mxu0 0
  %6319 = vmatprep.subr.bf16.mxu0 0
  %6320 = vmatpush1.bf16.msra.mxu0 0
  %6321 = vmatprep.subr.bf16.mxu0 0
  %6322 = vmatpush1.bf16.msra.mxu0 0
  %6323 = vmatprep.subr.bf16.mxu0 0
  %6324 = vmatpush1.bf16.msra.mxu0 0
  %6325 = vmatprep.subr.bf16.mxu0 0
  %6326 = vmatpush1.bf16.msra.mxu0 0
  %6327 = vmatprep.subr.bf16.mxu0 0
  %6328 = vmatpush1.bf16.msra.mxu0 0
  %6329 = vmatprep.subr.bf16.mxu0 0
  %6330 = vmatpush1.bf16.msra.mxu0 0
  %6331 = vmatprep.subr.bf16.mxu0 0
  %6332 = vmatpush1.bf16.msra.mxu0 0
  %6333 = vmatprep.mubr.bf16.mxu0 0
  %6334 = vmatmul.mubr.bf16.gmra.mrb[0].mxu0 %v6258
  %v6335 = vpop.f32.mrb[0].mxu0
  %v6336 = vadd.f32 %v6295, %v6335
  %v6337 = vpop.f32.mrb[0].mxu0
  %v6338 = vadd.f32 %v6297, %v6337
  %v6339 = vpop.f32.mrb[0].mxu0
  %v6340 = vpop.f32.mrb[0].mxu0
  %6341 = vdwg.mxu0
  %6342 = vmatprep.subr.bf16.mxu0 %v6164
  %6343 = vmatpush1.bf16.msra.mxu0 %v6163
  %6344 = vmatprep.subr.bf16.mxu0 %v6168
  %6345 = vmatpush1.bf16.msra.mxu0 %v6167
  %6346 = vmatprep.subr.bf16.mxu0 %v6172
  %6347 = vmatpush1.bf16.msra.mxu0 %v6171
  %6348 = vmatprep.subr.bf16.mxu0 %v6176
  %6349 = vmatpush1.bf16.msra.mxu0 %v6175
  %6350 = vmatprep.subr.bf16.mxu0 %v6180
  %6351 = vmatpush1.bf16.msra.mxu0 %v6179
  %6352 = vmatprep.subr.bf16.mxu0 %v6184
  %6353 = vmatpush1.bf16.msra.mxu0 %v6183
  %6354 = vmatprep.subr.bf16.mxu0 %v6188
  %6355 = vmatpush1.bf16.msra.mxu0 %v6187
  %6356 = vmatprep.subr.bf16.mxu0 %v6192
  %6357 = vmatpush1.bf16.msra.mxu0 %v6191
  %6358 = vmatprep.subr.bf16.mxu0 %v6196
  %6359 = vmatpush1.bf16.msra.mxu0 %v6195
  %6360 = vmatprep.subr.bf16.mxu0 %v6200
  %6361 = vmatpush1.bf16.msra.mxu0 %v6199
  %6362 = vmatprep.subr.bf16.mxu0 %v6204
  %6363 = vmatpush1.bf16.msra.mxu0 %v6203
  %6364 = vmatprep.subr.bf16.mxu0 %v6208
  %6365 = vmatpush1.bf16.msra.mxu0 %v6207
  %6366 = vmatprep.subr.bf16.mxu0 %v6212
  %6367 = vmatpush1.bf16.msra.mxu0 %v6211
  %6368 = vmatprep.subr.bf16.mxu0 %v6216
  %6369 = vmatpush1.bf16.msra.mxu0 %v6215
  %6370 = vmatprep.subr.bf16.mxu0 %v6220
  %6371 = vmatpush1.bf16.msra.mxu0 %v6219
  %6372 = vmatprep.subr.bf16.mxu0 %v6224
  %6373 = vmatpush1.bf16.msra.mxu0 %v6223
  %6374 = vmatprep.mubr.bf16.mxu0 %v6254
  %6375 = vmatmul.mubr.bf16.gmra.mrb[0].mxu0 %v6246
  %v6376 = vpop.f32.mrb[0].mxu0
  %v6377 = vadd.f32 %v6236, %v6376
  %v6378 = vpop.f32.mrb[0].mxu0
  %v6379 = vadd.f32 %v6236, %v6378
  %v6380 = vpop.f32.mrb[0].mxu0
  %v6381 = vpop.f32.mrb[0].mxu0
  %6382 = vdwg.mxu0
  %6383 = vmatprep.subr.bf16.mxu0 %v6228
  %6384 = vmatpush1.bf16.msra.mxu0 %v6227
  %6385 = vmatprep.subr.bf16.mxu0 %v6232
  %6386 = vmatpush1.bf16.msra.mxu0 %v6231
  %6387 = vmatprep.subr.bf16.mxu0 0
  %6388 = vmatpush1.bf16.msra.mxu0 0
  %6389 = vmatprep.subr.bf16.mxu0 0
  %6390 = vmatpush1.bf16.msra.mxu0 0
  %6391 = vmatprep.subr.bf16.mxu0 0
  %6392 = vmatpush1.bf16.msra.mxu0 0
  %6393 = vmatprep.subr.bf16.mxu0 0
  %6394 = vmatpush1.bf16.msra.mxu0 0
  %6395 = vmatprep.subr.bf16.mxu0 0
  %6396 = vmatpush1.bf16.msra.mxu0 0
  %6397 = vmatprep.subr.bf16.mxu0 0
  %6398 = vmatpush1.bf16.msra.mxu0 0
  %6399 = vmatprep.subr.bf16.mxu0 0
  %6400 = vmatpush1.bf16.msra.mxu0 0
  %6401 = vmatprep.subr.bf16.mxu0 0
  %6402 = vmatpush1.bf16.msra.mxu0 0
  %6403 = vmatprep.subr.bf16.mxu0 0
  %6404 = vmatpush1.bf16.msra.mxu0 0
  %6405 = vmatprep.subr.bf16.mxu0 0
  %6406 = vmatpush1.bf16.msra.mxu0 0
  %6407 = vmatprep.subr.bf16.mxu0 0
  %6408 = vmatpush1.bf16.msra.mxu0 0
  %6409 = vmatprep.subr.bf16.mxu0 0
  %6410 = vmatpush1.bf16.msra.mxu0 0
  %6411 = vmatprep.subr.bf16.mxu0 0
  %6412 = vmatpush1.bf16.msra.mxu0 0
  %6413 = vmatprep.subr.bf16.mxu0 0
  %6414 = vmatpush1.bf16.msra.mxu0 0
  %6415 = vmatprep.mubr.bf16.mxu0 0
  %6416 = vmatmul.mubr.bf16.gmra.mrb[0].mxu0 %v6258
  %v6417 = vpop.f32.mrb[0].mxu0
  %v6418 = vadd.f32 %v6377, %v6417
  %v6419 = vpop.f32.mrb[0].mxu0
  %v6420 = vadd.f32 %v6379, %v6419
  %v6421 = vpop.f32.mrb[0].mxu0
  %v6422 = vpop.f32.mrb[0].mxu0
  %6423 = vdwg.mxu0
  %v6424 = vtanh.pop %v6336
  %v6425 = vtanh.pop %v6338
  %v6426 = vtanh.pop %v6418
  %v6427 = vtanh.pop %v6420
  %v6432 = vcombine.low %v6424, %v6425
  %v6433 = vcombine.low %v6426, %v6427
  %6436 = vst [vmem:[%s22] sm:$0x77] %v6432
  %6437 = vst [vmem:[%s22 + $0x8] sm:$0x77] %v6433
  // Predicated region
  $region90: #{generator_forward.1} parent=0 // pred_check
    _
  $region91: #{generator_forward.1} parent=0 // pred_check_branch
    %6439 = sbr.rel (0) target = $region93
  $region92: #{generator_forward.1} parent=0 // pred_region
    _
  $region93: #{generator_forward.1} parent=0 // pred_fallthru
    _
  // Predicated region
  $region94: #{generator_forward.1} parent=0 // pred_check
    _
  $region95: #{generator_forward.1} parent=0 // pred_check_branch
    %6441 = sbr.rel (0) target = $region97
  $region96: #{generator_forward.1} parent=0 // pred_region
    _
  $region97: #{generator_forward.1} parent=0 // pred_fallthru
    _

</llo_original>
